<compile_context>
chip_gen: v7x
topology: tpu7x:2x2x1
jax: 0.10.0
libtpu: 0.0.40
codegen_flags: <defaults>
</compile_context>

<pallas_src>
import numpy as np
import jax
import jax.numpy as jnp
from jax import lax
from jax.experimental import pallas as pl
from jax.experimental.pallas import tpu as pltpu

# antialiased_cnns.BlurPool(filt_size=4): 2-D filter = outer([1,3,3,1])/64,
# reflect pad (left=1, right=2, top=1, bottom=2), depthwise conv, stride=1.
_BLUR_TAPS = (1.0 / 8.0, 3.0 / 8.0, 3.0 / 8.0, 1.0 / 8.0)
_BLUR_2D = np.outer([1.0, 3.0, 3.0, 1.0], [1.0, 3.0, 3.0, 1.0])
_BLUR_2D = _BLUR_2D / _BLUR_2D.sum()


# -------------------- fused Pallas kernel --------------------

def _unet_up_fused_kernel(xp_ref, w_ref, o_ref, ys_ref):
    """Fused ConvTranspose2d(4,2,1) + BlurPool(4,s=1) + InstanceNorm + ReLU.

    xp_ref: (H+2, W+2, Cin)        bf16  zero-padded NHWC input image
    w_ref:  (2, 2, 3*Cin, 2*cblk)  bf16  [ph, dh, dw*Cin+ic, pw*cblk+oc]
    o_ref:  (H2, W2, cblk)         f32   final NHWC output channel-block
    ys_ref: (H2, W2, cblk)         f32   VMEM scratch for the deconv output
    """
    Hp, Wp, Cin = xp_ref.shape
    H, W = Hp - 2, Wp - 2
    H2, W2, cblk = o_ref.shape

    # ---- ConvTranspose2d: per H-phase, 2 GEMMs with the 3 dw taps merged ----
    for ph in range(2):
        acc = jnp.zeros((H * W, 2 * cblk), jnp.float32)
        for dh in range(2):
            # in-kernel im2col of one row band: K dim = (dw, ic) = 3*Cin
            xop = jnp.concatenate(
                [xp_ref[pl.ds(ph + dh, H), dw:dw + W, :] for dw in range(3)],
                axis=-1)                                       # (H, W, 3*Cin)
            acc = acc + jnp.dot(xop.reshape(H * W, 3 * Cin),
                                w_ref[ph, dh],
                                preferred_element_type=jnp.float32)
        # scatter the (pw, oc) columns into the interleaved full-res scratch:
        # ys[2h+ph, 2w+pw, oc] = acc[h*W+w, pw*cblk+oc]
        for pw in range(2):
            plane = acc[:, pw * cblk:(pw + 1) * cblk].reshape(H, W, cblk)
            ys_ref[pl.ds(ph, H, stride=2), pl.ds(pw, W, stride=2), :] = plane

    # ---- fused reflect-pad + separable BlurPool + InstanceNorm + ReLU ----
    y = ys_ref[...]
    f0, f1, f2, f3 = _BLUR_TAPS

    # reflect pad (1, 2) along H (major dim) + 4-tap blur along H
    hp = jnp.concatenate(
        [y[1:2], y, y[H2 - 2:H2 - 1], y[H2 - 3:H2 - 2]], axis=0)
    th = (f0 * hp[0:H2] + f1 * hp[1:H2 + 1] +
          f2 * hp[2:H2 + 2] + f3 * hp[3:H2 + 3])

    # reflect pad (1, 2) along W (sublane dim) + 4-tap blur along W
    wpad = jnp.concatenate(
        [th[:, 1:2], th, th[:, W2 - 2:W2 - 1], th[:, W2 - 3:W2 - 2]], axis=1)
    tb = (f0 * wpad[:, 0:W2] + f1 * wpad[:, 1:W2 + 1] +
          f2 * wpad[:, 2:W2 + 2] + f3 * wpad[:, 3:W2 + 3])

    # one-pass InstanceNorm stats per channel (lane dim): var = E[x^2] - mean^2
    inv_n = 1.0 / float(H2 * W2)
    mean = jnp.sum(tb, axis=(0, 1), keepdims=True) * inv_n
    msq = jnp.sum(tb * tb, axis=(0, 1), keepdims=True) * inv_n
    z = (tb - mean) * lax.rsqrt(msq - mean * mean + 1e-5)
    o_ref[...] = jnp.maximum(z, 0.0)


# -------------------- weight preparation (XLA side, tiny) --------------------

def _build_deconv_weights(w_t, cblk, dtype):
    """PyTorch ConvTranspose2d weight (Cin, Cout, 4, 4) ->
    (n_cblk, 2, 2, 3*Cin, 2*cblk) with index
    [cb, ph, dh, dw*Cin+ic, pw*cblk+j] = w_t[ic, cb*cblk+j, 3-ph-2dh, 3-2dw+pw]
    (zero when kw = 3-2dw+pw is outside [0, 3])."""
    Cin, Cout = w_t.shape[0], w_t.shape[1]
    n_cblk = Cout // cblk
    zeros = jnp.zeros((Cin, Cout), w_t.dtype)
    phases = []
    for ph in range(2):
        dhs = []
        for dh in range(2):
            kh = 3 - ph - 2 * dh
            rows = []
            for dw in range(3):
                cols = []
                for pw in range(2):
                    kw = 3 - 2 * dw + pw
                    cols.append(w_t[:, :, kh, kw] if 0 <= kw <= 3 else zeros)
                rows.append(jnp.concatenate(cols, axis=1))       # (Cin, 2*Cout)
            dhs.append(jnp.concatenate(rows, axis=0))            # (3*Cin, 2*Cout)
        phases.append(jnp.stack(dhs, axis=0))                    # (2, 3*Cin, 2*Cout)
    wk = jnp.stack(phases, axis=0)                               # (2, 2, 3*Cin, 2*Cout)
    # re-block the (pw, oc) columns per output-channel block
    wk = wk.reshape(2, 2, 3 * Cin, 2, n_cblk, cblk)
    wk = jnp.transpose(wk, (4, 0, 1, 2, 3, 5))
    return wk.reshape(n_cblk, 2, 2, 3 * Cin, 2 * cblk).astype(dtype)


# -------------------- wrapper --------------------

def unet_up_forward(x, skip, w_t):
    """x: (N, Cin, H, W), skip: (N, Cskip, 2H, 2W), w_t: (Cin, Cout, 4, 4)."""
    N, Cin, H, W = x.shape
    Cout = w_t.shape[1]
    H2, W2 = 2 * H, 2 * W

    # channel blocking (exact for InstanceNorm); lane-aligned at real widths
    cblk = 128 if Cout % 128 == 0 else Cout
    n_cblk = Cout // cblk

    # small pre-upsample input: NCHW -> NHWC, zero-pad spatial by 1, cast bf16
    # TODO(synk): absorb this pad/relayout into the kernel (masked border taps).
    x_nhwc = jnp.transpose(x, (0, 2, 3, 1))
    xp = jnp.pad(x_nhwc, ((0, 0), (1, 1), (1, 1), (0, 0))).astype(jnp.bfloat16)
    wk = _build_deconv_weights(w_t, cblk, jnp.bfloat16)

    # explicit VMEM budget (double-buffered in/out + scratch + GEMM temporaries)
    blk_bytes = (2 * (H + 2) * (W + 2) * Cin * 2
                 + 2 * (2 * 2 * 3 * Cin * 2 * cblk) * 2
                 + 2 * H2 * W2 * cblk * 4
                 + H2 * W2 * cblk * 4)
    vmem_limit = int(min(max(4 * blk_bytes, 8 << 20), 64 << 20))

    z = pl.pallas_call(
        _unet_up_fused_kernel,
        out_shape=jax.ShapeDtypeStruct((N, H2, W2, Cout), jnp.float32),
        grid_spec=pltpu.PrefetchScalarGridSpec(
            num_scalar_prefetch=0,
            # (channel-block, image): weights block index constant over the
            # inner image axis -> VMEM-resident weights.
            grid=(n_cblk, N),
            in_specs=[
                pl.BlockSpec((pl.Squeezed(), H + 2, W + 2, Cin),
                             lambda cb, n: (n, 0, 0, 0)),
                pl.BlockSpec((pl.Squeezed(), 2, 2, 3 * Cin, 2 * cblk),
                             lambda cb, n: (cb, 0, 0, 0, 0)),
            ],
            out_specs=pl.BlockSpec((pl.Squeezed(), H2, W2, cblk),
                                   lambda cb, n: (n, 0, 0, cb)),
            scratch_shapes=[pltpu.VMEM((H2, W2, cblk), jnp.float32)],
        ),
        compiler_params=pltpu.CompilerParams(
            dimension_semantics=("parallel", "parallel"),
            vmem_limit_bytes=vmem_limit),
    )(xp, wk)

    # torch.cat((x, skip), dim=1) in NCHW.
    # TODO(synk): fold this relayout + concat into the kernel (NCHW out block +
    #             input_output_aliases for skip) to remove this XLA pass.
    return jnp.concatenate([jnp.transpose(z, (0, 3, 1, 2)), skip], axis=1)


# -------------------- pure-JAX reference (for verification) --------------------

def _reference(x, skip, w_t):
    Cout = w_t.shape[1]
    w_conv = jnp.flip(w_t, (2, 3)).transpose(1, 0, 2, 3)   # (Cout, Cin, 4, 4)
    y = lax.conv_general_dilated(
        x, w_conv, window_strides=(1, 1), padding=[(2, 2), (2, 2)],
        lhs_dilation=(2, 2), dimension_numbers=("NCHW", "OIHW", "NCHW"),
        precision=lax.Precision.HIGHEST)
    y_pad = jnp.pad(y, ((0, 0), (0, 0), (1, 2), (1, 2)), mode="reflect")
    blur_w = jnp.broadcast_to(jnp.asarray(_BLUR_2D, jnp.float32)[None, None],
                              (Cout, 1, 4, 4))
    yb = lax.conv_general_dilated(
        y_pad, blur_w, window_strides=(1, 1), padding="VALID",
        feature_group_count=Cout, dimension_numbers=("NCHW", "OIHW", "NCHW"),
        precision=lax.Precision.HIGHEST)
    mean = jnp.mean(yb, axis=(2, 3), keepdims=True)
    var = jnp.mean((yb - mean) ** 2, axis=(2, 3), keepdims=True)
    yn = jnp.maximum((yb - mean) * lax.rsqrt(var + 1e-5), 0.0)
    return jnp.concatenate([yn, skip], axis=1)


if __name__ == "__main__":
    key = jax.random.PRNGKey(0)
    k1, k2, k3 = jax.random.split(key, 3)

    # small shapes: in_size=4, out_size=4, skip channels=4, spatial 16 -> 32
    N, Cin, H, W = 2, 4, 16, 16
    Cout, Cskip = 4, 4
    x = jax.random.normal(k1, (N, Cin, H, W), jnp.float32)
    skip = jax.random.normal(k2, (N, Cskip, 2 * H, 2 * W), jnp.float32)
    # ConvTranspose2d weight, PyTorch layout (in_size, out_size, 4, 4)
    w_t = jax.random.normal(k3, (Cin, Cout, 4, 4), jnp.float32) * 0.1

    fwd = jax.jit(unet_up_forward)
    out = jax.block_until_ready(fwd(x, skip, w_t))
    ref = jax.block_until_ready(_reference(x, skip, w_t))

    assert out.shape == (N, Cout + Cskip, 2 * H, 2 * W)
    # bf16 MXU operands (f32 accumulation) -> slightly looser tolerance vs f32 ref
    np.testing.assert_allclose(np.asarray(out), np.asarray(ref),
                               rtol=3e-2, atol=3e-2)
    print("KERNEL_OK")
</pallas_src>

<mosaic_0001>
module attributes {stable_mosaic.version = 11 : i64} {
  func.func @_unet_up_fused_kernel(%arg0: i32, %arg1: i32, %arg2: memref<1x18x18x4xbf16, #tpu.memory_space<vmem>>, %arg3: memref<1x2x2x12x8xbf16, #tpu.memory_space<vmem>>, %arg4: memref<1x32x32x4xf32, #tpu.memory_space<vmem>>, %arg5: memref<32x32x4xf32, #tpu.memory_space<vmem>>) attributes {dimension_semantics = [#tpu.dimension_semantics<parallel>, #tpu.dimension_semantics<parallel>], iteration_bounds = array<i64: 1, 2>, scalar_prefetch = 0 : i64, scratch_operands = 1 : i64, tpu.core_type = #tpu.core_type<tc>, window_params = [{transform_indices = @transform_0, window_bounds = array<i64: 1, 18, 18, 4>}, {transform_indices = @transform_1, window_bounds = array<i64: 1, 2, 2, 12, 8>}, {transform_indices = @transform_2, window_bounds = array<i64: 1, 32, 32, 4>}]} {
    %cst = arith.constant 0.000000e+00 : f32
    %0 = vector.broadcast %cst : f32 to vector<256x8xf32>
    %c0 = arith.constant 0 : index
    %c0_0 = arith.constant 0 : index
    %c0_1 = arith.constant 0 : index
    %c0_2 = arith.constant 0 : index
    %1 = vector.load %arg2[%c0, %c0_0, %c0_1, %c0_2] : memref<1x18x18x4xbf16, #tpu.memory_space<vmem>>, vector<1x16x16x4xbf16>
    %2 = vector.shape_cast %1 : vector<1x16x16x4xbf16> to vector<16x16x4xbf16>
    %c0_3 = arith.constant 0 : index
    %c0_4 = arith.constant 0 : index
    %c1 = arith.constant 1 : index
    %c0_5 = arith.constant 0 : index
    %3 = vector.load %arg2[%c0_3, %c0_4, %c1, %c0_5] : memref<1x18x18x4xbf16, #tpu.memory_space<vmem>>, vector<1x16x16x4xbf16>
    %4 = vector.shape_cast %3 : vector<1x16x16x4xbf16> to vector<16x16x4xbf16>
    %c0_6 = arith.constant 0 : index
    %c0_7 = arith.constant 0 : index
    %c2 = arith.constant 2 : index
    %c0_8 = arith.constant 0 : index
    %5 = vector.load %arg2[%c0_6, %c0_7, %c2, %c0_8] : memref<1x18x18x4xbf16, #tpu.memory_space<vmem>>, vector<1x16x16x4xbf16>
    %6 = vector.shape_cast %5 : vector<1x16x16x4xbf16> to vector<16x16x4xbf16>
    %7 = tpu.concatenate %2, %4, %6 in 2 : vector<16x16x4xbf16>, vector<16x16x4xbf16>, vector<16x16x4xbf16> -> vector<16x16x12xbf16>
    %8 = vector.shape_cast %7 : vector<16x16x12xbf16> to vector<256x12xbf16>
    %c0_9 = arith.constant 0 : index
    %c0_10 = arith.constant 0 : index
    %c0_11 = arith.constant 0 : index
    %c0_12 = arith.constant 0 : index
    %c0_13 = arith.constant 0 : index
    %9 = vector.load %arg3[%c0_9, %c0_10, %c0_11, %c0_12, %c0_13] : memref<1x2x2x12x8xbf16, #tpu.memory_space<vmem>>, vector<1x1x1x12x8xbf16>
    %10 = vector.shape_cast %9 : vector<1x1x1x12x8xbf16> to vector<12x8xbf16>
    %cst_14 = arith.constant dense<0.000000e+00> : vector<256x8xf32>
    %11 = tpu.matmul %8, %10, %cst_14 {dimension_numbers = #tpu.dot_dimension_numbers<[1], [0], [0], [1], [0, 0, 1, 1], [], []>} : vector<256x12xbf16>, vector<12x8xbf16>, vector<256x8xf32> -> vector<256x8xf32>
    %12 = arith.addf %0, %11 : vector<256x8xf32>
    %c0_15 = arith.constant 0 : index
    %c1_16 = arith.constant 1 : index
    %c0_17 = arith.constant 0 : index
    %c0_18 = arith.constant 0 : index
    %13 = vector.load %arg2[%c0_15, %c1_16, %c0_17, %c0_18] : memref<1x18x18x4xbf16, #tpu.memory_space<vmem>>, vector<1x16x16x4xbf16>
    %14 = vector.shape_cast %13 : vector<1x16x16x4xbf16> to vector<16x16x4xbf16>
    %c0_19 = arith.constant 0 : index
    %c1_20 = arith.constant 1 : index
    %c1_21 = arith.constant 1 : index
    %c0_22 = arith.constant 0 : index
    %15 = vector.load %arg2[%c0_19, %c1_20, %c1_21, %c0_22] : memref<1x18x18x4xbf16, #tpu.memory_space<vmem>>, vector<1x16x16x4xbf16>
    %16 = vector.shape_cast %15 : vector<1x16x16x4xbf16> to vector<16x16x4xbf16>
    %c0_23 = arith.constant 0 : index
    %c1_24 = arith.constant 1 : index
    %c2_25 = arith.constant 2 : index
    %c0_26 = arith.constant 0 : index
    %17 = vector.load %arg2[%c0_23, %c1_24, %c2_25, %c0_26] : memref<1x18x18x4xbf16, #tpu.memory_space<vmem>>, vector<1x16x16x4xbf16>
    %18 = vector.shape_cast %17 : vector<1x16x16x4xbf16> to vector<16x16x4xbf16>
    %19 = tpu.concatenate %14, %16, %18 in 2 : vector<16x16x4xbf16>, vector<16x16x4xbf16>, vector<16x16x4xbf16> -> vector<16x16x12xbf16>
    %20 = vector.shape_cast %19 : vector<16x16x12xbf16> to vector<256x12xbf16>
    %c0_27 = arith.constant 0 : index
    %c0_28 = arith.constant 0 : index
    %c1_29 = arith.constant 1 : index
    %c0_30 = arith.constant 0 : index
    %c0_31 = arith.constant 0 : index
    %21 = vector.load %arg3[%c0_27, %c0_28, %c1_29, %c0_30, %c0_31] : memref<1x2x2x12x8xbf16, #tpu.memory_space<vmem>>, vector<1x1x1x12x8xbf16>
    %22 = vector.shape_cast %21 : vector<1x1x1x12x8xbf16> to vector<12x8xbf16>
    %cst_32 = arith.constant dense<0.000000e+00> : vector<256x8xf32>
    %23 = tpu.matmul %20, %22, %cst_32 {dimension_numbers = #tpu.dot_dimension_numbers<[1], [0], [0], [1], [0, 0, 1, 1], [], []>} : vector<256x12xbf16>, vector<12x8xbf16>, vector<256x8xf32> -> vector<256x8xf32>
    %24 = arith.addf %12, %23 : vector<256x8xf32>
    %25 = vector.extract_strided_slice %24 {offsets = [0, 0], sizes = [256, 4], strides = [1, 1]} : vector<256x8xf32> to vector<256x4xf32>
    %26 = vector.shape_cast %25 : vector<256x4xf32> to vector<16x16x4xf32>
    %c0_33 = arith.constant 0 : index
    %c0_34 = arith.constant 0 : index
    %c0_35 = arith.constant 0 : index
    %27 = tpu.strided_load %arg5[%c0_33, %c0_34, %c0_35] {strides = array<i32: 2, 2, 1>} : memref<32x32x4xf32, #tpu.memory_space<vmem>>, vector<16x16x4xf32>
    tpu.strided_store %arg5[%c0_33, %c0_34, %c0_35], %26 {strides = array<i32: 2, 2, 1>} : memref<32x32x4xf32, #tpu.memory_space<vmem>>, vector<16x16x4xf32>
    %28 = vector.extract_strided_slice %24 {offsets = [0, 4], sizes = [256, 4], strides = [1, 1]} : vector<256x8xf32> to vector<256x4xf32>
    %29 = vector.shape_cast %28 : vector<256x4xf32> to vector<16x16x4xf32>
    %c0_36 = arith.constant 0 : index
    %c1_37 = arith.constant 1 : index
    %c0_38 = arith.constant 0 : index
    %30 = tpu.strided_load %arg5[%c0_36, %c1_37, %c0_38] {strides = array<i32: 2, 2, 1>} : memref<32x32x4xf32, #tpu.memory_space<vmem>>, vector<16x16x4xf32>
    tpu.strided_store %arg5[%c0_36, %c1_37, %c0_38], %29 {strides = array<i32: 2, 2, 1>} : memref<32x32x4xf32, #tpu.memory_space<vmem>>, vector<16x16x4xf32>
    %cst_39 = arith.constant 0.000000e+00 : f32
    %31 = vector.broadcast %cst_39 : f32 to vector<256x8xf32>
    %c0_40 = arith.constant 0 : index
    %c1_41 = arith.constant 1 : index
    %c0_42 = arith.constant 0 : index
    %c0_43 = arith.constant 0 : index
    %32 = vector.load %arg2[%c0_40, %c1_41, %c0_42, %c0_43] : memref<1x18x18x4xbf16, #tpu.memory_space<vmem>>, vector<1x16x16x4xbf16>
    %33 = vector.shape_cast %32 : vector<1x16x16x4xbf16> to vector<16x16x4xbf16>
    %c0_44 = arith.constant 0 : index
    %c1_45 = arith.constant 1 : index
    %c1_46 = arith.constant 1 : index
    %c0_47 = arith.constant 0 : index
    %34 = vector.load %arg2[%c0_44, %c1_45, %c1_46, %c0_47] : memref<1x18x18x4xbf16, #tpu.memory_space<vmem>>, vector<1x16x16x4xbf16>
    %35 = vector.shape_cast %34 : vector<1x16x16x4xbf16> to vector<16x16x4xbf16>
    %c0_48 = arith.constant 0 : index
    %c1_49 = arith.constant 1 : index
    %c2_50 = arith.constant 2 : index
    %c0_51 = arith.constant 0 : index
    %36 = vector.load %arg2[%c0_48, %c1_49, %c2_50, %c0_51] : memref<1x18x18x4xbf16, #tpu.memory_space<vmem>>, vector<1x16x16x4xbf16>
    %37 = vector.shape_cast %36 : vector<1x16x16x4xbf16> to vector<16x16x4xbf16>
    %38 = tpu.concatenate %33, %35, %37 in 2 : vector<16x16x4xbf16>, vector<16x16x4xbf16>, vector<16x16x4xbf16> -> vector<16x16x12xbf16>
    %39 = vector.shape_cast %38 : vector<16x16x12xbf16> to vector<256x12xbf16>
    %c0_52 = arith.constant 0 : index
    %c1_53 = arith.constant 1 : index
    %c0_54 = arith.constant 0 : index
    %c0_55 = arith.constant 0 : index
    %c0_56 = arith.constant 0 : index
    %40 = vector.load %arg3[%c0_52, %c1_53, %c0_54, %c0_55, %c0_56] : memref<1x2x2x12x8xbf16, #tpu.memory_space<vmem>>, vector<1x1x1x12x8xbf16>
    %41 = vector.shape_cast %40 : vector<1x1x1x12x8xbf16> to vector<12x8xbf16>
    %cst_57 = arith.constant dense<0.000000e+00> : vector<256x8xf32>
    %42 = tpu.matmul %39, %41, %cst_57 {dimension_numbers = #tpu.dot_dimension_numbers<[1], [0], [0], [1], [0, 0, 1, 1], [], []>} : vector<256x12xbf16>, vector<12x8xbf16>, vector<256x8xf32> -> vector<256x8xf32>
    %43 = arith.addf %31, %42 : vector<256x8xf32>
    %c0_58 = arith.constant 0 : index
    %c2_59 = arith.constant 2 : index
    %c0_60 = arith.constant 0 : index
    %c0_61 = arith.constant 0 : index
    %44 = vector.load %arg2[%c0_58, %c2_59, %c0_60, %c0_61] : memref<1x18x18x4xbf16, #tpu.memory_space<vmem>>, vector<1x16x16x4xbf16>
    %45 = vector.shape_cast %44 : vector<1x16x16x4xbf16> to vector<16x16x4xbf16>
    %c0_62 = arith.constant 0 : index
    %c2_63 = arith.constant 2 : index
    %c1_64 = arith.constant 1 : index
    %c0_65 = arith.constant 0 : index
    %46 = vector.load %arg2[%c0_62, %c2_63, %c1_64, %c0_65] : memref<1x18x18x4xbf16, #tpu.memory_space<vmem>>, vector<1x16x16x4xbf16>
    %47 = vector.shape_cast %46 : vector<1x16x16x4xbf16> to vector<16x16x4xbf16>
    %c0_66 = arith.constant 0 : index
    %c2_67 = arith.constant 2 : index
    %c2_68 = arith.constant 2 : index
    %c0_69 = arith.constant 0 : index
    %48 = vector.load %arg2[%c0_66, %c2_67, %c2_68, %c0_69] : memref<1x18x18x4xbf16, #tpu.memory_space<vmem>>, vector<1x16x16x4xbf16>
    %49 = vector.shape_cast %48 : vector<1x16x16x4xbf16> to vector<16x16x4xbf16>
    %50 = tpu.concatenate %45, %47, %49 in 2 : vector<16x16x4xbf16>, vector<16x16x4xbf16>, vector<16x16x4xbf16> -> vector<16x16x12xbf16>
    %51 = vector.shape_cast %50 : vector<16x16x12xbf16> to vector<256x12xbf16>
    %c0_70 = arith.constant 0 : index
    %c1_71 = arith.constant 1 : index
    %c1_72 = arith.constant 1 : index
    %c0_73 = arith.constant 0 : index
    %c0_74 = arith.constant 0 : index
    %52 = vector.load %arg3[%c0_70, %c1_71, %c1_72, %c0_73, %c0_74] : memref<1x2x2x12x8xbf16, #tpu.memory_space<vmem>>, vector<1x1x1x12x8xbf16>
    %53 = vector.shape_cast %52 : vector<1x1x1x12x8xbf16> to vector<12x8xbf16>
    %cst_75 = arith.constant dense<0.000000e+00> : vector<256x8xf32>
    %54 = tpu.matmul %51, %53, %cst_75 {dimension_numbers = #tpu.dot_dimension_numbers<[1], [0], [0], [1], [0, 0, 1, 1], [], []>} : vector<256x12xbf16>, vector<12x8xbf16>, vector<256x8xf32> -> vector<256x8xf32>
    %55 = arith.addf %43, %54 : vector<256x8xf32>
    %56 = vector.extract_strided_slice %55 {offsets = [0, 0], sizes = [256, 4], strides = [1, 1]} : vector<256x8xf32> to vector<256x4xf32>
    %57 = vector.shape_cast %56 : vector<256x4xf32> to vector<16x16x4xf32>
    %c1_76 = arith.constant 1 : index
    %c0_77 = arith.constant 0 : index
    %c0_78 = arith.constant 0 : index
    %58 = tpu.strided_load %arg5[%c1_76, %c0_77, %c0_78] {strides = array<i32: 2, 2, 1>} : memref<32x32x4xf32, #tpu.memory_space<vmem>>, vector<16x16x4xf32>
    tpu.strided_store %arg5[%c1_76, %c0_77, %c0_78], %57 {strides = array<i32: 2, 2, 1>} : memref<32x32x4xf32, #tpu.memory_space<vmem>>, vector<16x16x4xf32>
    %59 = vector.extract_strided_slice %55 {offsets = [0, 4], sizes = [256, 4], strides = [1, 1]} : vector<256x8xf32> to vector<256x4xf32>
    %60 = vector.shape_cast %59 : vector<256x4xf32> to vector<16x16x4xf32>
    %c1_79 = arith.constant 1 : index
    %c1_80 = arith.constant 1 : index
    %c0_81 = arith.constant 0 : index
    %61 = tpu.strided_load %arg5[%c1_79, %c1_80, %c0_81] {strides = array<i32: 2, 2, 1>} : memref<32x32x4xf32, #tpu.memory_space<vmem>>, vector<16x16x4xf32>
    tpu.strided_store %arg5[%c1_79, %c1_80, %c0_81], %60 {strides = array<i32: 2, 2, 1>} : memref<32x32x4xf32, #tpu.memory_space<vmem>>, vector<16x16x4xf32>
    %c0_82 = arith.constant 0 : index
    %c0_83 = arith.constant 0 : index
    %c0_84 = arith.constant 0 : index
    %62 = vector.load %arg5[%c0_82, %c0_83, %c0_84] : memref<32x32x4xf32, #tpu.memory_space<vmem>>, vector<32x32x4xf32>
    %63 = vector.extract_strided_slice %62 {offsets = [1, 0, 0], sizes = [1, 32, 4], strides = [1, 1, 1]} : vector<32x32x4xf32> to vector<1x32x4xf32>
    %64 = vector.extract_strided_slice %62 {offsets = [30, 0, 0], sizes = [1, 32, 4], strides = [1, 1, 1]} : vector<32x32x4xf32> to vector<1x32x4xf32>
    %65 = vector.extract_strided_slice %62 {offsets = [29, 0, 0], sizes = [1, 32, 4], strides = [1, 1, 1]} : vector<32x32x4xf32> to vector<1x32x4xf32>
    %66 = tpu.concatenate %63, %62, %64, %65 in 0 : vector<1x32x4xf32>, vector<32x32x4xf32>, vector<1x32x4xf32>, vector<1x32x4xf32> -> vector<35x32x4xf32>
    %67 = vector.extract_strided_slice %66 {offsets = [0, 0, 0], sizes = [32, 32, 4], strides = [1, 1, 1]} : vector<35x32x4xf32> to vector<32x32x4xf32>
    %cst_85 = arith.constant 1.250000e-01 : f32
    %68 = vector.broadcast %cst_85 : f32 to vector<32x32x4xf32>
    %69 = arith.mulf %68, %67 : vector<32x32x4xf32>
    %70 = vector.extract_strided_slice %66 {offsets = [1, 0, 0], sizes = [32, 32, 4], strides = [1, 1, 1]} : vector<35x32x4xf32> to vector<32x32x4xf32>
    %cst_86 = arith.constant 3.750000e-01 : f32
    %71 = vector.broadcast %cst_86 : f32 to vector<32x32x4xf32>
    %72 = arith.mulf %71, %70 : vector<32x32x4xf32>
    %73 = arith.addf %69, %72 : vector<32x32x4xf32>
    %74 = vector.extract_strided_slice %66 {offsets = [2, 0, 0], sizes = [32, 32, 4], strides = [1, 1, 1]} : vector<35x32x4xf32> to vector<32x32x4xf32>
    %cst_87 = arith.constant 3.750000e-01 : f32
    %75 = vector.broadcast %cst_87 : f32 to vector<32x32x4xf32>
    %76 = arith.mulf %75, %74 : vector<32x32x4xf32>
    %77 = arith.addf %73, %76 : vector<32x32x4xf32>
    %78 = vector.extract_strided_slice %66 {offsets = [3, 0, 0], sizes = [32, 32, 4], strides = [1, 1, 1]} : vector<35x32x4xf32> to vector<32x32x4xf32>
    %cst_88 = arith.constant 1.250000e-01 : f32
    %79 = vector.broadcast %cst_88 : f32 to vector<32x32x4xf32>
    %80 = arith.mulf %79, %78 : vector<32x32x4xf32>
    %81 = arith.addf %77, %80 : vector<32x32x4xf32>
    %82 = vector.extract_strided_slice %81 {offsets = [0, 1, 0], sizes = [32, 1, 4], strides = [1, 1, 1]} : vector<32x32x4xf32> to vector<32x1x4xf32>
    %83 = vector.extract_strided_slice %81 {offsets = [0, 30, 0], sizes = [32, 1, 4], strides = [1, 1, 1]} : vector<32x32x4xf32> to vector<32x1x4xf32>
    %84 = vector.extract_strided_slice %81 {offsets = [0, 29, 0], sizes = [32, 1, 4], strides = [1, 1, 1]} : vector<32x32x4xf32> to vector<32x1x4xf32>
    %85 = tpu.concatenate %82, %81, %83, %84 in 1 : vector<32x1x4xf32>, vector<32x32x4xf32>, vector<32x1x4xf32>, vector<32x1x4xf32> -> vector<32x35x4xf32>
    %86 = vector.extract_strided_slice %85 {offsets = [0, 0, 0], sizes = [32, 32, 4], strides = [1, 1, 1]} : vector<32x35x4xf32> to vector<32x32x4xf32>
    %cst_89 = arith.constant 1.250000e-01 : f32
    %87 = vector.broadcast %cst_89 : f32 to vector<32x32x4xf32>
    %88 = arith.mulf %87, %86 : vector<32x32x4xf32>
    %89 = vector.extract_strided_slice %85 {offsets = [0, 1, 0], sizes = [32, 32, 4], strides = [1, 1, 1]} : vector<32x35x4xf32> to vector<32x32x4xf32>
    %cst_90 = arith.constant 3.750000e-01 : f32
    %90 = vector.broadcast %cst_90 : f32 to vector<32x32x4xf32>
    %91 = arith.mulf %90, %89 : vector<32x32x4xf32>
    %92 = arith.addf %88, %91 : vector<32x32x4xf32>
    %93 = vector.extract_strided_slice %85 {offsets = [0, 2, 0], sizes = [32, 32, 4], strides = [1, 1, 1]} : vector<32x35x4xf32> to vector<32x32x4xf32>
    %cst_91 = arith.constant 3.750000e-01 : f32
    %94 = vector.broadcast %cst_91 : f32 to vector<32x32x4xf32>
    %95 = arith.mulf %94, %93 : vector<32x32x4xf32>
    %96 = arith.addf %92, %95 : vector<32x32x4xf32>
    %97 = vector.extract_strided_slice %85 {offsets = [0, 3, 0], sizes = [32, 32, 4], strides = [1, 1, 1]} : vector<32x35x4xf32> to vector<32x32x4xf32>
    %cst_92 = arith.constant 1.250000e-01 : f32
    %98 = vector.broadcast %cst_92 : f32 to vector<32x32x4xf32>
    %99 = arith.mulf %98, %97 : vector<32x32x4xf32>
    %100 = arith.addf %96, %99 : vector<32x32x4xf32>
    %cst_93 = arith.constant dense<0.000000e+00> : vector<4xf32>
    %101 = vector.multi_reduction <add>, %100, %cst_93 [0, 1] : vector<32x32x4xf32> to vector<4xf32>
    %102 = vector.shape_cast %101 : vector<4xf32> to vector<1x1x4xf32>
    %cst_94 = arith.constant 9.765625E-4 : f32
    %103 = vector.broadcast %cst_94 : f32 to vector<1x1x4xf32>
    %104 = arith.mulf %102, %103 : vector<1x1x4xf32>
    %105 = arith.mulf %100, %100 : vector<32x32x4xf32>
    %cst_95 = arith.constant dense<0.000000e+00> : vector<4xf32>
    %106 = vector.multi_reduction <add>, %105, %cst_95 [0, 1] : vector<32x32x4xf32> to vector<4xf32>
    %107 = vector.shape_cast %106 : vector<4xf32> to vector<1x1x4xf32>
    %cst_96 = arith.constant 9.765625E-4 : f32
    %108 = vector.broadcast %cst_96 : f32 to vector<1x1x4xf32>
    %109 = arith.mulf %107, %108 : vector<1x1x4xf32>
    %110 = vector.broadcast %104 : vector<1x1x4xf32> to vector<32x32x4xf32>
    %111 = arith.subf %100, %110 : vector<32x32x4xf32>
    %112 = arith.mulf %104, %104 : vector<1x1x4xf32>
    %113 = arith.subf %109, %112 : vector<1x1x4xf32>
    %cst_97 = arith.constant 9.99999974E-6 : f32
    %114 = vector.broadcast %cst_97 : f32 to vector<1x1x4xf32>
    %115 = arith.addf %113, %114 : vector<1x1x4xf32>
    %116 = math.rsqrt %115 : vector<1x1x4xf32>
    %117 = vector.broadcast %116 : vector<1x1x4xf32> to vector<32x32x4xf32>
    %118 = arith.mulf %111, %117 : vector<32x32x4xf32>
    %cst_98 = arith.constant 0.000000e+00 : f32
    %119 = vector.broadcast %cst_98 : f32 to vector<32x32x4xf32>
    %120 = arith.maximumf %118, %119 : vector<32x32x4xf32>
    %c0_99 = arith.constant 0 : index
    %c0_100 = arith.constant 0 : index
    %c0_101 = arith.constant 0 : index
    %c0_102 = arith.constant 0 : index
    %121 = vector.load %arg4[%c0_99, %c0_100, %c0_101, %c0_102] : memref<1x32x32x4xf32, #tpu.memory_space<vmem>>, vector<1x32x32x4xf32>
    %122 = vector.shape_cast %121 : vector<1x32x32x4xf32> to vector<32x32x4xf32>
    %123 = vector.shape_cast %120 : vector<32x32x4xf32> to vector<1x32x32x4xf32>
    tpu.vector_store %arg4[%c0_99, %c0_100, %c0_101, %c0_102], %123 {strides = array<i32>} : memref<1x32x32x4xf32, #tpu.memory_space<vmem>>, vector<1x32x32x4xf32>,
    return
  }
  func.func @transform_0(%arg0: i32, %arg1: i32) -> (i32, i32, i32, i32) {
    %c0_i32 = arith.constant 0 : i32
    %c0_i32_0 = arith.constant 0 : i32
    %c0_i32_1 = arith.constant 0 : i32
    %c0_i32_2 = arith.constant 0 : i32
    return %arg1, %c0_i32, %c0_i32_0, %c0_i32_1 : i32, i32, i32, i32
  }
  func.func @transform_1(%arg0: i32, %arg1: i32) -> (i32, i32, i32, i32, i32) {
    %c0_i32 = arith.constant 0 : i32
    %c0_i32_0 = arith.constant 0 : i32
    %c0_i32_1 = arith.constant 0 : i32
    %c0_i32_2 = arith.constant 0 : i32
    %c0_i32_3 = arith.constant 0 : i32
    return %arg0, %c0_i32, %c0_i32_0, %c0_i32_1, %c0_i32_2 : i32, i32, i32, i32, i32
  }
  func.func @transform_2(%arg0: i32, %arg1: i32) -> (i32, i32, i32, i32) {
    %c0_i32 = arith.constant 0 : i32
    %c0_i32_0 = arith.constant 0 : i32
    %c0_i32_1 = arith.constant 0 : i32
    return %arg1, %c0_i32, %c0_i32_0, %arg0 : i32, i32, i32, i32
  }
}

</mosaic_0001>

<llo_original>
// kernel: unet_up_forward.1
$region0: #{unet_up_forward.1}
  #allocation0 [shape = 'u32[]', space=smem, size = 0x4, offset = 0x4, fixed_abs, tag = 'smem constant byte address 0x4 - core index']
  #allocation1 [shape = 'u32[144,128]{1,0:T(1,128)}', space=vmem, size = 0x12000, scoped, tag = 'internal scratch']
  #allocation2 [shape = 'f32[32,32,4]{2,1,0:T(8,128)}', space=vmem, size = 0x80000, scoped, tag = 'scratch operand']
  %s0 = inlined_call_operand.vmem [shape: bf16[2,18,18,4], index: 0, kind: input, shape index: {}]
  %s1 = inlined_call_operand.vmem [shape: bf16[1,2,2,12,8], index: 1, kind: input, shape index: {}]
  %s2 = inlined_call_operand.vmem [shape: f32[2,32,32,4], index: 2, kind: output, shape index: {}]
  %s3 = sld [smem:[#allocation0]]
  $region41: #{unet_up_forward.1} parent=0
    _
  %s5 = ssub.s32 1, %s3
  %s6 = scalar_select 0, %s5, %s3
  loop: start=0, step=1, limit=4
  $region2: #{unet_up_forward.1} parent=0 // loop_pre_header
    _
  $region3: #{unet_up_forward.1} parent=0 // loop_header
    %s8 = sphi 0, %s12
    %p9 = scmp.ge.s32.totalorder %s8, 4
    %s15 = sphi 0, %s27
    %s16 = sphi 0, %s23
    %s17 = sphi 0, %s15
    %s18 = sphi 0, %s16
    %s19 = sphi 0, %s17
    %s20 = sphi 0, %s18
    %s30 = sphi 0, %s32
    %s33 = sphi 0, %s30
    %s34 = sphi 0, %s33
    %s50 = sphi 0, %s34
    %s56 = sphi 0, %s58
    %s59 = sphi 0, %s56
    %s60 = sphi 0, %s59
    %s76 = sphi 0, %s60
    %s84 = sphi 0, %s86
    %s87 = sphi 0, %s84
    %s88 = sphi 0, %s87
    %s104 = sphi 0, %s88
  $region4: #{unet_up_forward.1} parent=0 // loop_header_branch
    %11 = sbr.rel (%p9) target = $region8
  $region5: #{unet_up_forward.1} parent=0 // loop_body
    %s13 = ssub.s32 %s8, 1
    %s14 = ssub.s32 %s8, 2
    %s21 = sadd.s32 1, %s16
    %p22 = scmp.ge.s32.totalorder %s21, 2
    %s23 = scalar_select %p22, 0, %s21
    %s24 = sadd.s32 1, %s15
    %s25 = scalar_select %p22, %s24, %s15
    %p26 = scmp.ge.s32.totalorder %s25, 1
    %s27 = scalar_select %p26, 0, %s25
    %s28 = ssub.s32 %s16, %s23
    %p29 = scmp.eq.s32.totalorder %s28, 0
    %s31 = sadd.s32 %s30, 1
    %s32 = scalar_select %p29, %s30, %s31
    %p35 = pneg %p29
    %p36 = scmp.eq.s32.totalorder %s8, 1
    %p37 = por %p35, %p36
    %p38 = scmp.ne.s32.totalorder %s30, %s33
    %p39 = scmp.eq.s32.totalorder %s8, 0
    %p40 = por %p38, %p39
    %p41 = scmp.ne.s32.totalorder %s30, %s33
    %p42 = scmp.eq.s32.totalorder %s13, 1
    %p43 = por %p41, %p42
    %p44 = scmp.ne.s32.totalorder %s33, %s34
    %p45 = scmp.eq.s32.totalorder %s13, 0
    %p46 = por %p44, %p45
    %p47 = scmp.ne.s32.totalorder %s33, %s34
    %p48 = scmp.eq.s32.totalorder %s14, 1
    %p49 = por %p47, %p48
    %p51 = scmp.ne.s32.totalorder %s34, %s50
    %p52 = scmp.eq.s32.totalorder %s14, 0
    %p53 = por %p51, %p52
    %s54 = ssub.s32 %s15, %s27
    %p55 = scmp.eq.s32.totalorder %s54, 0
    %s57 = sadd.s32 %s56, 1
    %s58 = scalar_select %p55, %s56, %s57
    %p61 = pneg %p55
    %p62 = scmp.eq.s32.totalorder %s8, 1
    %p63 = por %p61, %p62
    %p64 = scmp.ne.s32.totalorder %s56, %s59
    %p65 = scmp.eq.s32.totalorder %s8, 0
    %p66 = por %p64, %p65
    %p67 = scmp.ne.s32.totalorder %s56, %s59
    %p68 = scmp.eq.s32.totalorder %s13, 1
    %p69 = por %p67, %p68
    %p70 = scmp.ne.s32.totalorder %s59, %s60
    %p71 = scmp.eq.s32.totalorder %s13, 0
    %p72 = por %p70, %p71
    %p73 = scmp.ne.s32.totalorder %s59, %s60
    %p74 = scmp.eq.s32.totalorder %s14, 1
    %p75 = por %p73, %p74
    %p77 = scmp.ne.s32.totalorder %s60, %s76
    %p78 = scmp.eq.s32.totalorder %s14, 0
    %p79 = por %p77, %p78
    %s80 = ssub.s32 %s16, %s23
    %s81 = ssub.s32 %s15, %s27
    %s82 = sor.u32 %s80, %s81
    %p83 = scmp.eq.s32.totalorder %s82, 0
    %s85 = sadd.s32 %s84, 1
    %s86 = scalar_select %p83, %s84, %s85
    %p89 = pneg %p83
    %p90 = scmp.eq.s32.totalorder %s8, 1
    %p91 = por %p89, %p90
    %p92 = scmp.ne.s32.totalorder %s84, %s87
    %p93 = scmp.eq.s32.totalorder %s8, 0
    %p94 = por %p92, %p93
    %p95 = scmp.ne.s32.totalorder %s84, %s87
    %p96 = scmp.eq.s32.totalorder %s13, 1
    %p97 = por %p95, %p96
    %p98 = scmp.ne.s32.totalorder %s87, %s88
    %p99 = scmp.eq.s32.totalorder %s13, 0
    %p100 = por %p98, %p99
    %p101 = scmp.ne.s32.totalorder %s87, %s88
    %p102 = scmp.eq.s32.totalorder %s14, 1
    %p103 = por %p101, %p102
    %p105 = scmp.ne.s32.totalorder %s88, %s104
    %p106 = scmp.eq.s32.totalorder %s14, 0
    %p107 = por %p105, %p106
    %p108 = scmp.le.s32.totalorder 1, %s8
    %p109 = scmp.lt.s32.totalorder %s8, 3
    %p110 = pnand %p108, %p109
    %p111 = pneg %p110
    // Predicated region
    $region9: #{unet_up_forward.1} parent=5 // pred_check
      _
    $region10: #{unet_up_forward.1} parent=5 // pred_check_branch
      %113 = sbr.rel (%p110) target = $region12
    $region11: #{unet_up_forward.1} parent=5 // pred_region
      %s114 = ssub.s32 %s8, 1
      // Predicated region
      $region13: #{unet_up_forward.1} parent=11 // pred_check
        %p115 = pneg %p72
      $region14: #{unet_up_forward.1} parent=11 // pred_check_branch
        %117 = sbr.rel (%p115) target = $region16
      $region15: #{unet_up_forward.1} parent=11 // pred_region
        %p118 = scmp.lt.s32.totalorder %s17, 0
        %s119 = scalar_select %p118, %s17, 0
        %s120 = smul.addr %s119, 8
        %s121 = smul.addr %s120, 4
        %s122 = scalar_lea.vmem %s1, %s121
      $region16: #{unet_up_forward.1} parent=11 // pred_fallthru
        _
    $region12: #{unet_up_forward.1} parent=5 // pred_fallthru
      _
    %p123 = scmp.lt.s32.totalorder %s8, 2
    // Predicated region
    $region17: #{unet_up_forward.1} parent=5 // pred_check
      %p124 = pneg %p123
    $region18: #{unet_up_forward.1} parent=5 // pred_check_branch
      %126 = sbr.rel (%p124) target = $region20
    $region19: #{unet_up_forward.1} parent=5 // pred_region
      // Predicated region
      $region21: #{unet_up_forward.1} parent=19 // pred_check
        %p127 = pneg %p40
      $region22: #{unet_up_forward.1} parent=19 // pred_check_branch
        %129 = sbr.rel (%p127) target = $region24
      $region23: #{unet_up_forward.1} parent=19 // pred_region
        %p130 = scmp.lt.s32.totalorder %s16, 1
        %s131 = scalar_select %p130, %s16, 1
        %s132 = smul.addr %s131, 54
        %s133 = smul.addr %s132, 4
        %s134 = scalar_lea.vmem %s0, %s133
      $region24: #{unet_up_forward.1} parent=19 // pred_fallthru
        _
    $region20: #{unet_up_forward.1} parent=5 // pred_fallthru
      _
    %p135 = scmp.le.s32.totalorder 1, %s8
    %p136 = scmp.lt.s32.totalorder %s8, 3
    %p137 = pnand %p135, %p136
    %p138 = pneg %p137
    // Predicated region
    $region25: #{unet_up_forward.1} parent=5 // pred_check
      _
    $region26: #{unet_up_forward.1} parent=5 // pred_check_branch
      %140 = sbr.rel (%p137) target = $region28
    $region27: #{unet_up_forward.1} parent=5 // pred_region
      %s141 = ssub.s32 %s8, 1
      %p142 = scmp.lt.s32.totalorder %s18, 1
      %s143 = scalar_select %p142, %s18, 1
      %s144 = smul.addr %s143, 54
      %s145 = smul.addr %s144, 4
      %s146 = scalar_lea.vmem %s0, %s145
      %p147 = pneg %p46
      %p148 = pneg %p43
      %p149 = scmp.lt.s32.totalorder %s17, 0
      %s150 = scalar_select %p149, %s17, 0
      %s151 = smul.addr %s150, 8
      %s152 = smul.addr %s151, 4
      %s153 = scalar_lea.vmem %s1, %s152
      %p154 = pneg %p72
      %p155 = pneg %p69
      %p156 = pneg %p100
      %p157 = pneg %p97
      %p158 = scmp.lt.s32.totalorder %s18, 1
      %s159 = scalar_select %p158, %s18, 1
      %p160 = scmp.lt.s32.totalorder %s17, 0
      %s161 = scalar_select %p160, %s17, 0
      %s162 = smul.addr %s159, 128
      %s163 = sadd.s32 %s161, %s162
      %s164 = smul.addr %s163, 8
      %s165 = scalar_lea.vmem %s2, %s164
      %p166 = scmp.lt.s32.totalorder %s18, 1
      %s167 = scalar_select %p166, %s18, 1
      %s168 = smul.addr %s167, 54
      %s169 = smul.addr %s168, 4
      %s170 = scalar_lea.vmem %s0, %s169
      %p171 = scmp.lt.s32.totalorder %s17, 0
      %s172 = scalar_select %p171, %s17, 0
      %s173 = smul.addr %s172, 8
      %s174 = smul.addr %s173, 4
      %s175 = scalar_lea.vmem %s1, %s174
      %p176 = scmp.lt.s32.totalorder %s18, 1
      %s177 = scalar_select %p176, %s18, 1
      %p178 = scmp.lt.s32.totalorder %s17, 0
      %s179 = scalar_select %p178, %s17, 0
      %s180 = smul.addr %s177, 128
      %s181 = sadd.s32 %s179, %s180
      %s182 = smul.addr %s181, 8
      %s183 = scalar_lea.vmem %s2, %s182
      %v185 = vld [vmem:[%s170] sm:$0xf]
      %v186 = vld [vmem:[%s170 + $0x4] sm:$0xf]
      %v187 = vld [vmem:[%s170 + $0xc] sm:$0xf]
      %v188 = vld [vmem:[%s170 + $0x10] sm:$0xf]
      %v189 = vld [vmem:[%s170 + $0x18] sm:$0xf]
      %v190 = vld [vmem:[%s170 + $0x1c] sm:$0xf]
      %v191 = vld [vmem:[%s170 + $0x24] sm:$0xf]
      %v192 = vld [vmem:[%s170 + $0x28] sm:$0xf]
      %v193 = vld [vmem:[%s170 + $0x30] sm:$0xf]
      %v194 = vld [vmem:[%s170 + $0x34] sm:$0xf]
      %v195 = vld [vmem:[%s170 + $0x3c] sm:$0xf]
      %v196 = vld [vmem:[%s170 + $0x40] sm:$0xf]
      %v197 = vld [vmem:[%s170 + $0x48] sm:$0xf]
      %v198 = vld [vmem:[%s170 + $0x4c] sm:$0xf]
      %v199 = vld [vmem:[%s170 + $0x54] sm:$0xf]
      %v200 = vld [vmem:[%s170 + $0x58] sm:$0xf]
      %v201 = vld [vmem:[%s170 + $0x60] sm:$0xf]
      %v202 = vld [vmem:[%s170 + $0x64] sm:$0xf]
      %v203 = vld [vmem:[%s170 + $0x6c] sm:$0xf]
      %v204 = vld [vmem:[%s170 + $0x70] sm:$0xf]
      %v205 = vld [vmem:[%s170 + $0x78] sm:$0xf]
      %v206 = vld [vmem:[%s170 + $0x7c] sm:$0xf]
      %v207 = vld [vmem:[%s170 + $0x84] sm:$0xf]
      %v208 = vld [vmem:[%s170 + $0x88] sm:$0xf]
      %v209 = vld [vmem:[%s170 + $0x90] sm:$0xf]
      %v210 = vld [vmem:[%s170 + $0x94] sm:$0xf]
      %v211 = vld [vmem:[%s170 + $0x9c] sm:$0xf]
      %v212 = vld [vmem:[%s170 + $0xa0] sm:$0xf]
      %v213 = vld [vmem:[%s170 + $0xa8] sm:$0xf]
      %v214 = vld [vmem:[%s170 + $0xac] sm:$0xf]
      %v215 = vld [vmem:[%s170 + $0xb4] sm:$0xf]
      %v216 = vld [vmem:[%s170 + $0xb8] sm:$0xf]
      %v217 = vld [vmem:[%s170 + $0x8] sm:$0x1]
      %v218 = vld [vmem:[%s170 + $0x14] sm:$0x1]
      %v219 = vld [vmem:[%s170 + $0x20] sm:$0x1]
      %v220 = vld [vmem:[%s170 + $0x2c] sm:$0x1]
      %v221 = vld [vmem:[%s170 + $0x38] sm:$0x1]
      %v222 = vld [vmem:[%s170 + $0x44] sm:$0x1]
      %v223 = vld [vmem:[%s170 + $0x50] sm:$0x1]
      %v224 = vld [vmem:[%s170 + $0x5c] sm:$0x1]
      %v225 = vld [vmem:[%s170 + $0x68] sm:$0x1]
      %v226 = vld [vmem:[%s170 + $0x74] sm:$0x1]
      %v227 = vld [vmem:[%s170 + $0x80] sm:$0x1]
      %v228 = vld [vmem:[%s170 + $0x8c] sm:$0x1]
      %v229 = vld [vmem:[%s170 + $0x98] sm:$0x1]
      %v230 = vld [vmem:[%s170 + $0xa4] sm:$0x1]
      %v231 = vld [vmem:[%s170 + $0xb0] sm:$0x1]
      %v232 = vld [vmem:[%s170 + $0xbc] sm:$0x1]
      %v233 = vld [vmem:[%s170] sm:$0xe]
      %v234 = vld [vmem:[%s170 + $0xc] sm:$0xe]
      %v235 = vld [vmem:[%s170 + $0x18] sm:$0xe]
      %v236 = vld [vmem:[%s170 + $0x24] sm:$0xe]
      %v237 = vld [vmem:[%s170 + $0x30] sm:$0xe]
      %v238 = vld [vmem:[%s170 + $0x3c] sm:$0xe]
      %v239 = vld [vmem:[%s170 + $0x48] sm:$0xe]
      %v240 = vld [vmem:[%s170 + $0x54] sm:$0xe]
      %v241 = vld [vmem:[%s170 + $0x60] sm:$0xe]
      %v242 = vld [vmem:[%s170 + $0x6c] sm:$0xe]
      %v243 = vld [vmem:[%s170 + $0x78] sm:$0xe]
      %v244 = vld [vmem:[%s170 + $0x84] sm:$0xe]
      %v245 = vld [vmem:[%s170 + $0x90] sm:$0xe]
      %v246 = vld [vmem:[%s170 + $0x9c] sm:$0xe]
      %v247 = vld [vmem:[%s170 + $0xa8] sm:$0xe]
      %v248 = vld [vmem:[%s170 + $0xb4] sm:$0xe]
      %v281 = vunpack.c.l.b16 %v185
      %v282 = vunpack.c.l.b16 %v186
      %v283 = vunpack.c.l.b16 %v187
      %v284 = vunpack.c.l.b16 %v188
      %v285 = vunpack.c.l.b16 %v189
      %v286 = vunpack.c.l.b16 %v190
      %v287 = vunpack.c.l.b16 %v191
      %v288 = vunpack.c.l.b16 %v192
      %v289 = vunpack.c.l.b16 %v193
      %v290 = vunpack.c.l.b16 %v194
      %v291 = vunpack.c.l.b16 %v195
      %v292 = vunpack.c.l.b16 %v196
      %v293 = vunpack.c.l.b16 %v197
      %v294 = vunpack.c.l.b16 %v198
      %v295 = vunpack.c.l.b16 %v199
      %v296 = vunpack.c.l.b16 %v200
      %v297 = vunpack.c.l.b16 %v201
      %v298 = vunpack.c.l.b16 %v202
      %v299 = vunpack.c.l.b16 %v203
      %v300 = vunpack.c.l.b16 %v204
      %v301 = vunpack.c.l.b16 %v205
      %v302 = vunpack.c.l.b16 %v206
      %v303 = vunpack.c.l.b16 %v207
      %v304 = vunpack.c.l.b16 %v208
      %v305 = vunpack.c.l.b16 %v209
      %v306 = vunpack.c.l.b16 %v210
      %v307 = vunpack.c.l.b16 %v211
      %v308 = vunpack.c.l.b16 %v212
      %v309 = vunpack.c.l.b16 %v213
      %v310 = vunpack.c.l.b16 %v214
      %v311 = vunpack.c.l.b16 %v215
      %v312 = vunpack.c.l.b16 %v216
      %v313 = vpack.c.b16 %v282, %v281
      %v314 = vpack.c.b16 %v284, %v283
      %v315 = vpack.c.b16 %v286, %v285
      %v316 = vpack.c.b16 %v288, %v287
      %v317 = vpack.c.b16 %v290, %v289
      %v318 = vpack.c.b16 %v292, %v291
      %v319 = vpack.c.b16 %v294, %v293
      %v320 = vpack.c.b16 %v296, %v295
      %v321 = vpack.c.b16 %v298, %v297
      %v322 = vpack.c.b16 %v300, %v299
      %v323 = vpack.c.b16 %v302, %v301
      %v324 = vpack.c.b16 %v304, %v303
      %v325 = vpack.c.b16 %v306, %v305
      %v326 = vpack.c.b16 %v308, %v307
      %v327 = vpack.c.b16 %v310, %v309
      %v328 = vpack.c.b16 %v312, %v311
      %v345 = vunpack.c.l.b16 %v217
      %v346 = vunpack.c.l.b16 %v218
      %v347 = vunpack.c.l.b16 %v219
      %v348 = vunpack.c.l.b16 %v220
      %v349 = vunpack.c.l.b16 %v221
      %v350 = vunpack.c.l.b16 %v222
      %v351 = vunpack.c.l.b16 %v223
      %v352 = vunpack.c.l.b16 %v224
      %v353 = vunpack.c.l.b16 %v225
      %v354 = vunpack.c.l.b16 %v226
      %v355 = vunpack.c.l.b16 %v227
      %v356 = vunpack.c.l.b16 %v228
      %v357 = vunpack.c.l.b16 %v229
      %v358 = vunpack.c.l.b16 %v230
      %v359 = vunpack.c.l.b16 %v231
      %v360 = vunpack.c.l.b16 %v232
      %v361 = vpack.c.b16 %v345, %v345
      %v362 = vpack.c.b16 %v346, %v346
      %v363 = vpack.c.b16 %v347, %v347
      %v364 = vpack.c.b16 %v348, %v348
      %v365 = vpack.c.b16 %v349, %v349
      %v366 = vpack.c.b16 %v350, %v350
      %v367 = vpack.c.b16 %v351, %v351
      %v368 = vpack.c.b16 %v352, %v352
      %v369 = vpack.c.b16 %v353, %v353
      %v370 = vpack.c.b16 %v354, %v354
      %v371 = vpack.c.b16 %v355, %v355
      %v372 = vpack.c.b16 %v356, %v356
      %v373 = vpack.c.b16 %v357, %v357
      %v374 = vpack.c.b16 %v358, %v358
      %v375 = vpack.c.b16 %v359, %v359
      %v376 = vpack.c.b16 %v360, %v360
      %vm377 = vsmask.f32 7424
      %v379 = vshrl.u32 %v313, 16
      %v381 = vshll.u32 %v313, 16
      %v383 = vrot.slane %v381, 1
      %v384 = vor.u32 %v379, %v383
      %v386 = vshll.u32 %v361, 16
      %v388 = vrot.slane %v386, 1
      %v389 = vsel %vm377, %v384, %v388
      %v391 = vshrl.u32 %v314, 16
      %v393 = vshll.u32 %v314, 16
      %v395 = vrot.slane %v393, 1
      %v396 = vor.u32 %v391, %v395
      %v398 = vshll.u32 %v362, 16
      %v400 = vrot.slane %v398, 1
      %v401 = vsel %vm377, %v396, %v400
      %v403 = vshrl.u32 %v315, 16
      %v405 = vshll.u32 %v315, 16
      %v407 = vrot.slane %v405, 1
      %v408 = vor.u32 %v403, %v407
      %v410 = vshll.u32 %v363, 16
      %v412 = vrot.slane %v410, 1
      %v413 = vsel %vm377, %v408, %v412
      %v415 = vshrl.u32 %v316, 16
      %v417 = vshll.u32 %v316, 16
      %v419 = vrot.slane %v417, 1
      %v420 = vor.u32 %v415, %v419
      %v422 = vshll.u32 %v364, 16
      %v424 = vrot.slane %v422, 1
      %v425 = vsel %vm377, %v420, %v424
      %v427 = vshrl.u32 %v317, 16
      %v429 = vshll.u32 %v317, 16
      %v431 = vrot.slane %v429, 1
      %v432 = vor.u32 %v427, %v431
      %v434 = vshll.u32 %v365, 16
      %v436 = vrot.slane %v434, 1
      %v437 = vsel %vm377, %v432, %v436
      %v439 = vshrl.u32 %v318, 16
      %v441 = vshll.u32 %v318, 16
      %v443 = vrot.slane %v441, 1
      %v444 = vor.u32 %v439, %v443
      %v446 = vshll.u32 %v366, 16
      %v448 = vrot.slane %v446, 1
      %v449 = vsel %vm377, %v444, %v448
      %v451 = vshrl.u32 %v319, 16
      %v453 = vshll.u32 %v319, 16
      %v455 = vrot.slane %v453, 1
      %v456 = vor.u32 %v451, %v455
      %v458 = vshll.u32 %v367, 16
      %v460 = vrot.slane %v458, 1
      %v461 = vsel %vm377, %v456, %v460
      %v463 = vshrl.u32 %v320, 16
      %v465 = vshll.u32 %v320, 16
      %v467 = vrot.slane %v465, 1
      %v468 = vor.u32 %v463, %v467
      %v470 = vshll.u32 %v368, 16
      %v472 = vrot.slane %v470, 1
      %v473 = vsel %vm377, %v468, %v472
      %v475 = vshrl.u32 %v321, 16
      %v477 = vshll.u32 %v321, 16
      %v479 = vrot.slane %v477, 1
      %v480 = vor.u32 %v475, %v479
      %v482 = vshll.u32 %v369, 16
      %v484 = vrot.slane %v482, 1
      %v485 = vsel %vm377, %v480, %v484
      %v487 = vshrl.u32 %v322, 16
      %v489 = vshll.u32 %v322, 16
      %v491 = vrot.slane %v489, 1
      %v492 = vor.u32 %v487, %v491
      %v494 = vshll.u32 %v370, 16
      %v496 = vrot.slane %v494, 1
      %v497 = vsel %vm377, %v492, %v496
      %v499 = vshrl.u32 %v323, 16
      %v501 = vshll.u32 %v323, 16
      %v503 = vrot.slane %v501, 1
      %v504 = vor.u32 %v499, %v503
      %v506 = vshll.u32 %v371, 16
      %v508 = vrot.slane %v506, 1
      %v509 = vsel %vm377, %v504, %v508
      %v511 = vshrl.u32 %v324, 16
      %v513 = vshll.u32 %v324, 16
      %v515 = vrot.slane %v513, 1
      %v516 = vor.u32 %v511, %v515
      %v518 = vshll.u32 %v372, 16
      %v520 = vrot.slane %v518, 1
      %v521 = vsel %vm377, %v516, %v520
      %v523 = vshrl.u32 %v325, 16
      %v525 = vshll.u32 %v325, 16
      %v527 = vrot.slane %v525, 1
      %v528 = vor.u32 %v523, %v527
      %v530 = vshll.u32 %v373, 16
      %v532 = vrot.slane %v530, 1
      %v533 = vsel %vm377, %v528, %v532
      %v535 = vshrl.u32 %v326, 16
      %v537 = vshll.u32 %v326, 16
      %v539 = vrot.slane %v537, 1
      %v540 = vor.u32 %v535, %v539
      %v542 = vshll.u32 %v374, 16
      %v544 = vrot.slane %v542, 1
      %v545 = vsel %vm377, %v540, %v544
      %v547 = vshrl.u32 %v327, 16
      %v549 = vshll.u32 %v327, 16
      %v551 = vrot.slane %v549, 1
      %v552 = vor.u32 %v547, %v551
      %v554 = vshll.u32 %v375, 16
      %v556 = vrot.slane %v554, 1
      %v557 = vsel %vm377, %v552, %v556
      %v559 = vshrl.u32 %v328, 16
      %v561 = vshll.u32 %v328, 16
      %v563 = vrot.slane %v561, 1
      %v564 = vor.u32 %v559, %v563
      %v566 = vshll.u32 %v376, 16
      %v568 = vrot.slane %v566, 1
      %v569 = vsel %vm377, %v564, %v568
      %570 = vrot.lane.b32.xlu0 %v389, 4
      %v571 = vpop.permute.xlu0 %570
      %572 = vrot.lane.b32.xlu0 %v401, 4
      %v573 = vpop.permute.xlu0 %572
      %574 = vrot.lane.b32.xlu0 %v413, 4
      %v575 = vpop.permute.xlu0 %574
      %576 = vrot.lane.b32.xlu0 %v425, 4
      %v577 = vpop.permute.xlu0 %576
      %578 = vrot.lane.b32.xlu0 %v437, 4
      %v579 = vpop.permute.xlu0 %578
      %580 = vrot.lane.b32.xlu0 %v449, 4
      %v581 = vpop.permute.xlu0 %580
      %582 = vrot.lane.b32.xlu0 %v461, 4
      %v583 = vpop.permute.xlu0 %582
      %584 = vrot.lane.b32.xlu0 %v473, 4
      %v585 = vpop.permute.xlu0 %584
      %586 = vrot.lane.b32.xlu0 %v485, 4
      %v587 = vpop.permute.xlu0 %586
      %588 = vrot.lane.b32.xlu0 %v497, 4
      %v589 = vpop.permute.xlu0 %588
      %590 = vrot.lane.b32.xlu0 %v509, 4
      %v591 = vpop.permute.xlu0 %590
      %592 = vrot.lane.b32.xlu0 %v521, 4
      %v593 = vpop.permute.xlu0 %592
      %594 = vrot.lane.b32.xlu0 %v533, 4
      %v595 = vpop.permute.xlu0 %594
      %596 = vrot.lane.b32.xlu0 %v545, 4
      %v597 = vpop.permute.xlu0 %596
      %598 = vrot.lane.b32.xlu0 %v557, 4
      %v599 = vpop.permute.xlu0 %598
      %600 = vrot.lane.b32.xlu0 %v569, 4
      %v601 = vpop.permute.xlu0 %600
      %v618 = vunpack.c.l.b16 %v233
      %v619 = vunpack.c.l.b16 %v234
      %v620 = vunpack.c.l.b16 %v235
      %v621 = vunpack.c.l.b16 %v236
      %v622 = vunpack.c.l.b16 %v237
      %v623 = vunpack.c.l.b16 %v238
      %v624 = vunpack.c.l.b16 %v239
      %v625 = vunpack.c.l.b16 %v240
      %v626 = vunpack.c.l.b16 %v241
      %v627 = vunpack.c.l.b16 %v242
      %v628 = vunpack.c.l.b16 %v243
      %v629 = vunpack.c.l.b16 %v244
      %v630 = vunpack.c.l.b16 %v245
      %v631 = vunpack.c.l.b16 %v246
      %v632 = vunpack.c.l.b16 %v247
      %v633 = vunpack.c.l.b16 %v248
      %v634 = vpack.c.b16 %v282, %v618
      %v635 = vpack.c.b16 %v284, %v619
      %v636 = vpack.c.b16 %v286, %v620
      %v637 = vpack.c.b16 %v288, %v621
      %v638 = vpack.c.b16 %v290, %v622
      %v639 = vpack.c.b16 %v292, %v623
      %v640 = vpack.c.b16 %v294, %v624
      %v641 = vpack.c.b16 %v296, %v625
      %v642 = vpack.c.b16 %v298, %v626
      %v643 = vpack.c.b16 %v300, %v627
      %v644 = vpack.c.b16 %v302, %v628
      %v645 = vpack.c.b16 %v304, %v629
      %v646 = vpack.c.b16 %v306, %v630
      %v647 = vpack.c.b16 %v308, %v631
      %v648 = vpack.c.b16 %v310, %v632
      %v649 = vpack.c.b16 %v312, %v633
      %vm650 = vcmask 1046528
      %v651 = vrot.slane %v634, 1
      %v652 = vrot.slane %v361, 1
      %v653 = vsel %vm650, %v651, %v652
      %v654 = vrot.slane %v635, 1
      %v655 = vrot.slane %v362, 1
      %v656 = vsel %vm650, %v654, %v655
      %v657 = vrot.slane %v636, 1
      %v658 = vrot.slane %v363, 1
      %v659 = vsel %vm650, %v657, %v658
      %v660 = vrot.slane %v637, 1
      %v661 = vrot.slane %v364, 1
      %v662 = vsel %vm650, %v660, %v661
      %v663 = vrot.slane %v638, 1
      %v664 = vrot.slane %v365, 1
      %v665 = vsel %vm650, %v663, %v664
      %v666 = vrot.slane %v639, 1
      %v667 = vrot.slane %v366, 1
      %v668 = vsel %vm650, %v666, %v667
      %v669 = vrot.slane %v640, 1
      %v670 = vrot.slane %v367, 1
      %v671 = vsel %vm650, %v669, %v670
      %v672 = vrot.slane %v641, 1
      %v673 = vrot.slane %v368, 1
      %v674 = vsel %vm650, %v672, %v673
      %v675 = vrot.slane %v642, 1
      %v676 = vrot.slane %v369, 1
      %v677 = vsel %vm650, %v675, %v676
      %v678 = vrot.slane %v643, 1
      %v679 = vrot.slane %v370, 1
      %v680 = vsel %vm650, %v678, %v679
      %v681 = vrot.slane %v644, 1
      %v682 = vrot.slane %v371, 1
      %v683 = vsel %vm650, %v681, %v682
      %v684 = vrot.slane %v645, 1
      %v685 = vrot.slane %v372, 1
      %v686 = vsel %vm650, %v684, %v685
      %v687 = vrot.slane %v646, 1
      %v688 = vrot.slane %v373, 1
      %v689 = vsel %vm650, %v687, %v688
      %v690 = vrot.slane %v647, 1
      %v691 = vrot.slane %v374, 1
      %v692 = vsel %vm650, %v690, %v691
      %v693 = vrot.slane %v648, 1
      %v694 = vrot.slane %v375, 1
      %v695 = vsel %vm650, %v693, %v694
      %v696 = vrot.slane %v649, 1
      %v697 = vrot.slane %v376, 1
      %v698 = vsel %vm650, %v696, %v697
      %699 = vrot.lane.b32.xlu0 %v653, 8
      %v700 = vpop.permute.xlu0 %699
      %701 = vrot.lane.b32.xlu0 %v656, 8
      %v702 = vpop.permute.xlu0 %701
      %703 = vrot.lane.b32.xlu0 %v659, 8
      %v704 = vpop.permute.xlu0 %703
      %705 = vrot.lane.b32.xlu0 %v662, 8
      %v706 = vpop.permute.xlu0 %705
      %707 = vrot.lane.b32.xlu0 %v665, 8
      %v708 = vpop.permute.xlu0 %707
      %709 = vrot.lane.b32.xlu0 %v668, 8
      %v710 = vpop.permute.xlu0 %709
      %711 = vrot.lane.b32.xlu0 %v671, 8
      %v712 = vpop.permute.xlu0 %711
      %713 = vrot.lane.b32.xlu0 %v674, 8
      %v714 = vpop.permute.xlu0 %713
      %715 = vrot.lane.b32.xlu0 %v677, 8
      %v716 = vpop.permute.xlu0 %715
      %717 = vrot.lane.b32.xlu0 %v680, 8
      %v718 = vpop.permute.xlu0 %717
      %719 = vrot.lane.b32.xlu0 %v683, 8
      %v720 = vpop.permute.xlu0 %719
      %721 = vrot.lane.b32.xlu0 %v686, 8
      %v722 = vpop.permute.xlu0 %721
      %723 = vrot.lane.b32.xlu0 %v689, 8
      %v724 = vpop.permute.xlu0 %723
      %725 = vrot.lane.b32.xlu0 %v692, 8
      %v726 = vpop.permute.xlu0 %725
      %727 = vrot.lane.b32.xlu0 %v695, 8
      %v728 = vpop.permute.xlu0 %727
      %729 = vrot.lane.b32.xlu0 %v698, 8
      %v730 = vpop.permute.xlu0 %729
      %vm731 = vcmask 31744
      %v733 = vsel %vm731, %v313, %v571
      %v735 = vsel %vm731, %v314, %v573
      %v737 = vsel %vm731, %v315, %v575
      %v739 = vsel %vm731, %v316, %v577
      %v741 = vsel %vm731, %v317, %v579
      %v743 = vsel %vm731, %v318, %v581
      %v745 = vsel %vm731, %v319, %v583
      %v747 = vsel %vm731, %v320, %v585
      %v749 = vsel %vm731, %v321, %v587
      %v751 = vsel %vm731, %v322, %v589
      %v753 = vsel %vm731, %v323, %v591
      %v755 = vsel %vm731, %v324, %v593
      %v757 = vsel %vm731, %v325, %v595
      %v759 = vsel %vm731, %v326, %v597
      %v761 = vsel %vm731, %v327, %v599
      %v763 = vsel %vm731, %v328, %v601
      %vm764 = vcmask 64512
      %v766 = vsel %vm764, %v733, %v700
      %v768 = vsel %vm764, %v735, %v702
      %v770 = vsel %vm764, %v737, %v704
      %v772 = vsel %vm764, %v739, %v706
      %v774 = vsel %vm764, %v741, %v708
      %v776 = vsel %vm764, %v743, %v710
      %v778 = vsel %vm764, %v745, %v712
      %v780 = vsel %vm764, %v747, %v714
      %v782 = vsel %vm764, %v749, %v716
      %v784 = vsel %vm764, %v751, %v718
      %v786 = vsel %vm764, %v753, %v720
      %v788 = vsel %vm764, %v755, %v722
      %v790 = vsel %vm764, %v757, %v724
      %v792 = vsel %vm764, %v759, %v726
      %v794 = vsel %vm764, %v761, %v728
      %v796 = vsel %vm764, %v763, %v730
      %v797 = vld [vmem:[%s175] sm:$0xf]
      %v798 = vld [vmem:[%s175 + $0x4] sm:$0x3]
      %s799 = scalar_lea.vmem %s170, 12
      %v800 = vld [vmem:[%s799] sm:$0xf]
      %v801 = vld [vmem:[%s799 + $0x4] sm:$0xf]
      %v802 = vld [vmem:[%s799 + $0xc] sm:$0xf]
      %v803 = vld [vmem:[%s799 + $0x10] sm:$0xf]
      %v804 = vld [vmem:[%s799 + $0x18] sm:$0xf]
      %v805 = vld [vmem:[%s799 + $0x1c] sm:$0xf]
      %v806 = vld [vmem:[%s799 + $0x24] sm:$0xf]
      %v807 = vld [vmem:[%s799 + $0x28] sm:$0xf]
      %v808 = vld [vmem:[%s799 + $0x30] sm:$0xf]
      %v809 = vld [vmem:[%s799 + $0x34] sm:$0xf]
      %v810 = vld [vmem:[%s799 + $0x3c] sm:$0xf]
      %v811 = vld [vmem:[%s799 + $0x40] sm:$0xf]
      %v812 = vld [vmem:[%s799 + $0x48] sm:$0xf]
      %v813 = vld [vmem:[%s799 + $0x4c] sm:$0xf]
      %v814 = vld [vmem:[%s799 + $0x54] sm:$0xf]
      %v815 = vld [vmem:[%s799 + $0x58] sm:$0xf]
      %v816 = vld [vmem:[%s799 + $0x60] sm:$0xf]
      %v817 = vld [vmem:[%s799 + $0x64] sm:$0xf]
      %v818 = vld [vmem:[%s799 + $0x6c] sm:$0xf]
      %v819 = vld [vmem:[%s799 + $0x70] sm:$0xf]
      %v820 = vld [vmem:[%s799 + $0x78] sm:$0xf]
      %v821 = vld [vmem:[%s799 + $0x7c] sm:$0xf]
      %v822 = vld [vmem:[%s799 + $0x84] sm:$0xf]
      %v823 = vld [vmem:[%s799 + $0x88] sm:$0xf]
      %v824 = vld [vmem:[%s799 + $0x90] sm:$0xf]
      %v825 = vld [vmem:[%s799 + $0x94] sm:$0xf]
      %v826 = vld [vmem:[%s799 + $0x9c] sm:$0xf]
      %v827 = vld [vmem:[%s799 + $0xa0] sm:$0xf]
      %v828 = vld [vmem:[%s799 + $0xa8] sm:$0xf]
      %v829 = vld [vmem:[%s799 + $0xac] sm:$0xf]
      %v830 = vld [vmem:[%s799 + $0xb4] sm:$0xf]
      %v831 = vld [vmem:[%s799 + $0xb8] sm:$0xf]
      %v832 = vld [vmem:[%s799 + $0x8] sm:$0x1]
      %v833 = vld [vmem:[%s799 + $0x14] sm:$0x1]
      %v834 = vld [vmem:[%s799 + $0x20] sm:$0x1]
      %v835 = vld [vmem:[%s799 + $0x2c] sm:$0x1]
      %v836 = vld [vmem:[%s799 + $0x38] sm:$0x1]
      %v837 = vld [vmem:[%s799 + $0x44] sm:$0x1]
      %v838 = vld [vmem:[%s799 + $0x50] sm:$0x1]
      %v839 = vld [vmem:[%s799 + $0x5c] sm:$0x1]
      %v840 = vld [vmem:[%s799 + $0x68] sm:$0x1]
      %v841 = vld [vmem:[%s799 + $0x74] sm:$0x1]
      %v842 = vld [vmem:[%s799 + $0x80] sm:$0x1]
      %v843 = vld [vmem:[%s799 + $0x8c] sm:$0x1]
      %v844 = vld [vmem:[%s799 + $0x98] sm:$0x1]
      %v845 = vld [vmem:[%s799 + $0xa4] sm:$0x1]
      %v846 = vld [vmem:[%s799 + $0xb0] sm:$0x1]
      %v847 = vld [vmem:[%s799 + $0xbc] sm:$0x1]
      %v848 = vld [vmem:[%s799] sm:$0xe]
      %v849 = vld [vmem:[%s799 + $0xc] sm:$0xe]
      %v850 = vld [vmem:[%s799 + $0x18] sm:$0xe]
      %v851 = vld [vmem:[%s799 + $0x24] sm:$0xe]
      %v852 = vld [vmem:[%s799 + $0x30] sm:$0xe]
      %v853 = vld [vmem:[%s799 + $0x3c] sm:$0xe]
      %v854 = vld [vmem:[%s799 + $0x48] sm:$0xe]
      %v855 = vld [vmem:[%s799 + $0x54] sm:$0xe]
      %v856 = vld [vmem:[%s799 + $0x60] sm:$0xe]
      %v857 = vld [vmem:[%s799 + $0x6c] sm:$0xe]
      %v858 = vld [vmem:[%s799 + $0x78] sm:$0xe]
      %v859 = vld [vmem:[%s799 + $0x84] sm:$0xe]
      %v860 = vld [vmem:[%s799 + $0x90] sm:$0xe]
      %v861 = vld [vmem:[%s799 + $0x9c] sm:$0xe]
      %v862 = vld [vmem:[%s799 + $0xa8] sm:$0xe]
      %v863 = vld [vmem:[%s799 + $0xb4] sm:$0xe]
      %v896 = vunpack.c.l.b16 %v800
      %v897 = vunpack.c.l.b16 %v801
      %v898 = vunpack.c.l.b16 %v802
      %v899 = vunpack.c.l.b16 %v803
      %v900 = vunpack.c.l.b16 %v804
      %v901 = vunpack.c.l.b16 %v805
      %v902 = vunpack.c.l.b16 %v806
      %v903 = vunpack.c.l.b16 %v807
      %v904 = vunpack.c.l.b16 %v808
      %v905 = vunpack.c.l.b16 %v809
      %v906 = vunpack.c.l.b16 %v810
      %v907 = vunpack.c.l.b16 %v811
      %v908 = vunpack.c.l.b16 %v812
      %v909 = vunpack.c.l.b16 %v813
      %v910 = vunpack.c.l.b16 %v814
      %v911 = vunpack.c.l.b16 %v815
      %v912 = vunpack.c.l.b16 %v816
      %v913 = vunpack.c.l.b16 %v817
      %v914 = vunpack.c.l.b16 %v818
      %v915 = vunpack.c.l.b16 %v819
      %v916 = vunpack.c.l.b16 %v820
      %v917 = vunpack.c.l.b16 %v821
      %v918 = vunpack.c.l.b16 %v822
      %v919 = vunpack.c.l.b16 %v823
      %v920 = vunpack.c.l.b16 %v824
      %v921 = vunpack.c.l.b16 %v825
      %v922 = vunpack.c.l.b16 %v826
      %v923 = vunpack.c.l.b16 %v827
      %v924 = vunpack.c.l.b16 %v828
      %v925 = vunpack.c.l.b16 %v829
      %v926 = vunpack.c.l.b16 %v830
      %v927 = vunpack.c.l.b16 %v831
      %v928 = vpack.c.b16 %v897, %v896
      %v929 = vpack.c.b16 %v899, %v898
      %v930 = vpack.c.b16 %v901, %v900
      %v931 = vpack.c.b16 %v903, %v902
      %v932 = vpack.c.b16 %v905, %v904
      %v933 = vpack.c.b16 %v907, %v906
      %v934 = vpack.c.b16 %v909, %v908
      %v935 = vpack.c.b16 %v911, %v910
      %v936 = vpack.c.b16 %v913, %v912
      %v937 = vpack.c.b16 %v915, %v914
      %v938 = vpack.c.b16 %v917, %v916
      %v939 = vpack.c.b16 %v919, %v918
      %v940 = vpack.c.b16 %v921, %v920
      %v941 = vpack.c.b16 %v923, %v922
      %v942 = vpack.c.b16 %v925, %v924
      %v943 = vpack.c.b16 %v927, %v926
      %v960 = vunpack.c.l.b16 %v832
      %v961 = vunpack.c.l.b16 %v833
      %v962 = vunpack.c.l.b16 %v834
      %v963 = vunpack.c.l.b16 %v835
      %v964 = vunpack.c.l.b16 %v836
      %v965 = vunpack.c.l.b16 %v837
      %v966 = vunpack.c.l.b16 %v838
      %v967 = vunpack.c.l.b16 %v839
      %v968 = vunpack.c.l.b16 %v840
      %v969 = vunpack.c.l.b16 %v841
      %v970 = vunpack.c.l.b16 %v842
      %v971 = vunpack.c.l.b16 %v843
      %v972 = vunpack.c.l.b16 %v844
      %v973 = vunpack.c.l.b16 %v845
      %v974 = vunpack.c.l.b16 %v846
      %v975 = vunpack.c.l.b16 %v847
      %v976 = vpack.c.b16 %v960, %v960
      %v977 = vpack.c.b16 %v961, %v961
      %v978 = vpack.c.b16 %v962, %v962
      %v979 = vpack.c.b16 %v963, %v963
      %v980 = vpack.c.b16 %v964, %v964
      %v981 = vpack.c.b16 %v965, %v965
      %v982 = vpack.c.b16 %v966, %v966
      %v983 = vpack.c.b16 %v967, %v967
      %v984 = vpack.c.b16 %v968, %v968
      %v985 = vpack.c.b16 %v969, %v969
      %v986 = vpack.c.b16 %v970, %v970
      %v987 = vpack.c.b16 %v971, %v971
      %v988 = vpack.c.b16 %v972, %v972
      %v989 = vpack.c.b16 %v973, %v973
      %v990 = vpack.c.b16 %v974, %v974
      %v991 = vpack.c.b16 %v975, %v975
      %v993 = vshrl.u32 %v928, 16
      %v995 = vshll.u32 %v928, 16
      %v997 = vrot.slane %v995, 1
      %v998 = vor.u32 %v993, %v997
      %v1000 = vshll.u32 %v976, 16
      %v1002 = vrot.slane %v1000, 1
      %v1003 = vsel %vm377, %v998, %v1002
      %v1005 = vshrl.u32 %v929, 16
      %v1007 = vshll.u32 %v929, 16
      %v1009 = vrot.slane %v1007, 1
      %v1010 = vor.u32 %v1005, %v1009
      %v1012 = vshll.u32 %v977, 16
      %v1014 = vrot.slane %v1012, 1
      %v1015 = vsel %vm377, %v1010, %v1014
      %v1017 = vshrl.u32 %v930, 16
      %v1019 = vshll.u32 %v930, 16
      %v1021 = vrot.slane %v1019, 1
      %v1022 = vor.u32 %v1017, %v1021
      %v1024 = vshll.u32 %v978, 16
      %v1026 = vrot.slane %v1024, 1
      %v1027 = vsel %vm377, %v1022, %v1026
      %v1029 = vshrl.u32 %v931, 16
      %v1031 = vshll.u32 %v931, 16
      %v1033 = vrot.slane %v1031, 1
      %v1034 = vor.u32 %v1029, %v1033
      %v1036 = vshll.u32 %v979, 16
      %v1038 = vrot.slane %v1036, 1
      %v1039 = vsel %vm377, %v1034, %v1038
      %v1041 = vshrl.u32 %v932, 16
      %v1043 = vshll.u32 %v932, 16
      %v1045 = vrot.slane %v1043, 1
      %v1046 = vor.u32 %v1041, %v1045
      %v1048 = vshll.u32 %v980, 16
      %v1050 = vrot.slane %v1048, 1
      %v1051 = vsel %vm377, %v1046, %v1050
      %v1053 = vshrl.u32 %v933, 16
      %v1055 = vshll.u32 %v933, 16
      %v1057 = vrot.slane %v1055, 1
      %v1058 = vor.u32 %v1053, %v1057
      %v1060 = vshll.u32 %v981, 16
      %v1062 = vrot.slane %v1060, 1
      %v1063 = vsel %vm377, %v1058, %v1062
      %v1065 = vshrl.u32 %v934, 16
      %v1067 = vshll.u32 %v934, 16
      %v1069 = vrot.slane %v1067, 1
      %v1070 = vor.u32 %v1065, %v1069
      %v1072 = vshll.u32 %v982, 16
      %v1074 = vrot.slane %v1072, 1
      %v1075 = vsel %vm377, %v1070, %v1074
      %v1077 = vshrl.u32 %v935, 16
      %v1079 = vshll.u32 %v935, 16
      %v1081 = vrot.slane %v1079, 1
      %v1082 = vor.u32 %v1077, %v1081
      %v1084 = vshll.u32 %v983, 16
      %v1086 = vrot.slane %v1084, 1
      %v1087 = vsel %vm377, %v1082, %v1086
      %v1089 = vshrl.u32 %v936, 16
      %v1091 = vshll.u32 %v936, 16
      %v1093 = vrot.slane %v1091, 1
      %v1094 = vor.u32 %v1089, %v1093
      %v1096 = vshll.u32 %v984, 16
      %v1098 = vrot.slane %v1096, 1
      %v1099 = vsel %vm377, %v1094, %v1098
      %v1101 = vshrl.u32 %v937, 16
      %v1103 = vshll.u32 %v937, 16
      %v1105 = vrot.slane %v1103, 1
      %v1106 = vor.u32 %v1101, %v1105
      %v1108 = vshll.u32 %v985, 16
      %v1110 = vrot.slane %v1108, 1
      %v1111 = vsel %vm377, %v1106, %v1110
      %v1113 = vshrl.u32 %v938, 16
      %v1115 = vshll.u32 %v938, 16
      %v1117 = vrot.slane %v1115, 1
      %v1118 = vor.u32 %v1113, %v1117
      %v1120 = vshll.u32 %v986, 16
      %v1122 = vrot.slane %v1120, 1
      %v1123 = vsel %vm377, %v1118, %v1122
      %v1125 = vshrl.u32 %v939, 16
      %v1127 = vshll.u32 %v939, 16
      %v1129 = vrot.slane %v1127, 1
      %v1130 = vor.u32 %v1125, %v1129
      %v1132 = vshll.u32 %v987, 16
      %v1134 = vrot.slane %v1132, 1
      %v1135 = vsel %vm377, %v1130, %v1134
      %v1137 = vshrl.u32 %v940, 16
      %v1139 = vshll.u32 %v940, 16
      %v1141 = vrot.slane %v1139, 1
      %v1142 = vor.u32 %v1137, %v1141
      %v1144 = vshll.u32 %v988, 16
      %v1146 = vrot.slane %v1144, 1
      %v1147 = vsel %vm377, %v1142, %v1146
      %v1149 = vshrl.u32 %v941, 16
      %v1151 = vshll.u32 %v941, 16
      %v1153 = vrot.slane %v1151, 1
      %v1154 = vor.u32 %v1149, %v1153
      %v1156 = vshll.u32 %v989, 16
      %v1158 = vrot.slane %v1156, 1
      %v1159 = vsel %vm377, %v1154, %v1158
      %v1161 = vshrl.u32 %v942, 16
      %v1163 = vshll.u32 %v942, 16
      %v1165 = vrot.slane %v1163, 1
      %v1166 = vor.u32 %v1161, %v1165
      %v1168 = vshll.u32 %v990, 16
      %v1170 = vrot.slane %v1168, 1
      %v1171 = vsel %vm377, %v1166, %v1170
      %v1173 = vshrl.u32 %v943, 16
      %v1175 = vshll.u32 %v943, 16
      %v1177 = vrot.slane %v1175, 1
      %v1178 = vor.u32 %v1173, %v1177
      %v1180 = vshll.u32 %v991, 16
      %v1182 = vrot.slane %v1180, 1
      %v1183 = vsel %vm377, %v1178, %v1182
      %1184 = vrot.lane.b32.xlu0 %v1003, 4
      %v1185 = vpop.permute.xlu0 %1184
      %1186 = vrot.lane.b32.xlu0 %v1015, 4
      %v1187 = vpop.permute.xlu0 %1186
      %1188 = vrot.lane.b32.xlu0 %v1027, 4
      %v1189 = vpop.permute.xlu0 %1188
      %1190 = vrot.lane.b32.xlu0 %v1039, 4
      %v1191 = vpop.permute.xlu0 %1190
      %1192 = vrot.lane.b32.xlu0 %v1051, 4
      %v1193 = vpop.permute.xlu0 %1192
      %1194 = vrot.lane.b32.xlu0 %v1063, 4
      %v1195 = vpop.permute.xlu0 %1194
      %1196 = vrot.lane.b32.xlu0 %v1075, 4
      %v1197 = vpop.permute.xlu0 %1196
      %1198 = vrot.lane.b32.xlu0 %v1087, 4
      %v1199 = vpop.permute.xlu0 %1198
      %1200 = vrot.lane.b32.xlu0 %v1099, 4
      %v1201 = vpop.permute.xlu0 %1200
      %1202 = vrot.lane.b32.xlu0 %v1111, 4
      %v1203 = vpop.permute.xlu0 %1202
      %1204 = vrot.lane.b32.xlu0 %v1123, 4
      %v1205 = vpop.permute.xlu0 %1204
      %1206 = vrot.lane.b32.xlu0 %v1135, 4
      %v1207 = vpop.permute.xlu0 %1206
      %1208 = vrot.lane.b32.xlu0 %v1147, 4
      %v1209 = vpop.permute.xlu0 %1208
      %1210 = vrot.lane.b32.xlu0 %v1159, 4
      %v1211 = vpop.permute.xlu0 %1210
      %1212 = vrot.lane.b32.xlu0 %v1171, 4
      %v1213 = vpop.permute.xlu0 %1212
      %1214 = vrot.lane.b32.xlu0 %v1183, 4
      %v1215 = vpop.permute.xlu0 %1214
      %v1232 = vunpack.c.l.b16 %v848
      %v1233 = vunpack.c.l.b16 %v849
      %v1234 = vunpack.c.l.b16 %v850
      %v1235 = vunpack.c.l.b16 %v851
      %v1236 = vunpack.c.l.b16 %v852
      %v1237 = vunpack.c.l.b16 %v853
      %v1238 = vunpack.c.l.b16 %v854
      %v1239 = vunpack.c.l.b16 %v855
      %v1240 = vunpack.c.l.b16 %v856
      %v1241 = vunpack.c.l.b16 %v857
      %v1242 = vunpack.c.l.b16 %v858
      %v1243 = vunpack.c.l.b16 %v859
      %v1244 = vunpack.c.l.b16 %v860
      %v1245 = vunpack.c.l.b16 %v861
      %v1246 = vunpack.c.l.b16 %v862
      %v1247 = vunpack.c.l.b16 %v863
      %v1248 = vpack.c.b16 %v897, %v1232
      %v1249 = vpack.c.b16 %v899, %v1233
      %v1250 = vpack.c.b16 %v901, %v1234
      %v1251 = vpack.c.b16 %v903, %v1235
      %v1252 = vpack.c.b16 %v905, %v1236
      %v1253 = vpack.c.b16 %v907, %v1237
      %v1254 = vpack.c.b16 %v909, %v1238
      %v1255 = vpack.c.b16 %v911, %v1239
      %v1256 = vpack.c.b16 %v913, %v1240
      %v1257 = vpack.c.b16 %v915, %v1241
      %v1258 = vpack.c.b16 %v917, %v1242
      %v1259 = vpack.c.b16 %v919, %v1243
      %v1260 = vpack.c.b16 %v921, %v1244
      %v1261 = vpack.c.b16 %v923, %v1245
      %v1262 = vpack.c.b16 %v925, %v1246
      %v1263 = vpack.c.b16 %v927, %v1247
      %v1264 = vrot.slane %v1248, 1
      %v1265 = vrot.slane %v976, 1
      %v1266 = vsel %vm650, %v1264, %v1265
      %v1267 = vrot.slane %v1249, 1
      %v1268 = vrot.slane %v977, 1
      %v1269 = vsel %vm650, %v1267, %v1268
      %v1270 = vrot.slane %v1250, 1
      %v1271 = vrot.slane %v978, 1
      %v1272 = vsel %vm650, %v1270, %v1271
      %v1273 = vrot.slane %v1251, 1
      %v1274 = vrot.slane %v979, 1
      %v1275 = vsel %vm650, %v1273, %v1274
      %v1276 = vrot.slane %v1252, 1
      %v1277 = vrot.slane %v980, 1
      %v1278 = vsel %vm650, %v1276, %v1277
      %v1279 = vrot.slane %v1253, 1
      %v1280 = vrot.slane %v981, 1
      %v1281 = vsel %vm650, %v1279, %v1280
      %v1282 = vrot.slane %v1254, 1
      %v1283 = vrot.slane %v982, 1
      %v1284 = vsel %vm650, %v1282, %v1283
      %v1285 = vrot.slane %v1255, 1
      %v1286 = vrot.slane %v983, 1
      %v1287 = vsel %vm650, %v1285, %v1286
      %v1288 = vrot.slane %v1256, 1
      %v1289 = vrot.slane %v984, 1
      %v1290 = vsel %vm650, %v1288, %v1289
      %v1291 = vrot.slane %v1257, 1
      %v1292 = vrot.slane %v985, 1
      %v1293 = vsel %vm650, %v1291, %v1292
      %v1294 = vrot.slane %v1258, 1
      %v1295 = vrot.slane %v986, 1
      %v1296 = vsel %vm650, %v1294, %v1295
      %v1297 = vrot.slane %v1259, 1
      %v1298 = vrot.slane %v987, 1
      %v1299 = vsel %vm650, %v1297, %v1298
      %v1300 = vrot.slane %v1260, 1
      %v1301 = vrot.slane %v988, 1
      %v1302 = vsel %vm650, %v1300, %v1301
      %v1303 = vrot.slane %v1261, 1
      %v1304 = vrot.slane %v989, 1
      %v1305 = vsel %vm650, %v1303, %v1304
      %v1306 = vrot.slane %v1262, 1
      %v1307 = vrot.slane %v990, 1
      %v1308 = vsel %vm650, %v1306, %v1307
      %v1309 = vrot.slane %v1263, 1
      %v1310 = vrot.slane %v991, 1
      %v1311 = vsel %vm650, %v1309, %v1310
      %1312 = vrot.lane.b32.xlu0 %v1266, 8
      %v1313 = vpop.permute.xlu0 %1312
      %1314 = vrot.lane.b32.xlu0 %v1269, 8
      %v1315 = vpop.permute.xlu0 %1314
      %1316 = vrot.lane.b32.xlu0 %v1272, 8
      %v1317 = vpop.permute.xlu0 %1316
      %1318 = vrot.lane.b32.xlu0 %v1275, 8
      %v1319 = vpop.permute.xlu0 %1318
      %1320 = vrot.lane.b32.xlu0 %v1278, 8
      %v1321 = vpop.permute.xlu0 %1320
      %1322 = vrot.lane.b32.xlu0 %v1281, 8
      %v1323 = vpop.permute.xlu0 %1322
      %1324 = vrot.lane.b32.xlu0 %v1284, 8
      %v1325 = vpop.permute.xlu0 %1324
      %1326 = vrot.lane.b32.xlu0 %v1287, 8
      %v1327 = vpop.permute.xlu0 %1326
      %1328 = vrot.lane.b32.xlu0 %v1290, 8
      %v1329 = vpop.permute.xlu0 %1328
      %1330 = vrot.lane.b32.xlu0 %v1293, 8
      %v1331 = vpop.permute.xlu0 %1330
      %1332 = vrot.lane.b32.xlu0 %v1296, 8
      %v1333 = vpop.permute.xlu0 %1332
      %1334 = vrot.lane.b32.xlu0 %v1299, 8
      %v1335 = vpop.permute.xlu0 %1334
      %1336 = vrot.lane.b32.xlu0 %v1302, 8
      %v1337 = vpop.permute.xlu0 %1336
      %1338 = vrot.lane.b32.xlu0 %v1305, 8
      %v1339 = vpop.permute.xlu0 %1338
      %1340 = vrot.lane.b32.xlu0 %v1308, 8
      %v1341 = vpop.permute.xlu0 %1340
      %1342 = vrot.lane.b32.xlu0 %v1311, 8
      %v1343 = vpop.permute.xlu0 %1342
      %v1345 = vsel %vm731, %v928, %v1185
      %v1347 = vsel %vm731, %v929, %v1187
      %v1349 = vsel %vm731, %v930, %v1189
      %v1351 = vsel %vm731, %v931, %v1191
      %v1353 = vsel %vm731, %v932, %v1193
      %v1355 = vsel %vm731, %v933, %v1195
      %v1357 = vsel %vm731, %v934, %v1197
      %v1359 = vsel %vm731, %v935, %v1199
      %v1361 = vsel %vm731, %v936, %v1201
      %v1363 = vsel %vm731, %v937, %v1203
      %v1365 = vsel %vm731, %v938, %v1205
      %v1367 = vsel %vm731, %v939, %v1207
      %v1369 = vsel %vm731, %v940, %v1209
      %v1371 = vsel %vm731, %v941, %v1211
      %v1373 = vsel %vm731, %v942, %v1213
      %v1375 = vsel %vm731, %v943, %v1215
      %v1377 = vsel %vm764, %v1345, %v1313
      %v1379 = vsel %vm764, %v1347, %v1315
      %v1381 = vsel %vm764, %v1349, %v1317
      %v1383 = vsel %vm764, %v1351, %v1319
      %v1385 = vsel %vm764, %v1353, %v1321
      %v1387 = vsel %vm764, %v1355, %v1323
      %v1389 = vsel %vm764, %v1357, %v1325
      %v1391 = vsel %vm764, %v1359, %v1327
      %v1393 = vsel %vm764, %v1361, %v1329
      %v1395 = vsel %vm764, %v1363, %v1331
      %v1397 = vsel %vm764, %v1365, %v1333
      %v1399 = vsel %vm764, %v1367, %v1335
      %v1401 = vsel %vm764, %v1369, %v1337
      %v1403 = vsel %vm764, %v1371, %v1339
      %v1405 = vsel %vm764, %v1373, %v1341
      %v1407 = vsel %vm764, %v1375, %v1343
      %s1408 = scalar_lea.vmem %s175, 8
      %v1409 = vld [vmem:[%s1408] sm:$0xf]
      %v1410 = vld [vmem:[%s1408 + $0x4] sm:$0x3]
      %v1413 = vunpack.c.l.b16 %v1409
      %v1414 = vunpack.c.l.b16 %v1410
      %v1415 = vpack.c.b16 %v1414, %v1413
      %vm1416 = vcmask 97280
      %v1417 = vsel %vm1416, %v1377, 0
      %v1419 = vsel %vm1416, %v1379, 0
      %v1421 = vsel %vm1416, %v1381, 0
      %v1423 = vsel %vm1416, %v1383, 0
      %v1425 = vsel %vm1416, %v1385, 0
      %v1427 = vsel %vm1416, %v1387, 0
      %v1429 = vsel %vm1416, %v1389, 0
      %v1431 = vsel %vm1416, %v1391, 0
      %v1433 = vsel %vm1416, %v1393, 0
      %v1435 = vsel %vm1416, %v1395, 0
      %v1437 = vsel %vm1416, %v1397, 0
      %v1439 = vsel %vm1416, %v1399, 0
      %v1441 = vsel %vm1416, %v1401, 0
      %v1443 = vsel %vm1416, %v1403, 0
      %v1445 = vsel %vm1416, %v1405, 0
      %v1447 = vsel %vm1416, %v1407, 0
      %vm1449 = vcmask 1045504
      %v1451 = vsel %vm1449, %v1415, 0
      %1453 = vmatprep.subr.bf16.mxu0 0
      %1454 = vmatpush1.bf16.msra.mxu0 %v1451
      %1455 = vmatprep.subr.bf16.mxu0 0
      %1456 = vmatpush1.bf16.msra.mxu0 0
      %1457 = vmatprep.subr.bf16.mxu0 0
      %1458 = vmatpush1.bf16.msra.mxu0 0
      %1459 = vmatprep.subr.bf16.mxu0 0
      %1460 = vmatpush1.bf16.msra.mxu0 0
      %1461 = vmatprep.subr.bf16.mxu0 0
      %1462 = vmatpush1.bf16.msra.mxu0 0
      %1463 = vmatprep.subr.bf16.mxu0 0
      %1464 = vmatpush1.bf16.msra.mxu0 0
      %1465 = vmatprep.subr.bf16.mxu0 0
      %1466 = vmatpush1.bf16.msra.mxu0 0
      %1467 = vmatprep.subr.bf16.mxu0 0
      %1468 = vmatpush1.bf16.msra.mxu0 0
      %1469 = vmatprep.subr.bf16.mxu0 0
      %1470 = vmatpush1.bf16.msra.mxu0 0
      %1471 = vmatprep.subr.bf16.mxu0 0
      %1472 = vmatpush1.bf16.msra.mxu0 0
      %1473 = vmatprep.subr.bf16.mxu0 0
      %1474 = vmatpush1.bf16.msra.mxu0 0
      %1475 = vmatprep.subr.bf16.mxu0 0
      %1476 = vmatpush1.bf16.msra.mxu0 0
      %1477 = vmatprep.subr.bf16.mxu0 0
      %1478 = vmatpush1.bf16.msra.mxu0 0
      %1479 = vmatprep.subr.bf16.mxu0 0
      %1480 = vmatpush1.bf16.msra.mxu0 0
      %1481 = vmatprep.subr.bf16.mxu0 0
      %1482 = vmatpush1.bf16.msra.mxu0 0
      %1483 = vmatprep.subr.bf16.mxu0 0
      %1484 = vmatpush1.bf16.msra.mxu0 0
      %1485 = vmatprep.mubr.bf16.mxu0 0
      %1486 = vmatmul.mubr.bf16.gmra.mrb[0].mxu0 %v1417
      %v1487 = vpop.f32.mrb[0].mxu0
      %v1488 = vadd.f32 0.0, %v1487
      %v1489 = vpop.f32.mrb[0].mxu0
      %v1490 = vpop.f32.mrb[0].mxu0
      %v1491 = vadd.f32 0.0, %v1490
      %v1492 = vpop.f32.mrb[0].mxu0
      %1493 = vmatprep.mubr.bf16.mxu0 0
      %1494 = vmatmul.mubr.bf16.gmra.mrb[0].mxu0 %v1419
      %v1495 = vpop.f32.mrb[0].mxu0
      %v1496 = vadd.f32 0.0, %v1495
      %v1497 = vpop.f32.mrb[0].mxu0
      %v1498 = vpop.f32.mrb[0].mxu0
      %v1499 = vadd.f32 0.0, %v1498
      %v1500 = vpop.f32.mrb[0].mxu0
      %1501 = vmatprep.mubr.bf16.mxu0 0
      %1502 = vmatmul.mubr.bf16.gmra.mrb[0].mxu0 %v1421
      %v1503 = vpop.f32.mrb[0].mxu0
      %v1504 = vadd.f32 0.0, %v1503
      %v1505 = vpop.f32.mrb[0].mxu0
      %v1506 = vpop.f32.mrb[0].mxu0
      %v1507 = vadd.f32 0.0, %v1506
      %v1508 = vpop.f32.mrb[0].mxu0
      %1509 = vmatprep.mubr.bf16.mxu0 0
      %1510 = vmatmul.mubr.bf16.gmra.mrb[0].mxu0 %v1423
      %v1511 = vpop.f32.mrb[0].mxu0
      %v1512 = vadd.f32 0.0, %v1511
      %v1513 = vpop.f32.mrb[0].mxu0
      %v1514 = vpop.f32.mrb[0].mxu0
      %v1515 = vadd.f32 0.0, %v1514
      %v1516 = vpop.f32.mrb[0].mxu0
      %1517 = vmatprep.mubr.bf16.mxu0 0
      %1518 = vmatmul.mubr.bf16.gmra.mrb[0].mxu0 %v1425
      %v1519 = vpop.f32.mrb[0].mxu0
      %v1520 = vadd.f32 0.0, %v1519
      %v1521 = vpop.f32.mrb[0].mxu0
      %v1522 = vpop.f32.mrb[0].mxu0
      %v1523 = vadd.f32 0.0, %v1522
      %v1524 = vpop.f32.mrb[0].mxu0
      %1525 = vmatprep.mubr.bf16.mxu0 0
      %1526 = vmatmul.mubr.bf16.gmra.mrb[0].mxu0 %v1427
      %v1527 = vpop.f32.mrb[0].mxu0
      %v1528 = vadd.f32 0.0, %v1527
      %v1529 = vpop.f32.mrb[0].mxu0
      %v1530 = vpop.f32.mrb[0].mxu0
      %v1531 = vadd.f32 0.0, %v1530
      %v1532 = vpop.f32.mrb[0].mxu0
      %1533 = vmatprep.mubr.bf16.mxu0 0
      %1534 = vmatmul.mubr.bf16.gmra.mrb[0].mxu0 %v1429
      %v1535 = vpop.f32.mrb[0].mxu0
      %v1536 = vadd.f32 0.0, %v1535
      %v1537 = vpop.f32.mrb[0].mxu0
      %v1538 = vpop.f32.mrb[0].mxu0
      %v1539 = vadd.f32 0.0, %v1538
      %v1540 = vpop.f32.mrb[0].mxu0
      %1541 = vmatprep.mubr.bf16.mxu0 0
      %1542 = vmatmul.mubr.bf16.gmra.mrb[0].mxu0 %v1431
      %v1543 = vpop.f32.mrb[0].mxu0
      %v1544 = vadd.f32 0.0, %v1543
      %v1545 = vpop.f32.mrb[0].mxu0
      %v1546 = vpop.f32.mrb[0].mxu0
      %v1547 = vadd.f32 0.0, %v1546
      %v1548 = vpop.f32.mrb[0].mxu0
      %1549 = vmatprep.mubr.bf16.mxu0 0
      %1550 = vmatmul.mubr.bf16.gmra.mrb[0].mxu0 %v1433
      %v1551 = vpop.f32.mrb[0].mxu0
      %v1552 = vadd.f32 0.0, %v1551
      %v1553 = vpop.f32.mrb[0].mxu0
      %v1554 = vpop.f32.mrb[0].mxu0
      %v1555 = vadd.f32 0.0, %v1554
      %v1556 = vpop.f32.mrb[0].mxu0
      %1557 = vmatprep.mubr.bf16.mxu0 0
      %1558 = vmatmul.mubr.bf16.gmra.mrb[0].mxu0 %v1435
      %v1559 = vpop.f32.mrb[0].mxu0
      %v1560 = vadd.f32 0.0, %v1559
      %v1561 = vpop.f32.mrb[0].mxu0
      %v1562 = vpop.f32.mrb[0].mxu0
      %v1563 = vadd.f32 0.0, %v1562
      %v1564 = vpop.f32.mrb[0].mxu0
      %1565 = vmatprep.mubr.bf16.mxu0 0
      %1566 = vmatmul.mubr.bf16.gmra.mrb[0].mxu0 %v1437
      %v1567 = vpop.f32.mrb[0].mxu0
      %v1568 = vadd.f32 0.0, %v1567
      %v1569 = vpop.f32.mrb[0].mxu0
      %v1570 = vpop.f32.mrb[0].mxu0
      %v1571 = vadd.f32 0.0, %v1570
      %v1572 = vpop.f32.mrb[0].mxu0
      %1573 = vmatprep.mubr.bf16.mxu0 0
      %1574 = vmatmul.mubr.bf16.gmra.mrb[0].mxu0 %v1439
      %v1575 = vpop.f32.mrb[0].mxu0
      %v1576 = vadd.f32 0.0, %v1575
      %v1577 = vpop.f32.mrb[0].mxu0
      %v1578 = vpop.f32.mrb[0].mxu0
      %v1579 = vadd.f32 0.0, %v1578
      %v1580 = vpop.f32.mrb[0].mxu0
      %1581 = vmatprep.mubr.bf16.mxu0 0
      %1582 = vmatmul.mubr.bf16.gmra.mrb[0].mxu0 %v1441
      %v1583 = vpop.f32.mrb[0].mxu0
      %v1584 = vadd.f32 0.0, %v1583
      %v1585 = vpop.f32.mrb[0].mxu0
      %v1586 = vpop.f32.mrb[0].mxu0
      %v1587 = vadd.f32 0.0, %v1586
      %v1588 = vpop.f32.mrb[0].mxu0
      %1589 = vmatprep.mubr.bf16.mxu0 0
      %1590 = vmatmul.mubr.bf16.gmra.mrb[0].mxu0 %v1443
      %v1591 = vpop.f32.mrb[0].mxu0
      %v1592 = vadd.f32 0.0, %v1591
      %v1593 = vpop.f32.mrb[0].mxu0
      %v1594 = vpop.f32.mrb[0].mxu0
      %v1595 = vadd.f32 0.0, %v1594
      %v1596 = vpop.f32.mrb[0].mxu0
      %1597 = vmatprep.mubr.bf16.mxu0 0
      %1598 = vmatmul.mubr.bf16.gmra.mrb[0].mxu0 %v1445
      %v1599 = vpop.f32.mrb[0].mxu0
      %v1600 = vadd.f32 0.0, %v1599
      %v1601 = vpop.f32.mrb[0].mxu0
      %v1602 = vpop.f32.mrb[0].mxu0
      %v1603 = vadd.f32 0.0, %v1602
      %v1604 = vpop.f32.mrb[0].mxu0
      %1605 = vmatprep.mubr.bf16.mxu0 0
      %1606 = vmatmul.mubr.bf16.gmra.mrb[0].mxu0 %v1447
      %v1607 = vpop.f32.mrb[0].mxu0
      %v1608 = vadd.f32 0.0, %v1607
      %v1609 = vpop.f32.mrb[0].mxu0
      %v1610 = vpop.f32.mrb[0].mxu0
      %v1611 = vadd.f32 0.0, %v1610
      %v1612 = vpop.f32.mrb[0].mxu0
      %1613 = vdwg.mxu0
      %v1616 = vunpack.c.l.b16 %v797
      %v1617 = vunpack.c.l.b16 %v798
      %v1618 = vpack.c.b16 %v1617, %v1616
      %v1619 = vsel %vm1416, %v766, 0
      %v1621 = vsel %vm1416, %v768, 0
      %v1623 = vsel %vm1416, %v770, 0
      %v1625 = vsel %vm1416, %v772, 0
      %v1627 = vsel %vm1416, %v774, 0
      %v1629 = vsel %vm1416, %v776, 0
      %v1631 = vsel %vm1416, %v778, 0
      %v1633 = vsel %vm1416, %v780, 0
      %v1635 = vsel %vm1416, %v782, 0
      %v1637 = vsel %vm1416, %v784, 0
      %v1639 = vsel %vm1416, %v786, 0
      %v1641 = vsel %vm1416, %v788, 0
      %v1643 = vsel %vm1416, %v790, 0
      %v1645 = vsel %vm1416, %v792, 0
      %v1647 = vsel %vm1416, %v794, 0
      %v1649 = vsel %vm1416, %v796, 0
      %v1652 = vsel %vm1449, %v1618, 0
      %1654 = vmatprep.subr.bf16.mxu0 0
      %1655 = vmatpush1.bf16.msra.mxu0 %v1652
      %1656 = vmatprep.subr.bf16.mxu0 0
      %1657 = vmatpush1.bf16.msra.mxu0 0
      %1658 = vmatprep.subr.bf16.mxu0 0
      %1659 = vmatpush1.bf16.msra.mxu0 0
      %1660 = vmatprep.subr.bf16.mxu0 0
      %1661 = vmatpush1.bf16.msra.mxu0 0
      %1662 = vmatprep.subr.bf16.mxu0 0
      %1663 = vmatpush1.bf16.msra.mxu0 0
      %1664 = vmatprep.subr.bf16.mxu0 0
      %1665 = vmatpush1.bf16.msra.mxu0 0
      %1666 = vmatprep.subr.bf16.mxu0 0
      %1667 = vmatpush1.bf16.msra.mxu0 0
      %1668 = vmatprep.subr.bf16.mxu0 0
      %1669 = vmatpush1.bf16.msra.mxu0 0
      %1670 = vmatprep.subr.bf16.mxu0 0
      %1671 = vmatpush1.bf16.msra.mxu0 0
      %1672 = vmatprep.subr.bf16.mxu0 0
      %1673 = vmatpush1.bf16.msra.mxu0 0
      %1674 = vmatprep.subr.bf16.mxu0 0
      %1675 = vmatpush1.bf16.msra.mxu0 0
      %1676 = vmatprep.subr.bf16.mxu0 0
      %1677 = vmatpush1.bf16.msra.mxu0 0
      %1678 = vmatprep.subr.bf16.mxu0 0
      %1679 = vmatpush1.bf16.msra.mxu0 0
      %1680 = vmatprep.subr.bf16.mxu0 0
      %1681 = vmatpush1.bf16.msra.mxu0 0
      %1682 = vmatprep.subr.bf16.mxu0 0
      %1683 = vmatpush1.bf16.msra.mxu0 0
      %1684 = vmatprep.subr.bf16.mxu0 0
      %1685 = vmatpush1.bf16.msra.mxu0 0
      %1686 = vmatprep.mubr.bf16.mxu0 0
      %1687 = vmatmul.mubr.bf16.gmra.mrb[0].mxu0 %v1619
      %v1688 = vpop.f32.mrb[0].mxu0
      %v1689 = vadd.f32 %v1488, %v1688
      %v1690 = vpop.f32.mrb[0].mxu0
      %v1691 = vpop.f32.mrb[0].mxu0
      %v1692 = vadd.f32 %v1491, %v1691
      %v1693 = vpop.f32.mrb[0].mxu0
      %1694 = vmatprep.mubr.bf16.mxu0 0
      %1695 = vmatmul.mubr.bf16.gmra.mrb[0].mxu0 %v1621
      %v1696 = vpop.f32.mrb[0].mxu0
      %v1697 = vadd.f32 %v1496, %v1696
      %v1698 = vpop.f32.mrb[0].mxu0
      %v1699 = vpop.f32.mrb[0].mxu0
      %v1700 = vadd.f32 %v1499, %v1699
      %v1701 = vpop.f32.mrb[0].mxu0
      %1702 = vmatprep.mubr.bf16.mxu0 0
      %1703 = vmatmul.mubr.bf16.gmra.mrb[0].mxu0 %v1623
      %v1704 = vpop.f32.mrb[0].mxu0
      %v1705 = vadd.f32 %v1504, %v1704
      %v1706 = vpop.f32.mrb[0].mxu0
      %v1707 = vpop.f32.mrb[0].mxu0
      %v1708 = vadd.f32 %v1507, %v1707
      %v1709 = vpop.f32.mrb[0].mxu0
      %1710 = vmatprep.mubr.bf16.mxu0 0
      %1711 = vmatmul.mubr.bf16.gmra.mrb[0].mxu0 %v1625
      %v1712 = vpop.f32.mrb[0].mxu0
      %v1713 = vadd.f32 %v1512, %v1712
      %v1714 = vpop.f32.mrb[0].mxu0
      %v1715 = vpop.f32.mrb[0].mxu0
      %v1716 = vadd.f32 %v1515, %v1715
      %v1717 = vpop.f32.mrb[0].mxu0
      %1718 = vmatprep.mubr.bf16.mxu0 0
      %1719 = vmatmul.mubr.bf16.gmra.mrb[0].mxu0 %v1627
      %v1720 = vpop.f32.mrb[0].mxu0
      %v1721 = vadd.f32 %v1520, %v1720
      %v1722 = vpop.f32.mrb[0].mxu0
      %v1723 = vpop.f32.mrb[0].mxu0
      %v1724 = vadd.f32 %v1523, %v1723
      %v1725 = vpop.f32.mrb[0].mxu0
      %1726 = vmatprep.mubr.bf16.mxu0 0
      %1727 = vmatmul.mubr.bf16.gmra.mrb[0].mxu0 %v1629
      %v1728 = vpop.f32.mrb[0].mxu0
      %v1729 = vadd.f32 %v1528, %v1728
      %v1730 = vpop.f32.mrb[0].mxu0
      %v1731 = vpop.f32.mrb[0].mxu0
      %v1732 = vadd.f32 %v1531, %v1731
      %v1733 = vpop.f32.mrb[0].mxu0
      %1734 = vmatprep.mubr.bf16.mxu0 0
      %1735 = vmatmul.mubr.bf16.gmra.mrb[0].mxu0 %v1631
      %v1736 = vpop.f32.mrb[0].mxu0
      %v1737 = vadd.f32 %v1536, %v1736
      %v1738 = vpop.f32.mrb[0].mxu0
      %v1739 = vpop.f32.mrb[0].mxu0
      %v1740 = vadd.f32 %v1539, %v1739
      %v1741 = vpop.f32.mrb[0].mxu0
      %1742 = vmatprep.mubr.bf16.mxu0 0
      %1743 = vmatmul.mubr.bf16.gmra.mrb[0].mxu0 %v1633
      %v1744 = vpop.f32.mrb[0].mxu0
      %v1745 = vadd.f32 %v1544, %v1744
      %v1746 = vpop.f32.mrb[0].mxu0
      %v1747 = vpop.f32.mrb[0].mxu0
      %v1748 = vadd.f32 %v1547, %v1747
      %v1749 = vpop.f32.mrb[0].mxu0
      %1750 = vmatprep.mubr.bf16.mxu0 0
      %1751 = vmatmul.mubr.bf16.gmra.mrb[0].mxu0 %v1635
      %v1752 = vpop.f32.mrb[0].mxu0
      %v1753 = vadd.f32 %v1552, %v1752
      %v1754 = vpop.f32.mrb[0].mxu0
      %v1755 = vpop.f32.mrb[0].mxu0
      %v1756 = vadd.f32 %v1555, %v1755
      %v1757 = vpop.f32.mrb[0].mxu0
      %1758 = vmatprep.mubr.bf16.mxu0 0
      %1759 = vmatmul.mubr.bf16.gmra.mrb[0].mxu0 %v1637
      %v1760 = vpop.f32.mrb[0].mxu0
      %v1761 = vadd.f32 %v1560, %v1760
      %v1762 = vpop.f32.mrb[0].mxu0
      %v1763 = vpop.f32.mrb[0].mxu0
      %v1764 = vadd.f32 %v1563, %v1763
      %v1765 = vpop.f32.mrb[0].mxu0
      %1766 = vmatprep.mubr.bf16.mxu0 0
      %1767 = vmatmul.mubr.bf16.gmra.mrb[0].mxu0 %v1639
      %v1768 = vpop.f32.mrb[0].mxu0
      %v1769 = vadd.f32 %v1568, %v1768
      %v1770 = vpop.f32.mrb[0].mxu0
      %v1771 = vpop.f32.mrb[0].mxu0
      %v1772 = vadd.f32 %v1571, %v1771
      %v1773 = vpop.f32.mrb[0].mxu0
      %1774 = vmatprep.mubr.bf16.mxu0 0
      %1775 = vmatmul.mubr.bf16.gmra.mrb[0].mxu0 %v1641
      %v1776 = vpop.f32.mrb[0].mxu0
      %v1777 = vadd.f32 %v1576, %v1776
      %v1778 = vpop.f32.mrb[0].mxu0
      %v1779 = vpop.f32.mrb[0].mxu0
      %v1780 = vadd.f32 %v1579, %v1779
      %v1781 = vpop.f32.mrb[0].mxu0
      %1782 = vmatprep.mubr.bf16.mxu0 0
      %1783 = vmatmul.mubr.bf16.gmra.mrb[0].mxu0 %v1643
      %v1784 = vpop.f32.mrb[0].mxu0
      %v1785 = vadd.f32 %v1584, %v1784
      %v1786 = vpop.f32.mrb[0].mxu0
      %v1787 = vpop.f32.mrb[0].mxu0
      %v1788 = vadd.f32 %v1587, %v1787
      %v1789 = vpop.f32.mrb[0].mxu0
      %1790 = vmatprep.mubr.bf16.mxu0 0
      %1791 = vmatmul.mubr.bf16.gmra.mrb[0].mxu0 %v1645
      %v1792 = vpop.f32.mrb[0].mxu0
      %v1793 = vadd.f32 %v1592, %v1792
      %v1794 = vpop.f32.mrb[0].mxu0
      %v1795 = vpop.f32.mrb[0].mxu0
      %v1796 = vadd.f32 %v1595, %v1795
      %v1797 = vpop.f32.mrb[0].mxu0
      %1798 = vmatprep.mubr.bf16.mxu0 0
      %1799 = vmatmul.mubr.bf16.gmra.mrb[0].mxu0 %v1647
      %v1800 = vpop.f32.mrb[0].mxu0
      %v1801 = vadd.f32 %v1600, %v1800
      %v1802 = vpop.f32.mrb[0].mxu0
      %v1803 = vpop.f32.mrb[0].mxu0
      %v1804 = vadd.f32 %v1603, %v1803
      %v1805 = vpop.f32.mrb[0].mxu0
      %1806 = vmatprep.mubr.bf16.mxu0 0
      %1807 = vmatmul.mubr.bf16.gmra.mrb[0].mxu0 %v1649
      %v1808 = vpop.f32.mrb[0].mxu0
      %v1809 = vadd.f32 %v1608, %v1808
      %v1810 = vpop.f32.mrb[0].mxu0
      %v1811 = vpop.f32.mrb[0].mxu0
      %v1812 = vadd.f32 %v1611, %v1811
      %v1813 = vpop.f32.mrb[0].mxu0
      %1814 = vdwg.mxu0
      %1815 = vst [vmem:[#allocation2] ss:$2 sm:$0xff] %v1689
      %s1816 = scalar_lea.vmem [#allocation2], 16
      %1817 = vst [vmem:[%s1816] ss:$2 sm:$0xff] %v1692
      %s1818 = scalar_lea.vmem [#allocation2], 64
      %1819 = vst [vmem:[%s1818] ss:$2 sm:$0xff] %v1697
      %s1820 = scalar_lea.vmem [#allocation2], 80
      %1821 = vst [vmem:[%s1820] ss:$2 sm:$0xff] %v1700
      %s1822 = scalar_lea.vmem [#allocation2], 128
      %1823 = vst [vmem:[%s1822] ss:$2 sm:$0xff] %v1705
      %s1824 = scalar_lea.vmem [#allocation2], 144
      %1825 = vst [vmem:[%s1824] ss:$2 sm:$0xff] %v1708
      %s1826 = scalar_lea.vmem [#allocation2], 192
      %1827 = vst [vmem:[%s1826] ss:$2 sm:$0xff] %v1713
      %s1828 = scalar_lea.vmem [#allocation2], 208
      %1829 = vst [vmem:[%s1828] ss:$2 sm:$0xff] %v1716
      %s1830 = scalar_lea.vmem [#allocation2], 256
      %1831 = vst [vmem:[%s1830] ss:$2 sm:$0xff] %v1721
      %s1832 = scalar_lea.vmem [#allocation2], 272
      %1833 = vst [vmem:[%s1832] ss:$2 sm:$0xff] %v1724
      %s1834 = scalar_lea.vmem [#allocation2], 320
      %1835 = vst [vmem:[%s1834] ss:$2 sm:$0xff] %v1729
      %s1836 = scalar_lea.vmem [#allocation2], 336
      %1837 = vst [vmem:[%s1836] ss:$2 sm:$0xff] %v1732
      %s1838 = scalar_lea.vmem [#allocation2], 384
      %1839 = vst [vmem:[%s1838] ss:$2 sm:$0xff] %v1737
      %s1840 = scalar_lea.vmem [#allocation2], 400
      %1841 = vst [vmem:[%s1840] ss:$2 sm:$0xff] %v1740
      %s1842 = scalar_lea.vmem [#allocation2], 448
      %1843 = vst [vmem:[%s1842] ss:$2 sm:$0xff] %v1745
      %s1844 = scalar_lea.vmem [#allocation2], 464
      %1845 = vst [vmem:[%s1844] ss:$2 sm:$0xff] %v1748
      %s1846 = scalar_lea.vmem [#allocation2], 512
      %1847 = vst [vmem:[%s1846] ss:$2 sm:$0xff] %v1753
      %s1848 = scalar_lea.vmem [#allocation2], 528
      %1849 = vst [vmem:[%s1848] ss:$2 sm:$0xff] %v1756
      %s1850 = scalar_lea.vmem [#allocation2], 576
      %1851 = vst [vmem:[%s1850] ss:$2 sm:$0xff] %v1761
      %s1852 = scalar_lea.vmem [#allocation2], 592
      %1853 = vst [vmem:[%s1852] ss:$2 sm:$0xff] %v1764
      %s1854 = scalar_lea.vmem [#allocation2], 640
      %1855 = vst [vmem:[%s1854] ss:$2 sm:$0xff] %v1769
      %s1856 = scalar_lea.vmem [#allocation2], 656
      %1857 = vst [vmem:[%s1856] ss:$2 sm:$0xff] %v1772
      %s1858 = scalar_lea.vmem [#allocation2], 704
      %1859 = vst [vmem:[%s1858] ss:$2 sm:$0xff] %v1777
      %s1860 = scalar_lea.vmem [#allocation2], 720
      %1861 = vst [vmem:[%s1860] ss:$2 sm:$0xff] %v1780
      %s1862 = scalar_lea.vmem [#allocation2], 768
      %1863 = vst [vmem:[%s1862] ss:$2 sm:$0xff] %v1785
      %s1864 = scalar_lea.vmem [#allocation2], 784
      %1865 = vst [vmem:[%s1864] ss:$2 sm:$0xff] %v1788
      %s1866 = scalar_lea.vmem [#allocation2], 832
      %1867 = vst [vmem:[%s1866] ss:$2 sm:$0xff] %v1793
      %s1868 = scalar_lea.vmem [#allocation2], 848
      %1869 = vst [vmem:[%s1868] ss:$2 sm:$0xff] %v1796
      %s1870 = scalar_lea.vmem [#allocation2], 896
      %1871 = vst [vmem:[%s1870] ss:$2 sm:$0xff] %v1801
      %s1872 = scalar_lea.vmem [#allocation2], 912
      %1873 = vst [vmem:[%s1872] ss:$2 sm:$0xff] %v1804
      %s1874 = scalar_lea.vmem [#allocation2], 960
      %1875 = vst [vmem:[%s1874] ss:$2 sm:$0xff] %v1809
      %s1876 = scalar_lea.vmem [#allocation2], 976
      %1877 = vst [vmem:[%s1876] ss:$2 sm:$0xff] %v1812
      %1910 = vrot.lane.b32.xlu0 %v1689, 124
      %v1911 = vpop.permute.xlu0 %1910
      %1912 = vrot.lane.b32.xlu0 %v1692, 124
      %v1913 = vpop.permute.xlu0 %1912
      %1914 = vrot.lane.b32.xlu0 %v1697, 124
      %v1915 = vpop.permute.xlu0 %1914
      %1916 = vrot.lane.b32.xlu0 %v1700, 124
      %v1917 = vpop.permute.xlu0 %1916
      %1918 = vrot.lane.b32.xlu0 %v1705, 124
      %v1919 = vpop.permute.xlu0 %1918
      %1920 = vrot.lane.b32.xlu0 %v1708, 124
      %v1921 = vpop.permute.xlu0 %1920
      %1922 = vrot.lane.b32.xlu0 %v1713, 124
      %v1923 = vpop.permute.xlu0 %1922
      %1924 = vrot.lane.b32.xlu0 %v1716, 124
      %v1925 = vpop.permute.xlu0 %1924
      %1926 = vrot.lane.b32.xlu0 %v1721, 124
      %v1927 = vpop.permute.xlu0 %1926
      %1928 = vrot.lane.b32.xlu0 %v1724, 124
      %v1929 = vpop.permute.xlu0 %1928
      %1930 = vrot.lane.b32.xlu0 %v1729, 124
      %v1931 = vpop.permute.xlu0 %1930
      %1932 = vrot.lane.b32.xlu0 %v1732, 124
      %v1933 = vpop.permute.xlu0 %1932
      %1934 = vrot.lane.b32.xlu0 %v1737, 124
      %v1935 = vpop.permute.xlu0 %1934
      %1936 = vrot.lane.b32.xlu0 %v1740, 124
      %v1937 = vpop.permute.xlu0 %1936
      %1938 = vrot.lane.b32.xlu0 %v1745, 124
      %v1939 = vpop.permute.xlu0 %1938
      %1940 = vrot.lane.b32.xlu0 %v1748, 124
      %v1941 = vpop.permute.xlu0 %1940
      %1942 = vrot.lane.b32.xlu0 %v1753, 124
      %v1943 = vpop.permute.xlu0 %1942
      %1944 = vrot.lane.b32.xlu0 %v1756, 124
      %v1945 = vpop.permute.xlu0 %1944
      %1946 = vrot.lane.b32.xlu0 %v1761, 124
      %v1947 = vpop.permute.xlu0 %1946
      %1948 = vrot.lane.b32.xlu0 %v1764, 124
      %v1949 = vpop.permute.xlu0 %1948
      %1950 = vrot.lane.b32.xlu0 %v1769, 124
      %v1951 = vpop.permute.xlu0 %1950
      %1952 = vrot.lane.b32.xlu0 %v1772, 124
      %v1953 = vpop.permute.xlu0 %1952
      %1954 = vrot.lane.b32.xlu0 %v1777, 124
      %v1955 = vpop.permute.xlu0 %1954
      %1956 = vrot.lane.b32.xlu0 %v1780, 124
      %v1957 = vpop.permute.xlu0 %1956
      %1958 = vrot.lane.b32.xlu0 %v1785, 124
      %v1959 = vpop.permute.xlu0 %1958
      %1960 = vrot.lane.b32.xlu0 %v1788, 124
      %v1961 = vpop.permute.xlu0 %1960
      %1962 = vrot.lane.b32.xlu0 %v1793, 124
      %v1963 = vpop.permute.xlu0 %1962
      %1964 = vrot.lane.b32.xlu0 %v1796, 124
      %v1965 = vpop.permute.xlu0 %1964
      %1966 = vrot.lane.b32.xlu0 %v1801, 124
      %v1967 = vpop.permute.xlu0 %1966
      %1968 = vrot.lane.b32.xlu0 %v1804, 124
      %v1969 = vpop.permute.xlu0 %1968
      %1970 = vrot.lane.b32.xlu0 %v1809, 124
      %v1971 = vpop.permute.xlu0 %1970
      %1972 = vrot.lane.b32.xlu0 %v1812, 124
      %v1973 = vpop.permute.xlu0 %1972
      %s2006 = scalar_lea.vmem [#allocation2], 1
      %2007 = vst [vmem:[%s2006] ss:$2 sm:$0xff] %v1911
      %s2008 = scalar_lea.vmem [#allocation2], 17
      %2009 = vst [vmem:[%s2008] ss:$2 sm:$0xff] %v1913
      %s2010 = scalar_lea.vmem [#allocation2], 65
      %2011 = vst [vmem:[%s2010] ss:$2 sm:$0xff] %v1915
      %s2012 = scalar_lea.vmem [#allocation2], 81
      %2013 = vst [vmem:[%s2012] ss:$2 sm:$0xff] %v1917
      %s2014 = scalar_lea.vmem [#allocation2], 129
      %2015 = vst [vmem:[%s2014] ss:$2 sm:$0xff] %v1919
      %s2016 = scalar_lea.vmem [#allocation2], 145
      %2017 = vst [vmem:[%s2016] ss:$2 sm:$0xff] %v1921
      %s2018 = scalar_lea.vmem [#allocation2], 193
      %2019 = vst [vmem:[%s2018] ss:$2 sm:$0xff] %v1923
      %s2020 = scalar_lea.vmem [#allocation2], 209
      %2021 = vst [vmem:[%s2020] ss:$2 sm:$0xff] %v1925
      %s2022 = scalar_lea.vmem [#allocation2], 257
      %2023 = vst [vmem:[%s2022] ss:$2 sm:$0xff] %v1927
      %s2024 = scalar_lea.vmem [#allocation2], 273
      %2025 = vst [vmem:[%s2024] ss:$2 sm:$0xff] %v1929
      %s2026 = scalar_lea.vmem [#allocation2], 321
      %2027 = vst [vmem:[%s2026] ss:$2 sm:$0xff] %v1931
      %s2028 = scalar_lea.vmem [#allocation2], 337
      %2029 = vst [vmem:[%s2028] ss:$2 sm:$0xff] %v1933
      %s2030 = scalar_lea.vmem [#allocation2], 385
      %2031 = vst [vmem:[%s2030] ss:$2 sm:$0xff] %v1935
      %s2032 = scalar_lea.vmem [#allocation2], 401
      %2033 = vst [vmem:[%s2032] ss:$2 sm:$0xff] %v1937
      %s2034 = scalar_lea.vmem [#allocation2], 449
      %2035 = vst [vmem:[%s2034] ss:$2 sm:$0xff] %v1939
      %s2036 = scalar_lea.vmem [#allocation2], 465
      %2037 = vst [vmem:[%s2036] ss:$2 sm:$0xff] %v1941
      %s2038 = scalar_lea.vmem [#allocation2], 513
      %2039 = vst [vmem:[%s2038] ss:$2 sm:$0xff] %v1943
      %s2040 = scalar_lea.vmem [#allocation2], 529
      %2041 = vst [vmem:[%s2040] ss:$2 sm:$0xff] %v1945
      %s2042 = scalar_lea.vmem [#allocation2], 577
      %2043 = vst [vmem:[%s2042] ss:$2 sm:$0xff] %v1947
      %s2044 = scalar_lea.vmem [#allocation2], 593
      %2045 = vst [vmem:[%s2044] ss:$2 sm:$0xff] %v1949
      %s2046 = scalar_lea.vmem [#allocation2], 641
      %2047 = vst [vmem:[%s2046] ss:$2 sm:$0xff] %v1951
      %s2048 = scalar_lea.vmem [#allocation2], 657
      %2049 = vst [vmem:[%s2048] ss:$2 sm:$0xff] %v1953
      %s2050 = scalar_lea.vmem [#allocation2], 705
      %2051 = vst [vmem:[%s2050] ss:$2 sm:$0xff] %v1955
      %s2052 = scalar_lea.vmem [#allocation2], 721
      %2053 = vst [vmem:[%s2052] ss:$2 sm:$0xff] %v1957
      %s2054 = scalar_lea.vmem [#allocation2], 769
      %2055 = vst [vmem:[%s2054] ss:$2 sm:$0xff] %v1959
      %s2056 = scalar_lea.vmem [#allocation2], 785
      %2057 = vst [vmem:[%s2056] ss:$2 sm:$0xff] %v1961
      %s2058 = scalar_lea.vmem [#allocation2], 833
      %2059 = vst [vmem:[%s2058] ss:$2 sm:$0xff] %v1963
      %s2060 = scalar_lea.vmem [#allocation2], 849
      %2061 = vst [vmem:[%s2060] ss:$2 sm:$0xff] %v1965
      %s2062 = scalar_lea.vmem [#allocation2], 897
      %2063 = vst [vmem:[%s2062] ss:$2 sm:$0xff] %v1967
      %s2064 = scalar_lea.vmem [#allocation2], 913
      %2065 = vst [vmem:[%s2064] ss:$2 sm:$0xff] %v1969
      %s2066 = scalar_lea.vmem [#allocation2], 961
      %2067 = vst [vmem:[%s2066] ss:$2 sm:$0xff] %v1971
      %s2068 = scalar_lea.vmem [#allocation2], 977
      %2069 = vst [vmem:[%s2068] ss:$2 sm:$0xff] %v1973
      %v2070 = vld [vmem:[%s799] sm:$0xf]
      %v2071 = vld [vmem:[%s799 + $0x4] sm:$0xf]
      %v2072 = vld [vmem:[%s799 + $0xc] sm:$0xf]
      %v2073 = vld [vmem:[%s799 + $0x10] sm:$0xf]
      %v2074 = vld [vmem:[%s799 + $0x18] sm:$0xf]
      %v2075 = vld [vmem:[%s799 + $0x1c] sm:$0xf]
      %v2076 = vld [vmem:[%s799 + $0x24] sm:$0xf]
      %v2077 = vld [vmem:[%s799 + $0x28] sm:$0xf]
      %v2078 = vld [vmem:[%s799 + $0x30] sm:$0xf]
      %v2079 = vld [vmem:[%s799 + $0x34] sm:$0xf]
      %v2080 = vld [vmem:[%s799 + $0x3c] sm:$0xf]
      %v2081 = vld [vmem:[%s799 + $0x40] sm:$0xf]
      %v2082 = vld [vmem:[%s799 + $0x48] sm:$0xf]
      %v2083 = vld [vmem:[%s799 + $0x4c] sm:$0xf]
      %v2084 = vld [vmem:[%s799 + $0x54] sm:$0xf]
      %v2085 = vld [vmem:[%s799 + $0x58] sm:$0xf]
      %v2086 = vld [vmem:[%s799 + $0x60] sm:$0xf]
      %v2087 = vld [vmem:[%s799 + $0x64] sm:$0xf]
      %v2088 = vld [vmem:[%s799 + $0x6c] sm:$0xf]
      %v2089 = vld [vmem:[%s799 + $0x70] sm:$0xf]
      %v2090 = vld [vmem:[%s799 + $0x78] sm:$0xf]
      %v2091 = vld [vmem:[%s799 + $0x7c] sm:$0xf]
      %v2092 = vld [vmem:[%s799 + $0x84] sm:$0xf]
      %v2093 = vld [vmem:[%s799 + $0x88] sm:$0xf]
      %v2094 = vld [vmem:[%s799 + $0x90] sm:$0xf]
      %v2095 = vld [vmem:[%s799 + $0x94] sm:$0xf]
      %v2096 = vld [vmem:[%s799 + $0x9c] sm:$0xf]
      %v2097 = vld [vmem:[%s799 + $0xa0] sm:$0xf]
      %v2098 = vld [vmem:[%s799 + $0xa8] sm:$0xf]
      %v2099 = vld [vmem:[%s799 + $0xac] sm:$0xf]
      %v2100 = vld [vmem:[%s799 + $0xb4] sm:$0xf]
      %v2101 = vld [vmem:[%s799 + $0xb8] sm:$0xf]
      %v2102 = vld [vmem:[%s799 + $0x8] sm:$0x1]
      %v2103 = vld [vmem:[%s799 + $0x14] sm:$0x1]
      %v2104 = vld [vmem:[%s799 + $0x20] sm:$0x1]
      %v2105 = vld [vmem:[%s799 + $0x2c] sm:$0x1]
      %v2106 = vld [vmem:[%s799 + $0x38] sm:$0x1]
      %v2107 = vld [vmem:[%s799 + $0x44] sm:$0x1]
      %v2108 = vld [vmem:[%s799 + $0x50] sm:$0x1]
      %v2109 = vld [vmem:[%s799 + $0x5c] sm:$0x1]
      %v2110 = vld [vmem:[%s799 + $0x68] sm:$0x1]
      %v2111 = vld [vmem:[%s799 + $0x74] sm:$0x1]
      %v2112 = vld [vmem:[%s799 + $0x80] sm:$0x1]
      %v2113 = vld [vmem:[%s799 + $0x8c] sm:$0x1]
      %v2114 = vld [vmem:[%s799 + $0x98] sm:$0x1]
      %v2115 = vld [vmem:[%s799 + $0xa4] sm:$0x1]
      %v2116 = vld [vmem:[%s799 + $0xb0] sm:$0x1]
      %v2117 = vld [vmem:[%s799 + $0xbc] sm:$0x1]
      %v2118 = vld [vmem:[%s799] sm:$0xe]
      %v2119 = vld [vmem:[%s799 + $0xc] sm:$0xe]
      %v2120 = vld [vmem:[%s799 + $0x18] sm:$0xe]
      %v2121 = vld [vmem:[%s799 + $0x24] sm:$0xe]
      %v2122 = vld [vmem:[%s799 + $0x30] sm:$0xe]
      %v2123 = vld [vmem:[%s799 + $0x3c] sm:$0xe]
      %v2124 = vld [vmem:[%s799 + $0x48] sm:$0xe]
      %v2125 = vld [vmem:[%s799 + $0x54] sm:$0xe]
      %v2126 = vld [vmem:[%s799 + $0x60] sm:$0xe]
      %v2127 = vld [vmem:[%s799 + $0x6c] sm:$0xe]
      %v2128 = vld [vmem:[%s799 + $0x78] sm:$0xe]
      %v2129 = vld [vmem:[%s799 + $0x84] sm:$0xe]
      %v2130 = vld [vmem:[%s799 + $0x90] sm:$0xe]
      %v2131 = vld [vmem:[%s799 + $0x9c] sm:$0xe]
      %v2132 = vld [vmem:[%s799 + $0xa8] sm:$0xe]
      %v2133 = vld [vmem:[%s799 + $0xb4] sm:$0xe]
      %v2166 = vunpack.c.l.b16 %v2070
      %v2167 = vunpack.c.l.b16 %v2071
      %v2168 = vunpack.c.l.b16 %v2072
      %v2169 = vunpack.c.l.b16 %v2073
      %v2170 = vunpack.c.l.b16 %v2074
      %v2171 = vunpack.c.l.b16 %v2075
      %v2172 = vunpack.c.l.b16 %v2076
      %v2173 = vunpack.c.l.b16 %v2077
      %v2174 = vunpack.c.l.b16 %v2078
      %v2175 = vunpack.c.l.b16 %v2079
      %v2176 = vunpack.c.l.b16 %v2080
      %v2177 = vunpack.c.l.b16 %v2081
      %v2178 = vunpack.c.l.b16 %v2082
      %v2179 = vunpack.c.l.b16 %v2083
      %v2180 = vunpack.c.l.b16 %v2084
      %v2181 = vunpack.c.l.b16 %v2085
      %v2182 = vunpack.c.l.b16 %v2086
      %v2183 = vunpack.c.l.b16 %v2087
      %v2184 = vunpack.c.l.b16 %v2088
      %v2185 = vunpack.c.l.b16 %v2089
      %v2186 = vunpack.c.l.b16 %v2090
      %v2187 = vunpack.c.l.b16 %v2091
      %v2188 = vunpack.c.l.b16 %v2092
      %v2189 = vunpack.c.l.b16 %v2093
      %v2190 = vunpack.c.l.b16 %v2094
      %v2191 = vunpack.c.l.b16 %v2095
      %v2192 = vunpack.c.l.b16 %v2096
      %v2193 = vunpack.c.l.b16 %v2097
      %v2194 = vunpack.c.l.b16 %v2098
      %v2195 = vunpack.c.l.b16 %v2099
      %v2196 = vunpack.c.l.b16 %v2100
      %v2197 = vunpack.c.l.b16 %v2101
      %v2198 = vpack.c.b16 %v2167, %v2166
      %v2199 = vpack.c.b16 %v2169, %v2168
      %v2200 = vpack.c.b16 %v2171, %v2170
      %v2201 = vpack.c.b16 %v2173, %v2172
      %v2202 = vpack.c.b16 %v2175, %v2174
      %v2203 = vpack.c.b16 %v2177, %v2176
      %v2204 = vpack.c.b16 %v2179, %v2178
      %v2205 = vpack.c.b16 %v2181, %v2180
      %v2206 = vpack.c.b16 %v2183, %v2182
      %v2207 = vpack.c.b16 %v2185, %v2184
      %v2208 = vpack.c.b16 %v2187, %v2186
      %v2209 = vpack.c.b16 %v2189, %v2188
      %v2210 = vpack.c.b16 %v2191, %v2190
      %v2211 = vpack.c.b16 %v2193, %v2192
      %v2212 = vpack.c.b16 %v2195, %v2194
      %v2213 = vpack.c.b16 %v2197, %v2196
      %v2230 = vunpack.c.l.b16 %v2102
      %v2231 = vunpack.c.l.b16 %v2103
      %v2232 = vunpack.c.l.b16 %v2104
      %v2233 = vunpack.c.l.b16 %v2105
      %v2234 = vunpack.c.l.b16 %v2106
      %v2235 = vunpack.c.l.b16 %v2107
      %v2236 = vunpack.c.l.b16 %v2108
      %v2237 = vunpack.c.l.b16 %v2109
      %v2238 = vunpack.c.l.b16 %v2110
      %v2239 = vunpack.c.l.b16 %v2111
      %v2240 = vunpack.c.l.b16 %v2112
      %v2241 = vunpack.c.l.b16 %v2113
      %v2242 = vunpack.c.l.b16 %v2114
      %v2243 = vunpack.c.l.b16 %v2115
      %v2244 = vunpack.c.l.b16 %v2116
      %v2245 = vunpack.c.l.b16 %v2117
      %v2246 = vpack.c.b16 %v2230, %v2230
      %v2247 = vpack.c.b16 %v2231, %v2231
      %v2248 = vpack.c.b16 %v2232, %v2232
      %v2249 = vpack.c.b16 %v2233, %v2233
      %v2250 = vpack.c.b16 %v2234, %v2234
      %v2251 = vpack.c.b16 %v2235, %v2235
      %v2252 = vpack.c.b16 %v2236, %v2236
      %v2253 = vpack.c.b16 %v2237, %v2237
      %v2254 = vpack.c.b16 %v2238, %v2238
      %v2255 = vpack.c.b16 %v2239, %v2239
      %v2256 = vpack.c.b16 %v2240, %v2240
      %v2257 = vpack.c.b16 %v2241, %v2241
      %v2258 = vpack.c.b16 %v2242, %v2242
      %v2259 = vpack.c.b16 %v2243, %v2243
      %v2260 = vpack.c.b16 %v2244, %v2244
      %v2261 = vpack.c.b16 %v2245, %v2245
      %v2263 = vshrl.u32 %v2198, 16
      %v2265 = vshll.u32 %v2198, 16
      %v2267 = vrot.slane %v2265, 1
      %v2268 = vor.u32 %v2263, %v2267
      %v2270 = vshll.u32 %v2246, 16
      %v2272 = vrot.slane %v2270, 1
      %v2273 = vsel %vm377, %v2268, %v2272
      %v2275 = vshrl.u32 %v2199, 16
      %v2277 = vshll.u32 %v2199, 16
      %v2279 = vrot.slane %v2277, 1
      %v2280 = vor.u32 %v2275, %v2279
      %v2282 = vshll.u32 %v2247, 16
      %v2284 = vrot.slane %v2282, 1
      %v2285 = vsel %vm377, %v2280, %v2284
      %v2287 = vshrl.u32 %v2200, 16
      %v2289 = vshll.u32 %v2200, 16
      %v2291 = vrot.slane %v2289, 1
      %v2292 = vor.u32 %v2287, %v2291
      %v2294 = vshll.u32 %v2248, 16
      %v2296 = vrot.slane %v2294, 1
      %v2297 = vsel %vm377, %v2292, %v2296
      %v2299 = vshrl.u32 %v2201, 16
      %v2301 = vshll.u32 %v2201, 16
      %v2303 = vrot.slane %v2301, 1
      %v2304 = vor.u32 %v2299, %v2303
      %v2306 = vshll.u32 %v2249, 16
      %v2308 = vrot.slane %v2306, 1
      %v2309 = vsel %vm377, %v2304, %v2308
      %v2311 = vshrl.u32 %v2202, 16
      %v2313 = vshll.u32 %v2202, 16
      %v2315 = vrot.slane %v2313, 1
      %v2316 = vor.u32 %v2311, %v2315
      %v2318 = vshll.u32 %v2250, 16
      %v2320 = vrot.slane %v2318, 1
      %v2321 = vsel %vm377, %v2316, %v2320
      %v2323 = vshrl.u32 %v2203, 16
      %v2325 = vshll.u32 %v2203, 16
      %v2327 = vrot.slane %v2325, 1
      %v2328 = vor.u32 %v2323, %v2327
      %v2330 = vshll.u32 %v2251, 16
      %v2332 = vrot.slane %v2330, 1
      %v2333 = vsel %vm377, %v2328, %v2332
      %v2335 = vshrl.u32 %v2204, 16
      %v2337 = vshll.u32 %v2204, 16
      %v2339 = vrot.slane %v2337, 1
      %v2340 = vor.u32 %v2335, %v2339
      %v2342 = vshll.u32 %v2252, 16
      %v2344 = vrot.slane %v2342, 1
      %v2345 = vsel %vm377, %v2340, %v2344
      %v2347 = vshrl.u32 %v2205, 16
      %v2349 = vshll.u32 %v2205, 16
      %v2351 = vrot.slane %v2349, 1
      %v2352 = vor.u32 %v2347, %v2351
      %v2354 = vshll.u32 %v2253, 16
      %v2356 = vrot.slane %v2354, 1
      %v2357 = vsel %vm377, %v2352, %v2356
      %v2359 = vshrl.u32 %v2206, 16
      %v2361 = vshll.u32 %v2206, 16
      %v2363 = vrot.slane %v2361, 1
      %v2364 = vor.u32 %v2359, %v2363
      %v2366 = vshll.u32 %v2254, 16
      %v2368 = vrot.slane %v2366, 1
      %v2369 = vsel %vm377, %v2364, %v2368
      %v2371 = vshrl.u32 %v2207, 16
      %v2373 = vshll.u32 %v2207, 16
      %v2375 = vrot.slane %v2373, 1
      %v2376 = vor.u32 %v2371, %v2375
      %v2378 = vshll.u32 %v2255, 16
      %v2380 = vrot.slane %v2378, 1
      %v2381 = vsel %vm377, %v2376, %v2380
      %v2383 = vshrl.u32 %v2208, 16
      %v2385 = vshll.u32 %v2208, 16
      %v2387 = vrot.slane %v2385, 1
      %v2388 = vor.u32 %v2383, %v2387
      %v2390 = vshll.u32 %v2256, 16
      %v2392 = vrot.slane %v2390, 1
      %v2393 = vsel %vm377, %v2388, %v2392
      %v2395 = vshrl.u32 %v2209, 16
      %v2397 = vshll.u32 %v2209, 16
      %v2399 = vrot.slane %v2397, 1
      %v2400 = vor.u32 %v2395, %v2399
      %v2402 = vshll.u32 %v2257, 16
      %v2404 = vrot.slane %v2402, 1
      %v2405 = vsel %vm377, %v2400, %v2404
      %v2407 = vshrl.u32 %v2210, 16
      %v2409 = vshll.u32 %v2210, 16
      %v2411 = vrot.slane %v2409, 1
      %v2412 = vor.u32 %v2407, %v2411
      %v2414 = vshll.u32 %v2258, 16
      %v2416 = vrot.slane %v2414, 1
      %v2417 = vsel %vm377, %v2412, %v2416
      %v2419 = vshrl.u32 %v2211, 16
      %v2421 = vshll.u32 %v2211, 16
      %v2423 = vrot.slane %v2421, 1
      %v2424 = vor.u32 %v2419, %v2423
      %v2426 = vshll.u32 %v2259, 16
      %v2428 = vrot.slane %v2426, 1
      %v2429 = vsel %vm377, %v2424, %v2428
      %v2431 = vshrl.u32 %v2212, 16
      %v2433 = vshll.u32 %v2212, 16
      %v2435 = vrot.slane %v2433, 1
      %v2436 = vor.u32 %v2431, %v2435
      %v2438 = vshll.u32 %v2260, 16
      %v2440 = vrot.slane %v2438, 1
      %v2441 = vsel %vm377, %v2436, %v2440
      %v2443 = vshrl.u32 %v2213, 16
      %v2445 = vshll.u32 %v2213, 16
      %v2447 = vrot.slane %v2445, 1
      %v2448 = vor.u32 %v2443, %v2447
      %v2450 = vshll.u32 %v2261, 16
      %v2452 = vrot.slane %v2450, 1
      %v2453 = vsel %vm377, %v2448, %v2452
      %2454 = vrot.lane.b32.xlu0 %v2273, 4
      %v2455 = vpop.permute.xlu0 %2454
      %2456 = vrot.lane.b32.xlu0 %v2285, 4
      %v2457 = vpop.permute.xlu0 %2456
      %2458 = vrot.lane.b32.xlu0 %v2297, 4
      %v2459 = vpop.permute.xlu0 %2458
      %2460 = vrot.lane.b32.xlu0 %v2309, 4
      %v2461 = vpop.permute.xlu0 %2460
      %2462 = vrot.lane.b32.xlu0 %v2321, 4
      %v2463 = vpop.permute.xlu0 %2462
      %2464 = vrot.lane.b32.xlu0 %v2333, 4
      %v2465 = vpop.permute.xlu0 %2464
      %2466 = vrot.lane.b32.xlu0 %v2345, 4
      %v2467 = vpop.permute.xlu0 %2466
      %2468 = vrot.lane.b32.xlu0 %v2357, 4
      %v2469 = vpop.permute.xlu0 %2468
      %2470 = vrot.lane.b32.xlu0 %v2369, 4
      %v2471 = vpop.permute.xlu0 %2470
      %2472 = vrot.lane.b32.xlu0 %v2381, 4
      %v2473 = vpop.permute.xlu0 %2472
      %2474 = vrot.lane.b32.xlu0 %v2393, 4
      %v2475 = vpop.permute.xlu0 %2474
      %2476 = vrot.lane.b32.xlu0 %v2405, 4
      %v2477 = vpop.permute.xlu0 %2476
      %2478 = vrot.lane.b32.xlu0 %v2417, 4
      %v2479 = vpop.permute.xlu0 %2478
      %2480 = vrot.lane.b32.xlu0 %v2429, 4
      %v2481 = vpop.permute.xlu0 %2480
      %2482 = vrot.lane.b32.xlu0 %v2441, 4
      %v2483 = vpop.permute.xlu0 %2482
      %2484 = vrot.lane.b32.xlu0 %v2453, 4
      %v2485 = vpop.permute.xlu0 %2484
      %v2502 = vunpack.c.l.b16 %v2118
      %v2503 = vunpack.c.l.b16 %v2119
      %v2504 = vunpack.c.l.b16 %v2120
      %v2505 = vunpack.c.l.b16 %v2121
      %v2506 = vunpack.c.l.b16 %v2122
      %v2507 = vunpack.c.l.b16 %v2123
      %v2508 = vunpack.c.l.b16 %v2124
      %v2509 = vunpack.c.l.b16 %v2125
      %v2510 = vunpack.c.l.b16 %v2126
      %v2511 = vunpack.c.l.b16 %v2127
      %v2512 = vunpack.c.l.b16 %v2128
      %v2513 = vunpack.c.l.b16 %v2129
      %v2514 = vunpack.c.l.b16 %v2130
      %v2515 = vunpack.c.l.b16 %v2131
      %v2516 = vunpack.c.l.b16 %v2132
      %v2517 = vunpack.c.l.b16 %v2133
      %v2518 = vpack.c.b16 %v2167, %v2502
      %v2519 = vpack.c.b16 %v2169, %v2503
      %v2520 = vpack.c.b16 %v2171, %v2504
      %v2521 = vpack.c.b16 %v2173, %v2505
      %v2522 = vpack.c.b16 %v2175, %v2506
      %v2523 = vpack.c.b16 %v2177, %v2507
      %v2524 = vpack.c.b16 %v2179, %v2508
      %v2525 = vpack.c.b16 %v2181, %v2509
      %v2526 = vpack.c.b16 %v2183, %v2510
      %v2527 = vpack.c.b16 %v2185, %v2511
      %v2528 = vpack.c.b16 %v2187, %v2512
      %v2529 = vpack.c.b16 %v2189, %v2513
      %v2530 = vpack.c.b16 %v2191, %v2514
      %v2531 = vpack.c.b16 %v2193, %v2515
      %v2532 = vpack.c.b16 %v2195, %v2516
      %v2533 = vpack.c.b16 %v2197, %v2517
      %v2534 = vrot.slane %v2518, 1
      %v2535 = vrot.slane %v2246, 1
      %v2536 = vsel %vm650, %v2534, %v2535
      %v2537 = vrot.slane %v2519, 1
      %v2538 = vrot.slane %v2247, 1
      %v2539 = vsel %vm650, %v2537, %v2538
      %v2540 = vrot.slane %v2520, 1
      %v2541 = vrot.slane %v2248, 1
      %v2542 = vsel %vm650, %v2540, %v2541
      %v2543 = vrot.slane %v2521, 1
      %v2544 = vrot.slane %v2249, 1
      %v2545 = vsel %vm650, %v2543, %v2544
      %v2546 = vrot.slane %v2522, 1
      %v2547 = vrot.slane %v2250, 1
      %v2548 = vsel %vm650, %v2546, %v2547
      %v2549 = vrot.slane %v2523, 1
      %v2550 = vrot.slane %v2251, 1
      %v2551 = vsel %vm650, %v2549, %v2550
      %v2552 = vrot.slane %v2524, 1
      %v2553 = vrot.slane %v2252, 1
      %v2554 = vsel %vm650, %v2552, %v2553
      %v2555 = vrot.slane %v2525, 1
      %v2556 = vrot.slane %v2253, 1
      %v2557 = vsel %vm650, %v2555, %v2556
      %v2558 = vrot.slane %v2526, 1
      %v2559 = vrot.slane %v2254, 1
      %v2560 = vsel %vm650, %v2558, %v2559
      %v2561 = vrot.slane %v2527, 1
      %v2562 = vrot.slane %v2255, 1
      %v2563 = vsel %vm650, %v2561, %v2562
      %v2564 = vrot.slane %v2528, 1
      %v2565 = vrot.slane %v2256, 1
      %v2566 = vsel %vm650, %v2564, %v2565
      %v2567 = vrot.slane %v2529, 1
      %v2568 = vrot.slane %v2257, 1
      %v2569 = vsel %vm650, %v2567, %v2568
      %v2570 = vrot.slane %v2530, 1
      %v2571 = vrot.slane %v2258, 1
      %v2572 = vsel %vm650, %v2570, %v2571
      %v2573 = vrot.slane %v2531, 1
      %v2574 = vrot.slane %v2259, 1
      %v2575 = vsel %vm650, %v2573, %v2574
      %v2576 = vrot.slane %v2532, 1
      %v2577 = vrot.slane %v2260, 1
      %v2578 = vsel %vm650, %v2576, %v2577
      %v2579 = vrot.slane %v2533, 1
      %v2580 = vrot.slane %v2261, 1
      %v2581 = vsel %vm650, %v2579, %v2580
      %2582 = vrot.lane.b32.xlu0 %v2536, 8
      %v2583 = vpop.permute.xlu0 %2582
      %2584 = vrot.lane.b32.xlu0 %v2539, 8
      %v2585 = vpop.permute.xlu0 %2584
      %2586 = vrot.lane.b32.xlu0 %v2542, 8
      %v2587 = vpop.permute.xlu0 %2586
      %2588 = vrot.lane.b32.xlu0 %v2545, 8
      %v2589 = vpop.permute.xlu0 %2588
      %2590 = vrot.lane.b32.xlu0 %v2548, 8
      %v2591 = vpop.permute.xlu0 %2590
      %2592 = vrot.lane.b32.xlu0 %v2551, 8
      %v2593 = vpop.permute.xlu0 %2592
      %2594 = vrot.lane.b32.xlu0 %v2554, 8
      %v2595 = vpop.permute.xlu0 %2594
      %2596 = vrot.lane.b32.xlu0 %v2557, 8
      %v2597 = vpop.permute.xlu0 %2596
      %2598 = vrot.lane.b32.xlu0 %v2560, 8
      %v2599 = vpop.permute.xlu0 %2598
      %2600 = vrot.lane.b32.xlu0 %v2563, 8
      %v2601 = vpop.permute.xlu0 %2600
      %2602 = vrot.lane.b32.xlu0 %v2566, 8
      %v2603 = vpop.permute.xlu0 %2602
      %2604 = vrot.lane.b32.xlu0 %v2569, 8
      %v2605 = vpop.permute.xlu0 %2604
      %2606 = vrot.lane.b32.xlu0 %v2572, 8
      %v2607 = vpop.permute.xlu0 %2606
      %2608 = vrot.lane.b32.xlu0 %v2575, 8
      %v2609 = vpop.permute.xlu0 %2608
      %2610 = vrot.lane.b32.xlu0 %v2578, 8
      %v2611 = vpop.permute.xlu0 %2610
      %2612 = vrot.lane.b32.xlu0 %v2581, 8
      %v2613 = vpop.permute.xlu0 %2612
      %v2615 = vsel %vm731, %v2198, %v2455
      %v2617 = vsel %vm731, %v2199, %v2457
      %v2619 = vsel %vm731, %v2200, %v2459
      %v2621 = vsel %vm731, %v2201, %v2461
      %v2623 = vsel %vm731, %v2202, %v2463
      %v2625 = vsel %vm731, %v2203, %v2465
      %v2627 = vsel %vm731, %v2204, %v2467
      %v2629 = vsel %vm731, %v2205, %v2469
      %v2631 = vsel %vm731, %v2206, %v2471
      %v2633 = vsel %vm731, %v2207, %v2473
      %v2635 = vsel %vm731, %v2208, %v2475
      %v2637 = vsel %vm731, %v2209, %v2477
      %v2639 = vsel %vm731, %v2210, %v2479
      %v2641 = vsel %vm731, %v2211, %v2481
      %v2643 = vsel %vm731, %v2212, %v2483
      %v2645 = vsel %vm731, %v2213, %v2485
      %v2647 = vsel %vm764, %v2615, %v2583
      %v2649 = vsel %vm764, %v2617, %v2585
      %v2651 = vsel %vm764, %v2619, %v2587
      %v2653 = vsel %vm764, %v2621, %v2589
      %v2655 = vsel %vm764, %v2623, %v2591
      %v2657 = vsel %vm764, %v2625, %v2593
      %v2659 = vsel %vm764, %v2627, %v2595
      %v2661 = vsel %vm764, %v2629, %v2597
      %v2663 = vsel %vm764, %v2631, %v2599
      %v2665 = vsel %vm764, %v2633, %v2601
      %v2667 = vsel %vm764, %v2635, %v2603
      %v2669 = vsel %vm764, %v2637, %v2605
      %v2671 = vsel %vm764, %v2639, %v2607
      %v2673 = vsel %vm764, %v2641, %v2609
      %v2675 = vsel %vm764, %v2643, %v2611
      %v2677 = vsel %vm764, %v2645, %v2613
      %s2678 = scalar_lea.vmem %s175, 16
      %v2679 = vld [vmem:[%s2678] sm:$0xf]
      %v2680 = vld [vmem:[%s2678 + $0x4] sm:$0x3]
      %s2681 = scalar_lea.vmem %s170, 24
      %v2682 = vld [vmem:[%s2681] sm:$0xf]
      %v2683 = vld [vmem:[%s2681 + $0x4] sm:$0xf]
      %v2684 = vld [vmem:[%s2681 + $0xc] sm:$0xf]
      %v2685 = vld [vmem:[%s2681 + $0x10] sm:$0xf]
      %v2686 = vld [vmem:[%s2681 + $0x18] sm:$0xf]
      %v2687 = vld [vmem:[%s2681 + $0x1c] sm:$0xf]
      %v2688 = vld [vmem:[%s2681 + $0x24] sm:$0xf]
      %v2689 = vld [vmem:[%s2681 + $0x28] sm:$0xf]
      %v2690 = vld [vmem:[%s2681 + $0x30] sm:$0xf]
      %v2691 = vld [vmem:[%s2681 + $0x34] sm:$0xf]
      %v2692 = vld [vmem:[%s2681 + $0x3c] sm:$0xf]
      %v2693 = vld [vmem:[%s2681 + $0x40] sm:$0xf]
      %v2694 = vld [vmem:[%s2681 + $0x48] sm:$0xf]
      %v2695 = vld [vmem:[%s2681 + $0x4c] sm:$0xf]
      %v2696 = vld [vmem:[%s2681 + $0x54] sm:$0xf]
      %v2697 = vld [vmem:[%s2681 + $0x58] sm:$0xf]
      %v2698 = vld [vmem:[%s2681 + $0x60] sm:$0xf]
      %v2699 = vld [vmem:[%s2681 + $0x64] sm:$0xf]
      %v2700 = vld [vmem:[%s2681 + $0x6c] sm:$0xf]
      %v2701 = vld [vmem:[%s2681 + $0x70] sm:$0xf]
      %v2702 = vld [vmem:[%s2681 + $0x78] sm:$0xf]
      %v2703 = vld [vmem:[%s2681 + $0x7c] sm:$0xf]
      %v2704 = vld [vmem:[%s2681 + $0x84] sm:$0xf]
      %v2705 = vld [vmem:[%s2681 + $0x88] sm:$0xf]
      %v2706 = vld [vmem:[%s2681 + $0x90] sm:$0xf]
      %v2707 = vld [vmem:[%s2681 + $0x94] sm:$0xf]
      %v2708 = vld [vmem:[%s2681 + $0x9c] sm:$0xf]
      %v2709 = vld [vmem:[%s2681 + $0xa0] sm:$0xf]
      %v2710 = vld [vmem:[%s2681 + $0xa8] sm:$0xf]
      %v2711 = vld [vmem:[%s2681 + $0xac] sm:$0xf]
      %v2712 = vld [vmem:[%s2681 + $0xb4] sm:$0xf]
      %v2713 = vld [vmem:[%s2681 + $0xb8] sm:$0xf]
      %v2714 = vld [vmem:[%s2681 + $0x8] sm:$0x1]
      %v2715 = vld [vmem:[%s2681 + $0x14] sm:$0x1]
      %v2716 = vld [vmem:[%s2681 + $0x20] sm:$0x1]
      %v2717 = vld [vmem:[%s2681 + $0x2c] sm:$0x1]
      %v2718 = vld [vmem:[%s2681 + $0x38] sm:$0x1]
      %v2719 = vld [vmem:[%s2681 + $0x44] sm:$0x1]
      %v2720 = vld [vmem:[%s2681 + $0x50] sm:$0x1]
      %v2721 = vld [vmem:[%s2681 + $0x5c] sm:$0x1]
      %v2722 = vld [vmem:[%s2681 + $0x68] sm:$0x1]
      %v2723 = vld [vmem:[%s2681 + $0x74] sm:$0x1]
      %v2724 = vld [vmem:[%s2681 + $0x80] sm:$0x1]
      %v2725 = vld [vmem:[%s2681 + $0x8c] sm:$0x1]
      %v2726 = vld [vmem:[%s2681 + $0x98] sm:$0x1]
      %v2727 = vld [vmem:[%s2681 + $0xa4] sm:$0x1]
      %v2728 = vld [vmem:[%s2681 + $0xb0] sm:$0x1]
      %v2729 = vld [vmem:[%s2681 + $0xbc] sm:$0x1]
      %v2730 = vld [vmem:[%s2681] sm:$0xe]
      %v2731 = vld [vmem:[%s2681 + $0xc] sm:$0xe]
      %v2732 = vld [vmem:[%s2681 + $0x18] sm:$0xe]
      %v2733 = vld [vmem:[%s2681 + $0x24] sm:$0xe]
      %v2734 = vld [vmem:[%s2681 + $0x30] sm:$0xe]
      %v2735 = vld [vmem:[%s2681 + $0x3c] sm:$0xe]
      %v2736 = vld [vmem:[%s2681 + $0x48] sm:$0xe]
      %v2737 = vld [vmem:[%s2681 + $0x54] sm:$0xe]
      %v2738 = vld [vmem:[%s2681 + $0x60] sm:$0xe]
      %v2739 = vld [vmem:[%s2681 + $0x6c] sm:$0xe]
      %v2740 = vld [vmem:[%s2681 + $0x78] sm:$0xe]
      %v2741 = vld [vmem:[%s2681 + $0x84] sm:$0xe]
      %v2742 = vld [vmem:[%s2681 + $0x90] sm:$0xe]
      %v2743 = vld [vmem:[%s2681 + $0x9c] sm:$0xe]
      %v2744 = vld [vmem:[%s2681 + $0xa8] sm:$0xe]
      %v2745 = vld [vmem:[%s2681 + $0xb4] sm:$0xe]
      %v2778 = vunpack.c.l.b16 %v2682
      %v2779 = vunpack.c.l.b16 %v2683
      %v2780 = vunpack.c.l.b16 %v2684
      %v2781 = vunpack.c.l.b16 %v2685
      %v2782 = vunpack.c.l.b16 %v2686
      %v2783 = vunpack.c.l.b16 %v2687
      %v2784 = vunpack.c.l.b16 %v2688
      %v2785 = vunpack.c.l.b16 %v2689
      %v2786 = vunpack.c.l.b16 %v2690
      %v2787 = vunpack.c.l.b16 %v2691
      %v2788 = vunpack.c.l.b16 %v2692
      %v2789 = vunpack.c.l.b16 %v2693
      %v2790 = vunpack.c.l.b16 %v2694
      %v2791 = vunpack.c.l.b16 %v2695
      %v2792 = vunpack.c.l.b16 %v2696
      %v2793 = vunpack.c.l.b16 %v2697
      %v2794 = vunpack.c.l.b16 %v2698
      %v2795 = vunpack.c.l.b16 %v2699
      %v2796 = vunpack.c.l.b16 %v2700
      %v2797 = vunpack.c.l.b16 %v2701
      %v2798 = vunpack.c.l.b16 %v2702
      %v2799 = vunpack.c.l.b16 %v2703
      %v2800 = vunpack.c.l.b16 %v2704
      %v2801 = vunpack.c.l.b16 %v2705
      %v2802 = vunpack.c.l.b16 %v2706
      %v2803 = vunpack.c.l.b16 %v2707
      %v2804 = vunpack.c.l.b16 %v2708
      %v2805 = vunpack.c.l.b16 %v2709
      %v2806 = vunpack.c.l.b16 %v2710
      %v2807 = vunpack.c.l.b16 %v2711
      %v2808 = vunpack.c.l.b16 %v2712
      %v2809 = vunpack.c.l.b16 %v2713
      %v2810 = vpack.c.b16 %v2779, %v2778
      %v2811 = vpack.c.b16 %v2781, %v2780
      %v2812 = vpack.c.b16 %v2783, %v2782
      %v2813 = vpack.c.b16 %v2785, %v2784
      %v2814 = vpack.c.b16 %v2787, %v2786
      %v2815 = vpack.c.b16 %v2789, %v2788
      %v2816 = vpack.c.b16 %v2791, %v2790
      %v2817 = vpack.c.b16 %v2793, %v2792
      %v2818 = vpack.c.b16 %v2795, %v2794
      %v2819 = vpack.c.b16 %v2797, %v2796
      %v2820 = vpack.c.b16 %v2799, %v2798
      %v2821 = vpack.c.b16 %v2801, %v2800
      %v2822 = vpack.c.b16 %v2803, %v2802
      %v2823 = vpack.c.b16 %v2805, %v2804
      %v2824 = vpack.c.b16 %v2807, %v2806
      %v2825 = vpack.c.b16 %v2809, %v2808
      %v2842 = vunpack.c.l.b16 %v2714
      %v2843 = vunpack.c.l.b16 %v2715
      %v2844 = vunpack.c.l.b16 %v2716
      %v2845 = vunpack.c.l.b16 %v2717
      %v2846 = vunpack.c.l.b16 %v2718
      %v2847 = vunpack.c.l.b16 %v2719
      %v2848 = vunpack.c.l.b16 %v2720
      %v2849 = vunpack.c.l.b16 %v2721
      %v2850 = vunpack.c.l.b16 %v2722
      %v2851 = vunpack.c.l.b16 %v2723
      %v2852 = vunpack.c.l.b16 %v2724
      %v2853 = vunpack.c.l.b16 %v2725
      %v2854 = vunpack.c.l.b16 %v2726
      %v2855 = vunpack.c.l.b16 %v2727
      %v2856 = vunpack.c.l.b16 %v2728
      %v2857 = vunpack.c.l.b16 %v2729
      %v2858 = vpack.c.b16 %v2842, %v2842
      %v2859 = vpack.c.b16 %v2843, %v2843
      %v2860 = vpack.c.b16 %v2844, %v2844
      %v2861 = vpack.c.b16 %v2845, %v2845
      %v2862 = vpack.c.b16 %v2846, %v2846
      %v2863 = vpack.c.b16 %v2847, %v2847
      %v2864 = vpack.c.b16 %v2848, %v2848
      %v2865 = vpack.c.b16 %v2849, %v2849
      %v2866 = vpack.c.b16 %v2850, %v2850
      %v2867 = vpack.c.b16 %v2851, %v2851
      %v2868 = vpack.c.b16 %v2852, %v2852
      %v2869 = vpack.c.b16 %v2853, %v2853
      %v2870 = vpack.c.b16 %v2854, %v2854
      %v2871 = vpack.c.b16 %v2855, %v2855
      %v2872 = vpack.c.b16 %v2856, %v2856
      %v2873 = vpack.c.b16 %v2857, %v2857
      %v2875 = vshrl.u32 %v2810, 16
      %v2877 = vshll.u32 %v2810, 16
      %v2879 = vrot.slane %v2877, 1
      %v2880 = vor.u32 %v2875, %v2879
      %v2882 = vshll.u32 %v2858, 16
      %v2884 = vrot.slane %v2882, 1
      %v2885 = vsel %vm377, %v2880, %v2884
      %v2887 = vshrl.u32 %v2811, 16
      %v2889 = vshll.u32 %v2811, 16
      %v2891 = vrot.slane %v2889, 1
      %v2892 = vor.u32 %v2887, %v2891
      %v2894 = vshll.u32 %v2859, 16
      %v2896 = vrot.slane %v2894, 1
      %v2897 = vsel %vm377, %v2892, %v2896
      %v2899 = vshrl.u32 %v2812, 16
      %v2901 = vshll.u32 %v2812, 16
      %v2903 = vrot.slane %v2901, 1
      %v2904 = vor.u32 %v2899, %v2903
      %v2906 = vshll.u32 %v2860, 16
      %v2908 = vrot.slane %v2906, 1
      %v2909 = vsel %vm377, %v2904, %v2908
      %v2911 = vshrl.u32 %v2813, 16
      %v2913 = vshll.u32 %v2813, 16
      %v2915 = vrot.slane %v2913, 1
      %v2916 = vor.u32 %v2911, %v2915
      %v2918 = vshll.u32 %v2861, 16
      %v2920 = vrot.slane %v2918, 1
      %v2921 = vsel %vm377, %v2916, %v2920
      %v2923 = vshrl.u32 %v2814, 16
      %v2925 = vshll.u32 %v2814, 16
      %v2927 = vrot.slane %v2925, 1
      %v2928 = vor.u32 %v2923, %v2927
      %v2930 = vshll.u32 %v2862, 16
      %v2932 = vrot.slane %v2930, 1
      %v2933 = vsel %vm377, %v2928, %v2932
      %v2935 = vshrl.u32 %v2815, 16
      %v2937 = vshll.u32 %v2815, 16
      %v2939 = vrot.slane %v2937, 1
      %v2940 = vor.u32 %v2935, %v2939
      %v2942 = vshll.u32 %v2863, 16
      %v2944 = vrot.slane %v2942, 1
      %v2945 = vsel %vm377, %v2940, %v2944
      %v2947 = vshrl.u32 %v2816, 16
      %v2949 = vshll.u32 %v2816, 16
      %v2951 = vrot.slane %v2949, 1
      %v2952 = vor.u32 %v2947, %v2951
      %v2954 = vshll.u32 %v2864, 16
      %v2956 = vrot.slane %v2954, 1
      %v2957 = vsel %vm377, %v2952, %v2956
      %v2959 = vshrl.u32 %v2817, 16
      %v2961 = vshll.u32 %v2817, 16
      %v2963 = vrot.slane %v2961, 1
      %v2964 = vor.u32 %v2959, %v2963
      %v2966 = vshll.u32 %v2865, 16
      %v2968 = vrot.slane %v2966, 1
      %v2969 = vsel %vm377, %v2964, %v2968
      %v2971 = vshrl.u32 %v2818, 16
      %v2973 = vshll.u32 %v2818, 16
      %v2975 = vrot.slane %v2973, 1
      %v2976 = vor.u32 %v2971, %v2975
      %v2978 = vshll.u32 %v2866, 16
      %v2980 = vrot.slane %v2978, 1
      %v2981 = vsel %vm377, %v2976, %v2980
      %v2983 = vshrl.u32 %v2819, 16
      %v2985 = vshll.u32 %v2819, 16
      %v2987 = vrot.slane %v2985, 1
      %v2988 = vor.u32 %v2983, %v2987
      %v2990 = vshll.u32 %v2867, 16
      %v2992 = vrot.slane %v2990, 1
      %v2993 = vsel %vm377, %v2988, %v2992
      %v2995 = vshrl.u32 %v2820, 16
      %v2997 = vshll.u32 %v2820, 16
      %v2999 = vrot.slane %v2997, 1
      %v3000 = vor.u32 %v2995, %v2999
      %v3002 = vshll.u32 %v2868, 16
      %v3004 = vrot.slane %v3002, 1
      %v3005 = vsel %vm377, %v3000, %v3004
      %v3007 = vshrl.u32 %v2821, 16
      %v3009 = vshll.u32 %v2821, 16
      %v3011 = vrot.slane %v3009, 1
      %v3012 = vor.u32 %v3007, %v3011
      %v3014 = vshll.u32 %v2869, 16
      %v3016 = vrot.slane %v3014, 1
      %v3017 = vsel %vm377, %v3012, %v3016
      %v3019 = vshrl.u32 %v2822, 16
      %v3021 = vshll.u32 %v2822, 16
      %v3023 = vrot.slane %v3021, 1
      %v3024 = vor.u32 %v3019, %v3023
      %v3026 = vshll.u32 %v2870, 16
      %v3028 = vrot.slane %v3026, 1
      %v3029 = vsel %vm377, %v3024, %v3028
      %v3031 = vshrl.u32 %v2823, 16
      %v3033 = vshll.u32 %v2823, 16
      %v3035 = vrot.slane %v3033, 1
      %v3036 = vor.u32 %v3031, %v3035
      %v3038 = vshll.u32 %v2871, 16
      %v3040 = vrot.slane %v3038, 1
      %v3041 = vsel %vm377, %v3036, %v3040
      %v3043 = vshrl.u32 %v2824, 16
      %v3045 = vshll.u32 %v2824, 16
      %v3047 = vrot.slane %v3045, 1
      %v3048 = vor.u32 %v3043, %v3047
      %v3050 = vshll.u32 %v2872, 16
      %v3052 = vrot.slane %v3050, 1
      %v3053 = vsel %vm377, %v3048, %v3052
      %v3055 = vshrl.u32 %v2825, 16
      %v3057 = vshll.u32 %v2825, 16
      %v3059 = vrot.slane %v3057, 1
      %v3060 = vor.u32 %v3055, %v3059
      %v3062 = vshll.u32 %v2873, 16
      %v3064 = vrot.slane %v3062, 1
      %v3065 = vsel %vm377, %v3060, %v3064
      %3066 = vrot.lane.b32.xlu0 %v2885, 4
      %v3067 = vpop.permute.xlu0 %3066
      %3068 = vrot.lane.b32.xlu0 %v2897, 4
      %v3069 = vpop.permute.xlu0 %3068
      %3070 = vrot.lane.b32.xlu0 %v2909, 4
      %v3071 = vpop.permute.xlu0 %3070
      %3072 = vrot.lane.b32.xlu0 %v2921, 4
      %v3073 = vpop.permute.xlu0 %3072
      %3074 = vrot.lane.b32.xlu0 %v2933, 4
      %v3075 = vpop.permute.xlu0 %3074
      %3076 = vrot.lane.b32.xlu0 %v2945, 4
      %v3077 = vpop.permute.xlu0 %3076
      %3078 = vrot.lane.b32.xlu0 %v2957, 4
      %v3079 = vpop.permute.xlu0 %3078
      %3080 = vrot.lane.b32.xlu0 %v2969, 4
      %v3081 = vpop.permute.xlu0 %3080
      %3082 = vrot.lane.b32.xlu0 %v2981, 4
      %v3083 = vpop.permute.xlu0 %3082
      %3084 = vrot.lane.b32.xlu0 %v2993, 4
      %v3085 = vpop.permute.xlu0 %3084
      %3086 = vrot.lane.b32.xlu0 %v3005, 4
      %v3087 = vpop.permute.xlu0 %3086
      %3088 = vrot.lane.b32.xlu0 %v3017, 4
      %v3089 = vpop.permute.xlu0 %3088
      %3090 = vrot.lane.b32.xlu0 %v3029, 4
      %v3091 = vpop.permute.xlu0 %3090
      %3092 = vrot.lane.b32.xlu0 %v3041, 4
      %v3093 = vpop.permute.xlu0 %3092
      %3094 = vrot.lane.b32.xlu0 %v3053, 4
      %v3095 = vpop.permute.xlu0 %3094
      %3096 = vrot.lane.b32.xlu0 %v3065, 4
      %v3097 = vpop.permute.xlu0 %3096
      %v3114 = vunpack.c.l.b16 %v2730
      %v3115 = vunpack.c.l.b16 %v2731
      %v3116 = vunpack.c.l.b16 %v2732
      %v3117 = vunpack.c.l.b16 %v2733
      %v3118 = vunpack.c.l.b16 %v2734
      %v3119 = vunpack.c.l.b16 %v2735
      %v3120 = vunpack.c.l.b16 %v2736
      %v3121 = vunpack.c.l.b16 %v2737
      %v3122 = vunpack.c.l.b16 %v2738
      %v3123 = vunpack.c.l.b16 %v2739
      %v3124 = vunpack.c.l.b16 %v2740
      %v3125 = vunpack.c.l.b16 %v2741
      %v3126 = vunpack.c.l.b16 %v2742
      %v3127 = vunpack.c.l.b16 %v2743
      %v3128 = vunpack.c.l.b16 %v2744
      %v3129 = vunpack.c.l.b16 %v2745
      %v3130 = vpack.c.b16 %v2779, %v3114
      %v3131 = vpack.c.b16 %v2781, %v3115
      %v3132 = vpack.c.b16 %v2783, %v3116
      %v3133 = vpack.c.b16 %v2785, %v3117
      %v3134 = vpack.c.b16 %v2787, %v3118
      %v3135 = vpack.c.b16 %v2789, %v3119
      %v3136 = vpack.c.b16 %v2791, %v3120
      %v3137 = vpack.c.b16 %v2793, %v3121
      %v3138 = vpack.c.b16 %v2795, %v3122
      %v3139 = vpack.c.b16 %v2797, %v3123
      %v3140 = vpack.c.b16 %v2799, %v3124
      %v3141 = vpack.c.b16 %v2801, %v3125
      %v3142 = vpack.c.b16 %v2803, %v3126
      %v3143 = vpack.c.b16 %v2805, %v3127
      %v3144 = vpack.c.b16 %v2807, %v3128
      %v3145 = vpack.c.b16 %v2809, %v3129
      %v3146 = vrot.slane %v3130, 1
      %v3147 = vrot.slane %v2858, 1
      %v3148 = vsel %vm650, %v3146, %v3147
      %v3149 = vrot.slane %v3131, 1
      %v3150 = vrot.slane %v2859, 1
      %v3151 = vsel %vm650, %v3149, %v3150
      %v3152 = vrot.slane %v3132, 1
      %v3153 = vrot.slane %v2860, 1
      %v3154 = vsel %vm650, %v3152, %v3153
      %v3155 = vrot.slane %v3133, 1
      %v3156 = vrot.slane %v2861, 1
      %v3157 = vsel %vm650, %v3155, %v3156
      %v3158 = vrot.slane %v3134, 1
      %v3159 = vrot.slane %v2862, 1
      %v3160 = vsel %vm650, %v3158, %v3159
      %v3161 = vrot.slane %v3135, 1
      %v3162 = vrot.slane %v2863, 1
      %v3163 = vsel %vm650, %v3161, %v3162
      %v3164 = vrot.slane %v3136, 1
      %v3165 = vrot.slane %v2864, 1
      %v3166 = vsel %vm650, %v3164, %v3165
      %v3167 = vrot.slane %v3137, 1
      %v3168 = vrot.slane %v2865, 1
      %v3169 = vsel %vm650, %v3167, %v3168
      %v3170 = vrot.slane %v3138, 1
      %v3171 = vrot.slane %v2866, 1
      %v3172 = vsel %vm650, %v3170, %v3171
      %v3173 = vrot.slane %v3139, 1
      %v3174 = vrot.slane %v2867, 1
      %v3175 = vsel %vm650, %v3173, %v3174
      %v3176 = vrot.slane %v3140, 1
      %v3177 = vrot.slane %v2868, 1
      %v3178 = vsel %vm650, %v3176, %v3177
      %v3179 = vrot.slane %v3141, 1
      %v3180 = vrot.slane %v2869, 1
      %v3181 = vsel %vm650, %v3179, %v3180
      %v3182 = vrot.slane %v3142, 1
      %v3183 = vrot.slane %v2870, 1
      %v3184 = vsel %vm650, %v3182, %v3183
      %v3185 = vrot.slane %v3143, 1
      %v3186 = vrot.slane %v2871, 1
      %v3187 = vsel %vm650, %v3185, %v3186
      %v3188 = vrot.slane %v3144, 1
      %v3189 = vrot.slane %v2872, 1
      %v3190 = vsel %vm650, %v3188, %v3189
      %v3191 = vrot.slane %v3145, 1
      %v3192 = vrot.slane %v2873, 1
      %v3193 = vsel %vm650, %v3191, %v3192
      %3194 = vrot.lane.b32.xlu0 %v3148, 8
      %v3195 = vpop.permute.xlu0 %3194
      %3196 = vrot.lane.b32.xlu0 %v3151, 8
      %v3197 = vpop.permute.xlu0 %3196
      %3198 = vrot.lane.b32.xlu0 %v3154, 8
      %v3199 = vpop.permute.xlu0 %3198
      %3200 = vrot.lane.b32.xlu0 %v3157, 8
      %v3201 = vpop.permute.xlu0 %3200
      %3202 = vrot.lane.b32.xlu0 %v3160, 8
      %v3203 = vpop.permute.xlu0 %3202
      %3204 = vrot.lane.b32.xlu0 %v3163, 8
      %v3205 = vpop.permute.xlu0 %3204
      %3206 = vrot.lane.b32.xlu0 %v3166, 8
      %v3207 = vpop.permute.xlu0 %3206
      %3208 = vrot.lane.b32.xlu0 %v3169, 8
      %v3209 = vpop.permute.xlu0 %3208
      %3210 = vrot.lane.b32.xlu0 %v3172, 8
      %v3211 = vpop.permute.xlu0 %3210
      %3212 = vrot.lane.b32.xlu0 %v3175, 8
      %v3213 = vpop.permute.xlu0 %3212
      %3214 = vrot.lane.b32.xlu0 %v3178, 8
      %v3215 = vpop.permute.xlu0 %3214
      %3216 = vrot.lane.b32.xlu0 %v3181, 8
      %v3217 = vpop.permute.xlu0 %3216
      %3218 = vrot.lane.b32.xlu0 %v3184, 8
      %v3219 = vpop.permute.xlu0 %3218
      %3220 = vrot.lane.b32.xlu0 %v3187, 8
      %v3221 = vpop.permute.xlu0 %3220
      %3222 = vrot.lane.b32.xlu0 %v3190, 8
      %v3223 = vpop.permute.xlu0 %3222
      %3224 = vrot.lane.b32.xlu0 %v3193, 8
      %v3225 = vpop.permute.xlu0 %3224
      %v3227 = vsel %vm731, %v2810, %v3067
      %v3229 = vsel %vm731, %v2811, %v3069
      %v3231 = vsel %vm731, %v2812, %v3071
      %v3233 = vsel %vm731, %v2813, %v3073
      %v3235 = vsel %vm731, %v2814, %v3075
      %v3237 = vsel %vm731, %v2815, %v3077
      %v3239 = vsel %vm731, %v2816, %v3079
      %v3241 = vsel %vm731, %v2817, %v3081
      %v3243 = vsel %vm731, %v2818, %v3083
      %v3245 = vsel %vm731, %v2819, %v3085
      %v3247 = vsel %vm731, %v2820, %v3087
      %v3249 = vsel %vm731, %v2821, %v3089
      %v3251 = vsel %vm731, %v2822, %v3091
      %v3253 = vsel %vm731, %v2823, %v3093
      %v3255 = vsel %vm731, %v2824, %v3095
      %v3257 = vsel %vm731, %v2825, %v3097
      %v3259 = vsel %vm764, %v3227, %v3195
      %v3261 = vsel %vm764, %v3229, %v3197
      %v3263 = vsel %vm764, %v3231, %v3199
      %v3265 = vsel %vm764, %v3233, %v3201
      %v3267 = vsel %vm764, %v3235, %v3203
      %v3269 = vsel %vm764, %v3237, %v3205
      %v3271 = vsel %vm764, %v3239, %v3207
      %v3273 = vsel %vm764, %v3241, %v3209
      %v3275 = vsel %vm764, %v3243, %v3211
      %v3277 = vsel %vm764, %v3245, %v3213
      %v3279 = vsel %vm764, %v3247, %v3215
      %v3281 = vsel %vm764, %v3249, %v3217
      %v3283 = vsel %vm764, %v3251, %v3219
      %v3285 = vsel %vm764, %v3253, %v3221
      %v3287 = vsel %vm764, %v3255, %v3223
      %v3289 = vsel %vm764, %v3257, %v3225
      %s3290 = scalar_lea.vmem %s175, 24
      %v3291 = vld [vmem:[%s3290] sm:$0xf]
      %v3292 = vld [vmem:[%s3290 + $0x4] sm:$0x3]
      %v3295 = vunpack.c.l.b16 %v3291
      %v3296 = vunpack.c.l.b16 %v3292
      %v3297 = vpack.c.b16 %v3296, %v3295
      %v3298 = vsel %vm1416, %v3259, 0
      %v3300 = vsel %vm1416, %v3261, 0
      %v3302 = vsel %vm1416, %v3263, 0
      %v3304 = vsel %vm1416, %v3265, 0
      %v3306 = vsel %vm1416, %v3267, 0
      %v3308 = vsel %vm1416, %v3269, 0
      %v3310 = vsel %vm1416, %v3271, 0
      %v3312 = vsel %vm1416, %v3273, 0
      %v3314 = vsel %vm1416, %v3275, 0
      %v3316 = vsel %vm1416, %v3277, 0
      %v3318 = vsel %vm1416, %v3279, 0
      %v3320 = vsel %vm1416, %v3281, 0
      %v3322 = vsel %vm1416, %v3283, 0
      %v3324 = vsel %vm1416, %v3285, 0
      %v3326 = vsel %vm1416, %v3287, 0
      %v3328 = vsel %vm1416, %v3289, 0
      %v3331 = vsel %vm1449, %v3297, 0
      %3333 = vmatprep.subr.bf16.mxu0 0
      %3334 = vmatpush1.bf16.msra.mxu0 %v3331
      %3335 = vmatprep.subr.bf16.mxu0 0
      %3336 = vmatpush1.bf16.msra.mxu0 0
      %3337 = vmatprep.subr.bf16.mxu0 0
      %3338 = vmatpush1.bf16.msra.mxu0 0
      %3339 = vmatprep.subr.bf16.mxu0 0
      %3340 = vmatpush1.bf16.msra.mxu0 0
      %3341 = vmatprep.subr.bf16.mxu0 0
      %3342 = vmatpush1.bf16.msra.mxu0 0
      %3343 = vmatprep.subr.bf16.mxu0 0
      %3344 = vmatpush1.bf16.msra.mxu0 0
      %3345 = vmatprep.subr.bf16.mxu0 0
      %3346 = vmatpush1.bf16.msra.mxu0 0
      %3347 = vmatprep.subr.bf16.mxu0 0
      %3348 = vmatpush1.bf16.msra.mxu0 0
      %3349 = vmatprep.subr.bf16.mxu0 0
      %3350 = vmatpush1.bf16.msra.mxu0 0
      %3351 = vmatprep.subr.bf16.mxu0 0
      %3352 = vmatpush1.bf16.msra.mxu0 0
      %3353 = vmatprep.subr.bf16.mxu0 0
      %3354 = vmatpush1.bf16.msra.mxu0 0
      %3355 = vmatprep.subr.bf16.mxu0 0
      %3356 = vmatpush1.bf16.msra.mxu0 0
      %3357 = vmatprep.subr.bf16.mxu0 0
      %3358 = vmatpush1.bf16.msra.mxu0 0
      %3359 = vmatprep.subr.bf16.mxu0 0
      %3360 = vmatpush1.bf16.msra.mxu0 0
      %3361 = vmatprep.subr.bf16.mxu0 0
      %3362 = vmatpush1.bf16.msra.mxu0 0
      %3363 = vmatprep.subr.bf16.mxu0 0
      %3364 = vmatpush1.bf16.msra.mxu0 0
      %3365 = vmatprep.mubr.bf16.mxu0 0
      %3366 = vmatmul.mubr.bf16.gmra.mrb[0].mxu0 %v3298
      %v3367 = vpop.f32.mrb[0].mxu0
      %v3368 = vadd.f32 0.0, %v3367
      %v3369 = vpop.f32.mrb[0].mxu0
      %v3370 = vpop.f32.mrb[0].mxu0
      %v3371 = vadd.f32 0.0, %v3370
      %v3372 = vpop.f32.mrb[0].mxu0
      %3373 = vmatprep.mubr.bf16.mxu0 0
      %3374 = vmatmul.mubr.bf16.gmra.mrb[0].mxu0 %v3300
      %v3375 = vpop.f32.mrb[0].mxu0
      %v3376 = vadd.f32 0.0, %v3375
      %v3377 = vpop.f32.mrb[0].mxu0
      %v3378 = vpop.f32.mrb[0].mxu0
      %v3379 = vadd.f32 0.0, %v3378
      %v3380 = vpop.f32.mrb[0].mxu0
      %3381 = vmatprep.mubr.bf16.mxu0 0
      %3382 = vmatmul.mubr.bf16.gmra.mrb[0].mxu0 %v3302
      %v3383 = vpop.f32.mrb[0].mxu0
      %v3384 = vadd.f32 0.0, %v3383
      %v3385 = vpop.f32.mrb[0].mxu0
      %v3386 = vpop.f32.mrb[0].mxu0
      %v3387 = vadd.f32 0.0, %v3386
      %v3388 = vpop.f32.mrb[0].mxu0
      %3389 = vmatprep.mubr.bf16.mxu0 0
      %3390 = vmatmul.mubr.bf16.gmra.mrb[0].mxu0 %v3304
      %v3391 = vpop.f32.mrb[0].mxu0
      %v3392 = vadd.f32 0.0, %v3391
      %v3393 = vpop.f32.mrb[0].mxu0
      %v3394 = vpop.f32.mrb[0].mxu0
      %v3395 = vadd.f32 0.0, %v3394
      %v3396 = vpop.f32.mrb[0].mxu0
      %3397 = vmatprep.mubr.bf16.mxu0 0
      %3398 = vmatmul.mubr.bf16.gmra.mrb[0].mxu0 %v3306
      %v3399 = vpop.f32.mrb[0].mxu0
      %v3400 = vadd.f32 0.0, %v3399
      %v3401 = vpop.f32.mrb[0].mxu0
      %v3402 = vpop.f32.mrb[0].mxu0
      %v3403 = vadd.f32 0.0, %v3402
      %v3404 = vpop.f32.mrb[0].mxu0
      %3405 = vmatprep.mubr.bf16.mxu0 0
      %3406 = vmatmul.mubr.bf16.gmra.mrb[0].mxu0 %v3308
      %v3407 = vpop.f32.mrb[0].mxu0
      %v3408 = vadd.f32 0.0, %v3407
      %v3409 = vpop.f32.mrb[0].mxu0
      %v3410 = vpop.f32.mrb[0].mxu0
      %v3411 = vadd.f32 0.0, %v3410
      %v3412 = vpop.f32.mrb[0].mxu0
      %3413 = vmatprep.mubr.bf16.mxu0 0
      %3414 = vmatmul.mubr.bf16.gmra.mrb[0].mxu0 %v3310
      %v3415 = vpop.f32.mrb[0].mxu0
      %v3416 = vadd.f32 0.0, %v3415
      %v3417 = vpop.f32.mrb[0].mxu0
      %v3418 = vpop.f32.mrb[0].mxu0
      %v3419 = vadd.f32 0.0, %v3418
      %v3420 = vpop.f32.mrb[0].mxu0
      %3421 = vmatprep.mubr.bf16.mxu0 0
      %3422 = vmatmul.mubr.bf16.gmra.mrb[0].mxu0 %v3312
      %v3423 = vpop.f32.mrb[0].mxu0
      %v3424 = vadd.f32 0.0, %v3423
      %v3425 = vpop.f32.mrb[0].mxu0
      %v3426 = vpop.f32.mrb[0].mxu0
      %v3427 = vadd.f32 0.0, %v3426
      %v3428 = vpop.f32.mrb[0].mxu0
      %3429 = vmatprep.mubr.bf16.mxu0 0
      %3430 = vmatmul.mubr.bf16.gmra.mrb[0].mxu0 %v3314
      %v3431 = vpop.f32.mrb[0].mxu0
      %v3432 = vadd.f32 0.0, %v3431
      %v3433 = vpop.f32.mrb[0].mxu0
      %v3434 = vpop.f32.mrb[0].mxu0
      %v3435 = vadd.f32 0.0, %v3434
      %v3436 = vpop.f32.mrb[0].mxu0
      %3437 = vmatprep.mubr.bf16.mxu0 0
      %3438 = vmatmul.mubr.bf16.gmra.mrb[0].mxu0 %v3316
      %v3439 = vpop.f32.mrb[0].mxu0
      %v3440 = vadd.f32 0.0, %v3439
      %v3441 = vpop.f32.mrb[0].mxu0
      %v3442 = vpop.f32.mrb[0].mxu0
      %v3443 = vadd.f32 0.0, %v3442
      %v3444 = vpop.f32.mrb[0].mxu0
      %3445 = vmatprep.mubr.bf16.mxu0 0
      %3446 = vmatmul.mubr.bf16.gmra.mrb[0].mxu0 %v3318
      %v3447 = vpop.f32.mrb[0].mxu0
      %v3448 = vadd.f32 0.0, %v3447
      %v3449 = vpop.f32.mrb[0].mxu0
      %v3450 = vpop.f32.mrb[0].mxu0
      %v3451 = vadd.f32 0.0, %v3450
      %v3452 = vpop.f32.mrb[0].mxu0
      %3453 = vmatprep.mubr.bf16.mxu0 0
      %3454 = vmatmul.mubr.bf16.gmra.mrb[0].mxu0 %v3320
      %v3455 = vpop.f32.mrb[0].mxu0
      %v3456 = vadd.f32 0.0, %v3455
      %v3457 = vpop.f32.mrb[0].mxu0
      %v3458 = vpop.f32.mrb[0].mxu0
      %v3459 = vadd.f32 0.0, %v3458
      %v3460 = vpop.f32.mrb[0].mxu0
      %3461 = vmatprep.mubr.bf16.mxu0 0
      %3462 = vmatmul.mubr.bf16.gmra.mrb[0].mxu0 %v3322
      %v3463 = vpop.f32.mrb[0].mxu0
      %v3464 = vadd.f32 0.0, %v3463
      %v3465 = vpop.f32.mrb[0].mxu0
      %v3466 = vpop.f32.mrb[0].mxu0
      %v3467 = vadd.f32 0.0, %v3466
      %v3468 = vpop.f32.mrb[0].mxu0
      %3469 = vmatprep.mubr.bf16.mxu0 0
      %3470 = vmatmul.mubr.bf16.gmra.mrb[0].mxu0 %v3324
      %v3471 = vpop.f32.mrb[0].mxu0
      %v3472 = vadd.f32 0.0, %v3471
      %v3473 = vpop.f32.mrb[0].mxu0
      %v3474 = vpop.f32.mrb[0].mxu0
      %v3475 = vadd.f32 0.0, %v3474
      %v3476 = vpop.f32.mrb[0].mxu0
      %3477 = vmatprep.mubr.bf16.mxu0 0
      %3478 = vmatmul.mubr.bf16.gmra.mrb[0].mxu0 %v3326
      %v3479 = vpop.f32.mrb[0].mxu0
      %v3480 = vadd.f32 0.0, %v3479
      %v3481 = vpop.f32.mrb[0].mxu0
      %v3482 = vpop.f32.mrb[0].mxu0
      %v3483 = vadd.f32 0.0, %v3482
      %v3484 = vpop.f32.mrb[0].mxu0
      %3485 = vmatprep.mubr.bf16.mxu0 0
      %3486 = vmatmul.mubr.bf16.gmra.mrb[0].mxu0 %v3328
      %v3487 = vpop.f32.mrb[0].mxu0
      %v3488 = vadd.f32 0.0, %v3487
      %v3489 = vpop.f32.mrb[0].mxu0
      %v3490 = vpop.f32.mrb[0].mxu0
      %v3491 = vadd.f32 0.0, %v3490
      %v3492 = vpop.f32.mrb[0].mxu0
      %3493 = vdwg.mxu0
      %v3496 = vunpack.c.l.b16 %v2679
      %v3497 = vunpack.c.l.b16 %v2680
      %v3498 = vpack.c.b16 %v3497, %v3496
      %v3499 = vsel %vm1416, %v2647, 0
      %v3501 = vsel %vm1416, %v2649, 0
      %v3503 = vsel %vm1416, %v2651, 0
      %v3505 = vsel %vm1416, %v2653, 0
      %v3507 = vsel %vm1416, %v2655, 0
      %v3509 = vsel %vm1416, %v2657, 0
      %v3511 = vsel %vm1416, %v2659, 0
      %v3513 = vsel %vm1416, %v2661, 0
      %v3515 = vsel %vm1416, %v2663, 0
      %v3517 = vsel %vm1416, %v2665, 0
      %v3519 = vsel %vm1416, %v2667, 0
      %v3521 = vsel %vm1416, %v2669, 0
      %v3523 = vsel %vm1416, %v2671, 0
      %v3525 = vsel %vm1416, %v2673, 0
      %v3527 = vsel %vm1416, %v2675, 0
      %v3529 = vsel %vm1416, %v2677, 0
      %v3532 = vsel %vm1449, %v3498, 0
      %3534 = vmatprep.subr.bf16.mxu0 0
      %3535 = vmatpush1.bf16.msra.mxu0 %v3532
      %3536 = vmatprep.subr.bf16.mxu0 0
      %3537 = vmatpush1.bf16.msra.mxu0 0
      %3538 = vmatprep.subr.bf16.mxu0 0
      %3539 = vmatpush1.bf16.msra.mxu0 0
      %3540 = vmatprep.subr.bf16.mxu0 0
      %3541 = vmatpush1.bf16.msra.mxu0 0
      %3542 = vmatprep.subr.bf16.mxu0 0
      %3543 = vmatpush1.bf16.msra.mxu0 0
      %3544 = vmatprep.subr.bf16.mxu0 0
      %3545 = vmatpush1.bf16.msra.mxu0 0
      %3546 = vmatprep.subr.bf16.mxu0 0
      %3547 = vmatpush1.bf16.msra.mxu0 0
      %3548 = vmatprep.subr.bf16.mxu0 0
      %3549 = vmatpush1.bf16.msra.mxu0 0
      %3550 = vmatprep.subr.bf16.mxu0 0
      %3551 = vmatpush1.bf16.msra.mxu0 0
      %3552 = vmatprep.subr.bf16.mxu0 0
      %3553 = vmatpush1.bf16.msra.mxu0 0
      %3554 = vmatprep.subr.bf16.mxu0 0
      %3555 = vmatpush1.bf16.msra.mxu0 0
      %3556 = vmatprep.subr.bf16.mxu0 0
      %3557 = vmatpush1.bf16.msra.mxu0 0
      %3558 = vmatprep.subr.bf16.mxu0 0
      %3559 = vmatpush1.bf16.msra.mxu0 0
      %3560 = vmatprep.subr.bf16.mxu0 0
      %3561 = vmatpush1.bf16.msra.mxu0 0
      %3562 = vmatprep.subr.bf16.mxu0 0
      %3563 = vmatpush1.bf16.msra.mxu0 0
      %3564 = vmatprep.subr.bf16.mxu0 0
      %3565 = vmatpush1.bf16.msra.mxu0 0
      %3566 = vmatprep.mubr.bf16.mxu0 0
      %3567 = vmatmul.mubr.bf16.gmra.mrb[0].mxu0 %v3499
      %v3568 = vpop.f32.mrb[0].mxu0
      %v3569 = vadd.f32 %v3368, %v3568
      %v3570 = vpop.f32.mrb[0].mxu0
      %v3571 = vpop.f32.mrb[0].mxu0
      %v3572 = vadd.f32 %v3371, %v3571
      %v3573 = vpop.f32.mrb[0].mxu0
      %3574 = vmatprep.mubr.bf16.mxu0 0
      %3575 = vmatmul.mubr.bf16.gmra.mrb[0].mxu0 %v3501
      %v3576 = vpop.f32.mrb[0].mxu0
      %v3577 = vadd.f32 %v3376, %v3576
      %v3578 = vpop.f32.mrb[0].mxu0
      %v3579 = vpop.f32.mrb[0].mxu0
      %v3580 = vadd.f32 %v3379, %v3579
      %v3581 = vpop.f32.mrb[0].mxu0
      %3582 = vmatprep.mubr.bf16.mxu0 0
      %3583 = vmatmul.mubr.bf16.gmra.mrb[0].mxu0 %v3503
      %v3584 = vpop.f32.mrb[0].mxu0
      %v3585 = vadd.f32 %v3384, %v3584
      %v3586 = vpop.f32.mrb[0].mxu0
      %v3587 = vpop.f32.mrb[0].mxu0
      %v3588 = vadd.f32 %v3387, %v3587
      %v3589 = vpop.f32.mrb[0].mxu0
      %3590 = vmatprep.mubr.bf16.mxu0 0
      %3591 = vmatmul.mubr.bf16.gmra.mrb[0].mxu0 %v3505
      %v3592 = vpop.f32.mrb[0].mxu0
      %v3593 = vadd.f32 %v3392, %v3592
      %v3594 = vpop.f32.mrb[0].mxu0
      %v3595 = vpop.f32.mrb[0].mxu0
      %v3596 = vadd.f32 %v3395, %v3595
      %v3597 = vpop.f32.mrb[0].mxu0
      %3598 = vmatprep.mubr.bf16.mxu0 0
      %3599 = vmatmul.mubr.bf16.gmra.mrb[0].mxu0 %v3507
      %v3600 = vpop.f32.mrb[0].mxu0
      %v3601 = vadd.f32 %v3400, %v3600
      %v3602 = vpop.f32.mrb[0].mxu0
      %v3603 = vpop.f32.mrb[0].mxu0
      %v3604 = vadd.f32 %v3403, %v3603
      %v3605 = vpop.f32.mrb[0].mxu0
      %3606 = vmatprep.mubr.bf16.mxu0 0
      %3607 = vmatmul.mubr.bf16.gmra.mrb[0].mxu0 %v3509
      %v3608 = vpop.f32.mrb[0].mxu0
      %v3609 = vadd.f32 %v3408, %v3608
      %v3610 = vpop.f32.mrb[0].mxu0
      %v3611 = vpop.f32.mrb[0].mxu0
      %v3612 = vadd.f32 %v3411, %v3611
      %v3613 = vpop.f32.mrb[0].mxu0
      %3614 = vmatprep.mubr.bf16.mxu0 0
      %3615 = vmatmul.mubr.bf16.gmra.mrb[0].mxu0 %v3511
      %v3616 = vpop.f32.mrb[0].mxu0
      %v3617 = vadd.f32 %v3416, %v3616
      %v3618 = vpop.f32.mrb[0].mxu0
      %v3619 = vpop.f32.mrb[0].mxu0
      %v3620 = vadd.f32 %v3419, %v3619
      %v3621 = vpop.f32.mrb[0].mxu0
      %3622 = vmatprep.mubr.bf16.mxu0 0
      %3623 = vmatmul.mubr.bf16.gmra.mrb[0].mxu0 %v3513
      %v3624 = vpop.f32.mrb[0].mxu0
      %v3625 = vadd.f32 %v3424, %v3624
      %v3626 = vpop.f32.mrb[0].mxu0
      %v3627 = vpop.f32.mrb[0].mxu0
      %v3628 = vadd.f32 %v3427, %v3627
      %v3629 = vpop.f32.mrb[0].mxu0
      %3630 = vmatprep.mubr.bf16.mxu0 0
      %3631 = vmatmul.mubr.bf16.gmra.mrb[0].mxu0 %v3515
      %v3632 = vpop.f32.mrb[0].mxu0
      %v3633 = vadd.f32 %v3432, %v3632
      %v3634 = vpop.f32.mrb[0].mxu0
      %v3635 = vpop.f32.mrb[0].mxu0
      %v3636 = vadd.f32 %v3435, %v3635
      %v3637 = vpop.f32.mrb[0].mxu0
      %3638 = vmatprep.mubr.bf16.mxu0 0
      %3639 = vmatmul.mubr.bf16.gmra.mrb[0].mxu0 %v3517
      %v3640 = vpop.f32.mrb[0].mxu0
      %v3641 = vadd.f32 %v3440, %v3640
      %v3642 = vpop.f32.mrb[0].mxu0
      %v3643 = vpop.f32.mrb[0].mxu0
      %v3644 = vadd.f32 %v3443, %v3643
      %v3645 = vpop.f32.mrb[0].mxu0
      %3646 = vmatprep.mubr.bf16.mxu0 0
      %3647 = vmatmul.mubr.bf16.gmra.mrb[0].mxu0 %v3519
      %v3648 = vpop.f32.mrb[0].mxu0
      %v3649 = vadd.f32 %v3448, %v3648
      %v3650 = vpop.f32.mrb[0].mxu0
      %v3651 = vpop.f32.mrb[0].mxu0
      %v3652 = vadd.f32 %v3451, %v3651
      %v3653 = vpop.f32.mrb[0].mxu0
      %3654 = vmatprep.mubr.bf16.mxu0 0
      %3655 = vmatmul.mubr.bf16.gmra.mrb[0].mxu0 %v3521
      %v3656 = vpop.f32.mrb[0].mxu0
      %v3657 = vadd.f32 %v3456, %v3656
      %v3658 = vpop.f32.mrb[0].mxu0
      %v3659 = vpop.f32.mrb[0].mxu0
      %v3660 = vadd.f32 %v3459, %v3659
      %v3661 = vpop.f32.mrb[0].mxu0
      %3662 = vmatprep.mubr.bf16.mxu0 0
      %3663 = vmatmul.mubr.bf16.gmra.mrb[0].mxu0 %v3523
      %v3664 = vpop.f32.mrb[0].mxu0
      %v3665 = vadd.f32 %v3464, %v3664
      %v3666 = vpop.f32.mrb[0].mxu0
      %v3667 = vpop.f32.mrb[0].mxu0
      %v3668 = vadd.f32 %v3467, %v3667
      %v3669 = vpop.f32.mrb[0].mxu0
      %3670 = vmatprep.mubr.bf16.mxu0 0
      %3671 = vmatmul.mubr.bf16.gmra.mrb[0].mxu0 %v3525
      %v3672 = vpop.f32.mrb[0].mxu0
      %v3673 = vadd.f32 %v3472, %v3672
      %v3674 = vpop.f32.mrb[0].mxu0
      %v3675 = vpop.f32.mrb[0].mxu0
      %v3676 = vadd.f32 %v3475, %v3675
      %v3677 = vpop.f32.mrb[0].mxu0
      %3678 = vmatprep.mubr.bf16.mxu0 0
      %3679 = vmatmul.mubr.bf16.gmra.mrb[0].mxu0 %v3527
      %v3680 = vpop.f32.mrb[0].mxu0
      %v3681 = vadd.f32 %v3480, %v3680
      %v3682 = vpop.f32.mrb[0].mxu0
      %v3683 = vpop.f32.mrb[0].mxu0
      %v3684 = vadd.f32 %v3483, %v3683
      %v3685 = vpop.f32.mrb[0].mxu0
      %3686 = vmatprep.mubr.bf16.mxu0 0
      %3687 = vmatmul.mubr.bf16.gmra.mrb[0].mxu0 %v3529
      %v3688 = vpop.f32.mrb[0].mxu0
      %v3689 = vadd.f32 %v3488, %v3688
      %v3690 = vpop.f32.mrb[0].mxu0
      %v3691 = vpop.f32.mrb[0].mxu0
      %v3692 = vadd.f32 %v3491, %v3691
      %v3693 = vpop.f32.mrb[0].mxu0
      %3694 = vdwg.mxu0
      %s3695 = scalar_lea.vmem [#allocation2], 32
      %3696 = vst [vmem:[%s3695] ss:$2 sm:$0xff] %v3569
      %s3697 = scalar_lea.vmem %s3695, 16 [#allocation2]
      %3698 = vst [vmem:[%s3697] ss:$2 sm:$0xff] %v3572
      %s3699 = scalar_lea.vmem %s3695, 64 [#allocation2]
      %3700 = vst [vmem:[%s3699] ss:$2 sm:$0xff] %v3577
      %s3701 = scalar_lea.vmem %s3695, 80 [#allocation2]
      %3702 = vst [vmem:[%s3701] ss:$2 sm:$0xff] %v3580
      %s3703 = scalar_lea.vmem %s3695, 128 [#allocation2]
      %3704 = vst [vmem:[%s3703] ss:$2 sm:$0xff] %v3585
      %s3705 = scalar_lea.vmem %s3695, 144 [#allocation2]
      %3706 = vst [vmem:[%s3705] ss:$2 sm:$0xff] %v3588
      %s3707 = scalar_lea.vmem %s3695, 192 [#allocation2]
      %3708 = vst [vmem:[%s3707] ss:$2 sm:$0xff] %v3593
      %s3709 = scalar_lea.vmem %s3695, 208 [#allocation2]
      %3710 = vst [vmem:[%s3709] ss:$2 sm:$0xff] %v3596
      %s3711 = scalar_lea.vmem %s3695, 256 [#allocation2]
      %3712 = vst [vmem:[%s3711] ss:$2 sm:$0xff] %v3601
      %s3713 = scalar_lea.vmem %s3695, 272 [#allocation2]
      %3714 = vst [vmem:[%s3713] ss:$2 sm:$0xff] %v3604
      %s3715 = scalar_lea.vmem %s3695, 320 [#allocation2]
      %3716 = vst [vmem:[%s3715] ss:$2 sm:$0xff] %v3609
      %s3717 = scalar_lea.vmem %s3695, 336 [#allocation2]
      %3718 = vst [vmem:[%s3717] ss:$2 sm:$0xff] %v3612
      %s3719 = scalar_lea.vmem %s3695, 384 [#allocation2]
      %3720 = vst [vmem:[%s3719] ss:$2 sm:$0xff] %v3617
      %s3721 = scalar_lea.vmem %s3695, 400 [#allocation2]
      %3722 = vst [vmem:[%s3721] ss:$2 sm:$0xff] %v3620
      %s3723 = scalar_lea.vmem %s3695, 448 [#allocation2]
      %3724 = vst [vmem:[%s3723] ss:$2 sm:$0xff] %v3625
      %s3725 = scalar_lea.vmem %s3695, 464 [#allocation2]
      %3726 = vst [vmem:[%s3725] ss:$2 sm:$0xff] %v3628
      %s3727 = scalar_lea.vmem %s3695, 512 [#allocation2]
      %3728 = vst [vmem:[%s3727] ss:$2 sm:$0xff] %v3633
      %s3729 = scalar_lea.vmem %s3695, 528 [#allocation2]
      %3730 = vst [vmem:[%s3729] ss:$2 sm:$0xff] %v3636
      %s3731 = scalar_lea.vmem %s3695, 576 [#allocation2]
      %3732 = vst [vmem:[%s3731] ss:$2 sm:$0xff] %v3641
      %s3733 = scalar_lea.vmem %s3695, 592 [#allocation2]
      %3734 = vst [vmem:[%s3733] ss:$2 sm:$0xff] %v3644
      %s3735 = scalar_lea.vmem %s3695, 640 [#allocation2]
      %3736 = vst [vmem:[%s3735] ss:$2 sm:$0xff] %v3649
      %s3737 = scalar_lea.vmem %s3695, 656 [#allocation2]
      %3738 = vst [vmem:[%s3737] ss:$2 sm:$0xff] %v3652
      %s3739 = scalar_lea.vmem %s3695, 704 [#allocation2]
      %3740 = vst [vmem:[%s3739] ss:$2 sm:$0xff] %v3657
      %s3741 = scalar_lea.vmem %s3695, 720 [#allocation2]
      %3742 = vst [vmem:[%s3741] ss:$2 sm:$0xff] %v3660
      %s3743 = scalar_lea.vmem %s3695, 768 [#allocation2]
      %3744 = vst [vmem:[%s3743] ss:$2 sm:$0xff] %v3665
      %s3745 = scalar_lea.vmem %s3695, 784 [#allocation2]
      %3746 = vst [vmem:[%s3745] ss:$2 sm:$0xff] %v3668
      %s3747 = scalar_lea.vmem %s3695, 832 [#allocation2]
      %3748 = vst [vmem:[%s3747] ss:$2 sm:$0xff] %v3673
      %s3749 = scalar_lea.vmem %s3695, 848 [#allocation2]
      %3750 = vst [vmem:[%s3749] ss:$2 sm:$0xff] %v3676
      %s3751 = scalar_lea.vmem %s3695, 896 [#allocation2]
      %3752 = vst [vmem:[%s3751] ss:$2 sm:$0xff] %v3681
      %s3753 = scalar_lea.vmem %s3695, 912 [#allocation2]
      %3754 = vst [vmem:[%s3753] ss:$2 sm:$0xff] %v3684
      %s3755 = scalar_lea.vmem %s3695, 960 [#allocation2]
      %3756 = vst [vmem:[%s3755] ss:$2 sm:$0xff] %v3689
      %s3757 = scalar_lea.vmem %s3695, 976 [#allocation2]
      %3758 = vst [vmem:[%s3757] ss:$2 sm:$0xff] %v3692
      %3791 = vrot.lane.b32.xlu0 %v3569, 124
      %v3792 = vpop.permute.xlu0 %3791
      %3793 = vrot.lane.b32.xlu0 %v3572, 124
      %v3794 = vpop.permute.xlu0 %3793
      %3795 = vrot.lane.b32.xlu0 %v3577, 124
      %v3796 = vpop.permute.xlu0 %3795
      %3797 = vrot.lane.b32.xlu0 %v3580, 124
      %v3798 = vpop.permute.xlu0 %3797
      %3799 = vrot.lane.b32.xlu0 %v3585, 124
      %v3800 = vpop.permute.xlu0 %3799
      %3801 = vrot.lane.b32.xlu0 %v3588, 124
      %v3802 = vpop.permute.xlu0 %3801
      %3803 = vrot.lane.b32.xlu0 %v3593, 124
      %v3804 = vpop.permute.xlu0 %3803
      %3805 = vrot.lane.b32.xlu0 %v3596, 124
      %v3806 = vpop.permute.xlu0 %3805
      %3807 = vrot.lane.b32.xlu0 %v3601, 124
      %v3808 = vpop.permute.xlu0 %3807
      %3809 = vrot.lane.b32.xlu0 %v3604, 124
      %v3810 = vpop.permute.xlu0 %3809
      %3811 = vrot.lane.b32.xlu0 %v3609, 124
      %v3812 = vpop.permute.xlu0 %3811
      %3813 = vrot.lane.b32.xlu0 %v3612, 124
      %v3814 = vpop.permute.xlu0 %3813
      %3815 = vrot.lane.b32.xlu0 %v3617, 124
      %v3816 = vpop.permute.xlu0 %3815
      %3817 = vrot.lane.b32.xlu0 %v3620, 124
      %v3818 = vpop.permute.xlu0 %3817
      %3819 = vrot.lane.b32.xlu0 %v3625, 124
      %v3820 = vpop.permute.xlu0 %3819
      %3821 = vrot.lane.b32.xlu0 %v3628, 124
      %v3822 = vpop.permute.xlu0 %3821
      %3823 = vrot.lane.b32.xlu0 %v3633, 124
      %v3824 = vpop.permute.xlu0 %3823
      %3825 = vrot.lane.b32.xlu0 %v3636, 124
      %v3826 = vpop.permute.xlu0 %3825
      %3827 = vrot.lane.b32.xlu0 %v3641, 124
      %v3828 = vpop.permute.xlu0 %3827
      %3829 = vrot.lane.b32.xlu0 %v3644, 124
      %v3830 = vpop.permute.xlu0 %3829
      %3831 = vrot.lane.b32.xlu0 %v3649, 124
      %v3832 = vpop.permute.xlu0 %3831
      %3833 = vrot.lane.b32.xlu0 %v3652, 124
      %v3834 = vpop.permute.xlu0 %3833
      %3835 = vrot.lane.b32.xlu0 %v3657, 124
      %v3836 = vpop.permute.xlu0 %3835
      %3837 = vrot.lane.b32.xlu0 %v3660, 124
      %v3838 = vpop.permute.xlu0 %3837
      %3839 = vrot.lane.b32.xlu0 %v3665, 124
      %v3840 = vpop.permute.xlu0 %3839
      %3841 = vrot.lane.b32.xlu0 %v3668, 124
      %v3842 = vpop.permute.xlu0 %3841
      %3843 = vrot.lane.b32.xlu0 %v3673, 124
      %v3844 = vpop.permute.xlu0 %3843
      %3845 = vrot.lane.b32.xlu0 %v3676, 124
      %v3846 = vpop.permute.xlu0 %3845
      %3847 = vrot.lane.b32.xlu0 %v3681, 124
      %v3848 = vpop.permute.xlu0 %3847
      %3849 = vrot.lane.b32.xlu0 %v3684, 124
      %v3850 = vpop.permute.xlu0 %3849
      %3851 = vrot.lane.b32.xlu0 %v3689, 124
      %v3852 = vpop.permute.xlu0 %3851
      %3853 = vrot.lane.b32.xlu0 %v3692, 124
      %v3854 = vpop.permute.xlu0 %3853
      %s3887 = scalar_lea.vmem %s3695, 1 [#allocation2]
      %3888 = vst [vmem:[%s3887] ss:$2 sm:$0xff] %v3792
      %s3889 = scalar_lea.vmem %s3695, 17 [#allocation2]
      %3890 = vst [vmem:[%s3889] ss:$2 sm:$0xff] %v3794
      %s3891 = scalar_lea.vmem %s3695, 65 [#allocation2]
      %3892 = vst [vmem:[%s3891] ss:$2 sm:$0xff] %v3796
      %s3893 = scalar_lea.vmem %s3695, 81 [#allocation2]
      %3894 = vst [vmem:[%s3893] ss:$2 sm:$0xff] %v3798
      %s3895 = scalar_lea.vmem %s3695, 129 [#allocation2]
      %3896 = vst [vmem:[%s3895] ss:$2 sm:$0xff] %v3800
      %s3897 = scalar_lea.vmem %s3695, 145 [#allocation2]
      %3898 = vst [vmem:[%s3897] ss:$2 sm:$0xff] %v3802
      %s3899 = scalar_lea.vmem %s3695, 193 [#allocation2]
      %3900 = vst [vmem:[%s3899] ss:$2 sm:$0xff] %v3804
      %s3901 = scalar_lea.vmem %s3695, 209 [#allocation2]
      %3902 = vst [vmem:[%s3901] ss:$2 sm:$0xff] %v3806
      %s3903 = scalar_lea.vmem %s3695, 257 [#allocation2]
      %3904 = vst [vmem:[%s3903] ss:$2 sm:$0xff] %v3808
      %s3905 = scalar_lea.vmem %s3695, 273 [#allocation2]
      %3906 = vst [vmem:[%s3905] ss:$2 sm:$0xff] %v3810
      %s3907 = scalar_lea.vmem %s3695, 321 [#allocation2]
      %3908 = vst [vmem:[%s3907] ss:$2 sm:$0xff] %v3812
      %s3909 = scalar_lea.vmem %s3695, 337 [#allocation2]
      %3910 = vst [vmem:[%s3909] ss:$2 sm:$0xff] %v3814
      %s3911 = scalar_lea.vmem %s3695, 385 [#allocation2]
      %3912 = vst [vmem:[%s3911] ss:$2 sm:$0xff] %v3816
      %s3913 = scalar_lea.vmem %s3695, 401 [#allocation2]
      %3914 = vst [vmem:[%s3913] ss:$2 sm:$0xff] %v3818
      %s3915 = scalar_lea.vmem %s3695, 449 [#allocation2]
      %3916 = vst [vmem:[%s3915] ss:$2 sm:$0xff] %v3820
      %s3917 = scalar_lea.vmem %s3695, 465 [#allocation2]
      %3918 = vst [vmem:[%s3917] ss:$2 sm:$0xff] %v3822
      %s3919 = scalar_lea.vmem %s3695, 513 [#allocation2]
      %3920 = vst [vmem:[%s3919] ss:$2 sm:$0xff] %v3824
      %s3921 = scalar_lea.vmem %s3695, 529 [#allocation2]
      %3922 = vst [vmem:[%s3921] ss:$2 sm:$0xff] %v3826
      %s3923 = scalar_lea.vmem %s3695, 577 [#allocation2]
      %3924 = vst [vmem:[%s3923] ss:$2 sm:$0xff] %v3828
      %s3925 = scalar_lea.vmem %s3695, 593 [#allocation2]
      %3926 = vst [vmem:[%s3925] ss:$2 sm:$0xff] %v3830
      %s3927 = scalar_lea.vmem %s3695, 641 [#allocation2]
      %3928 = vst [vmem:[%s3927] ss:$2 sm:$0xff] %v3832
      %s3929 = scalar_lea.vmem %s3695, 657 [#allocation2]
      %3930 = vst [vmem:[%s3929] ss:$2 sm:$0xff] %v3834
      %s3931 = scalar_lea.vmem %s3695, 705 [#allocation2]
      %3932 = vst [vmem:[%s3931] ss:$2 sm:$0xff] %v3836
      %s3933 = scalar_lea.vmem %s3695, 721 [#allocation2]
      %3934 = vst [vmem:[%s3933] ss:$2 sm:$0xff] %v3838
      %s3935 = scalar_lea.vmem %s3695, 769 [#allocation2]
      %3936 = vst [vmem:[%s3935] ss:$2 sm:$0xff] %v3840
      %s3937 = scalar_lea.vmem %s3695, 785 [#allocation2]
      %3938 = vst [vmem:[%s3937] ss:$2 sm:$0xff] %v3842
      %s3939 = scalar_lea.vmem %s3695, 833 [#allocation2]
      %3940 = vst [vmem:[%s3939] ss:$2 sm:$0xff] %v3844
      %s3941 = scalar_lea.vmem %s3695, 849 [#allocation2]
      %3942 = vst [vmem:[%s3941] ss:$2 sm:$0xff] %v3846
      %s3943 = scalar_lea.vmem %s3695, 897 [#allocation2]
      %3944 = vst [vmem:[%s3943] ss:$2 sm:$0xff] %v3848
      %s3945 = scalar_lea.vmem %s3695, 913 [#allocation2]
      %3946 = vst [vmem:[%s3945] ss:$2 sm:$0xff] %v3850
      %s3947 = scalar_lea.vmem %s3695, 961 [#allocation2]
      %3948 = vst [vmem:[%s3947] ss:$2 sm:$0xff] %v3852
      %s3949 = scalar_lea.vmem %s3695, 977 [#allocation2]
      %3950 = vst [vmem:[%s3949] ss:$2 sm:$0xff] %v3854
      %v3951 = vld [vmem:[#allocation2] sm:$0xff]
      %v3952 = vld [vmem:[#allocation2 + $0x8] sm:$0xff]
      %v3953 = vld [vmem:[#allocation2 + $0x10] sm:$0xff]
      %v3954 = vld [vmem:[#allocation2 + $0x18] sm:$0xff]
      %v3955 = vld [vmem:[#allocation2 + $0x20] sm:$0xff]
      %v3956 = vld [vmem:[#allocation2 + $0x28] sm:$0xff]
      %v3957 = vld [vmem:[#allocation2 + $0x30] sm:$0xff]
      %v3958 = vld [vmem:[#allocation2 + $0x38] sm:$0xff]
      %v3959 = vld [vmem:[#allocation2 + $0x40] sm:$0xff]
      %v3960 = vld [vmem:[#allocation2 + $0x48] sm:$0xff]
      %v3961 = vld [vmem:[#allocation2 + $0x50] sm:$0xff]
      %v3962 = vld [vmem:[#allocation2 + $0x58] sm:$0xff]
      %v3963 = vld [vmem:[#allocation2 + $0x60] sm:$0xff]
      %v3964 = vld [vmem:[#allocation2 + $0x68] sm:$0xff]
      %v3965 = vld [vmem:[#allocation2 + $0x70] sm:$0xff]
      %v3966 = vld [vmem:[#allocation2 + $0x78] sm:$0xff]
      %v3967 = vld [vmem:[#allocation2 + $0x80] sm:$0xff]
      %v3968 = vld [vmem:[#allocation2 + $0x88] sm:$0xff]
      %v3969 = vld [vmem:[#allocation2 + $0x90] sm:$0xff]
      %v3970 = vld [vmem:[#allocation2 + $0x98] sm:$0xff]
      %v3971 = vld [vmem:[#allocation2 + $0xa0] sm:$0xff]
      %v3972 = vld [vmem:[#allocation2 + $0xa8] sm:$0xff]
      %v3973 = vld [vmem:[#allocation2 + $0xb0] sm:$0xff]
      %v3974 = vld [vmem:[#allocation2 + $0xb8] sm:$0xff]
      %v3975 = vld [vmem:[#allocation2 + $0xc0] sm:$0xff]
      %v3976 = vld [vmem:[#allocation2 + $0xc8] sm:$0xff]
      %v3977 = vld [vmem:[#allocation2 + $0xd0] sm:$0xff]
      %v3978 = vld [vmem:[#allocation2 + $0xd8] sm:$0xff]
      %v3979 = vld [vmem:[#allocation2 + $0xe0] sm:$0xff]
      %v3980 = vld [vmem:[#allocation2 + $0xe8] sm:$0xff]
      %v3981 = vld [vmem:[#allocation2 + $0xf0] sm:$0xff]
      %v3982 = vld [vmem:[#allocation2 + $0xf8] sm:$0xff]
      %v3983 = vld [vmem:[#allocation2 + $0x100] sm:$0xff]
      %v3984 = vld [vmem:[#allocation2 + $0x108] sm:$0xff]
      %v3985 = vld [vmem:[#allocation2 + $0x110] sm:$0xff]
      %v3986 = vld [vmem:[#allocation2 + $0x118] sm:$0xff]
      %v3987 = vld [vmem:[#allocation2 + $0x120] sm:$0xff]
      %v3988 = vld [vmem:[#allocation2 + $0x128] sm:$0xff]
      %v3989 = vld [vmem:[#allocation2 + $0x130] sm:$0xff]
      %v3990 = vld [vmem:[#allocation2 + $0x138] sm:$0xff]
      %v3991 = vld [vmem:[#allocation2 + $0x140] sm:$0xff]
      %v3992 = vld [vmem:[#allocation2 + $0x148] sm:$0xff]
      %v3993 = vld [vmem:[#allocation2 + $0x150] sm:$0xff]
      %v3994 = vld [vmem:[#allocation2 + $0x158] sm:$0xff]
      %v3995 = vld [vmem:[#allocation2 + $0x160] sm:$0xff]
      %v3996 = vld [vmem:[#allocation2 + $0x168] sm:$0xff]
      %v3997 = vld [vmem:[#allocation2 + $0x170] sm:$0xff]
      %v3998 = vld [vmem:[#allocation2 + $0x178] sm:$0xff]
      %v3999 = vld [vmem:[#allocation2 + $0x180] sm:$0xff]
      %v4000 = vld [vmem:[#allocation2 + $0x188] sm:$0xff]
      %v4001 = vld [vmem:[#allocation2 + $0x190] sm:$0xff]
      %v4002 = vld [vmem:[#allocation2 + $0x198] sm:$0xff]
      %v4003 = vld [vmem:[#allocation2 + $0x1a0] sm:$0xff]
      %v4004 = vld [vmem:[#allocation2 + $0x1a8] sm:$0xff]
      %v4005 = vld [vmem:[#allocation2 + $0x1b0] sm:$0xff]
      %v4006 = vld [vmem:[#allocation2 + $0x1b8] sm:$0xff]
      %v4007 = vld [vmem:[#allocation2 + $0x1c0] sm:$0xff]
      %v4008 = vld [vmem:[#allocation2 + $0x1c8] sm:$0xff]
      %v4009 = vld [vmem:[#allocation2 + $0x1d0] sm:$0xff]
      %v4010 = vld [vmem:[#allocation2 + $0x1d8] sm:$0xff]
      %v4011 = vld [vmem:[#allocation2 + $0x1e0] sm:$0xff]
      %v4012 = vld [vmem:[#allocation2 + $0x1e8] sm:$0xff]
      %v4013 = vld [vmem:[#allocation2 + $0x1f0] sm:$0xff]
      %v4014 = vld [vmem:[#allocation2 + $0x1f8] sm:$0xff]
      %v4015 = vld [vmem:[#allocation2 + $0x200] sm:$0xff]
      %v4016 = vld [vmem:[#allocation2 + $0x208] sm:$0xff]
      %v4017 = vld [vmem:[#allocation2 + $0x210] sm:$0xff]
      %v4018 = vld [vmem:[#allocation2 + $0x218] sm:$0xff]
      %v4019 = vld [vmem:[#allocation2 + $0x220] sm:$0xff]
      %v4020 = vld [vmem:[#allocation2 + $0x228] sm:$0xff]
      %v4021 = vld [vmem:[#allocation2 + $0x230] sm:$0xff]
      %v4022 = vld [vmem:[#allocation2 + $0x238] sm:$0xff]
      %v4023 = vld [vmem:[#allocation2 + $0x240] sm:$0xff]
      %v4024 = vld [vmem:[#allocation2 + $0x248] sm:$0xff]
      %v4025 = vld [vmem:[#allocation2 + $0x250] sm:$0xff]
      %v4026 = vld [vmem:[#allocation2 + $0x258] sm:$0xff]
      %v4027 = vld [vmem:[#allocation2 + $0x260] sm:$0xff]
      %v4028 = vld [vmem:[#allocation2 + $0x268] sm:$0xff]
      %v4029 = vld [vmem:[#allocation2 + $0x270] sm:$0xff]
      %v4030 = vld [vmem:[#allocation2 + $0x278] sm:$0xff]
      %v4031 = vld [vmem:[#allocation2 + $0x280] sm:$0xff]
      %v4032 = vld [vmem:[#allocation2 + $0x288] sm:$0xff]
      %v4033 = vld [vmem:[#allocation2 + $0x290] sm:$0xff]
      %v4034 = vld [vmem:[#allocation2 + $0x298] sm:$0xff]
      %v4035 = vld [vmem:[#allocation2 + $0x2a0] sm:$0xff]
      %v4036 = vld [vmem:[#allocation2 + $0x2a8] sm:$0xff]
      %v4037 = vld [vmem:[#allocation2 + $0x2b0] sm:$0xff]
      %v4038 = vld [vmem:[#allocation2 + $0x2b8] sm:$0xff]
      %v4039 = vld [vmem:[#allocation2 + $0x2c0] sm:$0xff]
      %v4040 = vld [vmem:[#allocation2 + $0x2c8] sm:$0xff]
      %v4041 = vld [vmem:[#allocation2 + $0x2d0] sm:$0xff]
      %v4042 = vld [vmem:[#allocation2 + $0x2d8] sm:$0xff]
      %v4043 = vld [vmem:[#allocation2 + $0x2e0] sm:$0xff]
      %v4044 = vld [vmem:[#allocation2 + $0x2e8] sm:$0xff]
      %v4045 = vld [vmem:[#allocation2 + $0x2f0] sm:$0xff]
      %v4046 = vld [vmem:[#allocation2 + $0x2f8] sm:$0xff]
      %v4047 = vld [vmem:[#allocation2 + $0x300] sm:$0xff]
      %v4048 = vld [vmem:[#allocation2 + $0x308] sm:$0xff]
      %v4049 = vld [vmem:[#allocation2 + $0x310] sm:$0xff]
      %v4050 = vld [vmem:[#allocation2 + $0x318] sm:$0xff]
      %v4051 = vld [vmem:[#allocation2 + $0x320] sm:$0xff]
      %v4052 = vld [vmem:[#allocation2 + $0x328] sm:$0xff]
      %v4053 = vld [vmem:[#allocation2 + $0x330] sm:$0xff]
      %v4054 = vld [vmem:[#allocation2 + $0x338] sm:$0xff]
      %v4055 = vld [vmem:[#allocation2 + $0x340] sm:$0xff]
      %v4056 = vld [vmem:[#allocation2 + $0x348] sm:$0xff]
      %v4057 = vld [vmem:[#allocation2 + $0x350] sm:$0xff]
      %v4058 = vld [vmem:[#allocation2 + $0x358] sm:$0xff]
      %v4059 = vld [vmem:[#allocation2 + $0x360] sm:$0xff]
      %v4060 = vld [vmem:[#allocation2 + $0x368] sm:$0xff]
      %v4061 = vld [vmem:[#allocation2 + $0x370] sm:$0xff]
      %v4062 = vld [vmem:[#allocation2 + $0x378] sm:$0xff]
      %v4063 = vld [vmem:[#allocation2 + $0x380] sm:$0xff]
      %v4064 = vld [vmem:[#allocation2 + $0x388] sm:$0xff]
      %v4065 = vld [vmem:[#allocation2 + $0x390] sm:$0xff]
      %v4066 = vld [vmem:[#allocation2 + $0x398] sm:$0xff]
      %v4067 = vld [vmem:[#allocation2 + $0x3a0] sm:$0xff]
      %v4068 = vld [vmem:[#allocation2 + $0x3a8] sm:$0xff]
      %v4069 = vld [vmem:[#allocation2 + $0x3b0] sm:$0xff]
      %v4070 = vld [vmem:[#allocation2 + $0x3b8] sm:$0xff]
      %v4071 = vld [vmem:[#allocation2 + $0x3c0] sm:$0xff]
      %v4072 = vld [vmem:[#allocation2 + $0x3c8] sm:$0xff]
      %v4073 = vld [vmem:[#allocation2 + $0x3d0] sm:$0xff]
      %v4074 = vld [vmem:[#allocation2 + $0x3d8] sm:$0xff]
      %v4075 = vld [vmem:[#allocation2 + $0x3e0] sm:$0xff]
      %v4076 = vld [vmem:[#allocation2 + $0x3e8] sm:$0xff]
      %v4077 = vld [vmem:[#allocation2 + $0x3f0] sm:$0xff]
      %v4078 = vld [vmem:[#allocation2 + $0x3f8] sm:$0xff]
      %v4079 = vmul.f32 %v3955, 0.125
      %v4080 = vmul.f32 %v3956, 0.125
      %v4081 = vmul.f32 %v3957, 0.125
      %v4082 = vmul.f32 %v3958, 0.125
      %v4083 = vmul.f32 %v3951, 0.125
      %v4084 = vmul.f32 %v3952, 0.125
      %v4085 = vmul.f32 %v3953, 0.125
      %v4086 = vmul.f32 %v3954, 0.125
      %v4087 = vmul.f32 %v3959, 0.125
      %v4088 = vmul.f32 %v3960, 0.125
      %v4089 = vmul.f32 %v3961, 0.125
      %v4090 = vmul.f32 %v3962, 0.125
      %v4091 = vmul.f32 %v3963, 0.125
      %v4092 = vmul.f32 %v3964, 0.125
      %v4093 = vmul.f32 %v3965, 0.125
      %v4094 = vmul.f32 %v3966, 0.125
      %v4095 = vmul.f32 %v3967, 0.125
      %v4096 = vmul.f32 %v3968, 0.125
      %v4097 = vmul.f32 %v3969, 0.125
      %v4098 = vmul.f32 %v3970, 0.125
      %v4099 = vmul.f32 %v3971, 0.125
      %v4100 = vmul.f32 %v3972, 0.125
      %v4101 = vmul.f32 %v3973, 0.125
      %v4102 = vmul.f32 %v3974, 0.125
      %v4103 = vmul.f32 %v3975, 0.125
      %v4104 = vmul.f32 %v3976, 0.125
      %v4105 = vmul.f32 %v3977, 0.125
      %v4106 = vmul.f32 %v3978, 0.125
      %v4107 = vmul.f32 %v3979, 0.125
      %v4108 = vmul.f32 %v3980, 0.125
      %v4109 = vmul.f32 %v3981, 0.125
      %v4110 = vmul.f32 %v3982, 0.125
      %v4111 = vmul.f32 %v3983, 0.125
      %v4112 = vmul.f32 %v3984, 0.125
      %v4113 = vmul.f32 %v3985, 0.125
      %v4114 = vmul.f32 %v3986, 0.125
      %v4115 = vmul.f32 %v3987, 0.125
      %v4116 = vmul.f32 %v3988, 0.125
      %v4117 = vmul.f32 %v3989, 0.125
      %v4118 = vmul.f32 %v3990, 0.125
      %v4119 = vmul.f32 %v3991, 0.125
      %v4120 = vmul.f32 %v3992, 0.125
      %v4121 = vmul.f32 %v3993, 0.125
      %v4122 = vmul.f32 %v3994, 0.125
      %v4123 = vmul.f32 %v3995, 0.125
      %v4124 = vmul.f32 %v3996, 0.125
      %v4125 = vmul.f32 %v3997, 0.125
      %v4126 = vmul.f32 %v3998, 0.125
      %v4127 = vmul.f32 %v3999, 0.125
      %v4128 = vmul.f32 %v4000, 0.125
      %v4129 = vmul.f32 %v4001, 0.125
      %v4130 = vmul.f32 %v4002, 0.125
      %v4131 = vmul.f32 %v4003, 0.125
      %v4132 = vmul.f32 %v4004, 0.125
      %v4133 = vmul.f32 %v4005, 0.125
      %v4134 = vmul.f32 %v4006, 0.125
      %v4135 = vmul.f32 %v4007, 0.125
      %v4136 = vmul.f32 %v4008, 0.125
      %v4137 = vmul.f32 %v4009, 0.125
      %v4138 = vmul.f32 %v4010, 0.125
      %v4139 = vmul.f32 %v4011, 0.125
      %v4140 = vmul.f32 %v4012, 0.125
      %v4141 = vmul.f32 %v4013, 0.125
      %v4142 = vmul.f32 %v4014, 0.125
      %v4143 = vmul.f32 %v4015, 0.125
      %v4144 = vmul.f32 %v4016, 0.125
      %v4145 = vmul.f32 %v4017, 0.125
      %v4146 = vmul.f32 %v4018, 0.125
      %v4147 = vmul.f32 %v4019, 0.125
      %v4148 = vmul.f32 %v4020, 0.125
      %v4149 = vmul.f32 %v4021, 0.125
      %v4150 = vmul.f32 %v4022, 0.125
      %v4151 = vmul.f32 %v4023, 0.125
      %v4152 = vmul.f32 %v4024, 0.125
      %v4153 = vmul.f32 %v4025, 0.125
      %v4154 = vmul.f32 %v4026, 0.125
      %v4155 = vmul.f32 %v4027, 0.125
      %v4156 = vmul.f32 %v4028, 0.125
      %v4157 = vmul.f32 %v4029, 0.125
      %v4158 = vmul.f32 %v4030, 0.125
      %v4159 = vmul.f32 %v4031, 0.125
      %v4160 = vmul.f32 %v4032, 0.125
      %v4161 = vmul.f32 %v4033, 0.125
      %v4162 = vmul.f32 %v4034, 0.125
      %v4163 = vmul.f32 %v4035, 0.125
      %v4164 = vmul.f32 %v4036, 0.125
      %v4165 = vmul.f32 %v4037, 0.125
      %v4166 = vmul.f32 %v4038, 0.125
      %v4167 = vmul.f32 %v4039, 0.125
      %v4168 = vmul.f32 %v4040, 0.125
      %v4169 = vmul.f32 %v4041, 0.125
      %v4170 = vmul.f32 %v4042, 0.125
      %v4171 = vmul.f32 %v4043, 0.125
      %v4172 = vmul.f32 %v4044, 0.125
      %v4173 = vmul.f32 %v4045, 0.125
      %v4174 = vmul.f32 %v4046, 0.125
      %v4175 = vmul.f32 %v4047, 0.125
      %v4176 = vmul.f32 %v4048, 0.125
      %v4177 = vmul.f32 %v4049, 0.125
      %v4178 = vmul.f32 %v4050, 0.125
      %v4179 = vmul.f32 %v4051, 0.125
      %v4180 = vmul.f32 %v4052, 0.125
      %v4181 = vmul.f32 %v4053, 0.125
      %v4182 = vmul.f32 %v4054, 0.125
      %v4183 = vmul.f32 %v4055, 0.125
      %v4184 = vmul.f32 %v4056, 0.125
      %v4185 = vmul.f32 %v4057, 0.125
      %v4186 = vmul.f32 %v4058, 0.125
      %v4187 = vmul.f32 %v4059, 0.125
      %v4188 = vmul.f32 %v4060, 0.125
      %v4189 = vmul.f32 %v4061, 0.125
      %v4190 = vmul.f32 %v4062, 0.125
      %v4191 = vmul.f32 %v4063, 0.125
      %v4192 = vmul.f32 %v4064, 0.125
      %v4193 = vmul.f32 %v4065, 0.125
      %v4194 = vmul.f32 %v4066, 0.125
      %v4195 = vmul.f32 %v4067, 0.125
      %v4196 = vmul.f32 %v4068, 0.125
      %v4197 = vmul.f32 %v4069, 0.125
      %v4198 = vmul.f32 %v4070, 0.125
      %v4199 = vmul.f32 %v4071, 0.125
      %v4200 = vmul.f32 %v4072, 0.125
      %v4201 = vmul.f32 %v4073, 0.125
      %v4202 = vmul.f32 %v4074, 0.125
      %v4203 = vmul.f32 %v3951, 0.375
      %v4204 = vmul.f32 %v3952, 0.375
      %v4205 = vmul.f32 %v3953, 0.375
      %v4206 = vmul.f32 %v3954, 0.375
      %v4207 = vmul.f32 %v3955, 0.375
      %v4208 = vmul.f32 %v3956, 0.375
      %v4209 = vmul.f32 %v3957, 0.375
      %v4210 = vmul.f32 %v3958, 0.375
      %v4211 = vmul.f32 %v3959, 0.375
      %v4212 = vmul.f32 %v3960, 0.375
      %v4213 = vmul.f32 %v3961, 0.375
      %v4214 = vmul.f32 %v3962, 0.375
      %v4215 = vmul.f32 %v3963, 0.375
      %v4216 = vmul.f32 %v3964, 0.375
      %v4217 = vmul.f32 %v3965, 0.375
      %v4218 = vmul.f32 %v3966, 0.375
      %v4219 = vmul.f32 %v3967, 0.375
      %v4220 = vmul.f32 %v3968, 0.375
      %v4221 = vmul.f32 %v3969, 0.375
      %v4222 = vmul.f32 %v3970, 0.375
      %v4223 = vmul.f32 %v3971, 0.375
      %v4224 = vmul.f32 %v3972, 0.375
      %v4225 = vmul.f32 %v3973, 0.375
      %v4226 = vmul.f32 %v3974, 0.375
      %v4227 = vmul.f32 %v3975, 0.375
      %v4228 = vmul.f32 %v3976, 0.375
      %v4229 = vmul.f32 %v3977, 0.375
      %v4230 = vmul.f32 %v3978, 0.375
      %v4231 = vmul.f32 %v3979, 0.375
      %v4232 = vmul.f32 %v3980, 0.375
      %v4233 = vmul.f32 %v3981, 0.375
      %v4234 = vmul.f32 %v3982, 0.375
      %v4235 = vmul.f32 %v3983, 0.375
      %v4236 = vmul.f32 %v3984, 0.375
      %v4237 = vmul.f32 %v3985, 0.375
      %v4238 = vmul.f32 %v3986, 0.375
      %v4239 = vmul.f32 %v3987, 0.375
      %v4240 = vmul.f32 %v3988, 0.375
      %v4241 = vmul.f32 %v3989, 0.375
      %v4242 = vmul.f32 %v3990, 0.375
      %v4243 = vmul.f32 %v3991, 0.375
      %v4244 = vmul.f32 %v3992, 0.375
      %v4245 = vmul.f32 %v3993, 0.375
      %v4246 = vmul.f32 %v3994, 0.375
      %v4247 = vmul.f32 %v3995, 0.375
      %v4248 = vmul.f32 %v3996, 0.375
      %v4249 = vmul.f32 %v3997, 0.375
      %v4250 = vmul.f32 %v3998, 0.375
      %v4251 = vmul.f32 %v3999, 0.375
      %v4252 = vmul.f32 %v4000, 0.375
      %v4253 = vmul.f32 %v4001, 0.375
      %v4254 = vmul.f32 %v4002, 0.375
      %v4255 = vmul.f32 %v4003, 0.375
      %v4256 = vmul.f32 %v4004, 0.375
      %v4257 = vmul.f32 %v4005, 0.375
      %v4258 = vmul.f32 %v4006, 0.375
      %v4259 = vmul.f32 %v4007, 0.375
      %v4260 = vmul.f32 %v4008, 0.375
      %v4261 = vmul.f32 %v4009, 0.375
      %v4262 = vmul.f32 %v4010, 0.375
      %v4263 = vmul.f32 %v4011, 0.375
      %v4264 = vmul.f32 %v4012, 0.375
      %v4265 = vmul.f32 %v4013, 0.375
      %v4266 = vmul.f32 %v4014, 0.375
      %v4267 = vmul.f32 %v4015, 0.375
      %v4268 = vmul.f32 %v4016, 0.375
      %v4269 = vmul.f32 %v4017, 0.375
      %v4270 = vmul.f32 %v4018, 0.375
      %v4271 = vmul.f32 %v4019, 0.375
      %v4272 = vmul.f32 %v4020, 0.375
      %v4273 = vmul.f32 %v4021, 0.375
      %v4274 = vmul.f32 %v4022, 0.375
      %v4275 = vmul.f32 %v4023, 0.375
      %v4276 = vmul.f32 %v4024, 0.375
      %v4277 = vmul.f32 %v4025, 0.375
      %v4278 = vmul.f32 %v4026, 0.375
      %v4279 = vmul.f32 %v4027, 0.375
      %v4280 = vmul.f32 %v4028, 0.375
      %v4281 = vmul.f32 %v4029, 0.375
      %v4282 = vmul.f32 %v4030, 0.375
      %v4283 = vmul.f32 %v4031, 0.375
      %v4284 = vmul.f32 %v4032, 0.375
      %v4285 = vmul.f32 %v4033, 0.375
      %v4286 = vmul.f32 %v4034, 0.375
      %v4287 = vmul.f32 %v4035, 0.375
      %v4288 = vmul.f32 %v4036, 0.375
      %v4289 = vmul.f32 %v4037, 0.375
      %v4290 = vmul.f32 %v4038, 0.375
      %v4291 = vmul.f32 %v4039, 0.375
      %v4292 = vmul.f32 %v4040, 0.375
      %v4293 = vmul.f32 %v4041, 0.375
      %v4294 = vmul.f32 %v4042, 0.375
      %v4295 = vmul.f32 %v4043, 0.375
      %v4296 = vmul.f32 %v4044, 0.375
      %v4297 = vmul.f32 %v4045, 0.375
      %v4298 = vmul.f32 %v4046, 0.375
      %v4299 = vmul.f32 %v4047, 0.375
      %v4300 = vmul.f32 %v4048, 0.375
      %v4301 = vmul.f32 %v4049, 0.375
      %v4302 = vmul.f32 %v4050, 0.375
      %v4303 = vmul.f32 %v4051, 0.375
      %v4304 = vmul.f32 %v4052, 0.375
      %v4305 = vmul.f32 %v4053, 0.375
      %v4306 = vmul.f32 %v4054, 0.375
      %v4307 = vmul.f32 %v4055, 0.375
      %v4308 = vmul.f32 %v4056, 0.375
      %v4309 = vmul.f32 %v4057, 0.375
      %v4310 = vmul.f32 %v4058, 0.375
      %v4311 = vmul.f32 %v4059, 0.375
      %v4312 = vmul.f32 %v4060, 0.375
      %v4313 = vmul.f32 %v4061, 0.375
      %v4314 = vmul.f32 %v4062, 0.375
      %v4315 = vmul.f32 %v4063, 0.375
      %v4316 = vmul.f32 %v4064, 0.375
      %v4317 = vmul.f32 %v4065, 0.375
      %v4318 = vmul.f32 %v4066, 0.375
      %v4319 = vmul.f32 %v4067, 0.375
      %v4320 = vmul.f32 %v4068, 0.375
      %v4321 = vmul.f32 %v4069, 0.375
      %v4322 = vmul.f32 %v4070, 0.375
      %v4323 = vmul.f32 %v4071, 0.375
      %v4324 = vmul.f32 %v4072, 0.375
      %v4325 = vmul.f32 %v4073, 0.375
      %v4326 = vmul.f32 %v4074, 0.375
      %v4327 = vmul.f32 %v4075, 0.375
      %v4328 = vmul.f32 %v4076, 0.375
      %v4329 = vmul.f32 %v4077, 0.375
      %v4330 = vmul.f32 %v4078, 0.375
      %v4331 = vadd.f32 %v4079, %v4203
      %v4332 = vadd.f32 %v4080, %v4204
      %v4333 = vadd.f32 %v4081, %v4205
      %v4334 = vadd.f32 %v4082, %v4206
      %v4335 = vadd.f32 %v4083, %v4207
      %v4336 = vadd.f32 %v4084, %v4208
      %v4337 = vadd.f32 %v4085, %v4209
      %v4338 = vadd.f32 %v4086, %v4210
      %v4339 = vadd.f32 %v4079, %v4211
      %v4340 = vadd.f32 %v4080, %v4212
      %v4341 = vadd.f32 %v4081, %v4213
      %v4342 = vadd.f32 %v4082, %v4214
      %v4343 = vadd.f32 %v4087, %v4215
      %v4344 = vadd.f32 %v4088, %v4216
      %v4345 = vadd.f32 %v4089, %v4217
      %v4346 = vadd.f32 %v4090, %v4218
      %v4347 = vadd.f32 %v4091, %v4219
      %v4348 = vadd.f32 %v4092, %v4220
      %v4349 = vadd.f32 %v4093, %v4221
      %v4350 = vadd.f32 %v4094, %v4222
      %v4351 = vadd.f32 %v4095, %v4223
      %v4352 = vadd.f32 %v4096, %v4224
      %v4353 = vadd.f32 %v4097, %v4225
      %v4354 = vadd.f32 %v4098, %v4226
      %v4355 = vadd.f32 %v4099, %v4227
      %v4356 = vadd.f32 %v4100, %v4228
      %v4357 = vadd.f32 %v4101, %v4229
      %v4358 = vadd.f32 %v4102, %v4230
      %v4359 = vadd.f32 %v4103, %v4231
      %v4360 = vadd.f32 %v4104, %v4232
      %v4361 = vadd.f32 %v4105, %v4233
      %v4362 = vadd.f32 %v4106, %v4234
      %v4363 = vadd.f32 %v4107, %v4235
      %v4364 = vadd.f32 %v4108, %v4236
      %v4365 = vadd.f32 %v4109, %v4237
      %v4366 = vadd.f32 %v4110, %v4238
      %v4367 = vadd.f32 %v4111, %v4239
      %v4368 = vadd.f32 %v4112, %v4240
      %v4369 = vadd.f32 %v4113, %v4241
      %v4370 = vadd.f32 %v4114, %v4242
      %v4371 = vadd.f32 %v4115, %v4243
      %v4372 = vadd.f32 %v4116, %v4244
      %v4373 = vadd.f32 %v4117, %v4245
      %v4374 = vadd.f32 %v4118, %v4246
      %v4375 = vadd.f32 %v4119, %v4247
      %v4376 = vadd.f32 %v4120, %v4248
      %v4377 = vadd.f32 %v4121, %v4249
      %v4378 = vadd.f32 %v4122, %v4250
      %v4379 = vadd.f32 %v4123, %v4251
      %v4380 = vadd.f32 %v4124, %v4252
      %v4381 = vadd.f32 %v4125, %v4253
      %v4382 = vadd.f32 %v4126, %v4254
      %v4383 = vadd.f32 %v4127, %v4255
      %v4384 = vadd.f32 %v4128, %v4256
      %v4385 = vadd.f32 %v4129, %v4257
      %v4386 = vadd.f32 %v4130, %v4258
      %v4387 = vadd.f32 %v4131, %v4259
      %v4388 = vadd.f32 %v4132, %v4260
      %v4389 = vadd.f32 %v4133, %v4261
      %v4390 = vadd.f32 %v4134, %v4262
      %v4391 = vadd.f32 %v4135, %v4263
      %v4392 = vadd.f32 %v4136, %v4264
      %v4393 = vadd.f32 %v4137, %v4265
      %v4394 = vadd.f32 %v4138, %v4266
      %v4395 = vadd.f32 %v4139, %v4267
      %v4396 = vadd.f32 %v4140, %v4268
      %v4397 = vadd.f32 %v4141, %v4269
      %v4398 = vadd.f32 %v4142, %v4270
      %v4399 = vadd.f32 %v4143, %v4271
      %v4400 = vadd.f32 %v4144, %v4272
      %v4401 = vadd.f32 %v4145, %v4273
      %v4402 = vadd.f32 %v4146, %v4274
      %v4403 = vadd.f32 %v4147, %v4275
      %v4404 = vadd.f32 %v4148, %v4276
      %v4405 = vadd.f32 %v4149, %v4277
      %v4406 = vadd.f32 %v4150, %v4278
      %v4407 = vadd.f32 %v4151, %v4279
      %v4408 = vadd.f32 %v4152, %v4280
      %v4409 = vadd.f32 %v4153, %v4281
      %v4410 = vadd.f32 %v4154, %v4282
      %v4411 = vadd.f32 %v4155, %v4283
      %v4412 = vadd.f32 %v4156, %v4284
      %v4413 = vadd.f32 %v4157, %v4285
      %v4414 = vadd.f32 %v4158, %v4286
      %v4415 = vadd.f32 %v4159, %v4287
      %v4416 = vadd.f32 %v4160, %v4288
      %v4417 = vadd.f32 %v4161, %v4289
      %v4418 = vadd.f32 %v4162, %v4290
      %v4419 = vadd.f32 %v4163, %v4291
      %v4420 = vadd.f32 %v4164, %v4292
      %v4421 = vadd.f32 %v4165, %v4293
      %v4422 = vadd.f32 %v4166, %v4294
      %v4423 = vadd.f32 %v4167, %v4295
      %v4424 = vadd.f32 %v4168, %v4296
      %v4425 = vadd.f32 %v4169, %v4297
      %v4426 = vadd.f32 %v4170, %v4298
      %v4427 = vadd.f32 %v4171, %v4299
      %v4428 = vadd.f32 %v4172, %v4300
      %v4429 = vadd.f32 %v4173, %v4301
      %v4430 = vadd.f32 %v4174, %v4302
      %v4431 = vadd.f32 %v4175, %v4303
      %v4432 = vadd.f32 %v4176, %v4304
      %v4433 = vadd.f32 %v4177, %v4305
      %v4434 = vadd.f32 %v4178, %v4306
      %v4435 = vadd.f32 %v4179, %v4307
      %v4436 = vadd.f32 %v4180, %v4308
      %v4437 = vadd.f32 %v4181, %v4309
      %v4438 = vadd.f32 %v4182, %v4310
      %v4439 = vadd.f32 %v4183, %v4311
      %v4440 = vadd.f32 %v4184, %v4312
      %v4441 = vadd.f32 %v4185, %v4313
      %v4442 = vadd.f32 %v4186, %v4314
      %v4443 = vadd.f32 %v4187, %v4315
      %v4444 = vadd.f32 %v4188, %v4316
      %v4445 = vadd.f32 %v4189, %v4317
      %v4446 = vadd.f32 %v4190, %v4318
      %v4447 = vadd.f32 %v4191, %v4319
      %v4448 = vadd.f32 %v4192, %v4320
      %v4449 = vadd.f32 %v4193, %v4321
      %v4450 = vadd.f32 %v4194, %v4322
      %v4451 = vadd.f32 %v4195, %v4323
      %v4452 = vadd.f32 %v4196, %v4324
      %v4453 = vadd.f32 %v4197, %v4325
      %v4454 = vadd.f32 %v4198, %v4326
      %v4455 = vadd.f32 %v4199, %v4327
      %v4456 = vadd.f32 %v4200, %v4328
      %v4457 = vadd.f32 %v4201, %v4329
      %v4458 = vadd.f32 %v4202, %v4330
      %v4459 = vadd.f32 %v4331, %v4207
      %v4460 = vadd.f32 %v4332, %v4208
      %v4461 = vadd.f32 %v4333, %v4209
      %v4462 = vadd.f32 %v4334, %v4210
      %v4463 = vadd.f32 %v4335, %v4211
      %v4464 = vadd.f32 %v4336, %v4212
      %v4465 = vadd.f32 %v4337, %v4213
      %v4466 = vadd.f32 %v4338, %v4214
      %v4467 = vadd.f32 %v4339, %v4215
      %v4468 = vadd.f32 %v4340, %v4216
      %v4469 = vadd.f32 %v4341, %v4217
      %v4470 = vadd.f32 %v4342, %v4218
      %v4471 = vadd.f32 %v4343, %v4219
      %v4472 = vadd.f32 %v4344, %v4220
      %v4473 = vadd.f32 %v4345, %v4221
      %v4474 = vadd.f32 %v4346, %v4222
      %v4475 = vadd.f32 %v4347, %v4223
      %v4476 = vadd.f32 %v4348, %v4224
      %v4477 = vadd.f32 %v4349, %v4225
      %v4478 = vadd.f32 %v4350, %v4226
      %v4479 = vadd.f32 %v4351, %v4227
      %v4480 = vadd.f32 %v4352, %v4228
      %v4481 = vadd.f32 %v4353, %v4229
      %v4482 = vadd.f32 %v4354, %v4230
      %v4483 = vadd.f32 %v4355, %v4231
      %v4484 = vadd.f32 %v4356, %v4232
      %v4485 = vadd.f32 %v4357, %v4233
      %v4486 = vadd.f32 %v4358, %v4234
      %v4487 = vadd.f32 %v4359, %v4235
      %v4488 = vadd.f32 %v4360, %v4236
      %v4489 = vadd.f32 %v4361, %v4237
      %v4490 = vadd.f32 %v4362, %v4238
      %v4491 = vadd.f32 %v4363, %v4239
      %v4492 = vadd.f32 %v4364, %v4240
      %v4493 = vadd.f32 %v4365, %v4241
      %v4494 = vadd.f32 %v4366, %v4242
      %v4495 = vadd.f32 %v4367, %v4243
      %v4496 = vadd.f32 %v4368, %v4244
      %v4497 = vadd.f32 %v4369, %v4245
      %v4498 = vadd.f32 %v4370, %v4246
      %v4499 = vadd.f32 %v4371, %v4247
      %v4500 = vadd.f32 %v4372, %v4248
      %v4501 = vadd.f32 %v4373, %v4249
      %v4502 = vadd.f32 %v4374, %v4250
      %v4503 = vadd.f32 %v4375, %v4251
      %v4504 = vadd.f32 %v4376, %v4252
      %v4505 = vadd.f32 %v4377, %v4253
      %v4506 = vadd.f32 %v4378, %v4254
      %v4507 = vadd.f32 %v4379, %v4255
      %v4508 = vadd.f32 %v4380, %v4256
      %v4509 = vadd.f32 %v4381, %v4257
      %v4510 = vadd.f32 %v4382, %v4258
      %v4511 = vadd.f32 %v4383, %v4259
      %v4512 = vadd.f32 %v4384, %v4260
      %v4513 = vadd.f32 %v4385, %v4261
      %v4514 = vadd.f32 %v4386, %v4262
      %v4515 = vadd.f32 %v4387, %v4263
      %v4516 = vadd.f32 %v4388, %v4264
      %v4517 = vadd.f32 %v4389, %v4265
      %v4518 = vadd.f32 %v4390, %v4266
      %v4519 = vadd.f32 %v4391, %v4267
      %v4520 = vadd.f32 %v4392, %v4268
      %v4521 = vadd.f32 %v4393, %v4269
      %v4522 = vadd.f32 %v4394, %v4270
      %v4523 = vadd.f32 %v4395, %v4271
      %v4524 = vadd.f32 %v4396, %v4272
      %v4525 = vadd.f32 %v4397, %v4273
      %v4526 = vadd.f32 %v4398, %v4274
      %v4527 = vadd.f32 %v4399, %v4275
      %v4528 = vadd.f32 %v4400, %v4276
      %v4529 = vadd.f32 %v4401, %v4277
      %v4530 = vadd.f32 %v4402, %v4278
      %v4531 = vadd.f32 %v4403, %v4279
      %v4532 = vadd.f32 %v4404, %v4280
      %v4533 = vadd.f32 %v4405, %v4281
      %v4534 = vadd.f32 %v4406, %v4282
      %v4535 = vadd.f32 %v4407, %v4283
      %v4536 = vadd.f32 %v4408, %v4284
      %v4537 = vadd.f32 %v4409, %v4285
      %v4538 = vadd.f32 %v4410, %v4286
      %v4539 = vadd.f32 %v4411, %v4287
      %v4540 = vadd.f32 %v4412, %v4288
      %v4541 = vadd.f32 %v4413, %v4289
      %v4542 = vadd.f32 %v4414, %v4290
      %v4543 = vadd.f32 %v4415, %v4291
      %v4544 = vadd.f32 %v4416, %v4292
      %v4545 = vadd.f32 %v4417, %v4293
      %v4546 = vadd.f32 %v4418, %v4294
      %v4547 = vadd.f32 %v4419, %v4295
      %v4548 = vadd.f32 %v4420, %v4296
      %v4549 = vadd.f32 %v4421, %v4297
      %v4550 = vadd.f32 %v4422, %v4298
      %v4551 = vadd.f32 %v4423, %v4299
      %v4552 = vadd.f32 %v4424, %v4300
      %v4553 = vadd.f32 %v4425, %v4301
      %v4554 = vadd.f32 %v4426, %v4302
      %v4555 = vadd.f32 %v4427, %v4303
      %v4556 = vadd.f32 %v4428, %v4304
      %v4557 = vadd.f32 %v4429, %v4305
      %v4558 = vadd.f32 %v4430, %v4306
      %v4559 = vadd.f32 %v4431, %v4307
      %v4560 = vadd.f32 %v4432, %v4308
      %v4561 = vadd.f32 %v4433, %v4309
      %v4562 = vadd.f32 %v4434, %v4310
      %v4563 = vadd.f32 %v4435, %v4311
      %v4564 = vadd.f32 %v4436, %v4312
      %v4565 = vadd.f32 %v4437, %v4313
      %v4566 = vadd.f32 %v4438, %v4314
      %v4567 = vadd.f32 %v4439, %v4315
      %v4568 = vadd.f32 %v4440, %v4316
      %v4569 = vadd.f32 %v4441, %v4317
      %v4570 = vadd.f32 %v4442, %v4318
      %v4571 = vadd.f32 %v4443, %v4319
      %v4572 = vadd.f32 %v4444, %v4320
      %v4573 = vadd.f32 %v4445, %v4321
      %v4574 = vadd.f32 %v4446, %v4322
      %v4575 = vadd.f32 %v4447, %v4323
      %v4576 = vadd.f32 %v4448, %v4324
      %v4577 = vadd.f32 %v4449, %v4325
      %v4578 = vadd.f32 %v4450, %v4326
      %v4579 = vadd.f32 %v4451, %v4327
      %v4580 = vadd.f32 %v4452, %v4328
      %v4581 = vadd.f32 %v4453, %v4329
      %v4582 = vadd.f32 %v4454, %v4330
      %v4583 = vadd.f32 %v4455, %v4323
      %v4584 = vadd.f32 %v4456, %v4324
      %v4585 = vadd.f32 %v4457, %v4325
      %v4586 = vadd.f32 %v4458, %v4326
      %v4587 = vmul.f32 %v4075, 0.125
      %v4588 = vmul.f32 %v4076, 0.125
      %v4589 = vmul.f32 %v4077, 0.125
      %v4590 = vmul.f32 %v4078, 0.125
      %v4591 = vadd.f32 %v4459, %v4087
      %v4592 = vadd.f32 %v4460, %v4088
      %v4593 = vadd.f32 %v4461, %v4089
      %v4594 = vadd.f32 %v4462, %v4090
      %v4595 = vadd.f32 %v4463, %v4091
      %v4596 = vadd.f32 %v4464, %v4092
      %v4597 = vadd.f32 %v4465, %v4093
      %v4598 = vadd.f32 %v4466, %v4094
      %v4599 = vadd.f32 %v4467, %v4095
      %v4600 = vadd.f32 %v4468, %v4096
      %v4601 = vadd.f32 %v4469, %v4097
      %v4602 = vadd.f32 %v4470, %v4098
      %v4603 = vadd.f32 %v4471, %v4099
      %v4604 = vadd.f32 %v4472, %v4100
      %v4605 = vadd.f32 %v4473, %v4101
      %v4606 = vadd.f32 %v4474, %v4102
      %v4607 = vadd.f32 %v4475, %v4103
      %v4608 = vadd.f32 %v4476, %v4104
      %v4609 = vadd.f32 %v4477, %v4105
      %v4610 = vadd.f32 %v4478, %v4106
      %v4611 = vadd.f32 %v4479, %v4107
      %v4612 = vadd.f32 %v4480, %v4108
      %v4613 = vadd.f32 %v4481, %v4109
      %v4614 = vadd.f32 %v4482, %v4110
      %v4615 = vadd.f32 %v4483, %v4111
      %v4616 = vadd.f32 %v4484, %v4112
      %v4617 = vadd.f32 %v4485, %v4113
      %v4618 = vadd.f32 %v4486, %v4114
      %v4619 = vadd.f32 %v4487, %v4115
      %v4620 = vadd.f32 %v4488, %v4116
      %v4621 = vadd.f32 %v4489, %v4117
      %v4622 = vadd.f32 %v4490, %v4118
      %v4623 = vadd.f32 %v4491, %v4119
      %v4624 = vadd.f32 %v4492, %v4120
      %v4625 = vadd.f32 %v4493, %v4121
      %v4626 = vadd.f32 %v4494, %v4122
      %v4627 = vadd.f32 %v4495, %v4123
      %v4628 = vadd.f32 %v4496, %v4124
      %v4629 = vadd.f32 %v4497, %v4125
      %v4630 = vadd.f32 %v4498, %v4126
      %v4631 = vadd.f32 %v4499, %v4127
      %v4632 = vadd.f32 %v4500, %v4128
      %v4633 = vadd.f32 %v4501, %v4129
      %v4634 = vadd.f32 %v4502, %v4130
      %v4635 = vadd.f32 %v4503, %v4131
      %v4636 = vadd.f32 %v4504, %v4132
      %v4637 = vadd.f32 %v4505, %v4133
      %v4638 = vadd.f32 %v4506, %v4134
      %v4639 = vadd.f32 %v4507, %v4135
      %v4640 = vadd.f32 %v4508, %v4136
      %v4641 = vadd.f32 %v4509, %v4137
      %v4642 = vadd.f32 %v4510, %v4138
      %v4643 = vadd.f32 %v4511, %v4139
      %v4644 = vadd.f32 %v4512, %v4140
      %v4645 = vadd.f32 %v4513, %v4141
      %v4646 = vadd.f32 %v4514, %v4142
      %v4647 = vadd.f32 %v4515, %v4143
      %v4648 = vadd.f32 %v4516, %v4144
      %v4649 = vadd.f32 %v4517, %v4145
      %v4650 = vadd.f32 %v4518, %v4146
      %v4651 = vadd.f32 %v4519, %v4147
      %v4652 = vadd.f32 %v4520, %v4148
      %v4653 = vadd.f32 %v4521, %v4149
      %v4654 = vadd.f32 %v4522, %v4150
      %v4655 = vadd.f32 %v4523, %v4151
      %v4656 = vadd.f32 %v4524, %v4152
      %v4657 = vadd.f32 %v4525, %v4153
      %v4658 = vadd.f32 %v4526, %v4154
      %v4659 = vadd.f32 %v4527, %v4155
      %v4660 = vadd.f32 %v4528, %v4156
      %v4661 = vadd.f32 %v4529, %v4157
      %v4662 = vadd.f32 %v4530, %v4158
      %v4663 = vadd.f32 %v4531, %v4159
      %v4664 = vadd.f32 %v4532, %v4160
      %v4665 = vadd.f32 %v4533, %v4161
      %v4666 = vadd.f32 %v4534, %v4162
      %v4667 = vadd.f32 %v4535, %v4163
      %v4668 = vadd.f32 %v4536, %v4164
      %v4669 = vadd.f32 %v4537, %v4165
      %v4670 = vadd.f32 %v4538, %v4166
      %v4671 = vadd.f32 %v4539, %v4167
      %v4672 = vadd.f32 %v4540, %v4168
      %v4673 = vadd.f32 %v4541, %v4169
      %v4674 = vadd.f32 %v4542, %v4170
      %v4675 = vadd.f32 %v4543, %v4171
      %v4676 = vadd.f32 %v4544, %v4172
      %v4677 = vadd.f32 %v4545, %v4173
      %v4678 = vadd.f32 %v4546, %v4174
      %v4679 = vadd.f32 %v4547, %v4175
      %v4680 = vadd.f32 %v4548, %v4176
      %v4681 = vadd.f32 %v4549, %v4177
      %v4682 = vadd.f32 %v4550, %v4178
      %v4683 = vadd.f32 %v4551, %v4179
      %v4684 = vadd.f32 %v4552, %v4180
      %v4685 = vadd.f32 %v4553, %v4181
      %v4686 = vadd.f32 %v4554, %v4182
      %v4687 = vadd.f32 %v4555, %v4183
      %v4688 = vadd.f32 %v4556, %v4184
      %v4689 = vadd.f32 %v4557, %v4185
      %v4690 = vadd.f32 %v4558, %v4186
      %v4691 = vadd.f32 %v4559, %v4187
      %v4692 = vadd.f32 %v4560, %v4188
      %v4693 = vadd.f32 %v4561, %v4189
      %v4694 = vadd.f32 %v4562, %v4190
      %v4695 = vadd.f32 %v4563, %v4191
      %v4696 = vadd.f32 %v4564, %v4192
      %v4697 = vadd.f32 %v4565, %v4193
      %v4698 = vadd.f32 %v4566, %v4194
      %v4699 = vadd.f32 %v4567, %v4195
      %v4700 = vadd.f32 %v4568, %v4196
      %v4701 = vadd.f32 %v4569, %v4197
      %v4702 = vadd.f32 %v4570, %v4198
      %v4703 = vadd.f32 %v4571, %v4199
      %v4704 = vadd.f32 %v4572, %v4200
      %v4705 = vadd.f32 %v4573, %v4201
      %v4706 = vadd.f32 %v4574, %v4202
      %v4707 = vadd.f32 %v4575, %v4587
      %v4708 = vadd.f32 %v4576, %v4588
      %v4709 = vadd.f32 %v4577, %v4589
      %v4710 = vadd.f32 %v4578, %v4590
      %v4711 = vadd.f32 %v4579, %v4199
      %v4712 = vadd.f32 %v4580, %v4200
      %v4713 = vadd.f32 %v4581, %v4201
      %v4714 = vadd.f32 %v4582, %v4202
      %v4715 = vadd.f32 %v4583, %v4195
      %v4716 = vadd.f32 %v4584, %v4196
      %v4717 = vadd.f32 %v4585, %v4197
      %v4718 = vadd.f32 %v4586, %v4198
      %v4751 = vrot.slane %v4591, 1
      %v4752 = vrot.slane %v4595, 1
      %v4753 = vrot.slane %v4599, 1
      %v4754 = vrot.slane %v4603, 1
      %v4755 = vrot.slane %v4607, 1
      %v4756 = vrot.slane %v4611, 1
      %v4757 = vrot.slane %v4615, 1
      %v4758 = vrot.slane %v4619, 1
      %v4759 = vrot.slane %v4623, 1
      %v4760 = vrot.slane %v4627, 1
      %v4761 = vrot.slane %v4631, 1
      %v4762 = vrot.slane %v4635, 1
      %v4763 = vrot.slane %v4639, 1
      %v4764 = vrot.slane %v4643, 1
      %v4765 = vrot.slane %v4647, 1
      %v4766 = vrot.slane %v4651, 1
      %v4767 = vrot.slane %v4655, 1
      %v4768 = vrot.slane %v4659, 1
      %v4769 = vrot.slane %v4663, 1
      %v4770 = vrot.slane %v4667, 1
      %v4771 = vrot.slane %v4671, 1
      %v4772 = vrot.slane %v4675, 1
      %v4773 = vrot.slane %v4679, 1
      %v4774 = vrot.slane %v4683, 1
      %v4775 = vrot.slane %v4687, 1
      %v4776 = vrot.slane %v4691, 1
      %v4777 = vrot.slane %v4695, 1
      %v4778 = vrot.slane %v4699, 1
      %v4779 = vrot.slane %v4703, 1
      %v4780 = vrot.slane %v4707, 1
      %v4781 = vrot.slane %v4711, 1
      %v4782 = vrot.slane %v4715, 1
      %vm4911 = vcmask 1040384
      %v4912 = vrot.slane %v4591, 7
      %v4913 = vrot.slane %v4592, 7
      %v4914 = vsel %vm4911, %v4912, %v4913
      %v4915 = vrot.slane %v4593, 7
      %v4916 = vsel %vm4911, %v4913, %v4915
      %v4917 = vrot.slane %v4594, 7
      %v4918 = vsel %vm4911, %v4915, %v4917
      %v4919 = vrot.slane %v4595, 7
      %v4920 = vrot.slane %v4596, 7
      %v4921 = vsel %vm4911, %v4919, %v4920
      %v4922 = vrot.slane %v4597, 7
      %v4923 = vsel %vm4911, %v4920, %v4922
      %v4924 = vrot.slane %v4598, 7
      %v4925 = vsel %vm4911, %v4922, %v4924
      %v4926 = vrot.slane %v4599, 7
      %v4927 = vrot.slane %v4600, 7
      %v4928 = vsel %vm4911, %v4926, %v4927
      %v4929 = vrot.slane %v4601, 7
      %v4930 = vsel %vm4911, %v4927, %v4929
      %v4931 = vrot.slane %v4602, 7
      %v4932 = vsel %vm4911, %v4929, %v4931
      %v4933 = vrot.slane %v4603, 7
      %v4934 = vrot.slane %v4604, 7
      %v4935 = vsel %vm4911, %v4933, %v4934
      %v4936 = vrot.slane %v4605, 7
      %v4937 = vsel %vm4911, %v4934, %v4936
      %v4938 = vrot.slane %v4606, 7
      %v4939 = vsel %vm4911, %v4936, %v4938
      %v4940 = vrot.slane %v4607, 7
      %v4941 = vrot.slane %v4608, 7
      %v4942 = vsel %vm4911, %v4940, %v4941
      %v4943 = vrot.slane %v4609, 7
      %v4944 = vsel %vm4911, %v4941, %v4943
      %v4945 = vrot.slane %v4610, 7
      %v4946 = vsel %vm4911, %v4943, %v4945
      %v4947 = vrot.slane %v4611, 7
      %v4948 = vrot.slane %v4612, 7
      %v4949 = vsel %vm4911, %v4947, %v4948
      %v4950 = vrot.slane %v4613, 7
      %v4951 = vsel %vm4911, %v4948, %v4950
      %v4952 = vrot.slane %v4614, 7
      %v4953 = vsel %vm4911, %v4950, %v4952
      %v4954 = vrot.slane %v4615, 7
      %v4955 = vrot.slane %v4616, 7
      %v4956 = vsel %vm4911, %v4954, %v4955
      %v4957 = vrot.slane %v4617, 7
      %v4958 = vsel %vm4911, %v4955, %v4957
      %v4959 = vrot.slane %v4618, 7
      %v4960 = vsel %vm4911, %v4957, %v4959
      %v4961 = vrot.slane %v4619, 7
      %v4962 = vrot.slane %v4620, 7
      %v4963 = vsel %vm4911, %v4961, %v4962
      %v4964 = vrot.slane %v4621, 7
      %v4965 = vsel %vm4911, %v4962, %v4964
      %v4966 = vrot.slane %v4622, 7
      %v4967 = vsel %vm4911, %v4964, %v4966
      %v4968 = vrot.slane %v4623, 7
      %v4969 = vrot.slane %v4624, 7
      %v4970 = vsel %vm4911, %v4968, %v4969
      %v4971 = vrot.slane %v4625, 7
      %v4972 = vsel %vm4911, %v4969, %v4971
      %v4973 = vrot.slane %v4626, 7
      %v4974 = vsel %vm4911, %v4971, %v4973
      %v4975 = vrot.slane %v4627, 7
      %v4976 = vrot.slane %v4628, 7
      %v4977 = vsel %vm4911, %v4975, %v4976
      %v4978 = vrot.slane %v4629, 7
      %v4979 = vsel %vm4911, %v4976, %v4978
      %v4980 = vrot.slane %v4630, 7
      %v4981 = vsel %vm4911, %v4978, %v4980
      %v4982 = vrot.slane %v4631, 7
      %v4983 = vrot.slane %v4632, 7
      %v4984 = vsel %vm4911, %v4982, %v4983
      %v4985 = vrot.slane %v4633, 7
      %v4986 = vsel %vm4911, %v4983, %v4985
      %v4987 = vrot.slane %v4634, 7
      %v4988 = vsel %vm4911, %v4985, %v4987
      %v4989 = vrot.slane %v4635, 7
      %v4990 = vrot.slane %v4636, 7
      %v4991 = vsel %vm4911, %v4989, %v4990
      %v4992 = vrot.slane %v4637, 7
      %v4993 = vsel %vm4911, %v4990, %v4992
      %v4994 = vrot.slane %v4638, 7
      %v4995 = vsel %vm4911, %v4992, %v4994
      %v4996 = vrot.slane %v4639, 7
      %v4997 = vrot.slane %v4640, 7
      %v4998 = vsel %vm4911, %v4996, %v4997
      %v4999 = vrot.slane %v4641, 7
      %v5000 = vsel %vm4911, %v4997, %v4999
      %v5001 = vrot.slane %v4642, 7
      %v5002 = vsel %vm4911, %v4999, %v5001
      %v5003 = vrot.slane %v4643, 7
      %v5004 = vrot.slane %v4644, 7
      %v5005 = vsel %vm4911, %v5003, %v5004
      %v5006 = vrot.slane %v4645, 7
      %v5007 = vsel %vm4911, %v5004, %v5006
      %v5008 = vrot.slane %v4646, 7
      %v5009 = vsel %vm4911, %v5006, %v5008
      %v5010 = vrot.slane %v4647, 7
      %v5011 = vrot.slane %v4648, 7
      %v5012 = vsel %vm4911, %v5010, %v5011
      %v5013 = vrot.slane %v4649, 7
      %v5014 = vsel %vm4911, %v5011, %v5013
      %v5015 = vrot.slane %v4650, 7
      %v5016 = vsel %vm4911, %v5013, %v5015
      %v5017 = vrot.slane %v4651, 7
      %v5018 = vrot.slane %v4652, 7
      %v5019 = vsel %vm4911, %v5017, %v5018
      %v5020 = vrot.slane %v4653, 7
      %v5021 = vsel %vm4911, %v5018, %v5020
      %v5022 = vrot.slane %v4654, 7
      %v5023 = vsel %vm4911, %v5020, %v5022
      %v5024 = vrot.slane %v4655, 7
      %v5025 = vrot.slane %v4656, 7
      %v5026 = vsel %vm4911, %v5024, %v5025
      %v5027 = vrot.slane %v4657, 7
      %v5028 = vsel %vm4911, %v5025, %v5027
      %v5029 = vrot.slane %v4658, 7
      %v5030 = vsel %vm4911, %v5027, %v5029
      %v5031 = vrot.slane %v4659, 7
      %v5032 = vrot.slane %v4660, 7
      %v5033 = vsel %vm4911, %v5031, %v5032
      %v5034 = vrot.slane %v4661, 7
      %v5035 = vsel %vm4911, %v5032, %v5034
      %v5036 = vrot.slane %v4662, 7
      %v5037 = vsel %vm4911, %v5034, %v5036
      %v5038 = vrot.slane %v4663, 7
      %v5039 = vrot.slane %v4664, 7
      %v5040 = vsel %vm4911, %v5038, %v5039
      %v5041 = vrot.slane %v4665, 7
      %v5042 = vsel %vm4911, %v5039, %v5041
      %v5043 = vrot.slane %v4666, 7
      %v5044 = vsel %vm4911, %v5041, %v5043
      %v5045 = vrot.slane %v4667, 7
      %v5046 = vrot.slane %v4668, 7
      %v5047 = vsel %vm4911, %v5045, %v5046
      %v5048 = vrot.slane %v4669, 7
      %v5049 = vsel %vm4911, %v5046, %v5048
      %v5050 = vrot.slane %v4670, 7
      %v5051 = vsel %vm4911, %v5048, %v5050
      %v5052 = vrot.slane %v4671, 7
      %v5053 = vrot.slane %v4672, 7
      %v5054 = vsel %vm4911, %v5052, %v5053
      %v5055 = vrot.slane %v4673, 7
      %v5056 = vsel %vm4911, %v5053, %v5055
      %v5057 = vrot.slane %v4674, 7
      %v5058 = vsel %vm4911, %v5055, %v5057
      %v5059 = vrot.slane %v4675, 7
      %v5060 = vrot.slane %v4676, 7
      %v5061 = vsel %vm4911, %v5059, %v5060
      %v5062 = vrot.slane %v4677, 7
      %v5063 = vsel %vm4911, %v5060, %v5062
      %v5064 = vrot.slane %v4678, 7
      %v5065 = vsel %vm4911, %v5062, %v5064
      %v5066 = vrot.slane %v4679, 7
      %v5067 = vrot.slane %v4680, 7
      %v5068 = vsel %vm4911, %v5066, %v5067
      %v5069 = vrot.slane %v4681, 7
      %v5070 = vsel %vm4911, %v5067, %v5069
      %v5071 = vrot.slane %v4682, 7
      %v5072 = vsel %vm4911, %v5069, %v5071
      %v5073 = vrot.slane %v4683, 7
      %v5074 = vrot.slane %v4684, 7
      %v5075 = vsel %vm4911, %v5073, %v5074
      %v5076 = vrot.slane %v4685, 7
      %v5077 = vsel %vm4911, %v5074, %v5076
      %v5078 = vrot.slane %v4686, 7
      %v5079 = vsel %vm4911, %v5076, %v5078
      %v5080 = vrot.slane %v4687, 7
      %v5081 = vrot.slane %v4688, 7
      %v5082 = vsel %vm4911, %v5080, %v5081
      %v5083 = vrot.slane %v4689, 7
      %v5084 = vsel %vm4911, %v5081, %v5083
      %v5085 = vrot.slane %v4690, 7
      %v5086 = vsel %vm4911, %v5083, %v5085
      %v5087 = vrot.slane %v4691, 7
      %v5088 = vrot.slane %v4692, 7
      %v5089 = vsel %vm4911, %v5087, %v5088
      %v5090 = vrot.slane %v4693, 7
      %v5091 = vsel %vm4911, %v5088, %v5090
      %v5092 = vrot.slane %v4694, 7
      %v5093 = vsel %vm4911, %v5090, %v5092
      %v5094 = vrot.slane %v4695, 7
      %v5095 = vrot.slane %v4696, 7
      %v5096 = vsel %vm4911, %v5094, %v5095
      %v5097 = vrot.slane %v4697, 7
      %v5098 = vsel %vm4911, %v5095, %v5097
      %v5099 = vrot.slane %v4698, 7
      %v5100 = vsel %vm4911, %v5097, %v5099
      %v5101 = vrot.slane %v4699, 7
      %v5102 = vrot.slane %v4700, 7
      %v5103 = vsel %vm4911, %v5101, %v5102
      %v5104 = vrot.slane %v4701, 7
      %v5105 = vsel %vm4911, %v5102, %v5104
      %v5106 = vrot.slane %v4702, 7
      %v5107 = vsel %vm4911, %v5104, %v5106
      %v5108 = vrot.slane %v4703, 7
      %v5109 = vrot.slane %v4704, 7
      %v5110 = vsel %vm4911, %v5108, %v5109
      %v5111 = vrot.slane %v4705, 7
      %v5112 = vsel %vm4911, %v5109, %v5111
      %v5113 = vrot.slane %v4706, 7
      %v5114 = vsel %vm4911, %v5111, %v5113
      %v5115 = vrot.slane %v4707, 7
      %v5116 = vrot.slane %v4708, 7
      %v5117 = vsel %vm4911, %v5115, %v5116
      %v5118 = vrot.slane %v4709, 7
      %v5119 = vsel %vm4911, %v5116, %v5118
      %v5120 = vrot.slane %v4710, 7
      %v5121 = vsel %vm4911, %v5118, %v5120
      %v5122 = vrot.slane %v4711, 7
      %v5123 = vrot.slane %v4712, 7
      %v5124 = vsel %vm4911, %v5122, %v5123
      %v5125 = vrot.slane %v4713, 7
      %v5126 = vsel %vm4911, %v5123, %v5125
      %v5127 = vrot.slane %v4714, 7
      %v5128 = vsel %vm4911, %v5125, %v5127
      %v5129 = vrot.slane %v4715, 7
      %v5130 = vrot.slane %v4716, 7
      %v5131 = vsel %vm4911, %v5129, %v5130
      %v5132 = vrot.slane %v4717, 7
      %v5133 = vsel %vm4911, %v5130, %v5132
      %v5134 = vrot.slane %v4718, 7
      %v5135 = vsel %vm4911, %v5132, %v5134
      %v5296 = vrot.slane %v4594, 5
      %v5297 = vrot.slane %v4598, 5
      %v5298 = vrot.slane %v4602, 5
      %v5299 = vrot.slane %v4606, 5
      %v5300 = vrot.slane %v4610, 5
      %v5301 = vrot.slane %v4614, 5
      %v5302 = vrot.slane %v4618, 5
      %v5303 = vrot.slane %v4622, 5
      %v5304 = vrot.slane %v4626, 5
      %v5305 = vrot.slane %v4630, 5
      %v5306 = vrot.slane %v4634, 5
      %v5307 = vrot.slane %v4638, 5
      %v5308 = vrot.slane %v4642, 5
      %v5309 = vrot.slane %v4646, 5
      %v5310 = vrot.slane %v4650, 5
      %v5311 = vrot.slane %v4654, 5
      %v5312 = vrot.slane %v4658, 5
      %v5313 = vrot.slane %v4662, 5
      %v5314 = vrot.slane %v4666, 5
      %v5315 = vrot.slane %v4670, 5
      %v5316 = vrot.slane %v4674, 5
      %v5317 = vrot.slane %v4678, 5
      %v5318 = vrot.slane %v4682, 5
      %v5319 = vrot.slane %v4686, 5
      %v5320 = vrot.slane %v4690, 5
      %v5321 = vrot.slane %v4694, 5
      %v5322 = vrot.slane %v4698, 5
      %v5323 = vrot.slane %v4702, 5
      %v5324 = vrot.slane %v4706, 5
      %v5325 = vrot.slane %v4710, 5
      %v5326 = vrot.slane %v4714, 5
      %v5327 = vrot.slane %v4718, 5
      %v5360 = vrot.slane %v4594, 3
      %v5361 = vrot.slane %v4598, 3
      %v5362 = vrot.slane %v4602, 3
      %v5363 = vrot.slane %v4606, 3
      %v5364 = vrot.slane %v4610, 3
      %v5365 = vrot.slane %v4614, 3
      %v5366 = vrot.slane %v4618, 3
      %v5367 = vrot.slane %v4622, 3
      %v5368 = vrot.slane %v4626, 3
      %v5369 = vrot.slane %v4630, 3
      %v5370 = vrot.slane %v4634, 3
      %v5371 = vrot.slane %v4638, 3
      %v5372 = vrot.slane %v4642, 3
      %v5373 = vrot.slane %v4646, 3
      %v5374 = vrot.slane %v4650, 3
      %v5375 = vrot.slane %v4654, 3
      %v5376 = vrot.slane %v4658, 3
      %v5377 = vrot.slane %v4662, 3
      %v5378 = vrot.slane %v4666, 3
      %v5379 = vrot.slane %v4670, 3
      %v5380 = vrot.slane %v4674, 3
      %v5381 = vrot.slane %v4678, 3
      %v5382 = vrot.slane %v4682, 3
      %v5383 = vrot.slane %v4686, 3
      %v5384 = vrot.slane %v4690, 3
      %v5385 = vrot.slane %v4694, 3
      %v5386 = vrot.slane %v4698, 3
      %v5387 = vrot.slane %v4702, 3
      %v5388 = vrot.slane %v4706, 3
      %v5389 = vrot.slane %v4710, 3
      %v5390 = vrot.slane %v4714, 3
      %v5391 = vrot.slane %v4718, 3
      %v5424 = vsel %vm4911, %v4751, %v4912
      %v5425 = vsel %vm4911, %v4752, %v4919
      %v5426 = vsel %vm4911, %v4753, %v4926
      %v5427 = vsel %vm4911, %v4754, %v4933
      %v5428 = vsel %vm4911, %v4755, %v4940
      %v5429 = vsel %vm4911, %v4756, %v4947
      %v5430 = vsel %vm4911, %v4757, %v4954
      %v5431 = vsel %vm4911, %v4758, %v4961
      %v5432 = vsel %vm4911, %v4759, %v4968
      %v5433 = vsel %vm4911, %v4760, %v4975
      %v5434 = vsel %vm4911, %v4761, %v4982
      %v5435 = vsel %vm4911, %v4762, %v4989
      %v5436 = vsel %vm4911, %v4763, %v4996
      %v5437 = vsel %vm4911, %v4764, %v5003
      %v5438 = vsel %vm4911, %v4765, %v5010
      %v5439 = vsel %vm4911, %v4766, %v5017
      %v5440 = vsel %vm4911, %v4767, %v5024
      %v5441 = vsel %vm4911, %v4768, %v5031
      %v5442 = vsel %vm4911, %v4769, %v5038
      %v5443 = vsel %vm4911, %v4770, %v5045
      %v5444 = vsel %vm4911, %v4771, %v5052
      %v5445 = vsel %vm4911, %v4772, %v5059
      %v5446 = vsel %vm4911, %v4773, %v5066
      %v5447 = vsel %vm4911, %v4774, %v5073
      %v5448 = vsel %vm4911, %v4775, %v5080
      %v5449 = vsel %vm4911, %v4776, %v5087
      %v5450 = vsel %vm4911, %v4777, %v5094
      %v5451 = vsel %vm4911, %v4778, %v5101
      %v5452 = vsel %vm4911, %v4779, %v5108
      %v5453 = vsel %vm4911, %v4780, %v5115
      %v5454 = vsel %vm4911, %v4781, %v5122
      %v5455 = vsel %vm4911, %v4782, %v5129
      %v5456 = vsel %vm4911, %v4917, %v5296
      %v5457 = vsel %vm4911, %v4924, %v5297
      %v5458 = vsel %vm4911, %v4931, %v5298
      %v5459 = vsel %vm4911, %v4938, %v5299
      %v5460 = vsel %vm4911, %v4945, %v5300
      %v5461 = vsel %vm4911, %v4952, %v5301
      %v5462 = vsel %vm4911, %v4959, %v5302
      %v5463 = vsel %vm4911, %v4966, %v5303
      %v5464 = vsel %vm4911, %v4973, %v5304
      %v5465 = vsel %vm4911, %v4980, %v5305
      %v5466 = vsel %vm4911, %v4987, %v5306
      %v5467 = vsel %vm4911, %v4994, %v5307
      %v5468 = vsel %vm4911, %v5001, %v5308
      %v5469 = vsel %vm4911, %v5008, %v5309
      %v5470 = vsel %vm4911, %v5015, %v5310
      %v5471 = vsel %vm4911, %v5022, %v5311
      %v5472 = vsel %vm4911, %v5029, %v5312
      %v5473 = vsel %vm4911, %v5036, %v5313
      %v5474 = vsel %vm4911, %v5043, %v5314
      %v5475 = vsel %vm4911, %v5050, %v5315
      %v5476 = vsel %vm4911, %v5057, %v5316
      %v5477 = vsel %vm4911, %v5064, %v5317
      %v5478 = vsel %vm4911, %v5071, %v5318
      %v5479 = vsel %vm4911, %v5078, %v5319
      %v5480 = vsel %vm4911, %v5085, %v5320
      %v5481 = vsel %vm4911, %v5092, %v5321
      %v5482 = vsel %vm4911, %v5099, %v5322
      %v5483 = vsel %vm4911, %v5106, %v5323
      %v5484 = vsel %vm4911, %v5113, %v5324
      %v5485 = vsel %vm4911, %v5120, %v5325
      %v5486 = vsel %vm4911, %v5127, %v5326
      %v5487 = vsel %vm4911, %v5134, %v5327
      %vm5488 = vcmask 1041408
      %v5489 = vsel %vm5488, %v5456, %v5360
      %v5490 = vsel %vm5488, %v5457, %v5361
      %v5491 = vsel %vm5488, %v5458, %v5362
      %v5492 = vsel %vm5488, %v5459, %v5363
      %v5493 = vsel %vm5488, %v5460, %v5364
      %v5494 = vsel %vm5488, %v5461, %v5365
      %v5495 = vsel %vm5488, %v5462, %v5366
      %v5496 = vsel %vm5488, %v5463, %v5367
      %v5497 = vsel %vm5488, %v5464, %v5368
      %v5498 = vsel %vm5488, %v5465, %v5369
      %v5499 = vsel %vm5488, %v5466, %v5370
      %v5500 = vsel %vm5488, %v5467, %v5371
      %v5501 = vsel %vm5488, %v5468, %v5372
      %v5502 = vsel %vm5488, %v5469, %v5373
      %v5503 = vsel %vm5488, %v5470, %v5374
      %v5504 = vsel %vm5488, %v5471, %v5375
      %v5505 = vsel %vm5488, %v5472, %v5376
      %v5506 = vsel %vm5488, %v5473, %v5377
      %v5507 = vsel %vm5488, %v5474, %v5378
      %v5508 = vsel %vm5488, %v5475, %v5379
      %v5509 = vsel %vm5488, %v5476, %v5380
      %v5510 = vsel %vm5488, %v5477, %v5381
      %v5511 = vsel %vm5488, %v5478, %v5382
      %v5512 = vsel %vm5488, %v5479, %v5383
      %v5513 = vsel %vm5488, %v5480, %v5384
      %v5514 = vsel %vm5488, %v5481, %v5385
      %v5515 = vsel %vm5488, %v5482, %v5386
      %v5516 = vsel %vm5488, %v5483, %v5387
      %v5517 = vsel %vm5488, %v5484, %v5388
      %v5518 = vsel %vm5488, %v5485, %v5389
      %v5519 = vsel %vm5488, %v5486, %v5390
      %v5520 = vsel %vm5488, %v5487, %v5391
      %v5521 = vmul.f32 %v5424, 0.125
      %v5522 = vmul.f32 %v4914, 0.125
      %v5523 = vmul.f32 %v4916, 0.125
      %v5524 = vmul.f32 %v4918, 0.125
      %v5525 = vmul.f32 %v5425, 0.125
      %v5526 = vmul.f32 %v4921, 0.125
      %v5527 = vmul.f32 %v4923, 0.125
      %v5528 = vmul.f32 %v4925, 0.125
      %v5529 = vmul.f32 %v5426, 0.125
      %v5530 = vmul.f32 %v4928, 0.125
      %v5531 = vmul.f32 %v4930, 0.125
      %v5532 = vmul.f32 %v4932, 0.125
      %v5533 = vmul.f32 %v5427, 0.125
      %v5534 = vmul.f32 %v4935, 0.125
      %v5535 = vmul.f32 %v4937, 0.125
      %v5536 = vmul.f32 %v4939, 0.125
      %v5537 = vmul.f32 %v5428, 0.125
      %v5538 = vmul.f32 %v4942, 0.125
      %v5539 = vmul.f32 %v4944, 0.125
      %v5540 = vmul.f32 %v4946, 0.125
      %v5541 = vmul.f32 %v5429, 0.125
      %v5542 = vmul.f32 %v4949, 0.125
      %v5543 = vmul.f32 %v4951, 0.125
      %v5544 = vmul.f32 %v4953, 0.125
      %v5545 = vmul.f32 %v5430, 0.125
      %v5546 = vmul.f32 %v4956, 0.125
      %v5547 = vmul.f32 %v4958, 0.125
      %v5548 = vmul.f32 %v4960, 0.125
      %v5549 = vmul.f32 %v5431, 0.125
      %v5550 = vmul.f32 %v4963, 0.125
      %v5551 = vmul.f32 %v4965, 0.125
      %v5552 = vmul.f32 %v4967, 0.125
      %v5553 = vmul.f32 %v5432, 0.125
      %v5554 = vmul.f32 %v4970, 0.125
      %v5555 = vmul.f32 %v4972, 0.125
      %v5556 = vmul.f32 %v4974, 0.125
      %v5557 = vmul.f32 %v5433, 0.125
      %v5558 = vmul.f32 %v4977, 0.125
      %v5559 = vmul.f32 %v4979, 0.125
      %v5560 = vmul.f32 %v4981, 0.125
      %v5561 = vmul.f32 %v5434, 0.125
      %v5562 = vmul.f32 %v4984, 0.125
      %v5563 = vmul.f32 %v4986, 0.125
      %v5564 = vmul.f32 %v4988, 0.125
      %v5565 = vmul.f32 %v5435, 0.125
      %v5566 = vmul.f32 %v4991, 0.125
      %v5567 = vmul.f32 %v4993, 0.125
      %v5568 = vmul.f32 %v4995, 0.125
      %v5569 = vmul.f32 %v5436, 0.125
      %v5570 = vmul.f32 %v4998, 0.125
      %v5571 = vmul.f32 %v5000, 0.125
      %v5572 = vmul.f32 %v5002, 0.125
      %v5573 = vmul.f32 %v5437, 0.125
      %v5574 = vmul.f32 %v5005, 0.125
      %v5575 = vmul.f32 %v5007, 0.125
      %v5576 = vmul.f32 %v5009, 0.125
      %v5577 = vmul.f32 %v5438, 0.125
      %v5578 = vmul.f32 %v5012, 0.125
      %v5579 = vmul.f32 %v5014, 0.125
      %v5580 = vmul.f32 %v5016, 0.125
      %v5581 = vmul.f32 %v5439, 0.125
      %v5582 = vmul.f32 %v5019, 0.125
      %v5583 = vmul.f32 %v5021, 0.125
      %v5584 = vmul.f32 %v5023, 0.125
      %v5585 = vmul.f32 %v5440, 0.125
      %v5586 = vmul.f32 %v5026, 0.125
      %v5587 = vmul.f32 %v5028, 0.125
      %v5588 = vmul.f32 %v5030, 0.125
      %v5589 = vmul.f32 %v5441, 0.125
      %v5590 = vmul.f32 %v5033, 0.125
      %v5591 = vmul.f32 %v5035, 0.125
      %v5592 = vmul.f32 %v5037, 0.125
      %v5593 = vmul.f32 %v5442, 0.125
      %v5594 = vmul.f32 %v5040, 0.125
      %v5595 = vmul.f32 %v5042, 0.125
      %v5596 = vmul.f32 %v5044, 0.125
      %v5597 = vmul.f32 %v5443, 0.125
      %v5598 = vmul.f32 %v5047, 0.125
      %v5599 = vmul.f32 %v5049, 0.125
      %v5600 = vmul.f32 %v5051, 0.125
      %v5601 = vmul.f32 %v5444, 0.125
      %v5602 = vmul.f32 %v5054, 0.125
      %v5603 = vmul.f32 %v5056, 0.125
      %v5604 = vmul.f32 %v5058, 0.125
      %v5605 = vmul.f32 %v5445, 0.125
      %v5606 = vmul.f32 %v5061, 0.125
      %v5607 = vmul.f32 %v5063, 0.125
      %v5608 = vmul.f32 %v5065, 0.125
      %v5609 = vmul.f32 %v5446, 0.125
      %v5610 = vmul.f32 %v5068, 0.125
      %v5611 = vmul.f32 %v5070, 0.125
      %v5612 = vmul.f32 %v5072, 0.125
      %v5613 = vmul.f32 %v5447, 0.125
      %v5614 = vmul.f32 %v5075, 0.125
      %v5615 = vmul.f32 %v5077, 0.125
      %v5616 = vmul.f32 %v5079, 0.125
      %v5617 = vmul.f32 %v5448, 0.125
      %v5618 = vmul.f32 %v5082, 0.125
      %v5619 = vmul.f32 %v5084, 0.125
      %v5620 = vmul.f32 %v5086, 0.125
      %v5621 = vmul.f32 %v5449, 0.125
      %v5622 = vmul.f32 %v5089, 0.125
      %v5623 = vmul.f32 %v5091, 0.125
      %v5624 = vmul.f32 %v5093, 0.125
      %v5625 = vmul.f32 %v5450, 0.125
      %v5626 = vmul.f32 %v5096, 0.125
      %v5627 = vmul.f32 %v5098, 0.125
      %v5628 = vmul.f32 %v5100, 0.125
      %v5629 = vmul.f32 %v5451, 0.125
      %v5630 = vmul.f32 %v5103, 0.125
      %v5631 = vmul.f32 %v5105, 0.125
      %v5632 = vmul.f32 %v5107, 0.125
      %v5633 = vmul.f32 %v5452, 0.125
      %v5634 = vmul.f32 %v5110, 0.125
      %v5635 = vmul.f32 %v5112, 0.125
      %v5636 = vmul.f32 %v5114, 0.125
      %v5637 = vmul.f32 %v5453, 0.125
      %v5638 = vmul.f32 %v5117, 0.125
      %v5639 = vmul.f32 %v5119, 0.125
      %v5640 = vmul.f32 %v5121, 0.125
      %v5641 = vmul.f32 %v5454, 0.125
      %v5642 = vmul.f32 %v5124, 0.125
      %v5643 = vmul.f32 %v5126, 0.125
      %v5644 = vmul.f32 %v5128, 0.125
      %v5645 = vmul.f32 %v5455, 0.125
      %v5646 = vmul.f32 %v5131, 0.125
      %v5647 = vmul.f32 %v5133, 0.125
      %v5648 = vmul.f32 %v5135, 0.125
      %v5649 = vmul.f32 %v5424, 0.375
      %v5650 = vmul.f32 %v4914, 0.375
      %v5651 = vmul.f32 %v4916, 0.375
      %v5652 = vmul.f32 %v4918, 0.375
      %v5653 = vmul.f32 %v5489, 0.375
      %v5654 = vmul.f32 %v5425, 0.375
      %v5655 = vmul.f32 %v4921, 0.375
      %v5656 = vmul.f32 %v4923, 0.375
      %v5657 = vmul.f32 %v4925, 0.375
      %v5658 = vmul.f32 %v5490, 0.375
      %v5659 = vmul.f32 %v5426, 0.375
      %v5660 = vmul.f32 %v4928, 0.375
      %v5661 = vmul.f32 %v4930, 0.375
      %v5662 = vmul.f32 %v4932, 0.375
      %v5663 = vmul.f32 %v5491, 0.375
      %v5664 = vmul.f32 %v5427, 0.375
      %v5665 = vmul.f32 %v4935, 0.375
      %v5666 = vmul.f32 %v4937, 0.375
      %v5667 = vmul.f32 %v4939, 0.375
      %v5668 = vmul.f32 %v5492, 0.375
      %v5669 = vmul.f32 %v5428, 0.375
      %v5670 = vmul.f32 %v4942, 0.375
      %v5671 = vmul.f32 %v4944, 0.375
      %v5672 = vmul.f32 %v4946, 0.375
      %v5673 = vmul.f32 %v5493, 0.375
      %v5674 = vmul.f32 %v5429, 0.375
      %v5675 = vmul.f32 %v4949, 0.375
      %v5676 = vmul.f32 %v4951, 0.375
      %v5677 = vmul.f32 %v4953, 0.375
      %v5678 = vmul.f32 %v5494, 0.375
      %v5679 = vmul.f32 %v5430, 0.375
      %v5680 = vmul.f32 %v4956, 0.375
      %v5681 = vmul.f32 %v4958, 0.375
      %v5682 = vmul.f32 %v4960, 0.375
      %v5683 = vmul.f32 %v5495, 0.375
      %v5684 = vmul.f32 %v5431, 0.375
      %v5685 = vmul.f32 %v4963, 0.375
      %v5686 = vmul.f32 %v4965, 0.375
      %v5687 = vmul.f32 %v4967, 0.375
      %v5688 = vmul.f32 %v5496, 0.375
      %v5689 = vmul.f32 %v5432, 0.375
      %v5690 = vmul.f32 %v4970, 0.375
      %v5691 = vmul.f32 %v4972, 0.375
      %v5692 = vmul.f32 %v4974, 0.375
      %v5693 = vmul.f32 %v5497, 0.375
      %v5694 = vmul.f32 %v5433, 0.375
      %v5695 = vmul.f32 %v4977, 0.375
      %v5696 = vmul.f32 %v4979, 0.375
      %v5697 = vmul.f32 %v4981, 0.375
      %v5698 = vmul.f32 %v5498, 0.375
      %v5699 = vmul.f32 %v5434, 0.375
      %v5700 = vmul.f32 %v4984, 0.375
      %v5701 = vmul.f32 %v4986, 0.375
      %v5702 = vmul.f32 %v4988, 0.375
      %v5703 = vmul.f32 %v5499, 0.375
      %v5704 = vmul.f32 %v5435, 0.375
      %v5705 = vmul.f32 %v4991, 0.375
      %v5706 = vmul.f32 %v4993, 0.375
      %v5707 = vmul.f32 %v4995, 0.375
      %v5708 = vmul.f32 %v5500, 0.375
      %v5709 = vmul.f32 %v5436, 0.375
      %v5710 = vmul.f32 %v4998, 0.375
      %v5711 = vmul.f32 %v5000, 0.375
      %v5712 = vmul.f32 %v5002, 0.375
      %v5713 = vmul.f32 %v5501, 0.375
      %v5714 = vmul.f32 %v5437, 0.375
      %v5715 = vmul.f32 %v5005, 0.375
      %v5716 = vmul.f32 %v5007, 0.375
      %v5717 = vmul.f32 %v5009, 0.375
      %v5718 = vmul.f32 %v5502, 0.375
      %v5719 = vmul.f32 %v5438, 0.375
      %v5720 = vmul.f32 %v5012, 0.375
      %v5721 = vmul.f32 %v5014, 0.375
      %v5722 = vmul.f32 %v5016, 0.375
      %v5723 = vmul.f32 %v5503, 0.375
      %v5724 = vmul.f32 %v5439, 0.375
      %v5725 = vmul.f32 %v5019, 0.375
      %v5726 = vmul.f32 %v5021, 0.375
      %v5727 = vmul.f32 %v5023, 0.375
      %v5728 = vmul.f32 %v5504, 0.375
      %v5729 = vmul.f32 %v5440, 0.375
      %v5730 = vmul.f32 %v5026, 0.375
      %v5731 = vmul.f32 %v5028, 0.375
      %v5732 = vmul.f32 %v5030, 0.375
      %v5733 = vmul.f32 %v5505, 0.375
      %v5734 = vmul.f32 %v5441, 0.375
      %v5735 = vmul.f32 %v5033, 0.375
      %v5736 = vmul.f32 %v5035, 0.375
      %v5737 = vmul.f32 %v5037, 0.375
      %v5738 = vmul.f32 %v5506, 0.375
      %v5739 = vmul.f32 %v5442, 0.375
      %v5740 = vmul.f32 %v5040, 0.375
      %v5741 = vmul.f32 %v5042, 0.375
      %v5742 = vmul.f32 %v5044, 0.375
      %v5743 = vmul.f32 %v5507, 0.375
      %v5744 = vmul.f32 %v5443, 0.375
      %v5745 = vmul.f32 %v5047, 0.375
      %v5746 = vmul.f32 %v5049, 0.375
      %v5747 = vmul.f32 %v5051, 0.375
      %v5748 = vmul.f32 %v5508, 0.375
      %v5749 = vmul.f32 %v5444, 0.375
      %v5750 = vmul.f32 %v5054, 0.375
      %v5751 = vmul.f32 %v5056, 0.375
      %v5752 = vmul.f32 %v5058, 0.375
      %v5753 = vmul.f32 %v5509, 0.375
      %v5754 = vmul.f32 %v5445, 0.375
      %v5755 = vmul.f32 %v5061, 0.375
      %v5756 = vmul.f32 %v5063, 0.375
      %v5757 = vmul.f32 %v5065, 0.375
      %v5758 = vmul.f32 %v5510, 0.375
      %v5759 = vmul.f32 %v5446, 0.375
      %v5760 = vmul.f32 %v5068, 0.375
      %v5761 = vmul.f32 %v5070, 0.375
      %v5762 = vmul.f32 %v5072, 0.375
      %v5763 = vmul.f32 %v5511, 0.375
      %v5764 = vmul.f32 %v5447, 0.375
      %v5765 = vmul.f32 %v5075, 0.375
      %v5766 = vmul.f32 %v5077, 0.375
      %v5767 = vmul.f32 %v5079, 0.375
      %v5768 = vmul.f32 %v5512, 0.375
      %v5769 = vmul.f32 %v5448, 0.375
      %v5770 = vmul.f32 %v5082, 0.375
      %v5771 = vmul.f32 %v5084, 0.375
      %v5772 = vmul.f32 %v5086, 0.375
      %v5773 = vmul.f32 %v5513, 0.375
      %v5774 = vmul.f32 %v5449, 0.375
      %v5775 = vmul.f32 %v5089, 0.375
      %v5776 = vmul.f32 %v5091, 0.375
      %v5777 = vmul.f32 %v5093, 0.375
      %v5778 = vmul.f32 %v5514, 0.375
      %v5779 = vmul.f32 %v5450, 0.375
      %v5780 = vmul.f32 %v5096, 0.375
      %v5781 = vmul.f32 %v5098, 0.375
      %v5782 = vmul.f32 %v5100, 0.375
      %v5783 = vmul.f32 %v5515, 0.375
      %v5784 = vmul.f32 %v5451, 0.375
      %v5785 = vmul.f32 %v5103, 0.375
      %v5786 = vmul.f32 %v5105, 0.375
      %v5787 = vmul.f32 %v5107, 0.375
      %v5788 = vmul.f32 %v5516, 0.375
      %v5789 = vmul.f32 %v5452, 0.375
      %v5790 = vmul.f32 %v5110, 0.375
      %v5791 = vmul.f32 %v5112, 0.375
      %v5792 = vmul.f32 %v5114, 0.375
      %v5793 = vmul.f32 %v5517, 0.375
      %v5794 = vmul.f32 %v5453, 0.375
      %v5795 = vmul.f32 %v5117, 0.375
      %v5796 = vmul.f32 %v5119, 0.375
      %v5797 = vmul.f32 %v5121, 0.375
      %v5798 = vmul.f32 %v5518, 0.375
      %v5799 = vmul.f32 %v5454, 0.375
      %v5800 = vmul.f32 %v5124, 0.375
      %v5801 = vmul.f32 %v5126, 0.375
      %v5802 = vmul.f32 %v5128, 0.375
      %v5803 = vmul.f32 %v5519, 0.375
      %v5804 = vmul.f32 %v5455, 0.375
      %v5805 = vmul.f32 %v5131, 0.375
      %v5806 = vmul.f32 %v5133, 0.375
      %v5807 = vmul.f32 %v5135, 0.375
      %v5808 = vmul.f32 %v5520, 0.375
      %vm5969 = vcmask 1046528
      %v5970 = vrot.slane %v5649, 1
      %v5971 = vrot.slane %v5650, 1
      %v5972 = vsel %vm5969, %v5970, %v5971
      %v5973 = vrot.slane %v5651, 1
      %v5974 = vsel %vm5969, %v5971, %v5973
      %v5975 = vrot.slane %v5652, 1
      %v5976 = vsel %vm5969, %v5973, %v5975
      %v5977 = vrot.slane %v5653, 1
      %v5978 = vsel %vm5969, %v5975, %v5977
      %v5979 = vrot.slane %v5654, 1
      %v5980 = vrot.slane %v5655, 1
      %v5981 = vsel %vm5969, %v5979, %v5980
      %v5982 = vrot.slane %v5656, 1
      %v5983 = vsel %vm5969, %v5980, %v5982
      %v5984 = vrot.slane %v5657, 1
      %v5985 = vsel %vm5969, %v5982, %v5984
      %v5986 = vrot.slane %v5658, 1
      %v5987 = vsel %vm5969, %v5984, %v5986
      %v5988 = vrot.slane %v5659, 1
      %v5989 = vrot.slane %v5660, 1
      %v5990 = vsel %vm5969, %v5988, %v5989
      %v5991 = vrot.slane %v5661, 1
      %v5992 = vsel %vm5969, %v5989, %v5991
      %v5993 = vrot.slane %v5662, 1
      %v5994 = vsel %vm5969, %v5991, %v5993
      %v5995 = vrot.slane %v5663, 1
      %v5996 = vsel %vm5969, %v5993, %v5995
      %v5997 = vrot.slane %v5664, 1
      %v5998 = vrot.slane %v5665, 1
      %v5999 = vsel %vm5969, %v5997, %v5998
      %v6000 = vrot.slane %v5666, 1
      %v6001 = vsel %vm5969, %v5998, %v6000
      %v6002 = vrot.slane %v5667, 1
      %v6003 = vsel %vm5969, %v6000, %v6002
      %v6004 = vrot.slane %v5668, 1
      %v6005 = vsel %vm5969, %v6002, %v6004
      %v6006 = vrot.slane %v5669, 1
      %v6007 = vrot.slane %v5670, 1
      %v6008 = vsel %vm5969, %v6006, %v6007
      %v6009 = vrot.slane %v5671, 1
      %v6010 = vsel %vm5969, %v6007, %v6009
      %v6011 = vrot.slane %v5672, 1
      %v6012 = vsel %vm5969, %v6009, %v6011
      %v6013 = vrot.slane %v5673, 1
      %v6014 = vsel %vm5969, %v6011, %v6013
      %v6015 = vrot.slane %v5674, 1
      %v6016 = vrot.slane %v5675, 1
      %v6017 = vsel %vm5969, %v6015, %v6016
      %v6018 = vrot.slane %v5676, 1
      %v6019 = vsel %vm5969, %v6016, %v6018
      %v6020 = vrot.slane %v5677, 1
      %v6021 = vsel %vm5969, %v6018, %v6020
      %v6022 = vrot.slane %v5678, 1
      %v6023 = vsel %vm5969, %v6020, %v6022
      %v6024 = vrot.slane %v5679, 1
      %v6025 = vrot.slane %v5680, 1
      %v6026 = vsel %vm5969, %v6024, %v6025
      %v6027 = vrot.slane %v5681, 1
      %v6028 = vsel %vm5969, %v6025, %v6027
      %v6029 = vrot.slane %v5682, 1
      %v6030 = vsel %vm5969, %v6027, %v6029
      %v6031 = vrot.slane %v5683, 1
      %v6032 = vsel %vm5969, %v6029, %v6031
      %v6033 = vrot.slane %v5684, 1
      %v6034 = vrot.slane %v5685, 1
      %v6035 = vsel %vm5969, %v6033, %v6034
      %v6036 = vrot.slane %v5686, 1
      %v6037 = vsel %vm5969, %v6034, %v6036
      %v6038 = vrot.slane %v5687, 1
      %v6039 = vsel %vm5969, %v6036, %v6038
      %v6040 = vrot.slane %v5688, 1
      %v6041 = vsel %vm5969, %v6038, %v6040
      %v6042 = vrot.slane %v5689, 1
      %v6043 = vrot.slane %v5690, 1
      %v6044 = vsel %vm5969, %v6042, %v6043
      %v6045 = vrot.slane %v5691, 1
      %v6046 = vsel %vm5969, %v6043, %v6045
      %v6047 = vrot.slane %v5692, 1
      %v6048 = vsel %vm5969, %v6045, %v6047
      %v6049 = vrot.slane %v5693, 1
      %v6050 = vsel %vm5969, %v6047, %v6049
      %v6051 = vrot.slane %v5694, 1
      %v6052 = vrot.slane %v5695, 1
      %v6053 = vsel %vm5969, %v6051, %v6052
      %v6054 = vrot.slane %v5696, 1
      %v6055 = vsel %vm5969, %v6052, %v6054
      %v6056 = vrot.slane %v5697, 1
      %v6057 = vsel %vm5969, %v6054, %v6056
      %v6058 = vrot.slane %v5698, 1
      %v6059 = vsel %vm5969, %v6056, %v6058
      %v6060 = vrot.slane %v5699, 1
      %v6061 = vrot.slane %v5700, 1
      %v6062 = vsel %vm5969, %v6060, %v6061
      %v6063 = vrot.slane %v5701, 1
      %v6064 = vsel %vm5969, %v6061, %v6063
      %v6065 = vrot.slane %v5702, 1
      %v6066 = vsel %vm5969, %v6063, %v6065
      %v6067 = vrot.slane %v5703, 1
      %v6068 = vsel %vm5969, %v6065, %v6067
      %v6069 = vrot.slane %v5704, 1
      %v6070 = vrot.slane %v5705, 1
      %v6071 = vsel %vm5969, %v6069, %v6070
      %v6072 = vrot.slane %v5706, 1
      %v6073 = vsel %vm5969, %v6070, %v6072
      %v6074 = vrot.slane %v5707, 1
      %v6075 = vsel %vm5969, %v6072, %v6074
      %v6076 = vrot.slane %v5708, 1
      %v6077 = vsel %vm5969, %v6074, %v6076
      %v6078 = vrot.slane %v5709, 1
      %v6079 = vrot.slane %v5710, 1
      %v6080 = vsel %vm5969, %v6078, %v6079
      %v6081 = vrot.slane %v5711, 1
      %v6082 = vsel %vm5969, %v6079, %v6081
      %v6083 = vrot.slane %v5712, 1
      %v6084 = vsel %vm5969, %v6081, %v6083
      %v6085 = vrot.slane %v5713, 1
      %v6086 = vsel %vm5969, %v6083, %v6085
      %v6087 = vrot.slane %v5714, 1
      %v6088 = vrot.slane %v5715, 1
      %v6089 = vsel %vm5969, %v6087, %v6088
      %v6090 = vrot.slane %v5716, 1
      %v6091 = vsel %vm5969, %v6088, %v6090
      %v6092 = vrot.slane %v5717, 1
      %v6093 = vsel %vm5969, %v6090, %v6092
      %v6094 = vrot.slane %v5718, 1
      %v6095 = vsel %vm5969, %v6092, %v6094
      %v6096 = vrot.slane %v5719, 1
      %v6097 = vrot.slane %v5720, 1
      %v6098 = vsel %vm5969, %v6096, %v6097
      %v6099 = vrot.slane %v5721, 1
      %v6100 = vsel %vm5969, %v6097, %v6099
      %v6101 = vrot.slane %v5722, 1
      %v6102 = vsel %vm5969, %v6099, %v6101
      %v6103 = vrot.slane %v5723, 1
      %v6104 = vsel %vm5969, %v6101, %v6103
      %v6105 = vrot.slane %v5724, 1
      %v6106 = vrot.slane %v5725, 1
      %v6107 = vsel %vm5969, %v6105, %v6106
      %v6108 = vrot.slane %v5726, 1
      %v6109 = vsel %vm5969, %v6106, %v6108
      %v6110 = vrot.slane %v5727, 1
      %v6111 = vsel %vm5969, %v6108, %v6110
      %v6112 = vrot.slane %v5728, 1
      %v6113 = vsel %vm5969, %v6110, %v6112
      %v6114 = vrot.slane %v5729, 1
      %v6115 = vrot.slane %v5730, 1
      %v6116 = vsel %vm5969, %v6114, %v6115
      %v6117 = vrot.slane %v5731, 1
      %v6118 = vsel %vm5969, %v6115, %v6117
      %v6119 = vrot.slane %v5732, 1
      %v6120 = vsel %vm5969, %v6117, %v6119
      %v6121 = vrot.slane %v5733, 1
      %v6122 = vsel %vm5969, %v6119, %v6121
      %v6123 = vrot.slane %v5734, 1
      %v6124 = vrot.slane %v5735, 1
      %v6125 = vsel %vm5969, %v6123, %v6124
      %v6126 = vrot.slane %v5736, 1
      %v6127 = vsel %vm5969, %v6124, %v6126
      %v6128 = vrot.slane %v5737, 1
      %v6129 = vsel %vm5969, %v6126, %v6128
      %v6130 = vrot.slane %v5738, 1
      %v6131 = vsel %vm5969, %v6128, %v6130
      %v6132 = vrot.slane %v5739, 1
      %v6133 = vrot.slane %v5740, 1
      %v6134 = vsel %vm5969, %v6132, %v6133
      %v6135 = vrot.slane %v5741, 1
      %v6136 = vsel %vm5969, %v6133, %v6135
      %v6137 = vrot.slane %v5742, 1
      %v6138 = vsel %vm5969, %v6135, %v6137
      %v6139 = vrot.slane %v5743, 1
      %v6140 = vsel %vm5969, %v6137, %v6139
      %v6141 = vrot.slane %v5744, 1
      %v6142 = vrot.slane %v5745, 1
      %v6143 = vsel %vm5969, %v6141, %v6142
      %v6144 = vrot.slane %v5746, 1
      %v6145 = vsel %vm5969, %v6142, %v6144
      %v6146 = vrot.slane %v5747, 1
      %v6147 = vsel %vm5969, %v6144, %v6146
      %v6148 = vrot.slane %v5748, 1
      %v6149 = vsel %vm5969, %v6146, %v6148
      %v6150 = vrot.slane %v5749, 1
      %v6151 = vrot.slane %v5750, 1
      %v6152 = vsel %vm5969, %v6150, %v6151
      %v6153 = vrot.slane %v5751, 1
      %v6154 = vsel %vm5969, %v6151, %v6153
      %v6155 = vrot.slane %v5752, 1
      %v6156 = vsel %vm5969, %v6153, %v6155
      %v6157 = vrot.slane %v5753, 1
      %v6158 = vsel %vm5969, %v6155, %v6157
      %v6159 = vrot.slane %v5754, 1
      %v6160 = vrot.slane %v5755, 1
      %v6161 = vsel %vm5969, %v6159, %v6160
      %v6162 = vrot.slane %v5756, 1
      %v6163 = vsel %vm5969, %v6160, %v6162
      %v6164 = vrot.slane %v5757, 1
      %v6165 = vsel %vm5969, %v6162, %v6164
      %v6166 = vrot.slane %v5758, 1
      %v6167 = vsel %vm5969, %v6164, %v6166
      %v6168 = vrot.slane %v5759, 1
      %v6169 = vrot.slane %v5760, 1
      %v6170 = vsel %vm5969, %v6168, %v6169
      %v6171 = vrot.slane %v5761, 1
      %v6172 = vsel %vm5969, %v6169, %v6171
      %v6173 = vrot.slane %v5762, 1
      %v6174 = vsel %vm5969, %v6171, %v6173
      %v6175 = vrot.slane %v5763, 1
      %v6176 = vsel %vm5969, %v6173, %v6175
      %v6177 = vrot.slane %v5764, 1
      %v6178 = vrot.slane %v5765, 1
      %v6179 = vsel %vm5969, %v6177, %v6178
      %v6180 = vrot.slane %v5766, 1
      %v6181 = vsel %vm5969, %v6178, %v6180
      %v6182 = vrot.slane %v5767, 1
      %v6183 = vsel %vm5969, %v6180, %v6182
      %v6184 = vrot.slane %v5768, 1
      %v6185 = vsel %vm5969, %v6182, %v6184
      %v6186 = vrot.slane %v5769, 1
      %v6187 = vrot.slane %v5770, 1
      %v6188 = vsel %vm5969, %v6186, %v6187
      %v6189 = vrot.slane %v5771, 1
      %v6190 = vsel %vm5969, %v6187, %v6189
      %v6191 = vrot.slane %v5772, 1
      %v6192 = vsel %vm5969, %v6189, %v6191
      %v6193 = vrot.slane %v5773, 1
      %v6194 = vsel %vm5969, %v6191, %v6193
      %v6195 = vrot.slane %v5774, 1
      %v6196 = vrot.slane %v5775, 1
      %v6197 = vsel %vm5969, %v6195, %v6196
      %v6198 = vrot.slane %v5776, 1
      %v6199 = vsel %vm5969, %v6196, %v6198
      %v6200 = vrot.slane %v5777, 1
      %v6201 = vsel %vm5969, %v6198, %v6200
      %v6202 = vrot.slane %v5778, 1
      %v6203 = vsel %vm5969, %v6200, %v6202
      %v6204 = vrot.slane %v5779, 1
      %v6205 = vrot.slane %v5780, 1
      %v6206 = vsel %vm5969, %v6204, %v6205
      %v6207 = vrot.slane %v5781, 1
      %v6208 = vsel %vm5969, %v6205, %v6207
      %v6209 = vrot.slane %v5782, 1
      %v6210 = vsel %vm5969, %v6207, %v6209
      %v6211 = vrot.slane %v5783, 1
      %v6212 = vsel %vm5969, %v6209, %v6211
      %v6213 = vrot.slane %v5784, 1
      %v6214 = vrot.slane %v5785, 1
      %v6215 = vsel %vm5969, %v6213, %v6214
      %v6216 = vrot.slane %v5786, 1
      %v6217 = vsel %vm5969, %v6214, %v6216
      %v6218 = vrot.slane %v5787, 1
      %v6219 = vsel %vm5969, %v6216, %v6218
      %v6220 = vrot.slane %v5788, 1
      %v6221 = vsel %vm5969, %v6218, %v6220
      %v6222 = vrot.slane %v5789, 1
      %v6223 = vrot.slane %v5790, 1
      %v6224 = vsel %vm5969, %v6222, %v6223
      %v6225 = vrot.slane %v5791, 1
      %v6226 = vsel %vm5969, %v6223, %v6225
      %v6227 = vrot.slane %v5792, 1
      %v6228 = vsel %vm5969, %v6225, %v6227
      %v6229 = vrot.slane %v5793, 1
      %v6230 = vsel %vm5969, %v6227, %v6229
      %v6231 = vrot.slane %v5794, 1
      %v6232 = vrot.slane %v5795, 1
      %v6233 = vsel %vm5969, %v6231, %v6232
      %v6234 = vrot.slane %v5796, 1
      %v6235 = vsel %vm5969, %v6232, %v6234
      %v6236 = vrot.slane %v5797, 1
      %v6237 = vsel %vm5969, %v6234, %v6236
      %v6238 = vrot.slane %v5798, 1
      %v6239 = vsel %vm5969, %v6236, %v6238
      %v6240 = vrot.slane %v5799, 1
      %v6241 = vrot.slane %v5800, 1
      %v6242 = vsel %vm5969, %v6240, %v6241
      %v6243 = vrot.slane %v5801, 1
      %v6244 = vsel %vm5969, %v6241, %v6243
      %v6245 = vrot.slane %v5802, 1
      %v6246 = vsel %vm5969, %v6243, %v6245
      %v6247 = vrot.slane %v5803, 1
      %v6248 = vsel %vm5969, %v6245, %v6247
      %v6249 = vrot.slane %v5804, 1
      %v6250 = vrot.slane %v5805, 1
      %v6251 = vsel %vm5969, %v6249, %v6250
      %v6252 = vrot.slane %v5806, 1
      %v6253 = vsel %vm5969, %v6250, %v6252
      %v6254 = vrot.slane %v5807, 1
      %v6255 = vsel %vm5969, %v6252, %v6254
      %v6256 = vrot.slane %v5808, 1
      %v6257 = vsel %vm5969, %v6254, %v6256
      %v6386 = vadd.f32 %v5521, %v5972
      %v6387 = vadd.f32 %v5522, %v5974
      %v6388 = vadd.f32 %v5523, %v5976
      %v6389 = vadd.f32 %v5524, %v5978
      %v6390 = vadd.f32 %v5525, %v5981
      %v6391 = vadd.f32 %v5526, %v5983
      %v6392 = vadd.f32 %v5527, %v5985
      %v6393 = vadd.f32 %v5528, %v5987
      %v6394 = vadd.f32 %v5529, %v5990
      %v6395 = vadd.f32 %v5530, %v5992
      %v6396 = vadd.f32 %v5531, %v5994
      %v6397 = vadd.f32 %v5532, %v5996
      %v6398 = vadd.f32 %v5533, %v5999
      %v6399 = vadd.f32 %v5534, %v6001
      %v6400 = vadd.f32 %v5535, %v6003
      %v6401 = vadd.f32 %v5536, %v6005
      %v6402 = vadd.f32 %v5537, %v6008
      %v6403 = vadd.f32 %v5538, %v6010
      %v6404 = vadd.f32 %v5539, %v6012
      %v6405 = vadd.f32 %v5540, %v6014
      %v6406 = vadd.f32 %v5541, %v6017
      %v6407 = vadd.f32 %v5542, %v6019
      %v6408 = vadd.f32 %v5543, %v6021
      %v6409 = vadd.f32 %v5544, %v6023
      %v6410 = vadd.f32 %v5545, %v6026
      %v6411 = vadd.f32 %v5546, %v6028
      %v6412 = vadd.f32 %v5547, %v6030
      %v6413 = vadd.f32 %v5548, %v6032
      %v6414 = vadd.f32 %v5549, %v6035
      %v6415 = vadd.f32 %v5550, %v6037
      %v6416 = vadd.f32 %v5551, %v6039
      %v6417 = vadd.f32 %v5552, %v6041
      %v6418 = vadd.f32 %v5553, %v6044
      %v6419 = vadd.f32 %v5554, %v6046
      %v6420 = vadd.f32 %v5555, %v6048
      %v6421 = vadd.f32 %v5556, %v6050
      %v6422 = vadd.f32 %v5557, %v6053
      %v6423 = vadd.f32 %v5558, %v6055
      %v6424 = vadd.f32 %v5559, %v6057
      %v6425 = vadd.f32 %v5560, %v6059
      %v6426 = vadd.f32 %v5561, %v6062
      %v6427 = vadd.f32 %v5562, %v6064
      %v6428 = vadd.f32 %v5563, %v6066
      %v6429 = vadd.f32 %v5564, %v6068
      %v6430 = vadd.f32 %v5565, %v6071
      %v6431 = vadd.f32 %v5566, %v6073
      %v6432 = vadd.f32 %v5567, %v6075
      %v6433 = vadd.f32 %v5568, %v6077
      %v6434 = vadd.f32 %v5569, %v6080
      %v6435 = vadd.f32 %v5570, %v6082
      %v6436 = vadd.f32 %v5571, %v6084
      %v6437 = vadd.f32 %v5572, %v6086
      %v6438 = vadd.f32 %v5573, %v6089
      %v6439 = vadd.f32 %v5574, %v6091
      %v6440 = vadd.f32 %v5575, %v6093
      %v6441 = vadd.f32 %v5576, %v6095
      %v6442 = vadd.f32 %v5577, %v6098
      %v6443 = vadd.f32 %v5578, %v6100
      %v6444 = vadd.f32 %v5579, %v6102
      %v6445 = vadd.f32 %v5580, %v6104
      %v6446 = vadd.f32 %v5581, %v6107
      %v6447 = vadd.f32 %v5582, %v6109
      %v6448 = vadd.f32 %v5583, %v6111
      %v6449 = vadd.f32 %v5584, %v6113
      %v6450 = vadd.f32 %v5585, %v6116
      %v6451 = vadd.f32 %v5586, %v6118
      %v6452 = vadd.f32 %v5587, %v6120
      %v6453 = vadd.f32 %v5588, %v6122
      %v6454 = vadd.f32 %v5589, %v6125
      %v6455 = vadd.f32 %v5590, %v6127
      %v6456 = vadd.f32 %v5591, %v6129
      %v6457 = vadd.f32 %v5592, %v6131
      %v6458 = vadd.f32 %v5593, %v6134
      %v6459 = vadd.f32 %v5594, %v6136
      %v6460 = vadd.f32 %v5595, %v6138
      %v6461 = vadd.f32 %v5596, %v6140
      %v6462 = vadd.f32 %v5597, %v6143
      %v6463 = vadd.f32 %v5598, %v6145
      %v6464 = vadd.f32 %v5599, %v6147
      %v6465 = vadd.f32 %v5600, %v6149
      %v6466 = vadd.f32 %v5601, %v6152
      %v6467 = vadd.f32 %v5602, %v6154
      %v6468 = vadd.f32 %v5603, %v6156
      %v6469 = vadd.f32 %v5604, %v6158
      %v6470 = vadd.f32 %v5605, %v6161
      %v6471 = vadd.f32 %v5606, %v6163
      %v6472 = vadd.f32 %v5607, %v6165
      %v6473 = vadd.f32 %v5608, %v6167
      %v6474 = vadd.f32 %v5609, %v6170
      %v6475 = vadd.f32 %v5610, %v6172
      %v6476 = vadd.f32 %v5611, %v6174
      %v6477 = vadd.f32 %v5612, %v6176
      %v6478 = vadd.f32 %v5613, %v6179
      %v6479 = vadd.f32 %v5614, %v6181
      %v6480 = vadd.f32 %v5615, %v6183
      %v6481 = vadd.f32 %v5616, %v6185
      %v6482 = vadd.f32 %v5617, %v6188
      %v6483 = vadd.f32 %v5618, %v6190
      %v6484 = vadd.f32 %v5619, %v6192
      %v6485 = vadd.f32 %v5620, %v6194
      %v6486 = vadd.f32 %v5621, %v6197
      %v6487 = vadd.f32 %v5622, %v6199
      %v6488 = vadd.f32 %v5623, %v6201
      %v6489 = vadd.f32 %v5624, %v6203
      %v6490 = vadd.f32 %v5625, %v6206
      %v6491 = vadd.f32 %v5626, %v6208
      %v6492 = vadd.f32 %v5627, %v6210
      %v6493 = vadd.f32 %v5628, %v6212
      %v6494 = vadd.f32 %v5629, %v6215
      %v6495 = vadd.f32 %v5630, %v6217
      %v6496 = vadd.f32 %v5631, %v6219
      %v6497 = vadd.f32 %v5632, %v6221
      %v6498 = vadd.f32 %v5633, %v6224
      %v6499 = vadd.f32 %v5634, %v6226
      %v6500 = vadd.f32 %v5635, %v6228
      %v6501 = vadd.f32 %v5636, %v6230
      %v6502 = vadd.f32 %v5637, %v6233
      %v6503 = vadd.f32 %v5638, %v6235
      %v6504 = vadd.f32 %v5639, %v6237
      %v6505 = vadd.f32 %v5640, %v6239
      %v6506 = vadd.f32 %v5641, %v6242
      %v6507 = vadd.f32 %v5642, %v6244
      %v6508 = vadd.f32 %v5643, %v6246
      %v6509 = vadd.f32 %v5644, %v6248
      %v6510 = vadd.f32 %v5645, %v6251
      %v6511 = vadd.f32 %v5646, %v6253
      %v6512 = vadd.f32 %v5647, %v6255
      %v6513 = vadd.f32 %v5648, %v6257
      %v6514 = vrot.slane %v5649, 2
      %v6515 = vrot.slane %v5650, 2
      %v6516 = vsel %vm1449, %v6514, %v6515
      %v6517 = vrot.slane %v5651, 2
      %v6518 = vsel %vm1449, %v6515, %v6517
      %v6519 = vrot.slane %v5652, 2
      %v6520 = vsel %vm1449, %v6517, %v6519
      %v6521 = vrot.slane %v5653, 2
      %v6522 = vsel %vm1449, %v6519, %v6521
      %v6523 = vrot.slane %v5654, 2
      %v6524 = vrot.slane %v5655, 2
      %v6525 = vsel %vm1449, %v6523, %v6524
      %v6526 = vrot.slane %v5656, 2
      %v6527 = vsel %vm1449, %v6524, %v6526
      %v6528 = vrot.slane %v5657, 2
      %v6529 = vsel %vm1449, %v6526, %v6528
      %v6530 = vrot.slane %v5658, 2
      %v6531 = vsel %vm1449, %v6528, %v6530
      %v6532 = vrot.slane %v5659, 2
      %v6533 = vrot.slane %v5660, 2
      %v6534 = vsel %vm1449, %v6532, %v6533
      %v6535 = vrot.slane %v5661, 2
      %v6536 = vsel %vm1449, %v6533, %v6535
      %v6537 = vrot.slane %v5662, 2
      %v6538 = vsel %vm1449, %v6535, %v6537
      %v6539 = vrot.slane %v5663, 2
      %v6540 = vsel %vm1449, %v6537, %v6539
      %v6541 = vrot.slane %v5664, 2
      %v6542 = vrot.slane %v5665, 2
      %v6543 = vsel %vm1449, %v6541, %v6542
      %v6544 = vrot.slane %v5666, 2
      %v6545 = vsel %vm1449, %v6542, %v6544
      %v6546 = vrot.slane %v5667, 2
      %v6547 = vsel %vm1449, %v6544, %v6546
      %v6548 = vrot.slane %v5668, 2
      %v6549 = vsel %vm1449, %v6546, %v6548
      %v6550 = vrot.slane %v5669, 2
      %v6551 = vrot.slane %v5670, 2
      %v6552 = vsel %vm1449, %v6550, %v6551
      %v6553 = vrot.slane %v5671, 2
      %v6554 = vsel %vm1449, %v6551, %v6553
      %v6555 = vrot.slane %v5672, 2
      %v6556 = vsel %vm1449, %v6553, %v6555
      %v6557 = vrot.slane %v5673, 2
      %v6558 = vsel %vm1449, %v6555, %v6557
      %v6559 = vrot.slane %v5674, 2
      %v6560 = vrot.slane %v5675, 2
      %v6561 = vsel %vm1449, %v6559, %v6560
      %v6562 = vrot.slane %v5676, 2
      %v6563 = vsel %vm1449, %v6560, %v6562
      %v6564 = vrot.slane %v5677, 2
      %v6565 = vsel %vm1449, %v6562, %v6564
      %v6566 = vrot.slane %v5678, 2
      %v6567 = vsel %vm1449, %v6564, %v6566
      %v6568 = vrot.slane %v5679, 2
      %v6569 = vrot.slane %v5680, 2
      %v6570 = vsel %vm1449, %v6568, %v6569
      %v6571 = vrot.slane %v5681, 2
      %v6572 = vsel %vm1449, %v6569, %v6571
      %v6573 = vrot.slane %v5682, 2
      %v6574 = vsel %vm1449, %v6571, %v6573
      %v6575 = vrot.slane %v5683, 2
      %v6576 = vsel %vm1449, %v6573, %v6575
      %v6577 = vrot.slane %v5684, 2
      %v6578 = vrot.slane %v5685, 2
      %v6579 = vsel %vm1449, %v6577, %v6578
      %v6580 = vrot.slane %v5686, 2
      %v6581 = vsel %vm1449, %v6578, %v6580
      %v6582 = vrot.slane %v5687, 2
      %v6583 = vsel %vm1449, %v6580, %v6582
      %v6584 = vrot.slane %v5688, 2
      %v6585 = vsel %vm1449, %v6582, %v6584
      %v6586 = vrot.slane %v5689, 2
      %v6587 = vrot.slane %v5690, 2
      %v6588 = vsel %vm1449, %v6586, %v6587
      %v6589 = vrot.slane %v5691, 2
      %v6590 = vsel %vm1449, %v6587, %v6589
      %v6591 = vrot.slane %v5692, 2
      %v6592 = vsel %vm1449, %v6589, %v6591
      %v6593 = vrot.slane %v5693, 2
      %v6594 = vsel %vm1449, %v6591, %v6593
      %v6595 = vrot.slane %v5694, 2
      %v6596 = vrot.slane %v5695, 2
      %v6597 = vsel %vm1449, %v6595, %v6596
      %v6598 = vrot.slane %v5696, 2
      %v6599 = vsel %vm1449, %v6596, %v6598
      %v6600 = vrot.slane %v5697, 2
      %v6601 = vsel %vm1449, %v6598, %v6600
      %v6602 = vrot.slane %v5698, 2
      %v6603 = vsel %vm1449, %v6600, %v6602
      %v6604 = vrot.slane %v5699, 2
      %v6605 = vrot.slane %v5700, 2
      %v6606 = vsel %vm1449, %v6604, %v6605
      %v6607 = vrot.slane %v5701, 2
      %v6608 = vsel %vm1449, %v6605, %v6607
      %v6609 = vrot.slane %v5702, 2
      %v6610 = vsel %vm1449, %v6607, %v6609
      %v6611 = vrot.slane %v5703, 2
      %v6612 = vsel %vm1449, %v6609, %v6611
      %v6613 = vrot.slane %v5704, 2
      %v6614 = vrot.slane %v5705, 2
      %v6615 = vsel %vm1449, %v6613, %v6614
      %v6616 = vrot.slane %v5706, 2
      %v6617 = vsel %vm1449, %v6614, %v6616
      %v6618 = vrot.slane %v5707, 2
      %v6619 = vsel %vm1449, %v6616, %v6618
      %v6620 = vrot.slane %v5708, 2
      %v6621 = vsel %vm1449, %v6618, %v6620
      %v6622 = vrot.slane %v5709, 2
      %v6623 = vrot.slane %v5710, 2
      %v6624 = vsel %vm1449, %v6622, %v6623
      %v6625 = vrot.slane %v5711, 2
      %v6626 = vsel %vm1449, %v6623, %v6625
      %v6627 = vrot.slane %v5712, 2
      %v6628 = vsel %vm1449, %v6625, %v6627
      %v6629 = vrot.slane %v5713, 2
      %v6630 = vsel %vm1449, %v6627, %v6629
      %v6631 = vrot.slane %v5714, 2
      %v6632 = vrot.slane %v5715, 2
      %v6633 = vsel %vm1449, %v6631, %v6632
      %v6634 = vrot.slane %v5716, 2
      %v6635 = vsel %vm1449, %v6632, %v6634
      %v6636 = vrot.slane %v5717, 2
      %v6637 = vsel %vm1449, %v6634, %v6636
      %v6638 = vrot.slane %v5718, 2
      %v6639 = vsel %vm1449, %v6636, %v6638
      %v6640 = vrot.slane %v5719, 2
      %v6641 = vrot.slane %v5720, 2
      %v6642 = vsel %vm1449, %v6640, %v6641
      %v6643 = vrot.slane %v5721, 2
      %v6644 = vsel %vm1449, %v6641, %v6643
      %v6645 = vrot.slane %v5722, 2
      %v6646 = vsel %vm1449, %v6643, %v6645
      %v6647 = vrot.slane %v5723, 2
      %v6648 = vsel %vm1449, %v6645, %v6647
      %v6649 = vrot.slane %v5724, 2
      %v6650 = vrot.slane %v5725, 2
      %v6651 = vsel %vm1449, %v6649, %v6650
      %v6652 = vrot.slane %v5726, 2
      %v6653 = vsel %vm1449, %v6650, %v6652
      %v6654 = vrot.slane %v5727, 2
      %v6655 = vsel %vm1449, %v6652, %v6654
      %v6656 = vrot.slane %v5728, 2
      %v6657 = vsel %vm1449, %v6654, %v6656
      %v6658 = vrot.slane %v5729, 2
      %v6659 = vrot.slane %v5730, 2
      %v6660 = vsel %vm1449, %v6658, %v6659
      %v6661 = vrot.slane %v5731, 2
      %v6662 = vsel %vm1449, %v6659, %v6661
      %v6663 = vrot.slane %v5732, 2
      %v6664 = vsel %vm1449, %v6661, %v6663
      %v6665 = vrot.slane %v5733, 2
      %v6666 = vsel %vm1449, %v6663, %v6665
      %v6667 = vrot.slane %v5734, 2
      %v6668 = vrot.slane %v5735, 2
      %v6669 = vsel %vm1449, %v6667, %v6668
      %v6670 = vrot.slane %v5736, 2
      %v6671 = vsel %vm1449, %v6668, %v6670
      %v6672 = vrot.slane %v5737, 2
      %v6673 = vsel %vm1449, %v6670, %v6672
      %v6674 = vrot.slane %v5738, 2
      %v6675 = vsel %vm1449, %v6672, %v6674
      %v6676 = vrot.slane %v5739, 2
      %v6677 = vrot.slane %v5740, 2
      %v6678 = vsel %vm1449, %v6676, %v6677
      %v6679 = vrot.slane %v5741, 2
      %v6680 = vsel %vm1449, %v6677, %v6679
      %v6681 = vrot.slane %v5742, 2
      %v6682 = vsel %vm1449, %v6679, %v6681
      %v6683 = vrot.slane %v5743, 2
      %v6684 = vsel %vm1449, %v6681, %v6683
      %v6685 = vrot.slane %v5744, 2
      %v6686 = vrot.slane %v5745, 2
      %v6687 = vsel %vm1449, %v6685, %v6686
      %v6688 = vrot.slane %v5746, 2
      %v6689 = vsel %vm1449, %v6686, %v6688
      %v6690 = vrot.slane %v5747, 2
      %v6691 = vsel %vm1449, %v6688, %v6690
      %v6692 = vrot.slane %v5748, 2
      %v6693 = vsel %vm1449, %v6690, %v6692
      %v6694 = vrot.slane %v5749, 2
      %v6695 = vrot.slane %v5750, 2
      %v6696 = vsel %vm1449, %v6694, %v6695
      %v6697 = vrot.slane %v5751, 2
      %v6698 = vsel %vm1449, %v6695, %v6697
      %v6699 = vrot.slane %v5752, 2
      %v6700 = vsel %vm1449, %v6697, %v6699
      %v6701 = vrot.slane %v5753, 2
      %v6702 = vsel %vm1449, %v6699, %v6701
      %v6703 = vrot.slane %v5754, 2
      %v6704 = vrot.slane %v5755, 2
      %v6705 = vsel %vm1449, %v6703, %v6704
      %v6706 = vrot.slane %v5756, 2
      %v6707 = vsel %vm1449, %v6704, %v6706
      %v6708 = vrot.slane %v5757, 2
      %v6709 = vsel %vm1449, %v6706, %v6708
      %v6710 = vrot.slane %v5758, 2
      %v6711 = vsel %vm1449, %v6708, %v6710
      %v6712 = vrot.slane %v5759, 2
      %v6713 = vrot.slane %v5760, 2
      %v6714 = vsel %vm1449, %v6712, %v6713
      %v6715 = vrot.slane %v5761, 2
      %v6716 = vsel %vm1449, %v6713, %v6715
      %v6717 = vrot.slane %v5762, 2
      %v6718 = vsel %vm1449, %v6715, %v6717
      %v6719 = vrot.slane %v5763, 2
      %v6720 = vsel %vm1449, %v6717, %v6719
      %v6721 = vrot.slane %v5764, 2
      %v6722 = vrot.slane %v5765, 2
      %v6723 = vsel %vm1449, %v6721, %v6722
      %v6724 = vrot.slane %v5766, 2
      %v6725 = vsel %vm1449, %v6722, %v6724
      %v6726 = vrot.slane %v5767, 2
      %v6727 = vsel %vm1449, %v6724, %v6726
      %v6728 = vrot.slane %v5768, 2
      %v6729 = vsel %vm1449, %v6726, %v6728
      %v6730 = vrot.slane %v5769, 2
      %v6731 = vrot.slane %v5770, 2
      %v6732 = vsel %vm1449, %v6730, %v6731
      %v6733 = vrot.slane %v5771, 2
      %v6734 = vsel %vm1449, %v6731, %v6733
      %v6735 = vrot.slane %v5772, 2
      %v6736 = vsel %vm1449, %v6733, %v6735
      %v6737 = vrot.slane %v5773, 2
      %v6738 = vsel %vm1449, %v6735, %v6737
      %v6739 = vrot.slane %v5774, 2
      %v6740 = vrot.slane %v5775, 2
      %v6741 = vsel %vm1449, %v6739, %v6740
      %v6742 = vrot.slane %v5776, 2
      %v6743 = vsel %vm1449, %v6740, %v6742
      %v6744 = vrot.slane %v5777, 2
      %v6745 = vsel %vm1449, %v6742, %v6744
      %v6746 = vrot.slane %v5778, 2
      %v6747 = vsel %vm1449, %v6744, %v6746
      %v6748 = vrot.slane %v5779, 2
      %v6749 = vrot.slane %v5780, 2
      %v6750 = vsel %vm1449, %v6748, %v6749
      %v6751 = vrot.slane %v5781, 2
      %v6752 = vsel %vm1449, %v6749, %v6751
      %v6753 = vrot.slane %v5782, 2
      %v6754 = vsel %vm1449, %v6751, %v6753
      %v6755 = vrot.slane %v5783, 2
      %v6756 = vsel %vm1449, %v6753, %v6755
      %v6757 = vrot.slane %v5784, 2
      %v6758 = vrot.slane %v5785, 2
      %v6759 = vsel %vm1449, %v6757, %v6758
      %v6760 = vrot.slane %v5786, 2
      %v6761 = vsel %vm1449, %v6758, %v6760
      %v6762 = vrot.slane %v5787, 2
      %v6763 = vsel %vm1449, %v6760, %v6762
      %v6764 = vrot.slane %v5788, 2
      %v6765 = vsel %vm1449, %v6762, %v6764
      %v6766 = vrot.slane %v5789, 2
      %v6767 = vrot.slane %v5790, 2
      %v6768 = vsel %vm1449, %v6766, %v6767
      %v6769 = vrot.slane %v5791, 2
      %v6770 = vsel %vm1449, %v6767, %v6769
      %v6771 = vrot.slane %v5792, 2
      %v6772 = vsel %vm1449, %v6769, %v6771
      %v6773 = vrot.slane %v5793, 2
      %v6774 = vsel %vm1449, %v6771, %v6773
      %v6775 = vrot.slane %v5794, 2
      %v6776 = vrot.slane %v5795, 2
      %v6777 = vsel %vm1449, %v6775, %v6776
      %v6778 = vrot.slane %v5796, 2
      %v6779 = vsel %vm1449, %v6776, %v6778
      %v6780 = vrot.slane %v5797, 2
      %v6781 = vsel %vm1449, %v6778, %v6780
      %v6782 = vrot.slane %v5798, 2
      %v6783 = vsel %vm1449, %v6780, %v6782
      %v6784 = vrot.slane %v5799, 2
      %v6785 = vrot.slane %v5800, 2
      %v6786 = vsel %vm1449, %v6784, %v6785
      %v6787 = vrot.slane %v5801, 2
      %v6788 = vsel %vm1449, %v6785, %v6787
      %v6789 = vrot.slane %v5802, 2
      %v6790 = vsel %vm1449, %v6787, %v6789
      %v6791 = vrot.slane %v5803, 2
      %v6792 = vsel %vm1449, %v6789, %v6791
      %v6793 = vrot.slane %v5804, 2
      %v6794 = vrot.slane %v5805, 2
      %v6795 = vsel %vm1449, %v6793, %v6794
      %v6796 = vrot.slane %v5806, 2
      %v6797 = vsel %vm1449, %v6794, %v6796
      %v6798 = vrot.slane %v5807, 2
      %v6799 = vsel %vm1449, %v6796, %v6798
      %v6800 = vrot.slane %v5808, 2
      %v6801 = vsel %vm1449, %v6798, %v6800
      %v6930 = vadd.f32 %v6386, %v6516
      %v6931 = vadd.f32 %v6387, %v6518
      %v6932 = vadd.f32 %v6388, %v6520
      %v6933 = vadd.f32 %v6389, %v6522
      %v6934 = vadd.f32 %v6390, %v6525
      %v6935 = vadd.f32 %v6391, %v6527
      %v6936 = vadd.f32 %v6392, %v6529
      %v6937 = vadd.f32 %v6393, %v6531
      %v6938 = vadd.f32 %v6394, %v6534
      %v6939 = vadd.f32 %v6395, %v6536
      %v6940 = vadd.f32 %v6396, %v6538
      %v6941 = vadd.f32 %v6397, %v6540
      %v6942 = vadd.f32 %v6398, %v6543
      %v6943 = vadd.f32 %v6399, %v6545
      %v6944 = vadd.f32 %v6400, %v6547
      %v6945 = vadd.f32 %v6401, %v6549
      %v6946 = vadd.f32 %v6402, %v6552
      %v6947 = vadd.f32 %v6403, %v6554
      %v6948 = vadd.f32 %v6404, %v6556
      %v6949 = vadd.f32 %v6405, %v6558
      %v6950 = vadd.f32 %v6406, %v6561
      %v6951 = vadd.f32 %v6407, %v6563
      %v6952 = vadd.f32 %v6408, %v6565
      %v6953 = vadd.f32 %v6409, %v6567
      %v6954 = vadd.f32 %v6410, %v6570
      %v6955 = vadd.f32 %v6411, %v6572
      %v6956 = vadd.f32 %v6412, %v6574
      %v6957 = vadd.f32 %v6413, %v6576
      %v6958 = vadd.f32 %v6414, %v6579
      %v6959 = vadd.f32 %v6415, %v6581
      %v6960 = vadd.f32 %v6416, %v6583
      %v6961 = vadd.f32 %v6417, %v6585
      %v6962 = vadd.f32 %v6418, %v6588
      %v6963 = vadd.f32 %v6419, %v6590
      %v6964 = vadd.f32 %v6420, %v6592
      %v6965 = vadd.f32 %v6421, %v6594
      %v6966 = vadd.f32 %v6422, %v6597
      %v6967 = vadd.f32 %v6423, %v6599
      %v6968 = vadd.f32 %v6424, %v6601
      %v6969 = vadd.f32 %v6425, %v6603
      %v6970 = vadd.f32 %v6426, %v6606
      %v6971 = vadd.f32 %v6427, %v6608
      %v6972 = vadd.f32 %v6428, %v6610
      %v6973 = vadd.f32 %v6429, %v6612
      %v6974 = vadd.f32 %v6430, %v6615
      %v6975 = vadd.f32 %v6431, %v6617
      %v6976 = vadd.f32 %v6432, %v6619
      %v6977 = vadd.f32 %v6433, %v6621
      %v6978 = vadd.f32 %v6434, %v6624
      %v6979 = vadd.f32 %v6435, %v6626
      %v6980 = vadd.f32 %v6436, %v6628
      %v6981 = vadd.f32 %v6437, %v6630
      %v6982 = vadd.f32 %v6438, %v6633
      %v6983 = vadd.f32 %v6439, %v6635
      %v6984 = vadd.f32 %v6440, %v6637
      %v6985 = vadd.f32 %v6441, %v6639
      %v6986 = vadd.f32 %v6442, %v6642
      %v6987 = vadd.f32 %v6443, %v6644
      %v6988 = vadd.f32 %v6444, %v6646
      %v6989 = vadd.f32 %v6445, %v6648
      %v6990 = vadd.f32 %v6446, %v6651
      %v6991 = vadd.f32 %v6447, %v6653
      %v6992 = vadd.f32 %v6448, %v6655
      %v6993 = vadd.f32 %v6449, %v6657
      %v6994 = vadd.f32 %v6450, %v6660
      %v6995 = vadd.f32 %v6451, %v6662
      %v6996 = vadd.f32 %v6452, %v6664
      %v6997 = vadd.f32 %v6453, %v6666
      %v6998 = vadd.f32 %v6454, %v6669
      %v6999 = vadd.f32 %v6455, %v6671
      %v7000 = vadd.f32 %v6456, %v6673
      %v7001 = vadd.f32 %v6457, %v6675
      %v7002 = vadd.f32 %v6458, %v6678
      %v7003 = vadd.f32 %v6459, %v6680
      %v7004 = vadd.f32 %v6460, %v6682
      %v7005 = vadd.f32 %v6461, %v6684
      %v7006 = vadd.f32 %v6462, %v6687
      %v7007 = vadd.f32 %v6463, %v6689
      %v7008 = vadd.f32 %v6464, %v6691
      %v7009 = vadd.f32 %v6465, %v6693
      %v7010 = vadd.f32 %v6466, %v6696
      %v7011 = vadd.f32 %v6467, %v6698
      %v7012 = vadd.f32 %v6468, %v6700
      %v7013 = vadd.f32 %v6469, %v6702
      %v7014 = vadd.f32 %v6470, %v6705
      %v7015 = vadd.f32 %v6471, %v6707
      %v7016 = vadd.f32 %v6472, %v6709
      %v7017 = vadd.f32 %v6473, %v6711
      %v7018 = vadd.f32 %v6474, %v6714
      %v7019 = vadd.f32 %v6475, %v6716
      %v7020 = vadd.f32 %v6476, %v6718
      %v7021 = vadd.f32 %v6477, %v6720
      %v7022 = vadd.f32 %v6478, %v6723
      %v7023 = vadd.f32 %v6479, %v6725
      %v7024 = vadd.f32 %v6480, %v6727
      %v7025 = vadd.f32 %v6481, %v6729
      %v7026 = vadd.f32 %v6482, %v6732
      %v7027 = vadd.f32 %v6483, %v6734
      %v7028 = vadd.f32 %v6484, %v6736
      %v7029 = vadd.f32 %v6485, %v6738
      %v7030 = vadd.f32 %v6486, %v6741
      %v7031 = vadd.f32 %v6487, %v6743
      %v7032 = vadd.f32 %v6488, %v6745
      %v7033 = vadd.f32 %v6489, %v6747
      %v7034 = vadd.f32 %v6490, %v6750
      %v7035 = vadd.f32 %v6491, %v6752
      %v7036 = vadd.f32 %v6492, %v6754
      %v7037 = vadd.f32 %v6493, %v6756
      %v7038 = vadd.f32 %v6494, %v6759
      %v7039 = vadd.f32 %v6495, %v6761
      %v7040 = vadd.f32 %v6496, %v6763
      %v7041 = vadd.f32 %v6497, %v6765
      %v7042 = vadd.f32 %v6498, %v6768
      %v7043 = vadd.f32 %v6499, %v6770
      %v7044 = vadd.f32 %v6500, %v6772
      %v7045 = vadd.f32 %v6501, %v6774
      %v7046 = vadd.f32 %v6502, %v6777
      %v7047 = vadd.f32 %v6503, %v6779
      %v7048 = vadd.f32 %v6504, %v6781
      %v7049 = vadd.f32 %v6505, %v6783
      %v7050 = vadd.f32 %v6506, %v6786
      %v7051 = vadd.f32 %v6507, %v6788
      %v7052 = vadd.f32 %v6508, %v6790
      %v7053 = vadd.f32 %v6509, %v6792
      %v7054 = vadd.f32 %v6510, %v6795
      %v7055 = vadd.f32 %v6511, %v6797
      %v7056 = vadd.f32 %v6512, %v6799
      %v7057 = vadd.f32 %v6513, %v6801
      %v7058 = vmul.f32 %v5489, 0.125
      %v7059 = vmul.f32 %v5490, 0.125
      %v7060 = vmul.f32 %v5491, 0.125
      %v7061 = vmul.f32 %v5492, 0.125
      %v7062 = vmul.f32 %v5493, 0.125
      %v7063 = vmul.f32 %v5494, 0.125
      %v7064 = vmul.f32 %v5495, 0.125
      %v7065 = vmul.f32 %v5496, 0.125
      %v7066 = vmul.f32 %v5497, 0.125
      %v7067 = vmul.f32 %v5498, 0.125
      %v7068 = vmul.f32 %v5499, 0.125
      %v7069 = vmul.f32 %v5500, 0.125
      %v7070 = vmul.f32 %v5501, 0.125
      %v7071 = vmul.f32 %v5502, 0.125
      %v7072 = vmul.f32 %v5503, 0.125
      %v7073 = vmul.f32 %v5504, 0.125
      %v7074 = vmul.f32 %v5505, 0.125
      %v7075 = vmul.f32 %v5506, 0.125
      %v7076 = vmul.f32 %v5507, 0.125
      %v7077 = vmul.f32 %v5508, 0.125
      %v7078 = vmul.f32 %v5509, 0.125
      %v7079 = vmul.f32 %v5510, 0.125
      %v7080 = vmul.f32 %v5511, 0.125
      %v7081 = vmul.f32 %v5512, 0.125
      %v7082 = vmul.f32 %v5513, 0.125
      %v7083 = vmul.f32 %v5514, 0.125
      %v7084 = vmul.f32 %v5515, 0.125
      %v7085 = vmul.f32 %v5516, 0.125
      %v7086 = vmul.f32 %v5517, 0.125
      %v7087 = vmul.f32 %v5518, 0.125
      %v7088 = vmul.f32 %v5519, 0.125
      %v7089 = vmul.f32 %v5520, 0.125
      %vm7250 = vcmask 1044480
      %v7251 = vrot.slane %v5521, 3
      %v7252 = vrot.slane %v5522, 3
      %v7253 = vsel %vm7250, %v7251, %v7252
      %v7254 = vrot.slane %v5523, 3
      %v7255 = vsel %vm7250, %v7252, %v7254
      %v7256 = vrot.slane %v5524, 3
      %v7257 = vsel %vm7250, %v7254, %v7256
      %v7258 = vrot.slane %v7058, 3
      %v7259 = vsel %vm7250, %v7256, %v7258
      %v7260 = vrot.slane %v5525, 3
      %v7261 = vrot.slane %v5526, 3
      %v7262 = vsel %vm7250, %v7260, %v7261
      %v7263 = vrot.slane %v5527, 3
      %v7264 = vsel %vm7250, %v7261, %v7263
      %v7265 = vrot.slane %v5528, 3
      %v7266 = vsel %vm7250, %v7263, %v7265
      %v7267 = vrot.slane %v7059, 3
      %v7268 = vsel %vm7250, %v7265, %v7267
      %v7269 = vrot.slane %v5529, 3
      %v7270 = vrot.slane %v5530, 3
      %v7271 = vsel %vm7250, %v7269, %v7270
      %v7272 = vrot.slane %v5531, 3
      %v7273 = vsel %vm7250, %v7270, %v7272
      %v7274 = vrot.slane %v5532, 3
      %v7275 = vsel %vm7250, %v7272, %v7274
      %v7276 = vrot.slane %v7060, 3
      %v7277 = vsel %vm7250, %v7274, %v7276
      %v7278 = vrot.slane %v5533, 3
      %v7279 = vrot.slane %v5534, 3
      %v7280 = vsel %vm7250, %v7278, %v7279
      %v7281 = vrot.slane %v5535, 3
      %v7282 = vsel %vm7250, %v7279, %v7281
      %v7283 = vrot.slane %v5536, 3
      %v7284 = vsel %vm7250, %v7281, %v7283
      %v7285 = vrot.slane %v7061, 3
      %v7286 = vsel %vm7250, %v7283, %v7285
      %v7287 = vrot.slane %v5537, 3
      %v7288 = vrot.slane %v5538, 3
      %v7289 = vsel %vm7250, %v7287, %v7288
      %v7290 = vrot.slane %v5539, 3
      %v7291 = vsel %vm7250, %v7288, %v7290
      %v7292 = vrot.slane %v5540, 3
      %v7293 = vsel %vm7250, %v7290, %v7292
      %v7294 = vrot.slane %v7062, 3
      %v7295 = vsel %vm7250, %v7292, %v7294
      %v7296 = vrot.slane %v5541, 3
      %v7297 = vrot.slane %v5542, 3
      %v7298 = vsel %vm7250, %v7296, %v7297
      %v7299 = vrot.slane %v5543, 3
      %v7300 = vsel %vm7250, %v7297, %v7299
      %v7301 = vrot.slane %v5544, 3
      %v7302 = vsel %vm7250, %v7299, %v7301
      %v7303 = vrot.slane %v7063, 3
      %v7304 = vsel %vm7250, %v7301, %v7303
      %v7305 = vrot.slane %v5545, 3
      %v7306 = vrot.slane %v5546, 3
      %v7307 = vsel %vm7250, %v7305, %v7306
      %v7308 = vrot.slane %v5547, 3
      %v7309 = vsel %vm7250, %v7306, %v7308
      %v7310 = vrot.slane %v5548, 3
      %v7311 = vsel %vm7250, %v7308, %v7310
      %v7312 = vrot.slane %v7064, 3
      %v7313 = vsel %vm7250, %v7310, %v7312
      %v7314 = vrot.slane %v5549, 3
      %v7315 = vrot.slane %v5550, 3
      %v7316 = vsel %vm7250, %v7314, %v7315
      %v7317 = vrot.slane %v5551, 3
      %v7318 = vsel %vm7250, %v7315, %v7317
      %v7319 = vrot.slane %v5552, 3
      %v7320 = vsel %vm7250, %v7317, %v7319
      %v7321 = vrot.slane %v7065, 3
      %v7322 = vsel %vm7250, %v7319, %v7321
      %v7323 = vrot.slane %v5553, 3
      %v7324 = vrot.slane %v5554, 3
      %v7325 = vsel %vm7250, %v7323, %v7324
      %v7326 = vrot.slane %v5555, 3
      %v7327 = vsel %vm7250, %v7324, %v7326
      %v7328 = vrot.slane %v5556, 3
      %v7329 = vsel %vm7250, %v7326, %v7328
      %v7330 = vrot.slane %v7066, 3
      %v7331 = vsel %vm7250, %v7328, %v7330
      %v7332 = vrot.slane %v5557, 3
      %v7333 = vrot.slane %v5558, 3
      %v7334 = vsel %vm7250, %v7332, %v7333
      %v7335 = vrot.slane %v5559, 3
      %v7336 = vsel %vm7250, %v7333, %v7335
      %v7337 = vrot.slane %v5560, 3
      %v7338 = vsel %vm7250, %v7335, %v7337
      %v7339 = vrot.slane %v7067, 3
      %v7340 = vsel %vm7250, %v7337, %v7339
      %v7341 = vrot.slane %v5561, 3
      %v7342 = vrot.slane %v5562, 3
      %v7343 = vsel %vm7250, %v7341, %v7342
      %v7344 = vrot.slane %v5563, 3
      %v7345 = vsel %vm7250, %v7342, %v7344
      %v7346 = vrot.slane %v5564, 3
      %v7347 = vsel %vm7250, %v7344, %v7346
      %v7348 = vrot.slane %v7068, 3
      %v7349 = vsel %vm7250, %v7346, %v7348
      %v7350 = vrot.slane %v5565, 3
      %v7351 = vrot.slane %v5566, 3
      %v7352 = vsel %vm7250, %v7350, %v7351
      %v7353 = vrot.slane %v5567, 3
      %v7354 = vsel %vm7250, %v7351, %v7353
      %v7355 = vrot.slane %v5568, 3
      %v7356 = vsel %vm7250, %v7353, %v7355
      %v7357 = vrot.slane %v7069, 3
      %v7358 = vsel %vm7250, %v7355, %v7357
      %v7359 = vrot.slane %v5569, 3
      %v7360 = vrot.slane %v5570, 3
      %v7361 = vsel %vm7250, %v7359, %v7360
      %v7362 = vrot.slane %v5571, 3
      %v7363 = vsel %vm7250, %v7360, %v7362
      %v7364 = vrot.slane %v5572, 3
      %v7365 = vsel %vm7250, %v7362, %v7364
      %v7366 = vrot.slane %v7070, 3
      %v7367 = vsel %vm7250, %v7364, %v7366
      %v7368 = vrot.slane %v5573, 3
      %v7369 = vrot.slane %v5574, 3
      %v7370 = vsel %vm7250, %v7368, %v7369
      %v7371 = vrot.slane %v5575, 3
      %v7372 = vsel %vm7250, %v7369, %v7371
      %v7373 = vrot.slane %v5576, 3
      %v7374 = vsel %vm7250, %v7371, %v7373
      %v7375 = vrot.slane %v7071, 3
      %v7376 = vsel %vm7250, %v7373, %v7375
      %v7377 = vrot.slane %v5577, 3
      %v7378 = vrot.slane %v5578, 3
      %v7379 = vsel %vm7250, %v7377, %v7378
      %v7380 = vrot.slane %v5579, 3
      %v7381 = vsel %vm7250, %v7378, %v7380
      %v7382 = vrot.slane %v5580, 3
      %v7383 = vsel %vm7250, %v7380, %v7382
      %v7384 = vrot.slane %v7072, 3
      %v7385 = vsel %vm7250, %v7382, %v7384
      %v7386 = vrot.slane %v5581, 3
      %v7387 = vrot.slane %v5582, 3
      %v7388 = vsel %vm7250, %v7386, %v7387
      %v7389 = vrot.slane %v5583, 3
      %v7390 = vsel %vm7250, %v7387, %v7389
      %v7391 = vrot.slane %v5584, 3
      %v7392 = vsel %vm7250, %v7389, %v7391
      %v7393 = vrot.slane %v7073, 3
      %v7394 = vsel %vm7250, %v7391, %v7393
      %v7395 = vrot.slane %v5585, 3
      %v7396 = vrot.slane %v5586, 3
      %v7397 = vsel %vm7250, %v7395, %v7396
      %v7398 = vrot.slane %v5587, 3
      %v7399 = vsel %vm7250, %v7396, %v7398
      %v7400 = vrot.slane %v5588, 3
      %v7401 = vsel %vm7250, %v7398, %v7400
      %v7402 = vrot.slane %v7074, 3
      %v7403 = vsel %vm7250, %v7400, %v7402
      %v7404 = vrot.slane %v5589, 3
      %v7405 = vrot.slane %v5590, 3
      %v7406 = vsel %vm7250, %v7404, %v7405
      %v7407 = vrot.slane %v5591, 3
      %v7408 = vsel %vm7250, %v7405, %v7407
      %v7409 = vrot.slane %v5592, 3
      %v7410 = vsel %vm7250, %v7407, %v7409
      %v7411 = vrot.slane %v7075, 3
      %v7412 = vsel %vm7250, %v7409, %v7411
      %v7413 = vrot.slane %v5593, 3
      %v7414 = vrot.slane %v5594, 3
      %v7415 = vsel %vm7250, %v7413, %v7414
      %v7416 = vrot.slane %v5595, 3
      %v7417 = vsel %vm7250, %v7414, %v7416
      %v7418 = vrot.slane %v5596, 3
      %v7419 = vsel %vm7250, %v7416, %v7418
      %v7420 = vrot.slane %v7076, 3
      %v7421 = vsel %vm7250, %v7418, %v7420
      %v7422 = vrot.slane %v5597, 3
      %v7423 = vrot.slane %v5598, 3
      %v7424 = vsel %vm7250, %v7422, %v7423
      %v7425 = vrot.slane %v5599, 3
      %v7426 = vsel %vm7250, %v7423, %v7425
      %v7427 = vrot.slane %v5600, 3
      %v7428 = vsel %vm7250, %v7425, %v7427
      %v7429 = vrot.slane %v7077, 3
      %v7430 = vsel %vm7250, %v7427, %v7429
      %v7431 = vrot.slane %v5601, 3
      %v7432 = vrot.slane %v5602, 3
      %v7433 = vsel %vm7250, %v7431, %v7432
      %v7434 = vrot.slane %v5603, 3
      %v7435 = vsel %vm7250, %v7432, %v7434
      %v7436 = vrot.slane %v5604, 3
      %v7437 = vsel %vm7250, %v7434, %v7436
      %v7438 = vrot.slane %v7078, 3
      %v7439 = vsel %vm7250, %v7436, %v7438
      %v7440 = vrot.slane %v5605, 3
      %v7441 = vrot.slane %v5606, 3
      %v7442 = vsel %vm7250, %v7440, %v7441
      %v7443 = vrot.slane %v5607, 3
      %v7444 = vsel %vm7250, %v7441, %v7443
      %v7445 = vrot.slane %v5608, 3
      %v7446 = vsel %vm7250, %v7443, %v7445
      %v7447 = vrot.slane %v7079, 3
      %v7448 = vsel %vm7250, %v7445, %v7447
      %v7449 = vrot.slane %v5609, 3
      %v7450 = vrot.slane %v5610, 3
      %v7451 = vsel %vm7250, %v7449, %v7450
      %v7452 = vrot.slane %v5611, 3
      %v7453 = vsel %vm7250, %v7450, %v7452
      %v7454 = vrot.slane %v5612, 3
      %v7455 = vsel %vm7250, %v7452, %v7454
      %v7456 = vrot.slane %v7080, 3
      %v7457 = vsel %vm7250, %v7454, %v7456
      %v7458 = vrot.slane %v5613, 3
      %v7459 = vrot.slane %v5614, 3
      %v7460 = vsel %vm7250, %v7458, %v7459
      %v7461 = vrot.slane %v5615, 3
      %v7462 = vsel %vm7250, %v7459, %v7461
      %v7463 = vrot.slane %v5616, 3
      %v7464 = vsel %vm7250, %v7461, %v7463
      %v7465 = vrot.slane %v7081, 3
      %v7466 = vsel %vm7250, %v7463, %v7465
      %v7467 = vrot.slane %v5617, 3
      %v7468 = vrot.slane %v5618, 3
      %v7469 = vsel %vm7250, %v7467, %v7468
      %v7470 = vrot.slane %v5619, 3
      %v7471 = vsel %vm7250, %v7468, %v7470
      %v7472 = vrot.slane %v5620, 3
      %v7473 = vsel %vm7250, %v7470, %v7472
      %v7474 = vrot.slane %v7082, 3
      %v7475 = vsel %vm7250, %v7472, %v7474
      %v7476 = vrot.slane %v5621, 3
      %v7477 = vrot.slane %v5622, 3
      %v7478 = vsel %vm7250, %v7476, %v7477
      %v7479 = vrot.slane %v5623, 3
      %v7480 = vsel %vm7250, %v7477, %v7479
      %v7481 = vrot.slane %v5624, 3
      %v7482 = vsel %vm7250, %v7479, %v7481
      %v7483 = vrot.slane %v7083, 3
      %v7484 = vsel %vm7250, %v7481, %v7483
      %v7485 = vrot.slane %v5625, 3
      %v7486 = vrot.slane %v5626, 3
      %v7487 = vsel %vm7250, %v7485, %v7486
      %v7488 = vrot.slane %v5627, 3
      %v7489 = vsel %vm7250, %v7486, %v7488
      %v7490 = vrot.slane %v5628, 3
      %v7491 = vsel %vm7250, %v7488, %v7490
      %v7492 = vrot.slane %v7084, 3
      %v7493 = vsel %vm7250, %v7490, %v7492
      %v7494 = vrot.slane %v5629, 3
      %v7495 = vrot.slane %v5630, 3
      %v7496 = vsel %vm7250, %v7494, %v7495
      %v7497 = vrot.slane %v5631, 3
      %v7498 = vsel %vm7250, %v7495, %v7497
      %v7499 = vrot.slane %v5632, 3
      %v7500 = vsel %vm7250, %v7497, %v7499
      %v7501 = vrot.slane %v7085, 3
      %v7502 = vsel %vm7250, %v7499, %v7501
      %v7503 = vrot.slane %v5633, 3
      %v7504 = vrot.slane %v5634, 3
      %v7505 = vsel %vm7250, %v7503, %v7504
      %v7506 = vrot.slane %v5635, 3
      %v7507 = vsel %vm7250, %v7504, %v7506
      %v7508 = vrot.slane %v5636, 3
      %v7509 = vsel %vm7250, %v7506, %v7508
      %v7510 = vrot.slane %v7086, 3
      %v7511 = vsel %vm7250, %v7508, %v7510
      %v7512 = vrot.slane %v5637, 3
      %v7513 = vrot.slane %v5638, 3
      %v7514 = vsel %vm7250, %v7512, %v7513
      %v7515 = vrot.slane %v5639, 3
      %v7516 = vsel %vm7250, %v7513, %v7515
      %v7517 = vrot.slane %v5640, 3
      %v7518 = vsel %vm7250, %v7515, %v7517
      %v7519 = vrot.slane %v7087, 3
      %v7520 = vsel %vm7250, %v7517, %v7519
      %v7521 = vrot.slane %v5641, 3
      %v7522 = vrot.slane %v5642, 3
      %v7523 = vsel %vm7250, %v7521, %v7522
      %v7524 = vrot.slane %v5643, 3
      %v7525 = vsel %vm7250, %v7522, %v7524
      %v7526 = vrot.slane %v5644, 3
      %v7527 = vsel %vm7250, %v7524, %v7526
      %v7528 = vrot.slane %v7088, 3
      %v7529 = vsel %vm7250, %v7526, %v7528
      %v7530 = vrot.slane %v5645, 3
      %v7531 = vrot.slane %v5646, 3
      %v7532 = vsel %vm7250, %v7530, %v7531
      %v7533 = vrot.slane %v5647, 3
      %v7534 = vsel %vm7250, %v7531, %v7533
      %v7535 = vrot.slane %v5648, 3
      %v7536 = vsel %vm7250, %v7533, %v7535
      %v7537 = vrot.slane %v7089, 3
      %v7538 = vsel %vm7250, %v7535, %v7537
      %v7667 = vadd.f32 %v6930, %v7253
      %v7668 = vadd.f32 %v6931, %v7255
      %v7669 = vadd.f32 %v6932, %v7257
      %v7670 = vadd.f32 %v6933, %v7259
      %v7671 = vadd.f32 %v6934, %v7262
      %v7672 = vadd.f32 %v6935, %v7264
      %v7673 = vadd.f32 %v6936, %v7266
      %v7674 = vadd.f32 %v6937, %v7268
      %v7675 = vadd.f32 %v6938, %v7271
      %v7676 = vadd.f32 %v6939, %v7273
      %v7677 = vadd.f32 %v6940, %v7275
      %v7678 = vadd.f32 %v6941, %v7277
      %v7679 = vadd.f32 %v6942, %v7280
      %v7680 = vadd.f32 %v6943, %v7282
      %v7681 = vadd.f32 %v6944, %v7284
      %v7682 = vadd.f32 %v6945, %v7286
      %v7683 = vadd.f32 %v6946, %v7289
      %v7684 = vadd.f32 %v6947, %v7291
      %v7685 = vadd.f32 %v6948, %v7293
      %v7686 = vadd.f32 %v6949, %v7295
      %v7687 = vadd.f32 %v6950, %v7298
      %v7688 = vadd.f32 %v6951, %v7300
      %v7689 = vadd.f32 %v6952, %v7302
      %v7690 = vadd.f32 %v6953, %v7304
      %v7691 = vadd.f32 %v6954, %v7307
      %v7692 = vadd.f32 %v6955, %v7309
      %v7693 = vadd.f32 %v6956, %v7311
      %v7694 = vadd.f32 %v6957, %v7313
      %v7695 = vadd.f32 %v6958, %v7316
      %v7696 = vadd.f32 %v6959, %v7318
      %v7697 = vadd.f32 %v6960, %v7320
      %v7698 = vadd.f32 %v6961, %v7322
      %v7699 = vadd.f32 %v6962, %v7325
      %v7700 = vadd.f32 %v6963, %v7327
      %v7701 = vadd.f32 %v6964, %v7329
      %v7702 = vadd.f32 %v6965, %v7331
      %v7703 = vadd.f32 %v6966, %v7334
      %v7704 = vadd.f32 %v6967, %v7336
      %v7705 = vadd.f32 %v6968, %v7338
      %v7706 = vadd.f32 %v6969, %v7340
      %v7707 = vadd.f32 %v6970, %v7343
      %v7708 = vadd.f32 %v6971, %v7345
      %v7709 = vadd.f32 %v6972, %v7347
      %v7710 = vadd.f32 %v6973, %v7349
      %v7711 = vadd.f32 %v6974, %v7352
      %v7712 = vadd.f32 %v6975, %v7354
      %v7713 = vadd.f32 %v6976, %v7356
      %v7714 = vadd.f32 %v6977, %v7358
      %v7715 = vadd.f32 %v6978, %v7361
      %v7716 = vadd.f32 %v6979, %v7363
      %v7717 = vadd.f32 %v6980, %v7365
      %v7718 = vadd.f32 %v6981, %v7367
      %v7719 = vadd.f32 %v6982, %v7370
      %v7720 = vadd.f32 %v6983, %v7372
      %v7721 = vadd.f32 %v6984, %v7374
      %v7722 = vadd.f32 %v6985, %v7376
      %v7723 = vadd.f32 %v6986, %v7379
      %v7724 = vadd.f32 %v6987, %v7381
      %v7725 = vadd.f32 %v6988, %v7383
      %v7726 = vadd.f32 %v6989, %v7385
      %v7727 = vadd.f32 %v6990, %v7388
      %v7728 = vadd.f32 %v6991, %v7390
      %v7729 = vadd.f32 %v6992, %v7392
      %v7730 = vadd.f32 %v6993, %v7394
      %v7731 = vadd.f32 %v6994, %v7397
      %v7732 = vadd.f32 %v6995, %v7399
      %v7733 = vadd.f32 %v6996, %v7401
      %v7734 = vadd.f32 %v6997, %v7403
      %v7735 = vadd.f32 %v6998, %v7406
      %v7736 = vadd.f32 %v6999, %v7408
      %v7737 = vadd.f32 %v7000, %v7410
      %v7738 = vadd.f32 %v7001, %v7412
      %v7739 = vadd.f32 %v7002, %v7415
      %v7740 = vadd.f32 %v7003, %v7417
      %v7741 = vadd.f32 %v7004, %v7419
      %v7742 = vadd.f32 %v7005, %v7421
      %v7743 = vadd.f32 %v7006, %v7424
      %v7744 = vadd.f32 %v7007, %v7426
      %v7745 = vadd.f32 %v7008, %v7428
      %v7746 = vadd.f32 %v7009, %v7430
      %v7747 = vadd.f32 %v7010, %v7433
      %v7748 = vadd.f32 %v7011, %v7435
      %v7749 = vadd.f32 %v7012, %v7437
      %v7750 = vadd.f32 %v7013, %v7439
      %v7751 = vadd.f32 %v7014, %v7442
      %v7752 = vadd.f32 %v7015, %v7444
      %v7753 = vadd.f32 %v7016, %v7446
      %v7754 = vadd.f32 %v7017, %v7448
      %v7755 = vadd.f32 %v7018, %v7451
      %v7756 = vadd.f32 %v7019, %v7453
      %v7757 = vadd.f32 %v7020, %v7455
      %v7758 = vadd.f32 %v7021, %v7457
      %v7759 = vadd.f32 %v7022, %v7460
      %v7760 = vadd.f32 %v7023, %v7462
      %v7761 = vadd.f32 %v7024, %v7464
      %v7762 = vadd.f32 %v7025, %v7466
      %v7763 = vadd.f32 %v7026, %v7469
      %v7764 = vadd.f32 %v7027, %v7471
      %v7765 = vadd.f32 %v7028, %v7473
      %v7766 = vadd.f32 %v7029, %v7475
      %v7767 = vadd.f32 %v7030, %v7478
      %v7768 = vadd.f32 %v7031, %v7480
      %v7769 = vadd.f32 %v7032, %v7482
      %v7770 = vadd.f32 %v7033, %v7484
      %v7771 = vadd.f32 %v7034, %v7487
      %v7772 = vadd.f32 %v7035, %v7489
      %v7773 = vadd.f32 %v7036, %v7491
      %v7774 = vadd.f32 %v7037, %v7493
      %v7775 = vadd.f32 %v7038, %v7496
      %v7776 = vadd.f32 %v7039, %v7498
      %v7777 = vadd.f32 %v7040, %v7500
      %v7778 = vadd.f32 %v7041, %v7502
      %v7779 = vadd.f32 %v7042, %v7505
      %v7780 = vadd.f32 %v7043, %v7507
      %v7781 = vadd.f32 %v7044, %v7509
      %v7782 = vadd.f32 %v7045, %v7511
      %v7783 = vadd.f32 %v7046, %v7514
      %v7784 = vadd.f32 %v7047, %v7516
      %v7785 = vadd.f32 %v7048, %v7518
      %v7786 = vadd.f32 %v7049, %v7520
      %v7787 = vadd.f32 %v7050, %v7523
      %v7788 = vadd.f32 %v7051, %v7525
      %v7789 = vadd.f32 %v7052, %v7527
      %v7790 = vadd.f32 %v7053, %v7529
      %v7791 = vadd.f32 %v7054, %v7532
      %v7792 = vadd.f32 %v7055, %v7534
      %v7793 = vadd.f32 %v7056, %v7536
      %v7794 = vadd.f32 %v7057, %v7538
      %v7795 = vsel %vm731, %v7667, 0.0
      %v7796 = vsel %vm731, %v7668, 0.0
      %v7797 = vadd.f32 %v7795, %v7796
      %v7798 = vsel %vm731, %v7669, 0.0
      %v7799 = vadd.f32 %v7797, %v7798
      %v7800 = vsel %vm731, %v7670, 0.0
      %v7801 = vadd.f32 %v7799, %v7800
      %v7802 = vsel %vm731, %v7671, 0.0
      %v7803 = vadd.f32 %v7801, %v7802
      %v7804 = vsel %vm731, %v7672, 0.0
      %v7805 = vadd.f32 %v7803, %v7804
      %v7806 = vsel %vm731, %v7673, 0.0
      %v7807 = vadd.f32 %v7805, %v7806
      %v7808 = vsel %vm731, %v7674, 0.0
      %v7809 = vadd.f32 %v7807, %v7808
      %v7810 = vsel %vm731, %v7675, 0.0
      %v7811 = vadd.f32 %v7809, %v7810
      %v7812 = vsel %vm731, %v7676, 0.0
      %v7813 = vadd.f32 %v7811, %v7812
      %v7814 = vsel %vm731, %v7677, 0.0
      %v7815 = vadd.f32 %v7813, %v7814
      %v7816 = vsel %vm731, %v7678, 0.0
      %v7817 = vadd.f32 %v7815, %v7816
      %v7818 = vsel %vm731, %v7679, 0.0
      %v7819 = vadd.f32 %v7817, %v7818
      %v7820 = vsel %vm731, %v7680, 0.0
      %v7821 = vadd.f32 %v7819, %v7820
      %v7822 = vsel %vm731, %v7681, 0.0
      %v7823 = vadd.f32 %v7821, %v7822
      %v7824 = vsel %vm731, %v7682, 0.0
      %v7825 = vadd.f32 %v7823, %v7824
      %v7826 = vsel %vm731, %v7683, 0.0
      %v7827 = vadd.f32 %v7825, %v7826
      %v7828 = vsel %vm731, %v7684, 0.0
      %v7829 = vadd.f32 %v7827, %v7828
      %v7830 = vsel %vm731, %v7685, 0.0
      %v7831 = vadd.f32 %v7829, %v7830
      %v7832 = vsel %vm731, %v7686, 0.0
      %v7833 = vadd.f32 %v7831, %v7832
      %v7834 = vsel %vm731, %v7687, 0.0
      %v7835 = vadd.f32 %v7833, %v7834
      %v7836 = vsel %vm731, %v7688, 0.0
      %v7837 = vadd.f32 %v7835, %v7836
      %v7838 = vsel %vm731, %v7689, 0.0
      %v7839 = vadd.f32 %v7837, %v7838
      %v7840 = vsel %vm731, %v7690, 0.0
      %v7841 = vadd.f32 %v7839, %v7840
      %v7842 = vsel %vm731, %v7691, 0.0
      %v7843 = vadd.f32 %v7841, %v7842
      %v7844 = vsel %vm731, %v7692, 0.0
      %v7845 = vadd.f32 %v7843, %v7844
      %v7846 = vsel %vm731, %v7693, 0.0
      %v7847 = vadd.f32 %v7845, %v7846
      %v7848 = vsel %vm731, %v7694, 0.0
      %v7849 = vadd.f32 %v7847, %v7848
      %v7850 = vsel %vm731, %v7695, 0.0
      %v7851 = vadd.f32 %v7849, %v7850
      %v7852 = vsel %vm731, %v7696, 0.0
      %v7853 = vadd.f32 %v7851, %v7852
      %v7854 = vsel %vm731, %v7697, 0.0
      %v7855 = vadd.f32 %v7853, %v7854
      %v7856 = vsel %vm731, %v7698, 0.0
      %v7857 = vadd.f32 %v7855, %v7856
      %v7858 = vsel %vm731, %v7699, 0.0
      %v7859 = vadd.f32 %v7857, %v7858
      %v7860 = vsel %vm731, %v7700, 0.0
      %v7861 = vadd.f32 %v7859, %v7860
      %v7862 = vsel %vm731, %v7701, 0.0
      %v7863 = vadd.f32 %v7861, %v7862
      %v7864 = vsel %vm731, %v7702, 0.0
      %v7865 = vadd.f32 %v7863, %v7864
      %v7866 = vsel %vm731, %v7703, 0.0
      %v7867 = vadd.f32 %v7865, %v7866
      %v7868 = vsel %vm731, %v7704, 0.0
      %v7869 = vadd.f32 %v7867, %v7868
      %v7870 = vsel %vm731, %v7705, 0.0
      %v7871 = vadd.f32 %v7869, %v7870
      %v7872 = vsel %vm731, %v7706, 0.0
      %v7873 = vadd.f32 %v7871, %v7872
      %v7874 = vsel %vm731, %v7707, 0.0
      %v7875 = vadd.f32 %v7873, %v7874
      %v7876 = vsel %vm731, %v7708, 0.0
      %v7877 = vadd.f32 %v7875, %v7876
      %v7878 = vsel %vm731, %v7709, 0.0
      %v7879 = vadd.f32 %v7877, %v7878
      %v7880 = vsel %vm731, %v7710, 0.0
      %v7881 = vadd.f32 %v7879, %v7880
      %v7882 = vsel %vm731, %v7711, 0.0
      %v7883 = vadd.f32 %v7881, %v7882
      %v7884 = vsel %vm731, %v7712, 0.0
      %v7885 = vadd.f32 %v7883, %v7884
      %v7886 = vsel %vm731, %v7713, 0.0
      %v7887 = vadd.f32 %v7885, %v7886
      %v7888 = vsel %vm731, %v7714, 0.0
      %v7889 = vadd.f32 %v7887, %v7888
      %v7890 = vsel %vm731, %v7715, 0.0
      %v7891 = vadd.f32 %v7889, %v7890
      %v7892 = vsel %vm731, %v7716, 0.0
      %v7893 = vadd.f32 %v7891, %v7892
      %v7894 = vsel %vm731, %v7717, 0.0
      %v7895 = vadd.f32 %v7893, %v7894
      %v7896 = vsel %vm731, %v7718, 0.0
      %v7897 = vadd.f32 %v7895, %v7896
      %v7898 = vsel %vm731, %v7719, 0.0
      %v7899 = vadd.f32 %v7897, %v7898
      %v7900 = vsel %vm731, %v7720, 0.0
      %v7901 = vadd.f32 %v7899, %v7900
      %v7902 = vsel %vm731, %v7721, 0.0
      %v7903 = vadd.f32 %v7901, %v7902
      %v7904 = vsel %vm731, %v7722, 0.0
      %v7905 = vadd.f32 %v7903, %v7904
      %v7906 = vsel %vm731, %v7723, 0.0
      %v7907 = vadd.f32 %v7905, %v7906
      %v7908 = vsel %vm731, %v7724, 0.0
      %v7909 = vadd.f32 %v7907, %v7908
      %v7910 = vsel %vm731, %v7725, 0.0
      %v7911 = vadd.f32 %v7909, %v7910
      %v7912 = vsel %vm731, %v7726, 0.0
      %v7913 = vadd.f32 %v7911, %v7912
      %v7914 = vsel %vm731, %v7727, 0.0
      %v7915 = vadd.f32 %v7913, %v7914
      %v7916 = vsel %vm731, %v7728, 0.0
      %v7917 = vadd.f32 %v7915, %v7916
      %v7918 = vsel %vm731, %v7729, 0.0
      %v7919 = vadd.f32 %v7917, %v7918
      %v7920 = vsel %vm731, %v7730, 0.0
      %v7921 = vadd.f32 %v7919, %v7920
      %v7922 = vsel %vm731, %v7731, 0.0
      %v7923 = vadd.f32 %v7921, %v7922
      %v7924 = vsel %vm731, %v7732, 0.0
      %v7925 = vadd.f32 %v7923, %v7924
      %v7926 = vsel %vm731, %v7733, 0.0
      %v7927 = vadd.f32 %v7925, %v7926
      %v7928 = vsel %vm731, %v7734, 0.0
      %v7929 = vadd.f32 %v7927, %v7928
      %v7930 = vsel %vm731, %v7735, 0.0
      %v7931 = vadd.f32 %v7929, %v7930
      %v7932 = vsel %vm731, %v7736, 0.0
      %v7933 = vadd.f32 %v7931, %v7932
      %v7934 = vsel %vm731, %v7737, 0.0
      %v7935 = vadd.f32 %v7933, %v7934
      %v7936 = vsel %vm731, %v7738, 0.0
      %v7937 = vadd.f32 %v7935, %v7936
      %v7938 = vsel %vm731, %v7739, 0.0
      %v7939 = vadd.f32 %v7937, %v7938
      %v7940 = vsel %vm731, %v7740, 0.0
      %v7941 = vadd.f32 %v7939, %v7940
      %v7942 = vsel %vm731, %v7741, 0.0
      %v7943 = vadd.f32 %v7941, %v7942
      %v7944 = vsel %vm731, %v7742, 0.0
      %v7945 = vadd.f32 %v7943, %v7944
      %v7946 = vsel %vm731, %v7743, 0.0
      %v7947 = vadd.f32 %v7945, %v7946
      %v7948 = vsel %vm731, %v7744, 0.0
      %v7949 = vadd.f32 %v7947, %v7948
      %v7950 = vsel %vm731, %v7745, 0.0
      %v7951 = vadd.f32 %v7949, %v7950
      %v7952 = vsel %vm731, %v7746, 0.0
      %v7953 = vadd.f32 %v7951, %v7952
      %v7954 = vsel %vm731, %v7747, 0.0
      %v7955 = vadd.f32 %v7953, %v7954
      %v7956 = vsel %vm731, %v7748, 0.0
      %v7957 = vadd.f32 %v7955, %v7956
      %v7958 = vsel %vm731, %v7749, 0.0
      %v7959 = vadd.f32 %v7957, %v7958
      %v7960 = vsel %vm731, %v7750, 0.0
      %v7961 = vadd.f32 %v7959, %v7960
      %v7962 = vsel %vm731, %v7751, 0.0
      %v7963 = vadd.f32 %v7961, %v7962
      %v7964 = vsel %vm731, %v7752, 0.0
      %v7965 = vadd.f32 %v7963, %v7964
      %v7966 = vsel %vm731, %v7753, 0.0
      %v7967 = vadd.f32 %v7965, %v7966
      %v7968 = vsel %vm731, %v7754, 0.0
      %v7969 = vadd.f32 %v7967, %v7968
      %v7970 = vsel %vm731, %v7755, 0.0
      %v7971 = vadd.f32 %v7969, %v7970
      %v7972 = vsel %vm731, %v7756, 0.0
      %v7973 = vadd.f32 %v7971, %v7972
      %v7974 = vsel %vm731, %v7757, 0.0
      %v7975 = vadd.f32 %v7973, %v7974
      %v7976 = vsel %vm731, %v7758, 0.0
      %v7977 = vadd.f32 %v7975, %v7976
      %v7978 = vsel %vm731, %v7759, 0.0
      %v7979 = vadd.f32 %v7977, %v7978
      %v7980 = vsel %vm731, %v7760, 0.0
      %v7981 = vadd.f32 %v7979, %v7980
      %v7982 = vsel %vm731, %v7761, 0.0
      %v7983 = vadd.f32 %v7981, %v7982
      %v7984 = vsel %vm731, %v7762, 0.0
      %v7985 = vadd.f32 %v7983, %v7984
      %v7986 = vsel %vm731, %v7763, 0.0
      %v7987 = vadd.f32 %v7985, %v7986
      %v7988 = vsel %vm731, %v7764, 0.0
      %v7989 = vadd.f32 %v7987, %v7988
      %v7990 = vsel %vm731, %v7765, 0.0
      %v7991 = vadd.f32 %v7989, %v7990
      %v7992 = vsel %vm731, %v7766, 0.0
      %v7993 = vadd.f32 %v7991, %v7992
      %v7994 = vsel %vm731, %v7767, 0.0
      %v7995 = vadd.f32 %v7993, %v7994
      %v7996 = vsel %vm731, %v7768, 0.0
      %v7997 = vadd.f32 %v7995, %v7996
      %v7998 = vsel %vm731, %v7769, 0.0
      %v7999 = vadd.f32 %v7997, %v7998
      %v8000 = vsel %vm731, %v7770, 0.0
      %v8001 = vadd.f32 %v7999, %v8000
      %v8002 = vsel %vm731, %v7771, 0.0
      %v8003 = vadd.f32 %v8001, %v8002
      %v8004 = vsel %vm731, %v7772, 0.0
      %v8005 = vadd.f32 %v8003, %v8004
      %v8006 = vsel %vm731, %v7773, 0.0
      %v8007 = vadd.f32 %v8005, %v8006
      %v8008 = vsel %vm731, %v7774, 0.0
      %v8009 = vadd.f32 %v8007, %v8008
      %v8010 = vsel %vm731, %v7775, 0.0
      %v8011 = vadd.f32 %v8009, %v8010
      %v8012 = vsel %vm731, %v7776, 0.0
      %v8013 = vadd.f32 %v8011, %v8012
      %v8014 = vsel %vm731, %v7777, 0.0
      %v8015 = vadd.f32 %v8013, %v8014
      %v8016 = vsel %vm731, %v7778, 0.0
      %v8017 = vadd.f32 %v8015, %v8016
      %v8018 = vsel %vm731, %v7779, 0.0
      %v8019 = vadd.f32 %v8017, %v8018
      %v8020 = vsel %vm731, %v7780, 0.0
      %v8021 = vadd.f32 %v8019, %v8020
      %v8022 = vsel %vm731, %v7781, 0.0
      %v8023 = vadd.f32 %v8021, %v8022
      %v8024 = vsel %vm731, %v7782, 0.0
      %v8025 = vadd.f32 %v8023, %v8024
      %v8026 = vsel %vm731, %v7783, 0.0
      %v8027 = vadd.f32 %v8025, %v8026
      %v8028 = vsel %vm731, %v7784, 0.0
      %v8029 = vadd.f32 %v8027, %v8028
      %v8030 = vsel %vm731, %v7785, 0.0
      %v8031 = vadd.f32 %v8029, %v8030
      %v8032 = vsel %vm731, %v7786, 0.0
      %v8033 = vadd.f32 %v8031, %v8032
      %v8034 = vsel %vm731, %v7787, 0.0
      %v8035 = vadd.f32 %v8033, %v8034
      %v8036 = vsel %vm731, %v7788, 0.0
      %v8037 = vadd.f32 %v8035, %v8036
      %v8038 = vsel %vm731, %v7789, 0.0
      %v8039 = vadd.f32 %v8037, %v8038
      %v8040 = vsel %vm731, %v7790, 0.0
      %v8041 = vadd.f32 %v8039, %v8040
      %v8042 = vsel %vm731, %v7791, 0.0
      %v8043 = vadd.f32 %v8041, %v8042
      %v8044 = vsel %vm731, %v7792, 0.0
      %v8045 = vadd.f32 %v8043, %v8044
      %v8046 = vsel %vm731, %v7793, 0.0
      %v8047 = vadd.f32 %v8045, %v8046
      %v8048 = vsel %vm731, %v7794, 0.0
      %v8049 = vadd.f32 %v8047, %v8048
      %v8050 = vrot.slane %v8049, 4
      %v8051 = vadd.f32 %v8049, %v8050
      %v8052 = vrot.slane %v8051, 2
      %v8053 = vadd.f32 %v8051, %v8052
      %v8054 = vrot.slane %v8053, 1
      %v8055 = vadd.f32 %v8053, %v8054
      %v8056 = vmul.f32 %v8055, 0.0009765625
      %v8057 = vmul.f32 %v7667, %v7667
      %v8058 = vmul.f32 %v7668, %v7668
      %v8059 = vmul.f32 %v7669, %v7669
      %v8060 = vmul.f32 %v7670, %v7670
      %v8061 = vmul.f32 %v7671, %v7671
      %v8062 = vmul.f32 %v7672, %v7672
      %v8063 = vmul.f32 %v7673, %v7673
      %v8064 = vmul.f32 %v7674, %v7674
      %v8065 = vmul.f32 %v7675, %v7675
      %v8066 = vmul.f32 %v7676, %v7676
      %v8067 = vmul.f32 %v7677, %v7677
      %v8068 = vmul.f32 %v7678, %v7678
      %v8069 = vmul.f32 %v7679, %v7679
      %v8070 = vmul.f32 %v7680, %v7680
      %v8071 = vmul.f32 %v7681, %v7681
      %v8072 = vmul.f32 %v7682, %v7682
      %v8073 = vmul.f32 %v7683, %v7683
      %v8074 = vmul.f32 %v7684, %v7684
      %v8075 = vmul.f32 %v7685, %v7685
      %v8076 = vmul.f32 %v7686, %v7686
      %v8077 = vmul.f32 %v7687, %v7687
      %v8078 = vmul.f32 %v7688, %v7688
      %v8079 = vmul.f32 %v7689, %v7689
      %v8080 = vmul.f32 %v7690, %v7690
      %v8081 = vmul.f32 %v7691, %v7691
      %v8082 = vmul.f32 %v7692, %v7692
      %v8083 = vmul.f32 %v7693, %v7693
      %v8084 = vmul.f32 %v7694, %v7694
      %v8085 = vmul.f32 %v7695, %v7695
      %v8086 = vmul.f32 %v7696, %v7696
      %v8087 = vmul.f32 %v7697, %v7697
      %v8088 = vmul.f32 %v7698, %v7698
      %v8089 = vmul.f32 %v7699, %v7699
      %v8090 = vmul.f32 %v7700, %v7700
      %v8091 = vmul.f32 %v7701, %v7701
      %v8092 = vmul.f32 %v7702, %v7702
      %v8093 = vmul.f32 %v7703, %v7703
      %v8094 = vmul.f32 %v7704, %v7704
      %v8095 = vmul.f32 %v7705, %v7705
      %v8096 = vmul.f32 %v7706, %v7706
      %v8097 = vmul.f32 %v7707, %v7707
      %v8098 = vmul.f32 %v7708, %v7708
      %v8099 = vmul.f32 %v7709, %v7709
      %v8100 = vmul.f32 %v7710, %v7710
      %v8101 = vmul.f32 %v7711, %v7711
      %v8102 = vmul.f32 %v7712, %v7712
      %v8103 = vmul.f32 %v7713, %v7713
      %v8104 = vmul.f32 %v7714, %v7714
      %v8105 = vmul.f32 %v7715, %v7715
      %v8106 = vmul.f32 %v7716, %v7716
      %v8107 = vmul.f32 %v7717, %v7717
      %v8108 = vmul.f32 %v7718, %v7718
      %v8109 = vmul.f32 %v7719, %v7719
      %v8110 = vmul.f32 %v7720, %v7720
      %v8111 = vmul.f32 %v7721, %v7721
      %v8112 = vmul.f32 %v7722, %v7722
      %v8113 = vmul.f32 %v7723, %v7723
      %v8114 = vmul.f32 %v7724, %v7724
      %v8115 = vmul.f32 %v7725, %v7725
      %v8116 = vmul.f32 %v7726, %v7726
      %v8117 = vmul.f32 %v7727, %v7727
      %v8118 = vmul.f32 %v7728, %v7728
      %v8119 = vmul.f32 %v7729, %v7729
      %v8120 = vmul.f32 %v7730, %v7730
      %v8121 = vmul.f32 %v7731, %v7731
      %v8122 = vmul.f32 %v7732, %v7732
      %v8123 = vmul.f32 %v7733, %v7733
      %v8124 = vmul.f32 %v7734, %v7734
      %v8125 = vmul.f32 %v7735, %v7735
      %v8126 = vmul.f32 %v7736, %v7736
      %v8127 = vmul.f32 %v7737, %v7737
      %v8128 = vmul.f32 %v7738, %v7738
      %v8129 = vmul.f32 %v7739, %v7739
      %v8130 = vmul.f32 %v7740, %v7740
      %v8131 = vmul.f32 %v7741, %v7741
      %v8132 = vmul.f32 %v7742, %v7742
      %v8133 = vmul.f32 %v7743, %v7743
      %v8134 = vmul.f32 %v7744, %v7744
      %v8135 = vmul.f32 %v7745, %v7745
      %v8136 = vmul.f32 %v7746, %v7746
      %v8137 = vmul.f32 %v7747, %v7747
      %v8138 = vmul.f32 %v7748, %v7748
      %v8139 = vmul.f32 %v7749, %v7749
      %v8140 = vmul.f32 %v7750, %v7750
      %v8141 = vmul.f32 %v7751, %v7751
      %v8142 = vmul.f32 %v7752, %v7752
      %v8143 = vmul.f32 %v7753, %v7753
      %v8144 = vmul.f32 %v7754, %v7754
      %v8145 = vmul.f32 %v7755, %v7755
      %v8146 = vmul.f32 %v7756, %v7756
      %v8147 = vmul.f32 %v7757, %v7757
      %v8148 = vmul.f32 %v7758, %v7758
      %v8149 = vmul.f32 %v7759, %v7759
      %v8150 = vmul.f32 %v7760, %v7760
      %v8151 = vmul.f32 %v7761, %v7761
      %v8152 = vmul.f32 %v7762, %v7762
      %v8153 = vmul.f32 %v7763, %v7763
      %v8154 = vmul.f32 %v7764, %v7764
      %v8155 = vmul.f32 %v7765, %v7765
      %v8156 = vmul.f32 %v7766, %v7766
      %v8157 = vmul.f32 %v7767, %v7767
      %v8158 = vmul.f32 %v7768, %v7768
      %v8159 = vmul.f32 %v7769, %v7769
      %v8160 = vmul.f32 %v7770, %v7770
      %v8161 = vmul.f32 %v7771, %v7771
      %v8162 = vmul.f32 %v7772, %v7772
      %v8163 = vmul.f32 %v7773, %v7773
      %v8164 = vmul.f32 %v7774, %v7774
      %v8165 = vmul.f32 %v7775, %v7775
      %v8166 = vmul.f32 %v7776, %v7776
      %v8167 = vmul.f32 %v7777, %v7777
      %v8168 = vmul.f32 %v7778, %v7778
      %v8169 = vmul.f32 %v7779, %v7779
      %v8170 = vmul.f32 %v7780, %v7780
      %v8171 = vmul.f32 %v7781, %v7781
      %v8172 = vmul.f32 %v7782, %v7782
      %v8173 = vmul.f32 %v7783, %v7783
      %v8174 = vmul.f32 %v7784, %v7784
      %v8175 = vmul.f32 %v7785, %v7785
      %v8176 = vmul.f32 %v7786, %v7786
      %v8177 = vmul.f32 %v7787, %v7787
      %v8178 = vmul.f32 %v7788, %v7788
      %v8179 = vmul.f32 %v7789, %v7789
      %v8180 = vmul.f32 %v7790, %v7790
      %v8181 = vmul.f32 %v7791, %v7791
      %v8182 = vmul.f32 %v7792, %v7792
      %v8183 = vmul.f32 %v7793, %v7793
      %v8184 = vmul.f32 %v7794, %v7794
      %v8185 = vsel %vm731, %v8057, 0.0
      %v8186 = vsel %vm731, %v8058, 0.0
      %v8187 = vadd.f32 %v8185, %v8186
      %v8188 = vsel %vm731, %v8059, 0.0
      %v8189 = vadd.f32 %v8187, %v8188
      %v8190 = vsel %vm731, %v8060, 0.0
      %v8191 = vadd.f32 %v8189, %v8190
      %v8192 = vsel %vm731, %v8061, 0.0
      %v8193 = vadd.f32 %v8191, %v8192
      %v8194 = vsel %vm731, %v8062, 0.0
      %v8195 = vadd.f32 %v8193, %v8194
      %v8196 = vsel %vm731, %v8063, 0.0
      %v8197 = vadd.f32 %v8195, %v8196
      %v8198 = vsel %vm731, %v8064, 0.0
      %v8199 = vadd.f32 %v8197, %v8198
      %v8200 = vsel %vm731, %v8065, 0.0
      %v8201 = vadd.f32 %v8199, %v8200
      %v8202 = vsel %vm731, %v8066, 0.0
      %v8203 = vadd.f32 %v8201, %v8202
      %v8204 = vsel %vm731, %v8067, 0.0
      %v8205 = vadd.f32 %v8203, %v8204
      %v8206 = vsel %vm731, %v8068, 0.0
      %v8207 = vadd.f32 %v8205, %v8206
      %v8208 = vsel %vm731, %v8069, 0.0
      %v8209 = vadd.f32 %v8207, %v8208
      %v8210 = vsel %vm731, %v8070, 0.0
      %v8211 = vadd.f32 %v8209, %v8210
      %v8212 = vsel %vm731, %v8071, 0.0
      %v8213 = vadd.f32 %v8211, %v8212
      %v8214 = vsel %vm731, %v8072, 0.0
      %v8215 = vadd.f32 %v8213, %v8214
      %v8216 = vsel %vm731, %v8073, 0.0
      %v8217 = vadd.f32 %v8215, %v8216
      %v8218 = vsel %vm731, %v8074, 0.0
      %v8219 = vadd.f32 %v8217, %v8218
      %v8220 = vsel %vm731, %v8075, 0.0
      %v8221 = vadd.f32 %v8219, %v8220
      %v8222 = vsel %vm731, %v8076, 0.0
      %v8223 = vadd.f32 %v8221, %v8222
      %v8224 = vsel %vm731, %v8077, 0.0
      %v8225 = vadd.f32 %v8223, %v8224
      %v8226 = vsel %vm731, %v8078, 0.0
      %v8227 = vadd.f32 %v8225, %v8226
      %v8228 = vsel %vm731, %v8079, 0.0
      %v8229 = vadd.f32 %v8227, %v8228
      %v8230 = vsel %vm731, %v8080, 0.0
      %v8231 = vadd.f32 %v8229, %v8230
      %v8232 = vsel %vm731, %v8081, 0.0
      %v8233 = vadd.f32 %v8231, %v8232
      %v8234 = vsel %vm731, %v8082, 0.0
      %v8235 = vadd.f32 %v8233, %v8234
      %v8236 = vsel %vm731, %v8083, 0.0
      %v8237 = vadd.f32 %v8235, %v8236
      %v8238 = vsel %vm731, %v8084, 0.0
      %v8239 = vadd.f32 %v8237, %v8238
      %v8240 = vsel %vm731, %v8085, 0.0
      %v8241 = vadd.f32 %v8239, %v8240
      %v8242 = vsel %vm731, %v8086, 0.0
      %v8243 = vadd.f32 %v8241, %v8242
      %v8244 = vsel %vm731, %v8087, 0.0
      %v8245 = vadd.f32 %v8243, %v8244
      %v8246 = vsel %vm731, %v8088, 0.0
      %v8247 = vadd.f32 %v8245, %v8246
      %v8248 = vsel %vm731, %v8089, 0.0
      %v8249 = vadd.f32 %v8247, %v8248
      %v8250 = vsel %vm731, %v8090, 0.0
      %v8251 = vadd.f32 %v8249, %v8250
      %v8252 = vsel %vm731, %v8091, 0.0
      %v8253 = vadd.f32 %v8251, %v8252
      %v8254 = vsel %vm731, %v8092, 0.0
      %v8255 = vadd.f32 %v8253, %v8254
      %v8256 = vsel %vm731, %v8093, 0.0
      %v8257 = vadd.f32 %v8255, %v8256
      %v8258 = vsel %vm731, %v8094, 0.0
      %v8259 = vadd.f32 %v8257, %v8258
      %v8260 = vsel %vm731, %v8095, 0.0
      %v8261 = vadd.f32 %v8259, %v8260
      %v8262 = vsel %vm731, %v8096, 0.0
      %v8263 = vadd.f32 %v8261, %v8262
      %v8264 = vsel %vm731, %v8097, 0.0
      %v8265 = vadd.f32 %v8263, %v8264
      %v8266 = vsel %vm731, %v8098, 0.0
      %v8267 = vadd.f32 %v8265, %v8266
      %v8268 = vsel %vm731, %v8099, 0.0
      %v8269 = vadd.f32 %v8267, %v8268
      %v8270 = vsel %vm731, %v8100, 0.0
      %v8271 = vadd.f32 %v8269, %v8270
      %v8272 = vsel %vm731, %v8101, 0.0
      %v8273 = vadd.f32 %v8271, %v8272
      %v8274 = vsel %vm731, %v8102, 0.0
      %v8275 = vadd.f32 %v8273, %v8274
      %v8276 = vsel %vm731, %v8103, 0.0
      %v8277 = vadd.f32 %v8275, %v8276
      %v8278 = vsel %vm731, %v8104, 0.0
      %v8279 = vadd.f32 %v8277, %v8278
      %v8280 = vsel %vm731, %v8105, 0.0
      %v8281 = vadd.f32 %v8279, %v8280
      %v8282 = vsel %vm731, %v8106, 0.0
      %v8283 = vadd.f32 %v8281, %v8282
      %v8284 = vsel %vm731, %v8107, 0.0
      %v8285 = vadd.f32 %v8283, %v8284
      %v8286 = vsel %vm731, %v8108, 0.0
      %v8287 = vadd.f32 %v8285, %v8286
      %v8288 = vsel %vm731, %v8109, 0.0
      %v8289 = vadd.f32 %v8287, %v8288
      %v8290 = vsel %vm731, %v8110, 0.0
      %v8291 = vadd.f32 %v8289, %v8290
      %v8292 = vsel %vm731, %v8111, 0.0
      %v8293 = vadd.f32 %v8291, %v8292
      %v8294 = vsel %vm731, %v8112, 0.0
      %v8295 = vadd.f32 %v8293, %v8294
      %v8296 = vsel %vm731, %v8113, 0.0
      %v8297 = vadd.f32 %v8295, %v8296
      %v8298 = vsel %vm731, %v8114, 0.0
      %v8299 = vadd.f32 %v8297, %v8298
      %v8300 = vsel %vm731, %v8115, 0.0
      %v8301 = vadd.f32 %v8299, %v8300
      %v8302 = vsel %vm731, %v8116, 0.0
      %v8303 = vadd.f32 %v8301, %v8302
      %v8304 = vsel %vm731, %v8117, 0.0
      %v8305 = vadd.f32 %v8303, %v8304
      %v8306 = vsel %vm731, %v8118, 0.0
      %v8307 = vadd.f32 %v8305, %v8306
      %v8308 = vsel %vm731, %v8119, 0.0
      %v8309 = vadd.f32 %v8307, %v8308
      %v8310 = vsel %vm731, %v8120, 0.0
      %v8311 = vadd.f32 %v8309, %v8310
      %v8312 = vsel %vm731, %v8121, 0.0
      %v8313 = vadd.f32 %v8311, %v8312
      %v8314 = vsel %vm731, %v8122, 0.0
      %v8315 = vadd.f32 %v8313, %v8314
      %v8316 = vsel %vm731, %v8123, 0.0
      %v8317 = vadd.f32 %v8315, %v8316
      %v8318 = vsel %vm731, %v8124, 0.0
      %v8319 = vadd.f32 %v8317, %v8318
      %v8320 = vsel %vm731, %v8125, 0.0
      %v8321 = vadd.f32 %v8319, %v8320
      %v8322 = vsel %vm731, %v8126, 0.0
      %v8323 = vadd.f32 %v8321, %v8322
      %v8324 = vsel %vm731, %v8127, 0.0
      %v8325 = vadd.f32 %v8323, %v8324
      %v8326 = vsel %vm731, %v8128, 0.0
      %v8327 = vadd.f32 %v8325, %v8326
      %v8328 = vsel %vm731, %v8129, 0.0
      %v8329 = vadd.f32 %v8327, %v8328
      %v8330 = vsel %vm731, %v8130, 0.0
      %v8331 = vadd.f32 %v8329, %v8330
      %v8332 = vsel %vm731, %v8131, 0.0
      %v8333 = vadd.f32 %v8331, %v8332
      %v8334 = vsel %vm731, %v8132, 0.0
      %v8335 = vadd.f32 %v8333, %v8334
      %v8336 = vsel %vm731, %v8133, 0.0
      %v8337 = vadd.f32 %v8335, %v8336
      %v8338 = vsel %vm731, %v8134, 0.0
      %v8339 = vadd.f32 %v8337, %v8338
      %v8340 = vsel %vm731, %v8135, 0.0
      %v8341 = vadd.f32 %v8339, %v8340
      %v8342 = vsel %vm731, %v8136, 0.0
      %v8343 = vadd.f32 %v8341, %v8342
      %v8344 = vsel %vm731, %v8137, 0.0
      %v8345 = vadd.f32 %v8343, %v8344
      %v8346 = vsel %vm731, %v8138, 0.0
      %v8347 = vadd.f32 %v8345, %v8346
      %v8348 = vsel %vm731, %v8139, 0.0
      %v8349 = vadd.f32 %v8347, %v8348
      %v8350 = vsel %vm731, %v8140, 0.0
      %v8351 = vadd.f32 %v8349, %v8350
      %v8352 = vsel %vm731, %v8141, 0.0
      %v8353 = vadd.f32 %v8351, %v8352
      %v8354 = vsel %vm731, %v8142, 0.0
      %v8355 = vadd.f32 %v8353, %v8354
      %v8356 = vsel %vm731, %v8143, 0.0
      %v8357 = vadd.f32 %v8355, %v8356
      %v8358 = vsel %vm731, %v8144, 0.0
      %v8359 = vadd.f32 %v8357, %v8358
      %v8360 = vsel %vm731, %v8145, 0.0
      %v8361 = vadd.f32 %v8359, %v8360
      %v8362 = vsel %vm731, %v8146, 0.0
      %v8363 = vadd.f32 %v8361, %v8362
      %v8364 = vsel %vm731, %v8147, 0.0
      %v8365 = vadd.f32 %v8363, %v8364
      %v8366 = vsel %vm731, %v8148, 0.0
      %v8367 = vadd.f32 %v8365, %v8366
      %v8368 = vsel %vm731, %v8149, 0.0
      %v8369 = vadd.f32 %v8367, %v8368
      %v8370 = vsel %vm731, %v8150, 0.0
      %v8371 = vadd.f32 %v8369, %v8370
      %v8372 = vsel %vm731, %v8151, 0.0
      %v8373 = vadd.f32 %v8371, %v8372
      %v8374 = vsel %vm731, %v8152, 0.0
      %v8375 = vadd.f32 %v8373, %v8374
      %v8376 = vsel %vm731, %v8153, 0.0
      %v8377 = vadd.f32 %v8375, %v8376
      %v8378 = vsel %vm731, %v8154, 0.0
      %v8379 = vadd.f32 %v8377, %v8378
      %v8380 = vsel %vm731, %v8155, 0.0
      %v8381 = vadd.f32 %v8379, %v8380
      %v8382 = vsel %vm731, %v8156, 0.0
      %v8383 = vadd.f32 %v8381, %v8382
      %v8384 = vsel %vm731, %v8157, 0.0
      %v8385 = vadd.f32 %v8383, %v8384
      %v8386 = vsel %vm731, %v8158, 0.0
      %v8387 = vadd.f32 %v8385, %v8386
      %v8388 = vsel %vm731, %v8159, 0.0
      %v8389 = vadd.f32 %v8387, %v8388
      %v8390 = vsel %vm731, %v8160, 0.0
      %v8391 = vadd.f32 %v8389, %v8390
      %v8392 = vsel %vm731, %v8161, 0.0
      %v8393 = vadd.f32 %v8391, %v8392
      %v8394 = vsel %vm731, %v8162, 0.0
      %v8395 = vadd.f32 %v8393, %v8394
      %v8396 = vsel %vm731, %v8163, 0.0
      %v8397 = vadd.f32 %v8395, %v8396
      %v8398 = vsel %vm731, %v8164, 0.0
      %v8399 = vadd.f32 %v8397, %v8398
      %v8400 = vsel %vm731, %v8165, 0.0
      %v8401 = vadd.f32 %v8399, %v8400
      %v8402 = vsel %vm731, %v8166, 0.0
      %v8403 = vadd.f32 %v8401, %v8402
      %v8404 = vsel %vm731, %v8167, 0.0
      %v8405 = vadd.f32 %v8403, %v8404
      %v8406 = vsel %vm731, %v8168, 0.0
      %v8407 = vadd.f32 %v8405, %v8406
      %v8408 = vsel %vm731, %v8169, 0.0
      %v8409 = vadd.f32 %v8407, %v8408
      %v8410 = vsel %vm731, %v8170, 0.0
      %v8411 = vadd.f32 %v8409, %v8410
      %v8412 = vsel %vm731, %v8171, 0.0
      %v8413 = vadd.f32 %v8411, %v8412
      %v8414 = vsel %vm731, %v8172, 0.0
      %v8415 = vadd.f32 %v8413, %v8414
      %v8416 = vsel %vm731, %v8173, 0.0
      %v8417 = vadd.f32 %v8415, %v8416
      %v8418 = vsel %vm731, %v8174, 0.0
      %v8419 = vadd.f32 %v8417, %v8418
      %v8420 = vsel %vm731, %v8175, 0.0
      %v8421 = vadd.f32 %v8419, %v8420
      %v8422 = vsel %vm731, %v8176, 0.0
      %v8423 = vadd.f32 %v8421, %v8422
      %v8424 = vsel %vm731, %v8177, 0.0
      %v8425 = vadd.f32 %v8423, %v8424
      %v8426 = vsel %vm731, %v8178, 0.0
      %v8427 = vadd.f32 %v8425, %v8426
      %v8428 = vsel %vm731, %v8179, 0.0
      %v8429 = vadd.f32 %v8427, %v8428
      %v8430 = vsel %vm731, %v8180, 0.0
      %v8431 = vadd.f32 %v8429, %v8430
      %v8432 = vsel %vm731, %v8181, 0.0
      %v8433 = vadd.f32 %v8431, %v8432
      %v8434 = vsel %vm731, %v8182, 0.0
      %v8435 = vadd.f32 %v8433, %v8434
      %v8436 = vsel %vm731, %v8183, 0.0
      %v8437 = vadd.f32 %v8435, %v8436
      %v8438 = vsel %vm731, %v8184, 0.0
      %v8439 = vadd.f32 %v8437, %v8438
      %v8440 = vrot.slane %v8439, 4
      %v8441 = vadd.f32 %v8439, %v8440
      %v8442 = vrot.slane %v8441, 2
      %v8443 = vadd.f32 %v8441, %v8442
      %v8444 = vrot.slane %v8443, 1
      %v8445 = vadd.f32 %v8443, %v8444
      %v8446 = vmul.f32 %v8445, 0.0009765625
      %v8447 = vsub.f32 %v7667, %v8056
      %v8448 = vsub.f32 %v7668, %v8056
      %v8449 = vsub.f32 %v7669, %v8056
      %v8450 = vsub.f32 %v7670, %v8056
      %v8451 = vsub.f32 %v7671, %v8056
      %v8452 = vsub.f32 %v7672, %v8056
      %v8453 = vsub.f32 %v7673, %v8056
      %v8454 = vsub.f32 %v7674, %v8056
      %v8455 = vsub.f32 %v7675, %v8056
      %v8456 = vsub.f32 %v7676, %v8056
      %v8457 = vsub.f32 %v7677, %v8056
      %v8458 = vsub.f32 %v7678, %v8056
      %v8459 = vsub.f32 %v7679, %v8056
      %v8460 = vsub.f32 %v7680, %v8056
      %v8461 = vsub.f32 %v7681, %v8056
      %v8462 = vsub.f32 %v7682, %v8056
      %v8463 = vsub.f32 %v7683, %v8056
      %v8464 = vsub.f32 %v7684, %v8056
      %v8465 = vsub.f32 %v7685, %v8056
      %v8466 = vsub.f32 %v7686, %v8056
      %v8467 = vsub.f32 %v7687, %v8056
      %v8468 = vsub.f32 %v7688, %v8056
      %v8469 = vsub.f32 %v7689, %v8056
      %v8470 = vsub.f32 %v7690, %v8056
      %v8471 = vsub.f32 %v7691, %v8056
      %v8472 = vsub.f32 %v7692, %v8056
      %v8473 = vsub.f32 %v7693, %v8056
      %v8474 = vsub.f32 %v7694, %v8056
      %v8475 = vsub.f32 %v7695, %v8056
      %v8476 = vsub.f32 %v7696, %v8056
      %v8477 = vsub.f32 %v7697, %v8056
      %v8478 = vsub.f32 %v7698, %v8056
      %v8479 = vsub.f32 %v7699, %v8056
      %v8480 = vsub.f32 %v7700, %v8056
      %v8481 = vsub.f32 %v7701, %v8056
      %v8482 = vsub.f32 %v7702, %v8056
      %v8483 = vsub.f32 %v7703, %v8056
      %v8484 = vsub.f32 %v7704, %v8056
      %v8485 = vsub.f32 %v7705, %v8056
      %v8486 = vsub.f32 %v7706, %v8056
      %v8487 = vsub.f32 %v7707, %v8056
      %v8488 = vsub.f32 %v7708, %v8056
      %v8489 = vsub.f32 %v7709, %v8056
      %v8490 = vsub.f32 %v7710, %v8056
      %v8491 = vsub.f32 %v7711, %v8056
      %v8492 = vsub.f32 %v7712, %v8056
      %v8493 = vsub.f32 %v7713, %v8056
      %v8494 = vsub.f32 %v7714, %v8056
      %v8495 = vsub.f32 %v7715, %v8056
      %v8496 = vsub.f32 %v7716, %v8056
      %v8497 = vsub.f32 %v7717, %v8056
      %v8498 = vsub.f32 %v7718, %v8056
      %v8499 = vsub.f32 %v7719, %v8056
      %v8500 = vsub.f32 %v7720, %v8056
      %v8501 = vsub.f32 %v7721, %v8056
      %v8502 = vsub.f32 %v7722, %v8056
      %v8503 = vsub.f32 %v7723, %v8056
      %v8504 = vsub.f32 %v7724, %v8056
      %v8505 = vsub.f32 %v7725, %v8056
      %v8506 = vsub.f32 %v7726, %v8056
      %v8507 = vsub.f32 %v7727, %v8056
      %v8508 = vsub.f32 %v7728, %v8056
      %v8509 = vsub.f32 %v7729, %v8056
      %v8510 = vsub.f32 %v7730, %v8056
      %v8511 = vsub.f32 %v7731, %v8056
      %v8512 = vsub.f32 %v7732, %v8056
      %v8513 = vsub.f32 %v7733, %v8056
      %v8514 = vsub.f32 %v7734, %v8056
      %v8515 = vsub.f32 %v7735, %v8056
      %v8516 = vsub.f32 %v7736, %v8056
      %v8517 = vsub.f32 %v7737, %v8056
      %v8518 = vsub.f32 %v7738, %v8056
      %v8519 = vsub.f32 %v7739, %v8056
      %v8520 = vsub.f32 %v7740, %v8056
      %v8521 = vsub.f32 %v7741, %v8056
      %v8522 = vsub.f32 %v7742, %v8056
      %v8523 = vsub.f32 %v7743, %v8056
      %v8524 = vsub.f32 %v7744, %v8056
      %v8525 = vsub.f32 %v7745, %v8056
      %v8526 = vsub.f32 %v7746, %v8056
      %v8527 = vsub.f32 %v7747, %v8056
      %v8528 = vsub.f32 %v7748, %v8056
      %v8529 = vsub.f32 %v7749, %v8056
      %v8530 = vsub.f32 %v7750, %v8056
      %v8531 = vsub.f32 %v7751, %v8056
      %v8532 = vsub.f32 %v7752, %v8056
      %v8533 = vsub.f32 %v7753, %v8056
      %v8534 = vsub.f32 %v7754, %v8056
      %v8535 = vsub.f32 %v7755, %v8056
      %v8536 = vsub.f32 %v7756, %v8056
      %v8537 = vsub.f32 %v7757, %v8056
      %v8538 = vsub.f32 %v7758, %v8056
      %v8539 = vsub.f32 %v7759, %v8056
      %v8540 = vsub.f32 %v7760, %v8056
      %v8541 = vsub.f32 %v7761, %v8056
      %v8542 = vsub.f32 %v7762, %v8056
      %v8543 = vsub.f32 %v7763, %v8056
      %v8544 = vsub.f32 %v7764, %v8056
      %v8545 = vsub.f32 %v7765, %v8056
      %v8546 = vsub.f32 %v7766, %v8056
      %v8547 = vsub.f32 %v7767, %v8056
      %v8548 = vsub.f32 %v7768, %v8056
      %v8549 = vsub.f32 %v7769, %v8056
      %v8550 = vsub.f32 %v7770, %v8056
      %v8551 = vsub.f32 %v7771, %v8056
      %v8552 = vsub.f32 %v7772, %v8056
      %v8553 = vsub.f32 %v7773, %v8056
      %v8554 = vsub.f32 %v7774, %v8056
      %v8555 = vsub.f32 %v7775, %v8056
      %v8556 = vsub.f32 %v7776, %v8056
      %v8557 = vsub.f32 %v7777, %v8056
      %v8558 = vsub.f32 %v7778, %v8056
      %v8559 = vsub.f32 %v7779, %v8056
      %v8560 = vsub.f32 %v7780, %v8056
      %v8561 = vsub.f32 %v7781, %v8056
      %v8562 = vsub.f32 %v7782, %v8056
      %v8563 = vsub.f32 %v7783, %v8056
      %v8564 = vsub.f32 %v7784, %v8056
      %v8565 = vsub.f32 %v7785, %v8056
      %v8566 = vsub.f32 %v7786, %v8056
      %v8567 = vsub.f32 %v7787, %v8056
      %v8568 = vsub.f32 %v7788, %v8056
      %v8569 = vsub.f32 %v7789, %v8056
      %v8570 = vsub.f32 %v7790, %v8056
      %v8571 = vsub.f32 %v7791, %v8056
      %v8572 = vsub.f32 %v7792, %v8056
      %v8573 = vsub.f32 %v7793, %v8056
      %v8574 = vsub.f32 %v7794, %v8056
      %v8575 = vmul.f32 %v8056, %v8056
      %v8576 = vsub.f32 %v8446, %v8575
      %v8577 = vadd.f32 %v8576, 1e-05
      %v8578 = vrsqrt.pop %v8577
      %v8579 = vmul.f32 %v8447, %v8578
      %v8580 = vmul.f32 %v8448, %v8578
      %v8581 = vmul.f32 %v8449, %v8578
      %v8582 = vmul.f32 %v8450, %v8578
      %v8583 = vmul.f32 %v8451, %v8578
      %v8584 = vmul.f32 %v8452, %v8578
      %v8585 = vmul.f32 %v8453, %v8578
      %v8586 = vmul.f32 %v8454, %v8578
      %v8587 = vmul.f32 %v8455, %v8578
      %v8588 = vmul.f32 %v8456, %v8578
      %v8589 = vmul.f32 %v8457, %v8578
      %v8590 = vmul.f32 %v8458, %v8578
      %v8591 = vmul.f32 %v8459, %v8578
      %v8592 = vmul.f32 %v8460, %v8578
      %v8593 = vmul.f32 %v8461, %v8578
      %v8594 = vmul.f32 %v8462, %v8578
      %v8595 = vmul.f32 %v8463, %v8578
      %v8596 = vmul.f32 %v8464, %v8578
      %v8597 = vmul.f32 %v8465, %v8578
      %v8598 = vmul.f32 %v8466, %v8578
      %v8599 = vmul.f32 %v8467, %v8578
      %v8600 = vmul.f32 %v8468, %v8578
      %v8601 = vmul.f32 %v8469, %v8578
      %v8602 = vmul.f32 %v8470, %v8578
      %v8603 = vmul.f32 %v8471, %v8578
      %v8604 = vmul.f32 %v8472, %v8578
      %v8605 = vmul.f32 %v8473, %v8578
      %v8606 = vmul.f32 %v8474, %v8578
      %v8607 = vmul.f32 %v8475, %v8578
      %v8608 = vmul.f32 %v8476, %v8578
      %v8609 = vmul.f32 %v8477, %v8578
      %v8610 = vmul.f32 %v8478, %v8578
      %v8611 = vmul.f32 %v8479, %v8578
      %v8612 = vmul.f32 %v8480, %v8578
      %v8613 = vmul.f32 %v8481, %v8578
      %v8614 = vmul.f32 %v8482, %v8578
      %v8615 = vmul.f32 %v8483, %v8578
      %v8616 = vmul.f32 %v8484, %v8578
      %v8617 = vmul.f32 %v8485, %v8578
      %v8618 = vmul.f32 %v8486, %v8578
      %v8619 = vmul.f32 %v8487, %v8578
      %v8620 = vmul.f32 %v8488, %v8578
      %v8621 = vmul.f32 %v8489, %v8578
      %v8622 = vmul.f32 %v8490, %v8578
      %v8623 = vmul.f32 %v8491, %v8578
      %v8624 = vmul.f32 %v8492, %v8578
      %v8625 = vmul.f32 %v8493, %v8578
      %v8626 = vmul.f32 %v8494, %v8578
      %v8627 = vmul.f32 %v8495, %v8578
      %v8628 = vmul.f32 %v8496, %v8578
      %v8629 = vmul.f32 %v8497, %v8578
      %v8630 = vmul.f32 %v8498, %v8578
      %v8631 = vmul.f32 %v8499, %v8578
      %v8632 = vmul.f32 %v8500, %v8578
      %v8633 = vmul.f32 %v8501, %v8578
      %v8634 = vmul.f32 %v8502, %v8578
      %v8635 = vmul.f32 %v8503, %v8578
      %v8636 = vmul.f32 %v8504, %v8578
      %v8637 = vmul.f32 %v8505, %v8578
      %v8638 = vmul.f32 %v8506, %v8578
      %v8639 = vmul.f32 %v8507, %v8578
      %v8640 = vmul.f32 %v8508, %v8578
      %v8641 = vmul.f32 %v8509, %v8578
      %v8642 = vmul.f32 %v8510, %v8578
      %v8643 = vmul.f32 %v8511, %v8578
      %v8644 = vmul.f32 %v8512, %v8578
      %v8645 = vmul.f32 %v8513, %v8578
      %v8646 = vmul.f32 %v8514, %v8578
      %v8647 = vmul.f32 %v8515, %v8578
      %v8648 = vmul.f32 %v8516, %v8578
      %v8649 = vmul.f32 %v8517, %v8578
      %v8650 = vmul.f32 %v8518, %v8578
      %v8651 = vmul.f32 %v8519, %v8578
      %v8652 = vmul.f32 %v8520, %v8578
      %v8653 = vmul.f32 %v8521, %v8578
      %v8654 = vmul.f32 %v8522, %v8578
      %v8655 = vmul.f32 %v8523, %v8578
      %v8656 = vmul.f32 %v8524, %v8578
      %v8657 = vmul.f32 %v8525, %v8578
      %v8658 = vmul.f32 %v8526, %v8578
      %v8659 = vmul.f32 %v8527, %v8578
      %v8660 = vmul.f32 %v8528, %v8578
      %v8661 = vmul.f32 %v8529, %v8578
      %v8662 = vmul.f32 %v8530, %v8578
      %v8663 = vmul.f32 %v8531, %v8578
      %v8664 = vmul.f32 %v8532, %v8578
      %v8665 = vmul.f32 %v8533, %v8578
      %v8666 = vmul.f32 %v8534, %v8578
      %v8667 = vmul.f32 %v8535, %v8578
      %v8668 = vmul.f32 %v8536, %v8578
      %v8669 = vmul.f32 %v8537, %v8578
      %v8670 = vmul.f32 %v8538, %v8578
      %v8671 = vmul.f32 %v8539, %v8578
      %v8672 = vmul.f32 %v8540, %v8578
      %v8673 = vmul.f32 %v8541, %v8578
      %v8674 = vmul.f32 %v8542, %v8578
      %v8675 = vmul.f32 %v8543, %v8578
      %v8676 = vmul.f32 %v8544, %v8578
      %v8677 = vmul.f32 %v8545, %v8578
      %v8678 = vmul.f32 %v8546, %v8578
      %v8679 = vmul.f32 %v8547, %v8578
      %v8680 = vmul.f32 %v8548, %v8578
      %v8681 = vmul.f32 %v8549, %v8578
      %v8682 = vmul.f32 %v8550, %v8578
      %v8683 = vmul.f32 %v8551, %v8578
      %v8684 = vmul.f32 %v8552, %v8578
      %v8685 = vmul.f32 %v8553, %v8578
      %v8686 = vmul.f32 %v8554, %v8578
      %v8687 = vmul.f32 %v8555, %v8578
      %v8688 = vmul.f32 %v8556, %v8578
      %v8689 = vmul.f32 %v8557, %v8578
      %v8690 = vmul.f32 %v8558, %v8578
      %v8691 = vmul.f32 %v8559, %v8578
      %v8692 = vmul.f32 %v8560, %v8578
      %v8693 = vmul.f32 %v8561, %v8578
      %v8694 = vmul.f32 %v8562, %v8578
      %v8695 = vmul.f32 %v8563, %v8578
      %v8696 = vmul.f32 %v8564, %v8578
      %v8697 = vmul.f32 %v8565, %v8578
      %v8698 = vmul.f32 %v8566, %v8578
      %v8699 = vmul.f32 %v8567, %v8578
      %v8700 = vmul.f32 %v8568, %v8578
      %v8701 = vmul.f32 %v8569, %v8578
      %v8702 = vmul.f32 %v8570, %v8578
      %v8703 = vmul.f32 %v8571, %v8578
      %v8704 = vmul.f32 %v8572, %v8578
      %v8705 = vmul.f32 %v8573, %v8578
      %v8706 = vmul.f32 %v8574, %v8578
      %v8707 = vmax.f32 %v8579, 0.0
      %v8708 = vmax.f32 %v8580, 0.0
      %v8709 = vmax.f32 %v8581, 0.0
      %v8710 = vmax.f32 %v8582, 0.0
      %v8711 = vmax.f32 %v8583, 0.0
      %v8712 = vmax.f32 %v8584, 0.0
      %v8713 = vmax.f32 %v8585, 0.0
      %v8714 = vmax.f32 %v8586, 0.0
      %v8715 = vmax.f32 %v8587, 0.0
      %v8716 = vmax.f32 %v8588, 0.0
      %v8717 = vmax.f32 %v8589, 0.0
      %v8718 = vmax.f32 %v8590, 0.0
      %v8719 = vmax.f32 %v8591, 0.0
      %v8720 = vmax.f32 %v8592, 0.0
      %v8721 = vmax.f32 %v8593, 0.0
      %v8722 = vmax.f32 %v8594, 0.0
      %v8723 = vmax.f32 %v8595, 0.0
      %v8724 = vmax.f32 %v8596, 0.0
      %v8725 = vmax.f32 %v8597, 0.0
      %v8726 = vmax.f32 %v8598, 0.0
      %v8727 = vmax.f32 %v8599, 0.0
      %v8728 = vmax.f32 %v8600, 0.0
      %v8729 = vmax.f32 %v8601, 0.0
      %v8730 = vmax.f32 %v8602, 0.0
      %v8731 = vmax.f32 %v8603, 0.0
      %v8732 = vmax.f32 %v8604, 0.0
      %v8733 = vmax.f32 %v8605, 0.0
      %v8734 = vmax.f32 %v8606, 0.0
      %v8735 = vmax.f32 %v8607, 0.0
      %v8736 = vmax.f32 %v8608, 0.0
      %v8737 = vmax.f32 %v8609, 0.0
      %v8738 = vmax.f32 %v8610, 0.0
      %v8739 = vmax.f32 %v8611, 0.0
      %v8740 = vmax.f32 %v8612, 0.0
      %v8741 = vmax.f32 %v8613, 0.0
      %v8742 = vmax.f32 %v8614, 0.0
      %v8743 = vmax.f32 %v8615, 0.0
      %v8744 = vmax.f32 %v8616, 0.0
      %v8745 = vmax.f32 %v8617, 0.0
      %v8746 = vmax.f32 %v8618, 0.0
      %v8747 = vmax.f32 %v8619, 0.0
      %v8748 = vmax.f32 %v8620, 0.0
      %v8749 = vmax.f32 %v8621, 0.0
      %v8750 = vmax.f32 %v8622, 0.0
      %v8751 = vmax.f32 %v8623, 0.0
      %v8752 = vmax.f32 %v8624, 0.0
      %v8753 = vmax.f32 %v8625, 0.0
      %v8754 = vmax.f32 %v8626, 0.0
      %v8755 = vmax.f32 %v8627, 0.0
      %v8756 = vmax.f32 %v8628, 0.0
      %v8757 = vmax.f32 %v8629, 0.0
      %v8758 = vmax.f32 %v8630, 0.0
      %v8759 = vmax.f32 %v8631, 0.0
      %v8760 = vmax.f32 %v8632, 0.0
      %v8761 = vmax.f32 %v8633, 0.0
      %v8762 = vmax.f32 %v8634, 0.0
      %v8763 = vmax.f32 %v8635, 0.0
      %v8764 = vmax.f32 %v8636, 0.0
      %v8765 = vmax.f32 %v8637, 0.0
      %v8766 = vmax.f32 %v8638, 0.0
      %v8767 = vmax.f32 %v8639, 0.0
      %v8768 = vmax.f32 %v8640, 0.0
      %v8769 = vmax.f32 %v8641, 0.0
      %v8770 = vmax.f32 %v8642, 0.0
      %v8771 = vmax.f32 %v8643, 0.0
      %v8772 = vmax.f32 %v8644, 0.0
      %v8773 = vmax.f32 %v8645, 0.0
      %v8774 = vmax.f32 %v8646, 0.0
      %v8775 = vmax.f32 %v8647, 0.0
      %v8776 = vmax.f32 %v8648, 0.0
      %v8777 = vmax.f32 %v8649, 0.0
      %v8778 = vmax.f32 %v8650, 0.0
      %v8779 = vmax.f32 %v8651, 0.0
      %v8780 = vmax.f32 %v8652, 0.0
      %v8781 = vmax.f32 %v8653, 0.0
      %v8782 = vmax.f32 %v8654, 0.0
      %v8783 = vmax.f32 %v8655, 0.0
      %v8784 = vmax.f32 %v8656, 0.0
      %v8785 = vmax.f32 %v8657, 0.0
      %v8786 = vmax.f32 %v8658, 0.0
      %v8787 = vmax.f32 %v8659, 0.0
      %v8788 = vmax.f32 %v8660, 0.0
      %v8789 = vmax.f32 %v8661, 0.0
      %v8790 = vmax.f32 %v8662, 0.0
      %v8791 = vmax.f32 %v8663, 0.0
      %v8792 = vmax.f32 %v8664, 0.0
      %v8793 = vmax.f32 %v8665, 0.0
      %v8794 = vmax.f32 %v8666, 0.0
      %v8795 = vmax.f32 %v8667, 0.0
      %v8796 = vmax.f32 %v8668, 0.0
      %v8797 = vmax.f32 %v8669, 0.0
      %v8798 = vmax.f32 %v8670, 0.0
      %v8799 = vmax.f32 %v8671, 0.0
      %v8800 = vmax.f32 %v8672, 0.0
      %v8801 = vmax.f32 %v8673, 0.0
      %v8802 = vmax.f32 %v8674, 0.0
      %v8803 = vmax.f32 %v8675, 0.0
      %v8804 = vmax.f32 %v8676, 0.0
      %v8805 = vmax.f32 %v8677, 0.0
      %v8806 = vmax.f32 %v8678, 0.0
      %v8807 = vmax.f32 %v8679, 0.0
      %v8808 = vmax.f32 %v8680, 0.0
      %v8809 = vmax.f32 %v8681, 0.0
      %v8810 = vmax.f32 %v8682, 0.0
      %v8811 = vmax.f32 %v8683, 0.0
      %v8812 = vmax.f32 %v8684, 0.0
      %v8813 = vmax.f32 %v8685, 0.0
      %v8814 = vmax.f32 %v8686, 0.0
      %v8815 = vmax.f32 %v8687, 0.0
      %v8816 = vmax.f32 %v8688, 0.0
      %v8817 = vmax.f32 %v8689, 0.0
      %v8818 = vmax.f32 %v8690, 0.0
      %v8819 = vmax.f32 %v8691, 0.0
      %v8820 = vmax.f32 %v8692, 0.0
      %v8821 = vmax.f32 %v8693, 0.0
      %v8822 = vmax.f32 %v8694, 0.0
      %v8823 = vmax.f32 %v8695, 0.0
      %v8824 = vmax.f32 %v8696, 0.0
      %v8825 = vmax.f32 %v8697, 0.0
      %v8826 = vmax.f32 %v8698, 0.0
      %v8827 = vmax.f32 %v8699, 0.0
      %v8828 = vmax.f32 %v8700, 0.0
      %v8829 = vmax.f32 %v8701, 0.0
      %v8830 = vmax.f32 %v8702, 0.0
      %v8831 = vmax.f32 %v8703, 0.0
      %v8832 = vmax.f32 %v8704, 0.0
      %v8833 = vmax.f32 %v8705, 0.0
      %v8834 = vmax.f32 %v8706, 0.0
      %8835 = vst.msk [vmem:[%s183] sm:$0xff] %vm731, %v8707
      %8836 = vst.msk [vmem:[%s183 + $0x8] sm:$0xff] %vm731, %v8708
      %8837 = vst.msk [vmem:[%s183 + $0x10] sm:$0xff] %vm731, %v8709
      %8838 = vst.msk [vmem:[%s183 + $0x18] sm:$0xff] %vm731, %v8710
      %8839 = vst.msk [vmem:[%s183 + $0x20] sm:$0xff] %vm731, %v8711
      %8840 = vst.msk [vmem:[%s183 + $0x28] sm:$0xff] %vm731, %v8712
      %8841 = vst.msk [vmem:[%s183 + $0x30] sm:$0xff] %vm731, %v8713
      %8842 = vst.msk [vmem:[%s183 + $0x38] sm:$0xff] %vm731, %v8714
      %8843 = vst.msk [vmem:[%s183 + $0x40] sm:$0xff] %vm731, %v8715
      %8844 = vst.msk [vmem:[%s183 + $0x48] sm:$0xff] %vm731, %v8716
      %8845 = vst.msk [vmem:[%s183 + $0x50] sm:$0xff] %vm731, %v8717
      %8846 = vst.msk [vmem:[%s183 + $0x58] sm:$0xff] %vm731, %v8718
      %8847 = vst.msk [vmem:[%s183 + $0x60] sm:$0xff] %vm731, %v8719
      %8848 = vst.msk [vmem:[%s183 + $0x68] sm:$0xff] %vm731, %v8720
      %8849 = vst.msk [vmem:[%s183 + $0x70] sm:$0xff] %vm731, %v8721
      %8850 = vst.msk [vmem:[%s183 + $0x78] sm:$0xff] %vm731, %v8722
      %8851 = vst.msk [vmem:[%s183 + $0x80] sm:$0xff] %vm731, %v8723
      %8852 = vst.msk [vmem:[%s183 + $0x88] sm:$0xff] %vm731, %v8724
      %8853 = vst.msk [vmem:[%s183 + $0x90] sm:$0xff] %vm731, %v8725
      %8854 = vst.msk [vmem:[%s183 + $0x98] sm:$0xff] %vm731, %v8726
      %8855 = vst.msk [vmem:[%s183 + $0xa0] sm:$0xff] %vm731, %v8727
      %8856 = vst.msk [vmem:[%s183 + $0xa8] sm:$0xff] %vm731, %v8728
      %8857 = vst.msk [vmem:[%s183 + $0xb0] sm:$0xff] %vm731, %v8729
      %8858 = vst.msk [vmem:[%s183 + $0xb8] sm:$0xff] %vm731, %v8730
      %8859 = vst.msk [vmem:[%s183 + $0xc0] sm:$0xff] %vm731, %v8731
      %8860 = vst.msk [vmem:[%s183 + $0xc8] sm:$0xff] %vm731, %v8732
      %8861 = vst.msk [vmem:[%s183 + $0xd0] sm:$0xff] %vm731, %v8733
      %8862 = vst.msk [vmem:[%s183 + $0xd8] sm:$0xff] %vm731, %v8734
      %8863 = vst.msk [vmem:[%s183 + $0xe0] sm:$0xff] %vm731, %v8735
      %8864 = vst.msk [vmem:[%s183 + $0xe8] sm:$0xff] %vm731, %v8736
      %8865 = vst.msk [vmem:[%s183 + $0xf0] sm:$0xff] %vm731, %v8737
      %8866 = vst.msk [vmem:[%s183 + $0xf8] sm:$0xff] %vm731, %v8738
      %8867 = vst.msk [vmem:[%s183 + $0x100] sm:$0xff] %vm731, %v8739
      %8868 = vst.msk [vmem:[%s183 + $0x108] sm:$0xff] %vm731, %v8740
      %8869 = vst.msk [vmem:[%s183 + $0x110] sm:$0xff] %vm731, %v8741
      %8870 = vst.msk [vmem:[%s183 + $0x118] sm:$0xff] %vm731, %v8742
      %8871 = vst.msk [vmem:[%s183 + $0x120] sm:$0xff] %vm731, %v8743
      %8872 = vst.msk [vmem:[%s183 + $0x128] sm:$0xff] %vm731, %v8744
      %8873 = vst.msk [vmem:[%s183 + $0x130] sm:$0xff] %vm731, %v8745
      %8874 = vst.msk [vmem:[%s183 + $0x138] sm:$0xff] %vm731, %v8746
      %8875 = vst.msk [vmem:[%s183 + $0x140] sm:$0xff] %vm731, %v8747
      %8876 = vst.msk [vmem:[%s183 + $0x148] sm:$0xff] %vm731, %v8748
      %8877 = vst.msk [vmem:[%s183 + $0x150] sm:$0xff] %vm731, %v8749
      %8878 = vst.msk [vmem:[%s183 + $0x158] sm:$0xff] %vm731, %v8750
      %8879 = vst.msk [vmem:[%s183 + $0x160] sm:$0xff] %vm731, %v8751
      %8880 = vst.msk [vmem:[%s183 + $0x168] sm:$0xff] %vm731, %v8752
      %8881 = vst.msk [vmem:[%s183 + $0x170] sm:$0xff] %vm731, %v8753
      %8882 = vst.msk [vmem:[%s183 + $0x178] sm:$0xff] %vm731, %v8754
      %8883 = vst.msk [vmem:[%s183 + $0x180] sm:$0xff] %vm731, %v8755
      %8884 = vst.msk [vmem:[%s183 + $0x188] sm:$0xff] %vm731, %v8756
      %8885 = vst.msk [vmem:[%s183 + $0x190] sm:$0xff] %vm731, %v8757
      %8886 = vst.msk [vmem:[%s183 + $0x198] sm:$0xff] %vm731, %v8758
      %8887 = vst.msk [vmem:[%s183 + $0x1a0] sm:$0xff] %vm731, %v8759
      %8888 = vst.msk [vmem:[%s183 + $0x1a8] sm:$0xff] %vm731, %v8760
      %8889 = vst.msk [vmem:[%s183 + $0x1b0] sm:$0xff] %vm731, %v8761
      %8890 = vst.msk [vmem:[%s183 + $0x1b8] sm:$0xff] %vm731, %v8762
      %8891 = vst.msk [vmem:[%s183 + $0x1c0] sm:$0xff] %vm731, %v8763
      %8892 = vst.msk [vmem:[%s183 + $0x1c8] sm:$0xff] %vm731, %v8764
      %8893 = vst.msk [vmem:[%s183 + $0x1d0] sm:$0xff] %vm731, %v8765
      %8894 = vst.msk [vmem:[%s183 + $0x1d8] sm:$0xff] %vm731, %v8766
      %8895 = vst.msk [vmem:[%s183 + $0x1e0] sm:$0xff] %vm731, %v8767
      %8896 = vst.msk [vmem:[%s183 + $0x1e8] sm:$0xff] %vm731, %v8768
      %8897 = vst.msk [vmem:[%s183 + $0x1f0] sm:$0xff] %vm731, %v8769
      %8898 = vst.msk [vmem:[%s183 + $0x1f8] sm:$0xff] %vm731, %v8770
      %8899 = vst.msk [vmem:[%s183 + $0x200] sm:$0xff] %vm731, %v8771
      %8900 = vst.msk [vmem:[%s183 + $0x208] sm:$0xff] %vm731, %v8772
      %8901 = vst.msk [vmem:[%s183 + $0x210] sm:$0xff] %vm731, %v8773
      %8902 = vst.msk [vmem:[%s183 + $0x218] sm:$0xff] %vm731, %v8774
      %8903 = vst.msk [vmem:[%s183 + $0x220] sm:$0xff] %vm731, %v8775
      %8904 = vst.msk [vmem:[%s183 + $0x228] sm:$0xff] %vm731, %v8776
      %8905 = vst.msk [vmem:[%s183 + $0x230] sm:$0xff] %vm731, %v8777
      %8906 = vst.msk [vmem:[%s183 + $0x238] sm:$0xff] %vm731, %v8778
      %8907 = vst.msk [vmem:[%s183 + $0x240] sm:$0xff] %vm731, %v8779
      %8908 = vst.msk [vmem:[%s183 + $0x248] sm:$0xff] %vm731, %v8780
      %8909 = vst.msk [vmem:[%s183 + $0x250] sm:$0xff] %vm731, %v8781
      %8910 = vst.msk [vmem:[%s183 + $0x258] sm:$0xff] %vm731, %v8782
      %8911 = vst.msk [vmem:[%s183 + $0x260] sm:$0xff] %vm731, %v8783
      %8912 = vst.msk [vmem:[%s183 + $0x268] sm:$0xff] %vm731, %v8784
      %8913 = vst.msk [vmem:[%s183 + $0x270] sm:$0xff] %vm731, %v8785
      %8914 = vst.msk [vmem:[%s183 + $0x278] sm:$0xff] %vm731, %v8786
      %8915 = vst.msk [vmem:[%s183 + $0x280] sm:$0xff] %vm731, %v8787
      %8916 = vst.msk [vmem:[%s183 + $0x288] sm:$0xff] %vm731, %v8788
      %8917 = vst.msk [vmem:[%s183 + $0x290] sm:$0xff] %vm731, %v8789
      %8918 = vst.msk [vmem:[%s183 + $0x298] sm:$0xff] %vm731, %v8790
      %8919 = vst.msk [vmem:[%s183 + $0x2a0] sm:$0xff] %vm731, %v8791
      %8920 = vst.msk [vmem:[%s183 + $0x2a8] sm:$0xff] %vm731, %v8792
      %8921 = vst.msk [vmem:[%s183 + $0x2b0] sm:$0xff] %vm731, %v8793
      %8922 = vst.msk [vmem:[%s183 + $0x2b8] sm:$0xff] %vm731, %v8794
      %8923 = vst.msk [vmem:[%s183 + $0x2c0] sm:$0xff] %vm731, %v8795
      %8924 = vst.msk [vmem:[%s183 + $0x2c8] sm:$0xff] %vm731, %v8796
      %8925 = vst.msk [vmem:[%s183 + $0x2d0] sm:$0xff] %vm731, %v8797
      %8926 = vst.msk [vmem:[%s183 + $0x2d8] sm:$0xff] %vm731, %v8798
      %8927 = vst.msk [vmem:[%s183 + $0x2e0] sm:$0xff] %vm731, %v8799
      %8928 = vst.msk [vmem:[%s183 + $0x2e8] sm:$0xff] %vm731, %v8800
      %8929 = vst.msk [vmem:[%s183 + $0x2f0] sm:$0xff] %vm731, %v8801
      %8930 = vst.msk [vmem:[%s183 + $0x2f8] sm:$0xff] %vm731, %v8802
      %8931 = vst.msk [vmem:[%s183 + $0x300] sm:$0xff] %vm731, %v8803
      %8932 = vst.msk [vmem:[%s183 + $0x308] sm:$0xff] %vm731, %v8804
      %8933 = vst.msk [vmem:[%s183 + $0x310] sm:$0xff] %vm731, %v8805
      %8934 = vst.msk [vmem:[%s183 + $0x318] sm:$0xff] %vm731, %v8806
      %8935 = vst.msk [vmem:[%s183 + $0x320] sm:$0xff] %vm731, %v8807
      %8936 = vst.msk [vmem:[%s183 + $0x328] sm:$0xff] %vm731, %v8808
      %8937 = vst.msk [vmem:[%s183 + $0x330] sm:$0xff] %vm731, %v8809
      %8938 = vst.msk [vmem:[%s183 + $0x338] sm:$0xff] %vm731, %v8810
      %8939 = vst.msk [vmem:[%s183 + $0x340] sm:$0xff] %vm731, %v8811
      %8940 = vst.msk [vmem:[%s183 + $0x348] sm:$0xff] %vm731, %v8812
      %8941 = vst.msk [vmem:[%s183 + $0x350] sm:$0xff] %vm731, %v8813
      %8942 = vst.msk [vmem:[%s183 + $0x358] sm:$0xff] %vm731, %v8814
      %8943 = vst.msk [vmem:[%s183 + $0x360] sm:$0xff] %vm731, %v8815
      %8944 = vst.msk [vmem:[%s183 + $0x368] sm:$0xff] %vm731, %v8816
      %8945 = vst.msk [vmem:[%s183 + $0x370] sm:$0xff] %vm731, %v8817
      %8946 = vst.msk [vmem:[%s183 + $0x378] sm:$0xff] %vm731, %v8818
      %8947 = vst.msk [vmem:[%s183 + $0x380] sm:$0xff] %vm731, %v8819
      %8948 = vst.msk [vmem:[%s183 + $0x388] sm:$0xff] %vm731, %v8820
      %8949 = vst.msk [vmem:[%s183 + $0x390] sm:$0xff] %vm731, %v8821
      %8950 = vst.msk [vmem:[%s183 + $0x398] sm:$0xff] %vm731, %v8822
      %8951 = vst.msk [vmem:[%s183 + $0x3a0] sm:$0xff] %vm731, %v8823
      %8952 = vst.msk [vmem:[%s183 + $0x3a8] sm:$0xff] %vm731, %v8824
      %8953 = vst.msk [vmem:[%s183 + $0x3b0] sm:$0xff] %vm731, %v8825
      %8954 = vst.msk [vmem:[%s183 + $0x3b8] sm:$0xff] %vm731, %v8826
      %8955 = vst.msk [vmem:[%s183 + $0x3c0] sm:$0xff] %vm731, %v8827
      %8956 = vst.msk [vmem:[%s183 + $0x3c8] sm:$0xff] %vm731, %v8828
      %8957 = vst.msk [vmem:[%s183 + $0x3d0] sm:$0xff] %vm731, %v8829
      %8958 = vst.msk [vmem:[%s183 + $0x3d8] sm:$0xff] %vm731, %v8830
      %8959 = vst.msk [vmem:[%s183 + $0x3e0] sm:$0xff] %vm731, %v8831
      %8960 = vst.msk [vmem:[%s183 + $0x3e8] sm:$0xff] %vm731, %v8832
      %8961 = vst.msk [vmem:[%s183 + $0x3f0] sm:$0xff] %vm731, %v8833
      %8962 = vst.msk [vmem:[%s183 + $0x3f8] sm:$0xff] %vm731, %v8834
      %p8963 = scmp.lt.s32.totalorder %s18, 1
      %s8964 = scalar_select %p8963, %s18, 1
      %p8965 = scmp.lt.s32.totalorder %s17, 0
      %s8966 = scalar_select %p8965, %s17, 0
      %s8967 = smul.addr %s8964, 128
      %s8968 = sadd.s32 %s8966, %s8967
      %s8969 = smul.addr %s8968, 8
      %s8970 = scalar_lea.vmem %s2, %s8969
      // Predicated region
      $region29: #{unet_up_forward.1} parent=27 // pred_check
        %p8971 = pneg %p97
      $region30: #{unet_up_forward.1} parent=27 // pred_check_branch
        %8973 = sbr.rel (%p8971) target = $region32
      $region31: #{unet_up_forward.1} parent=27 // pred_region
        _
      $region32: #{unet_up_forward.1} parent=27 // pred_fallthru
        _
    $region28: #{unet_up_forward.1} parent=5 // pred_fallthru
      _
    %p8974 = scmp.le.s32.totalorder 2, %s8
    // Predicated region
    $region33: #{unet_up_forward.1} parent=5 // pred_check
      %p8975 = pneg %p8974
    $region34: #{unet_up_forward.1} parent=5 // pred_check_branch
      %8977 = sbr.rel (%p8975) target = $region36
    $region35: #{unet_up_forward.1} parent=5 // pred_region
      %s8978 = ssub.s32 %s8, 2
      // Predicated region
      $region37: #{unet_up_forward.1} parent=35 // pred_check
        %p8979 = pneg %p103
      $region38: #{unet_up_forward.1} parent=35 // pred_check_branch
        %8981 = sbr.rel (%p8979) target = $region40
      $region39: #{unet_up_forward.1} parent=35 // pred_region
        %p8982 = scmp.lt.s32.totalorder %s20, 1
        %s8983 = scalar_select %p8982, %s20, 1
        %p8984 = scmp.lt.s32.totalorder %s19, 0
        %s8985 = scalar_select %p8984, %s19, 0
        %s8986 = smul.addr %s8983, 128
        %s8987 = sadd.s32 %s8985, %s8986
        %s8988 = smul.addr %s8987, 8
        %s8989 = scalar_lea.vmem %s2, %s8988
      $region40: #{unet_up_forward.1} parent=35 // pred_fallthru
        _
    $region36: #{unet_up_forward.1} parent=5 // pred_fallthru
      _
  $region6: #{unet_up_forward.1} parent=0 // loop_footer
    %s12 = sadd.s32 1, %s8
  $region7: #{unet_up_forward.1} parent=0 // loop_footer_branch
    %7 = sbr.rel target = $region3
  $region8: #{unet_up_forward.1} parent=0 // loop_exit
    _

</llo_original>
